<compile_context>
chip_gen: v7x
topology: tpu7x:2x2x1
jax: 0.10.0
libtpu: 0.0.40
codegen_flags: <defaults>
</compile_context>

<pallas_src>
import functools

import jax
import jax.numpy as jnp
from jax.experimental import pallas as pl
from jax.experimental.pallas import tpu as pltpu


# ---------------------------------------------------------------------------
# Pallas kernel
# ---------------------------------------------------------------------------

def _swap_leading_two(a):
    """(P, Q, C) -> (Q, P, C): swap the two leading axes, keep the minor (lane) axis. In-VMEM."""
    einshape = getattr(pltpu, "einshape", None)
    if einshape is not None:
        return einshape("pqe->qpe", a)
    return jnp.transpose(a, (1, 0, 2))


def _fused_block_kernel(x_ref, wqkv_ref, wo_ref, bo_ref, o_ref, *,
                        heads, dim_heads, B, H, W):
    """Fully fused ResidualAxialBlock over the whole batch, one grid step.

    x_ref    : (B, H, W, E)  channels-last images
    wqkv_ref : (E, 6*Dh)     columns = [ q_H | k_H | v_H | q_W | k_W | v_W ], Dh = heads*dim_heads
    wo_ref   : (2, Dh, E)    to_out weights, index 0 = H axis, 1 = W axis
    bo_ref   : (2, 1, E)     to_out biases
    o_ref    : (B, H, W, E)
    """
    Dh = heads * dim_heads
    scale = dim_heads ** -0.5

    x = x_ref[...].astype(jnp.float32)                       # (B, H, W, E), VMEM-resident
    E = x.shape[-1]

    # -------- one fused projection: q,k,v for BOTH axial passes in a single matmul --------
    xf = x.reshape(B * H * W, E)                              # (128, E)
    qkv = jnp.dot(xf, wqkv_ref[...],
                  preferred_element_type=jnp.float32)         # (128, 6*Dh)

    def attn_core(qkv3, wo, bo):
        # qkv3: (Bs, T, 3*Dh) laid out [q | k | v]; returns (Bs, T, E).
        Bs, T, _ = qkv3.shape
        q = qkv3[..., :Dh]
        k = qkv3[..., Dh:2 * Dh]
        v = qkv3[..., 2 * Dh:]
        acc = jnp.zeros((Bs * T, E), jnp.float32)
        for h in range(heads):                                # static, tiny loop (heads=2)
            lo, hi = h * dim_heads, (h + 1) * dim_heads
            qh, kh, vh = q[..., lo:hi], k[..., lo:hi], v[..., lo:hi]
            # batched dots contracting on dh (no explicit transpose of kh)
            dots = jnp.einsum("btd,bsd->bts", qh, kh,
                              preferred_element_type=jnp.float32) * scale   # (Bs, T, T)
            dots = dots - jnp.max(dots, axis=-1, keepdims=True)
            p = jnp.exp(dots)
            p = p * pl.reciprocal(jnp.sum(p, axis=-1, keepdims=True), approx=True)
            ho = jnp.einsum("bts,bsd->btd", p, vh,
                            preferred_element_type=jnp.float32)             # (Bs, T, dh)
            # concat-of-heads @ wo  ==  sum_h  ho_h @ wo[lo:hi, :]
            acc = acc + jnp.dot(ho.reshape(Bs * T, dim_heads), wo[lo:hi, :],
                                preferred_element_type=jnp.float32)
        return (acc + bo).reshape(Bs, T, E)                   # bias (1, E) broadcast

    # -------- attention along W: sequences of length W, batched over (B, H) rows --------
    qkv_w = qkv[:, 3 * Dh:].reshape(B * H, W, 3 * Dh)
    zw = attn_core(qkv_w, wo_ref[1], bo_ref[1]).reshape(B, H, W, E)

    # -------- attention along H: sequences of length H, batched over (B, W) columns --------
    # (H<->W swap stays in VMEM, done per image with the proven 3D einshape)
    qkv_h4 = qkv[:, :3 * Dh].reshape(B, H, W, 3 * Dh)
    qkv_h = jnp.concatenate([_swap_leading_two(qkv_h4[b]) for b in range(B)],
                            axis=0)                           # (B*W, H, 3*Dh)
    zh = attn_core(qkv_h, wo_ref[0], bo_ref[0])               # (B*W, H, E)

    # -------- residual + ReLU (dropout = identity in eval mode), per-image swap-back + store --------
    for b in range(B):                                        # static, B=2
        zh_b = _swap_leading_two(zh[b * W:(b + 1) * W])       # (H, W, E)
        o_ref[b] = jnp.maximum(zw[b] + zh_b + x[b], 0.0).astype(o_ref.dtype)


# ---------------------------------------------------------------------------
# Wrapper
# ---------------------------------------------------------------------------

def residual_axial_block(x, params, *, heads, dim_heads):
    """Forward pass of ResidualAxialBlock (eval mode). x: (B, H, W, E) channels-last."""
    B, H, W, E = x.shape
    Dh = heads * dim_heads
    (wq_h, wkv_h, wo_h, bo_h), (wq_w, wkv_w, wo_w, bo_w) = params

    # Pack the 8 parameter arrays into 3 slabs (fewer refs, enables the fused QKV matmul).
    w_qkv = jnp.concatenate([wq_h, wkv_h, wq_w, wkv_w], axis=1)   # (E, 6*Dh)
    w_o = jnp.stack([wo_h, wo_w], axis=0)                          # (2, Dh, E)
    b_o = jnp.stack([bo_h, bo_w], axis=0)                          # (2, 1, E)

    kernel = functools.partial(_fused_block_kernel, heads=heads, dim_heads=dim_heads,
                               B=B, H=H, W=W)

    # Advisory cost estimate so XLA schedules around this tiny custom call.
    n_pos = B * H * W
    flops = 2 * n_pos * E * (6 * Dh)                               # fused qkv projection
    trans = 0
    for bs, t in ((B * H, W), (B * W, H)):                         # two axial passes
        flops += 2 * (2 * heads * bs * t * t * dim_heads)          # dots + p@v
        flops += 2 * bs * t * Dh * E                               # output projection
        trans += heads * bs * t * t + heads * bs * t               # exp + reciprocal
    bytes_accessed = 4 * (2 * x.size + w_qkv.size + w_o.size + b_o.size)
    cost = pl.CostEstimate(flops=int(flops), transcendentals=int(trans),
                           bytes_accessed=int(bytes_accessed))

    return pl.pallas_call(
        kernel,
        out_shape=jax.ShapeDtypeStruct((B, H, W, E), x.dtype),
        grid=(1,),                          # single step: whole batch, minimal fixed overhead
        in_specs=[
            pl.BlockSpec((B, H, W, E), lambda i: (0, 0, 0, 0)),
            pl.BlockSpec((E, 6 * Dh), lambda i: (0, 0)),
            pl.BlockSpec((2, Dh, E), lambda i: (0, 0, 0)),
            pl.BlockSpec((2, 1, E), lambda i: (0, 0, 0)),
        ],
        out_specs=pl.BlockSpec((B, H, W, E), lambda i: (0, 0, 0, 0)),
        compiler_params=pltpu.CompilerParams(dimension_semantics=("arbitrary",)),
        cost_estimate=cost,
    )(x, w_qkv, w_o, b_o)


# ---------------------------------------------------------------------------
# Pure-JAX reference (mirrors the PyTorch axial_attention library) for checking
# ---------------------------------------------------------------------------

def _self_attn_ref(x, wq, wkv, wo, bo, heads, dim_heads):
    q = x @ wq
    kv = x @ wkv
    k, v = jnp.split(kv, 2, axis=-1)
    B, T, _ = q.shape

    def merge_heads(t):
        return t.reshape(B, T, heads, dim_heads).transpose(0, 2, 1, 3).reshape(B * heads, T, dim_heads)

    q, k, v = merge_heads(q), merge_heads(k), merge_heads(v)
    dots = jnp.einsum("bie,bje->bij", q, k) * (dim_heads ** -0.5)
    p = jax.nn.softmax(dots, axis=-1)
    out = jnp.einsum("bij,bje->bie", p, v)
    out = out.reshape(B, heads, T, dim_heads).transpose(0, 2, 1, 3).reshape(B, T, heads * dim_heads)
    return out @ wo + bo


def _residual_axial_block_ref(x, params, heads, dim_heads):
    B, H, W, E = x.shape
    (wq_h, wkv_h, wo_h, bo_h), (wq_w, wkv_w, wo_w, bo_w) = params
    xh = jnp.transpose(x, (0, 2, 1, 3)).reshape(B * W, H, E)
    zh = _self_attn_ref(xh, wq_h, wkv_h, wo_h, bo_h, heads, dim_heads)
    zh = jnp.transpose(zh.reshape(B, W, H, E), (0, 2, 1, 3))
    xw = x.reshape(B * H, W, E)
    zw = _self_attn_ref(xw, wq_w, wkv_w, wo_w, bo_w, heads, dim_heads).reshape(B, H, W, E)
    return jax.nn.relu(zh + zw + x)


# ---------------------------------------------------------------------------
# Main
# ---------------------------------------------------------------------------

if __name__ == "__main__":
    # module hyperparams: embedding_dim=16, num_dimentions=2, num_heads=2, dropout=0.1
    E, heads, dim_heads = 16, 2, 4          # dim_heads=4 is hard-coded in the module
    Dh = heads * dim_heads
    B, H, W = 2, 8, 8

    key = jax.random.PRNGKey(0)
    keys = jax.random.split(key, 3)
    x = jax.random.normal(keys[0], (B, H, W, E), dtype=jnp.float32)

    # Two independent SelfAttention parameter sets (one per axial dimension).
    params = []
    for axis in range(2):
        k0, k1, k2, k3 = jax.random.split(keys[axis + 1], 4)
        wq = jax.random.normal(k0, (E, Dh), dtype=jnp.float32) * 0.1
        wkv = jax.random.normal(k1, (E, 2 * Dh), dtype=jnp.float32) * 0.1
        wo = jax.random.normal(k2, (Dh, E), dtype=jnp.float32) * 0.1
        bo = jax.random.normal(k3, (1, E), dtype=jnp.float32) * 0.1
        params.append((wq, wkv, wo, bo))
    params = tuple(params)

    out = residual_axial_block(x, params, heads=heads, dim_heads=dim_heads)
    out = jax.block_until_ready(out)

    ref = jax.block_until_ready(_residual_axial_block_ref(x, params, heads, dim_heads))
    assert out.shape == (B, H, W, E) and out.dtype == jnp.float32
    assert jnp.allclose(out, ref, atol=2e-3, rtol=2e-3), float(jnp.max(jnp.abs(out - ref)))

    print("KERNEL_OK")
</pallas_src>

<mosaic_0001>
module attributes {stable_mosaic.version = 11 : i64} {
  func.func @_fused_block_kernel(%arg0: i32, %arg1: memref<2x8x8x16xf32, #tpu.memory_space<vmem>>, %arg2: memref<16x48xf32, #tpu.memory_space<vmem>>, %arg3: memref<2x8x16xf32, #tpu.memory_space<vmem>>, %arg4: memref<2x1x16xf32, #tpu.memory_space<vmem>>, %arg5: memref<2x8x8x16xf32, #tpu.memory_space<vmem>>) attributes {dimension_semantics = [#tpu.dimension_semantics<arbitrary>], iteration_bounds = array<i64: 1>, scalar_prefetch = 0 : i64, scratch_operands = 0 : i64, tpu.core_type = #tpu.core_type<tc>, window_params = [{pipeline_mode = #tpu.pipeline_mode<synchronous>, transform_indices = @transform_0, window_bounds = array<i64: 2, 8, 8, 16>}, {pipeline_mode = #tpu.pipeline_mode<synchronous>, transform_indices = @transform_1, window_bounds = array<i64: 16, 48>}, {pipeline_mode = #tpu.pipeline_mode<synchronous>, transform_indices = @transform_2, window_bounds = array<i64: 2, 8, 16>}, {pipeline_mode = #tpu.pipeline_mode<synchronous>, transform_indices = @transform_3, window_bounds = array<i64: 2, 1, 16>}, {pipeline_mode = #tpu.pipeline_mode<synchronous>, transform_indices = @transform_4, window_bounds = array<i64: 2, 8, 8, 16>}]} {
    %c0 = arith.constant 0 : index
    %c0_0 = arith.constant 0 : index
    %c0_1 = arith.constant 0 : index
    %c0_2 = arith.constant 0 : index
    %0 = vector.load %arg1[%c0, %c0_0, %c0_1, %c0_2] : memref<2x8x8x16xf32, #tpu.memory_space<vmem>>, vector<2x8x8x16xf32>
    %1 = vector.shape_cast %0 : vector<2x8x8x16xf32> to vector<128x16xf32>
    %c0_3 = arith.constant 0 : index
    %c0_4 = arith.constant 0 : index
    %2 = vector.load %arg2[%c0_3, %c0_4] : memref<16x48xf32, #tpu.memory_space<vmem>>, vector<16x48xf32>
    %cst = arith.constant dense<0.000000e+00> : vector<128x48xf32>
    %3 = tpu.matmul %1, %2, %cst {dimension_numbers = #tpu.dot_dimension_numbers<[1], [0], [0], [1], [0, 0, 1, 1], [], []>} : vector<128x16xf32>, vector<16x48xf32>, vector<128x48xf32> -> vector<128x48xf32>
    %4 = vector.extract_strided_slice %3 {offsets = [0, 24], sizes = [128, 24], strides = [1, 1]} : vector<128x48xf32> to vector<128x24xf32>
    %5 = vector.shape_cast %4 : vector<128x24xf32> to vector<16x8x24xf32>
    %c1 = arith.constant 1 : index
    %c0_5 = arith.constant 0 : index
    %c0_6 = arith.constant 0 : index
    %6 = vector.load %arg3[%c1, %c0_5, %c0_6] : memref<2x8x16xf32, #tpu.memory_space<vmem>>, vector<1x8x16xf32>
    %7 = vector.shape_cast %6 : vector<1x8x16xf32> to vector<8x16xf32>
    %c1_7 = arith.constant 1 : index
    %c0_8 = arith.constant 0 : index
    %c0_9 = arith.constant 0 : index
    %8 = vector.load %arg4[%c1_7, %c0_8, %c0_9] : memref<2x1x16xf32, #tpu.memory_space<vmem>>, vector<1x1x16xf32>
    %9 = vector.shape_cast %8 : vector<1x1x16xf32> to vector<1x16xf32>
    %10 = vector.extract_strided_slice %5 {offsets = [0, 0, 0], sizes = [16, 8, 8], strides = [1, 1, 1]} : vector<16x8x24xf32> to vector<16x8x8xf32>
    %11 = vector.extract_strided_slice %5 {offsets = [0, 0, 8], sizes = [16, 8, 8], strides = [1, 1, 1]} : vector<16x8x24xf32> to vector<16x8x8xf32>
    %12 = vector.extract_strided_slice %5 {offsets = [0, 0, 16], sizes = [16, 8, 8], strides = [1, 1, 1]} : vector<16x8x24xf32> to vector<16x8x8xf32>
    %cst_10 = arith.constant 0.000000e+00 : f32
    %13 = vector.broadcast %cst_10 : f32 to vector<128x16xf32>
    %14 = vector.extract_strided_slice %10 {offsets = [0, 0, 0], sizes = [16, 8, 4], strides = [1, 1, 1]} : vector<16x8x8xf32> to vector<16x8x4xf32>
    %15 = vector.extract_strided_slice %11 {offsets = [0, 0, 0], sizes = [16, 8, 4], strides = [1, 1, 1]} : vector<16x8x8xf32> to vector<16x8x4xf32>
    %16 = vector.extract_strided_slice %12 {offsets = [0, 0, 0], sizes = [16, 8, 4], strides = [1, 1, 1]} : vector<16x8x8xf32> to vector<16x8x4xf32>
    "tpu.trace_start"() <{level = 10 : i32, message = "btd,bsd->bts"}> : () -> ()
    %cst_11 = arith.constant dense<0.000000e+00> : vector<16x8x8xf32>
    %17 = tpu.matmul %14, %15, %cst_11 {dimension_numbers = #tpu.dot_dimension_numbers<[2], [2], [1], [1], [0, 0, 0, 1, 1, 1], [0], [0]>} : vector<16x8x4xf32>, vector<16x8x4xf32>, vector<16x8x8xf32> -> vector<16x8x8xf32>
    "tpu.trace_stop"() : () -> ()
    %cst_12 = arith.constant 5.000000e-01 : f32
    %18 = vector.broadcast %cst_12 : f32 to vector<16x8x8xf32>
    %19 = arith.mulf %17, %18 : vector<16x8x8xf32>
    %cst_13 = arith.constant dense<0xFF800000> : vector<16x8xf32>
    %20 = vector.multi_reduction <maximumf>, %19, %cst_13 [2] : vector<16x8x8xf32> to vector<16x8xf32>
    %21 = vector.shape_cast %20 : vector<16x8xf32> to vector<16x8x1xf32>
    %22 = vector.broadcast %21 : vector<16x8x1xf32> to vector<16x8x8xf32>
    %23 = arith.subf %19, %22 : vector<16x8x8xf32>
    %24 = math.exp %23 : vector<16x8x8xf32>
    %cst_14 = arith.constant dense<0.000000e+00> : vector<16x8xf32>
    %25 = vector.multi_reduction <add>, %24, %cst_14 [2] : vector<16x8x8xf32> to vector<16x8xf32>
    %26 = vector.shape_cast %25 : vector<16x8xf32> to vector<16x8x1xf32>
    %27 = tpu.reciprocal %26 {approx = true} : vector<16x8x1xf32> -> vector<16x8x1xf32>
    %28 = vector.broadcast %27 : vector<16x8x1xf32> to vector<16x8x8xf32>
    %29 = arith.mulf %24, %28 : vector<16x8x8xf32>
    "tpu.trace_start"() <{level = 10 : i32, message = "bts,bsd->btd"}> : () -> ()
    %cst_15 = arith.constant dense<0.000000e+00> : vector<16x8x4xf32>
    %30 = tpu.matmul %29, %16, %cst_15 {dimension_numbers = #tpu.dot_dimension_numbers<[2], [1], [1], [2], [0, 0, 0, 1, 1, 2], [0], [0]>} : vector<16x8x8xf32>, vector<16x8x4xf32>, vector<16x8x4xf32> -> vector<16x8x4xf32>
    "tpu.trace_stop"() : () -> ()
    %31 = vector.shape_cast %30 : vector<16x8x4xf32> to vector<128x4xf32>
    %32 = vector.extract_strided_slice %7 {offsets = [0, 0], sizes = [4, 16], strides = [1, 1]} : vector<8x16xf32> to vector<4x16xf32>
    %cst_16 = arith.constant dense<0.000000e+00> : vector<128x16xf32>
    %33 = tpu.matmul %31, %32, %cst_16 {dimension_numbers = #tpu.dot_dimension_numbers<[1], [0], [0], [1], [0, 0, 1, 1], [], []>} : vector<128x4xf32>, vector<4x16xf32>, vector<128x16xf32> -> vector<128x16xf32>
    %34 = arith.addf %13, %33 : vector<128x16xf32>
    %35 = vector.extract_strided_slice %10 {offsets = [0, 0, 4], sizes = [16, 8, 4], strides = [1, 1, 1]} : vector<16x8x8xf32> to vector<16x8x4xf32>
    %36 = vector.extract_strided_slice %11 {offsets = [0, 0, 4], sizes = [16, 8, 4], strides = [1, 1, 1]} : vector<16x8x8xf32> to vector<16x8x4xf32>
    %37 = vector.extract_strided_slice %12 {offsets = [0, 0, 4], sizes = [16, 8, 4], strides = [1, 1, 1]} : vector<16x8x8xf32> to vector<16x8x4xf32>
    "tpu.trace_start"() <{level = 10 : i32, message = "btd,bsd->bts"}> : () -> ()
    %cst_17 = arith.constant dense<0.000000e+00> : vector<16x8x8xf32>
    %38 = tpu.matmul %35, %36, %cst_17 {dimension_numbers = #tpu.dot_dimension_numbers<[2], [2], [1], [1], [0, 0, 0, 1, 1, 1], [0], [0]>} : vector<16x8x4xf32>, vector<16x8x4xf32>, vector<16x8x8xf32> -> vector<16x8x8xf32>
    "tpu.trace_stop"() : () -> ()
    %cst_18 = arith.constant 5.000000e-01 : f32
    %39 = vector.broadcast %cst_18 : f32 to vector<16x8x8xf32>
    %40 = arith.mulf %38, %39 : vector<16x8x8xf32>
    %cst_19 = arith.constant dense<0xFF800000> : vector<16x8xf32>
    %41 = vector.multi_reduction <maximumf>, %40, %cst_19 [2] : vector<16x8x8xf32> to vector<16x8xf32>
    %42 = vector.shape_cast %41 : vector<16x8xf32> to vector<16x8x1xf32>
    %43 = vector.broadcast %42 : vector<16x8x1xf32> to vector<16x8x8xf32>
    %44 = arith.subf %40, %43 : vector<16x8x8xf32>
    %45 = math.exp %44 : vector<16x8x8xf32>
    %cst_20 = arith.constant dense<0.000000e+00> : vector<16x8xf32>
    %46 = vector.multi_reduction <add>, %45, %cst_20 [2] : vector<16x8x8xf32> to vector<16x8xf32>
    %47 = vector.shape_cast %46 : vector<16x8xf32> to vector<16x8x1xf32>
    %48 = tpu.reciprocal %47 {approx = true} : vector<16x8x1xf32> -> vector<16x8x1xf32>
    %49 = vector.broadcast %48 : vector<16x8x1xf32> to vector<16x8x8xf32>
    %50 = arith.mulf %45, %49 : vector<16x8x8xf32>
    "tpu.trace_start"() <{level = 10 : i32, message = "bts,bsd->btd"}> : () -> ()
    %cst_21 = arith.constant dense<0.000000e+00> : vector<16x8x4xf32>
    %51 = tpu.matmul %50, %37, %cst_21 {dimension_numbers = #tpu.dot_dimension_numbers<[2], [1], [1], [2], [0, 0, 0, 1, 1, 2], [0], [0]>} : vector<16x8x8xf32>, vector<16x8x4xf32>, vector<16x8x4xf32> -> vector<16x8x4xf32>
    "tpu.trace_stop"() : () -> ()
    %52 = vector.shape_cast %51 : vector<16x8x4xf32> to vector<128x4xf32>
    %53 = vector.extract_strided_slice %7 {offsets = [4, 0], sizes = [4, 16], strides = [1, 1]} : vector<8x16xf32> to vector<4x16xf32>
    %cst_22 = arith.constant dense<0.000000e+00> : vector<128x16xf32>
    %54 = tpu.matmul %52, %53, %cst_22 {dimension_numbers = #tpu.dot_dimension_numbers<[1], [0], [0], [1], [0, 0, 1, 1], [], []>} : vector<128x4xf32>, vector<4x16xf32>, vector<128x16xf32> -> vector<128x16xf32>
    %55 = arith.addf %34, %54 : vector<128x16xf32>
    %56 = vector.broadcast %9 : vector<1x16xf32> to vector<128x16xf32>
    %57 = arith.addf %55, %56 : vector<128x16xf32>
    %58 = vector.shape_cast %57 : vector<128x16xf32> to vector<16x8x16xf32>
    %59 = vector.shape_cast %58 : vector<16x8x16xf32> to vector<2x8x8x16xf32>
    %60 = vector.extract_strided_slice %3 {offsets = [0, 0], sizes = [128, 24], strides = [1, 1]} : vector<128x48xf32> to vector<128x24xf32>
    %61 = vector.shape_cast %60 : vector<128x24xf32> to vector<2x8x8x24xf32>
    %62 = vector.extract_strided_slice %61 {offsets = [0, 0, 0, 0], sizes = [1, 8, 8, 24], strides = [1, 1, 1, 1]} : vector<2x8x8x24xf32> to vector<1x8x8x24xf32>
    %63 = vector.shape_cast %62 : vector<1x8x8x24xf32> to vector<8x8x24xf32>
    %64 = tpu.transpose %63, [1, 0, 2] : vector<8x8x24xf32> -> vector<8x8x24xf32>
    %65 = vector.extract_strided_slice %61 {offsets = [1, 0, 0, 0], sizes = [1, 8, 8, 24], strides = [1, 1, 1, 1]} : vector<2x8x8x24xf32> to vector<1x8x8x24xf32>
    %66 = vector.shape_cast %65 : vector<1x8x8x24xf32> to vector<8x8x24xf32>
    %67 = tpu.transpose %66, [1, 0, 2] : vector<8x8x24xf32> -> vector<8x8x24xf32>
    %68 = tpu.concatenate %64, %67 in 0 : vector<8x8x24xf32>, vector<8x8x24xf32> -> vector<16x8x24xf32>
    %c0_23 = arith.constant 0 : index
    %c0_24 = arith.constant 0 : index
    %c0_25 = arith.constant 0 : index
    %69 = vector.load %arg3[%c0_23, %c0_24, %c0_25] : memref<2x8x16xf32, #tpu.memory_space<vmem>>, vector<1x8x16xf32>
    %70 = vector.shape_cast %69 : vector<1x8x16xf32> to vector<8x16xf32>
    %c0_26 = arith.constant 0 : index
    %c0_27 = arith.constant 0 : index
    %c0_28 = arith.constant 0 : index
    %71 = vector.load %arg4[%c0_26, %c0_27, %c0_28] : memref<2x1x16xf32, #tpu.memory_space<vmem>>, vector<1x1x16xf32>
    %72 = vector.shape_cast %71 : vector<1x1x16xf32> to vector<1x16xf32>
    %73 = vector.extract_strided_slice %68 {offsets = [0, 0, 0], sizes = [16, 8, 8], strides = [1, 1, 1]} : vector<16x8x24xf32> to vector<16x8x8xf32>
    %74 = vector.extract_strided_slice %68 {offsets = [0, 0, 8], sizes = [16, 8, 8], strides = [1, 1, 1]} : vector<16x8x24xf32> to vector<16x8x8xf32>
    %75 = vector.extract_strided_slice %68 {offsets = [0, 0, 16], sizes = [16, 8, 8], strides = [1, 1, 1]} : vector<16x8x24xf32> to vector<16x8x8xf32>
    %cst_29 = arith.constant 0.000000e+00 : f32
    %76 = vector.broadcast %cst_29 : f32 to vector<128x16xf32>
    %77 = vector.extract_strided_slice %73 {offsets = [0, 0, 0], sizes = [16, 8, 4], strides = [1, 1, 1]} : vector<16x8x8xf32> to vector<16x8x4xf32>
    %78 = vector.extract_strided_slice %74 {offsets = [0, 0, 0], sizes = [16, 8, 4], strides = [1, 1, 1]} : vector<16x8x8xf32> to vector<16x8x4xf32>
    %79 = vector.extract_strided_slice %75 {offsets = [0, 0, 0], sizes = [16, 8, 4], strides = [1, 1, 1]} : vector<16x8x8xf32> to vector<16x8x4xf32>
    "tpu.trace_start"() <{level = 10 : i32, message = "btd,bsd->bts"}> : () -> ()
    %cst_30 = arith.constant dense<0.000000e+00> : vector<16x8x8xf32>
    %80 = tpu.matmul %77, %78, %cst_30 {dimension_numbers = #tpu.dot_dimension_numbers<[2], [2], [1], [1], [0, 0, 0, 1, 1, 1], [0], [0]>} : vector<16x8x4xf32>, vector<16x8x4xf32>, vector<16x8x8xf32> -> vector<16x8x8xf32>
    "tpu.trace_stop"() : () -> ()
    %cst_31 = arith.constant 5.000000e-01 : f32
    %81 = vector.broadcast %cst_31 : f32 to vector<16x8x8xf32>
    %82 = arith.mulf %80, %81 : vector<16x8x8xf32>
    %cst_32 = arith.constant dense<0xFF800000> : vector<16x8xf32>
    %83 = vector.multi_reduction <maximumf>, %82, %cst_32 [2] : vector<16x8x8xf32> to vector<16x8xf32>
    %84 = vector.shape_cast %83 : vector<16x8xf32> to vector<16x8x1xf32>
    %85 = vector.broadcast %84 : vector<16x8x1xf32> to vector<16x8x8xf32>
    %86 = arith.subf %82, %85 : vector<16x8x8xf32>
    %87 = math.exp %86 : vector<16x8x8xf32>
    %cst_33 = arith.constant dense<0.000000e+00> : vector<16x8xf32>
    %88 = vector.multi_reduction <add>, %87, %cst_33 [2] : vector<16x8x8xf32> to vector<16x8xf32>
    %89 = vector.shape_cast %88 : vector<16x8xf32> to vector<16x8x1xf32>
    %90 = tpu.reciprocal %89 {approx = true} : vector<16x8x1xf32> -> vector<16x8x1xf32>
    %91 = vector.broadcast %90 : vector<16x8x1xf32> to vector<16x8x8xf32>
    %92 = arith.mulf %87, %91 : vector<16x8x8xf32>
    "tpu.trace_start"() <{level = 10 : i32, message = "bts,bsd->btd"}> : () -> ()
    %cst_34 = arith.constant dense<0.000000e+00> : vector<16x8x4xf32>
    %93 = tpu.matmul %92, %79, %cst_34 {dimension_numbers = #tpu.dot_dimension_numbers<[2], [1], [1], [2], [0, 0, 0, 1, 1, 2], [0], [0]>} : vector<16x8x8xf32>, vector<16x8x4xf32>, vector<16x8x4xf32> -> vector<16x8x4xf32>
    "tpu.trace_stop"() : () -> ()
    %94 = vector.shape_cast %93 : vector<16x8x4xf32> to vector<128x4xf32>
    %95 = vector.extract_strided_slice %70 {offsets = [0, 0], sizes = [4, 16], strides = [1, 1]} : vector<8x16xf32> to vector<4x16xf32>
    %cst_35 = arith.constant dense<0.000000e+00> : vector<128x16xf32>
    %96 = tpu.matmul %94, %95, %cst_35 {dimension_numbers = #tpu.dot_dimension_numbers<[1], [0], [0], [1], [0, 0, 1, 1], [], []>} : vector<128x4xf32>, vector<4x16xf32>, vector<128x16xf32> -> vector<128x16xf32>
    %97 = arith.addf %76, %96 : vector<128x16xf32>
    %98 = vector.extract_strided_slice %73 {offsets = [0, 0, 4], sizes = [16, 8, 4], strides = [1, 1, 1]} : vector<16x8x8xf32> to vector<16x8x4xf32>
    %99 = vector.extract_strided_slice %74 {offsets = [0, 0, 4], sizes = [16, 8, 4], strides = [1, 1, 1]} : vector<16x8x8xf32> to vector<16x8x4xf32>
    %100 = vector.extract_strided_slice %75 {offsets = [0, 0, 4], sizes = [16, 8, 4], strides = [1, 1, 1]} : vector<16x8x8xf32> to vector<16x8x4xf32>
    "tpu.trace_start"() <{level = 10 : i32, message = "btd,bsd->bts"}> : () -> ()
    %cst_36 = arith.constant dense<0.000000e+00> : vector<16x8x8xf32>
    %101 = tpu.matmul %98, %99, %cst_36 {dimension_numbers = #tpu.dot_dimension_numbers<[2], [2], [1], [1], [0, 0, 0, 1, 1, 1], [0], [0]>} : vector<16x8x4xf32>, vector<16x8x4xf32>, vector<16x8x8xf32> -> vector<16x8x8xf32>
    "tpu.trace_stop"() : () -> ()
    %cst_37 = arith.constant 5.000000e-01 : f32
    %102 = vector.broadcast %cst_37 : f32 to vector<16x8x8xf32>
    %103 = arith.mulf %101, %102 : vector<16x8x8xf32>
    %cst_38 = arith.constant dense<0xFF800000> : vector<16x8xf32>
    %104 = vector.multi_reduction <maximumf>, %103, %cst_38 [2] : vector<16x8x8xf32> to vector<16x8xf32>
    %105 = vector.shape_cast %104 : vector<16x8xf32> to vector<16x8x1xf32>
    %106 = vector.broadcast %105 : vector<16x8x1xf32> to vector<16x8x8xf32>
    %107 = arith.subf %103, %106 : vector<16x8x8xf32>
    %108 = math.exp %107 : vector<16x8x8xf32>
    %cst_39 = arith.constant dense<0.000000e+00> : vector<16x8xf32>
    %109 = vector.multi_reduction <add>, %108, %cst_39 [2] : vector<16x8x8xf32> to vector<16x8xf32>
    %110 = vector.shape_cast %109 : vector<16x8xf32> to vector<16x8x1xf32>
    %111 = tpu.reciprocal %110 {approx = true} : vector<16x8x1xf32> -> vector<16x8x1xf32>
    %112 = vector.broadcast %111 : vector<16x8x1xf32> to vector<16x8x8xf32>
    %113 = arith.mulf %108, %112 : vector<16x8x8xf32>
    "tpu.trace_start"() <{level = 10 : i32, message = "bts,bsd->btd"}> : () -> ()
    %cst_40 = arith.constant dense<0.000000e+00> : vector<16x8x4xf32>
    %114 = tpu.matmul %113, %100, %cst_40 {dimension_numbers = #tpu.dot_dimension_numbers<[2], [1], [1], [2], [0, 0, 0, 1, 1, 2], [0], [0]>} : vector<16x8x8xf32>, vector<16x8x4xf32>, vector<16x8x4xf32> -> vector<16x8x4xf32>
    "tpu.trace_stop"() : () -> ()
    %115 = vector.shape_cast %114 : vector<16x8x4xf32> to vector<128x4xf32>
    %116 = vector.extract_strided_slice %70 {offsets = [4, 0], sizes = [4, 16], strides = [1, 1]} : vector<8x16xf32> to vector<4x16xf32>
    %cst_41 = arith.constant dense<0.000000e+00> : vector<128x16xf32>
    %117 = tpu.matmul %115, %116, %cst_41 {dimension_numbers = #tpu.dot_dimension_numbers<[1], [0], [0], [1], [0, 0, 1, 1], [], []>} : vector<128x4xf32>, vector<4x16xf32>, vector<128x16xf32> -> vector<128x16xf32>
    %118 = arith.addf %97, %117 : vector<128x16xf32>
    %119 = vector.broadcast %72 : vector<1x16xf32> to vector<128x16xf32>
    %120 = arith.addf %118, %119 : vector<128x16xf32>
    %121 = vector.shape_cast %120 : vector<128x16xf32> to vector<16x8x16xf32>
    %122 = vector.extract_strided_slice %121 {offsets = [0, 0, 0], sizes = [8, 8, 16], strides = [1, 1, 1]} : vector<16x8x16xf32> to vector<8x8x16xf32>
    %123 = tpu.transpose %122, [1, 0, 2] : vector<8x8x16xf32> -> vector<8x8x16xf32>
    %124 = vector.extract_strided_slice %59 {offsets = [0, 0, 0, 0], sizes = [1, 8, 8, 16], strides = [1, 1, 1, 1]} : vector<2x8x8x16xf32> to vector<1x8x8x16xf32>
    %125 = vector.shape_cast %124 : vector<1x8x8x16xf32> to vector<8x8x16xf32>
    %126 = arith.addf %125, %123 : vector<8x8x16xf32>
    %127 = vector.extract_strided_slice %0 {offsets = [0, 0, 0, 0], sizes = [1, 8, 8, 16], strides = [1, 1, 1, 1]} : vector<2x8x8x16xf32> to vector<1x8x8x16xf32>
    %128 = vector.shape_cast %127 : vector<1x8x8x16xf32> to vector<8x8x16xf32>
    %129 = arith.addf %126, %128 : vector<8x8x16xf32>
    %cst_42 = arith.constant 0.000000e+00 : f32
    %130 = vector.broadcast %cst_42 : f32 to vector<8x8x16xf32>
    %131 = arith.maximumf %129, %130 : vector<8x8x16xf32>
    %c0_43 = arith.constant 0 : index
    %c0_44 = arith.constant 0 : index
    %c0_45 = arith.constant 0 : index
    %c0_46 = arith.constant 0 : index
    %132 = vector.load %arg5[%c0_43, %c0_44, %c0_45, %c0_46] : memref<2x8x8x16xf32, #tpu.memory_space<vmem>>, vector<1x8x8x16xf32>
    %133 = vector.shape_cast %132 : vector<1x8x8x16xf32> to vector<8x8x16xf32>
    %134 = vector.shape_cast %131 : vector<8x8x16xf32> to vector<1x8x8x16xf32>
    tpu.vector_store %arg5[%c0_43, %c0_44, %c0_45, %c0_46], %134 {strides = array<i32>} : memref<2x8x8x16xf32, #tpu.memory_space<vmem>>, vector<1x8x8x16xf32>,
    %135 = vector.extract_strided_slice %121 {offsets = [8, 0, 0], sizes = [8, 8, 16], strides = [1, 1, 1]} : vector<16x8x16xf32> to vector<8x8x16xf32>
    %136 = tpu.transpose %135, [1, 0, 2] : vector<8x8x16xf32> -> vector<8x8x16xf32>
    %137 = vector.extract_strided_slice %59 {offsets = [1, 0, 0, 0], sizes = [1, 8, 8, 16], strides = [1, 1, 1, 1]} : vector<2x8x8x16xf32> to vector<1x8x8x16xf32>
    %138 = vector.shape_cast %137 : vector<1x8x8x16xf32> to vector<8x8x16xf32>
    %139 = arith.addf %138, %136 : vector<8x8x16xf32>
    %140 = vector.extract_strided_slice %0 {offsets = [1, 0, 0, 0], sizes = [1, 8, 8, 16], strides = [1, 1, 1, 1]} : vector<2x8x8x16xf32> to vector<1x8x8x16xf32>
    %141 = vector.shape_cast %140 : vector<1x8x8x16xf32> to vector<8x8x16xf32>
    %142 = arith.addf %139, %141 : vector<8x8x16xf32>
    %cst_47 = arith.constant 0.000000e+00 : f32
    %143 = vector.broadcast %cst_47 : f32 to vector<8x8x16xf32>
    %144 = arith.maximumf %142, %143 : vector<8x8x16xf32>
    %c1_48 = arith.constant 1 : index
    %c0_49 = arith.constant 0 : index
    %c0_50 = arith.constant 0 : index
    %c0_51 = arith.constant 0 : index
    %145 = vector.load %arg5[%c1_48, %c0_49, %c0_50, %c0_51] : memref<2x8x8x16xf32, #tpu.memory_space<vmem>>, vector<1x8x8x16xf32>
    %146 = vector.shape_cast %145 : vector<1x8x8x16xf32> to vector<8x8x16xf32>
    %147 = vector.shape_cast %144 : vector<8x8x16xf32> to vector<1x8x8x16xf32>
    tpu.vector_store %arg5[%c1_48, %c0_49, %c0_50, %c0_51], %147 {strides = array<i32>} : memref<2x8x8x16xf32, #tpu.memory_space<vmem>>, vector<1x8x8x16xf32>,
    return
  }
  func.func @transform_0(%arg0: i32) -> (i32, i32, i32, i32) {
    %c0_i32 = arith.constant 0 : i32
    %c0_i32_0 = arith.constant 0 : i32
    %c0_i32_1 = arith.constant 0 : i32
    %c0_i32_2 = arith.constant 0 : i32
    %c0_i32_3 = arith.constant 0 : i32
    return %c0_i32, %c0_i32_0, %c0_i32_1, %c0_i32_2 : i32, i32, i32, i32
  }
  func.func @transform_1(%arg0: i32) -> (i32, i32) {
    %c0_i32 = arith.constant 0 : i32
    %c0_i32_0 = arith.constant 0 : i32
    %c0_i32_1 = arith.constant 0 : i32
    return %c0_i32, %c0_i32_0 : i32, i32
  }
  func.func @transform_2(%arg0: i32) -> (i32, i32, i32) {
    %c0_i32 = arith.constant 0 : i32
    %c0_i32_0 = arith.constant 0 : i32
    %c0_i32_1 = arith.constant 0 : i32
    %c0_i32_2 = arith.constant 0 : i32
    return %c0_i32, %c0_i32_0, %c0_i32_1 : i32, i32, i32
  }
  func.func @transform_3(%arg0: i32) -> (i32, i32, i32) {
    %c0_i32 = arith.constant 0 : i32
    %c0_i32_0 = arith.constant 0 : i32
    %c0_i32_1 = arith.constant 0 : i32
    %c0_i32_2 = arith.constant 0 : i32
    return %c0_i32, %c0_i32_0, %c0_i32_1 : i32, i32, i32
  }
  func.func @transform_4(%arg0: i32) -> (i32, i32, i32, i32) {
    %c0_i32 = arith.constant 0 : i32
    %c0_i32_0 = arith.constant 0 : i32
    %c0_i32_1 = arith.constant 0 : i32
    %c0_i32_2 = arith.constant 0 : i32
    %c0_i32_3 = arith.constant 0 : i32
    return %c0_i32, %c0_i32_0, %c0_i32_1, %c0_i32_2 : i32, i32, i32, i32
  }
}

</mosaic_0001>

<llo_original>
// kernel: tpu_custom_call.1
$region0: #{tpu_custom_call.1}
  #allocation0 [shape = 'u32[]', space=smem, size = 0x4, offset = 0x4, fixed_abs, tag = 'smem constant byte address 0x4 - core index']
  #allocation1 [shape = 'u32[144,128]{1,0:T(1,128)}', space=vmem, size = 0x12000, scoped, tag = 'internal scratch']
  %s0 = inlined_call_operand.hbm [shape: f32[2,8,8,16], index: 0, kind: input, shape index: {}]
  %s1 = inlined_call_operand.hbm [shape: f32[16,48], index: 1, kind: input, shape index: {}]
  %s2 = inlined_call_operand.hbm [shape: f32[2,8,16], index: 2, kind: input, shape index: {}]
  %s3 = inlined_call_operand.vmem [shape: f32[2,1,16], index: 3, kind: input, shape index: {}]
  %s4 = inlined_call_operand.hbm [shape: f32[2,8,8,16], index: 4, kind: output, shape index: {}]
  %s5 = sld [smem:[#allocation0]]
  $region38: #{tpu_custom_call.1} parent=0
    _
  %s7 = ssub.s32 1, %s5
  %s8 = scalar_select 0, %s7, %s5
  $region1: #{tpu_custom_call.1} parent=0
    #allocation2 [shape = 'u8[65536]{0}', space=vmem, size = 0x10000, scoped, tag = 'input window, operand 0, single buffered']
    #allocation3 [shape = 's32[1]{0}', space=sflag, size = 0x4, scoped, tag = 'scoped memory for tpu_custom_call.1']
    #allocation4 [shape = 's32[1]{0}', space=sflag, size = 0x4, scoped, tag = 'scoped memory for tpu_custom_call.1']
    #allocation5 [shape = 'u8[8192]{0}', space=vmem, size = 0x2000, scoped, tag = 'input window, operand 1, single buffered']
    #allocation6 [shape = 's32[1]{0}', space=sflag, size = 0x4, scoped, tag = 'scoped memory for tpu_custom_call.1']
    #allocation7 [shape = 'u8[8192]{0}', space=vmem, size = 0x2000, scoped, tag = 'input window, operand 2, single buffered']
    #allocation8 [shape = 'u8[65536]{0}', space=vmem, size = 0x10000, scoped, tag = 'output window, operand 0, single buffered']
    %9 = vsyncpa [#allocation3], 0
    %10 = vsyncpa [#allocation6], 0
    %11 = vsyncpa [#allocation4], 0
    // Predicated region
    $region2: #{tpu_custom_call.1} parent=1 // pred_check
      _
    $region3: #{tpu_custom_call.1} parent=1 // pred_check_branch
      %13 = sbr.rel (0) target = $region5
    $region4: #{tpu_custom_call.1} parent=1 // pred_region
      %s15 = ssub.s32 2048, 2048
      %16 = vsyncadd [#allocation3], %s15
      %s17 = sshll.u32 [#allocation2], 4
      %s18 = int_to_ptr.vmem [resolvable:$true] %s17
      %23 = dma.hbm_to_vmem [thread:$0]  %s0, 2048, %s18, [#allocation3], 128, 128, 8
    $region5: #{tpu_custom_call.1} parent=1 // pred_fallthru
      _
    // Predicated region
    $region6: #{tpu_custom_call.1} parent=1 // pred_check
      _
    $region7: #{tpu_custom_call.1} parent=1 // pred_check_branch
      %25 = sbr.rel (0) target = $region9
    $region8: #{tpu_custom_call.1} parent=1 // pred_region
      %s27 = ssub.s32 256, 256
      %28 = vsyncadd [#allocation6], %s27
      %s29 = sshll.u32 [#allocation5], 4
      %s30 = int_to_ptr.vmem [resolvable:$true] %s29
      %35 = dma.hbm_to_vmem [thread:$0]  %s1, 256, %s30, [#allocation6], 128, 128, 8
    $region9: #{tpu_custom_call.1} parent=1 // pred_fallthru
      _
    // Predicated region
    $region10: #{tpu_custom_call.1} parent=1 // pred_check
      _
    $region11: #{tpu_custom_call.1} parent=1 // pred_check_branch
      %37 = sbr.rel (0) target = $region13
    $region12: #{tpu_custom_call.1} parent=1 // pred_region
      %s39 = ssub.s32 256, 256
      %40 = vsyncadd [#allocation6], %s39
      %s41 = sshll.u32 [#allocation7], 4
      %s42 = int_to_ptr.vmem [resolvable:$true] %s41
      %47 = dma.hbm_to_vmem [thread:$0]  %s2, 256, %s42, [#allocation6], 128, 128, 8
    $region13: #{tpu_custom_call.1} parent=1 // pred_fallthru
      _
    // Predicated region
    $region14: #{tpu_custom_call.1} parent=1 // pred_check
      _
    $region15: #{tpu_custom_call.1} parent=1 // pred_check_branch
      %49 = sbr.rel (0) target = $region17
    $region16: #{tpu_custom_call.1} parent=1 // pred_region
      _
    $region17: #{tpu_custom_call.1} parent=1 // pred_fallthru
      _
    // Predicated region
    $region18: #{tpu_custom_call.1} parent=1 // pred_check
      _
    $region19: #{tpu_custom_call.1} parent=1 // pred_check_branch
      %51 = sbr.rel (0) target = $region21
    $region20: #{tpu_custom_call.1} parent=1 // pred_region
      %52 = dma.done [#allocation3], 2048
    $region21: #{tpu_custom_call.1} parent=1 // pred_fallthru
      _
    // Predicated region
    $region22: #{tpu_custom_call.1} parent=1 // pred_check
      _
    $region23: #{tpu_custom_call.1} parent=1 // pred_check_branch
      %54 = sbr.rel (0) target = $region25
    $region24: #{tpu_custom_call.1} parent=1 // pred_region
      %55 = dma.done [#allocation6], 256
    $region25: #{tpu_custom_call.1} parent=1 // pred_fallthru
      _
    // Predicated region
    $region26: #{tpu_custom_call.1} parent=1 // pred_check
      _
    $region27: #{tpu_custom_call.1} parent=1 // pred_check_branch
      %57 = sbr.rel (0) target = $region29
    $region28: #{tpu_custom_call.1} parent=1 // pred_region
      %58 = dma.done [#allocation6], 256
    $region29: #{tpu_custom_call.1} parent=1 // pred_fallthru
      _
    %v59 = vld [vmem:[#allocation2] sm:$0xff]
    %v60 = vld [vmem:[#allocation2 + $0x8] sm:$0xff]
    %v61 = vld [vmem:[#allocation2 + $0x10] sm:$0xff]
    %v62 = vld [vmem:[#allocation2 + $0x18] sm:$0xff]
    %v63 = vld [vmem:[#allocation2 + $0x20] sm:$0xff]
    %v64 = vld [vmem:[#allocation2 + $0x28] sm:$0xff]
    %v65 = vld [vmem:[#allocation2 + $0x30] sm:$0xff]
    %v66 = vld [vmem:[#allocation2 + $0x38] sm:$0xff]
    %v67 = vld [vmem:[#allocation2 + $0x40] sm:$0xff]
    %v68 = vld [vmem:[#allocation2 + $0x48] sm:$0xff]
    %v69 = vld [vmem:[#allocation2 + $0x50] sm:$0xff]
    %v70 = vld [vmem:[#allocation2 + $0x58] sm:$0xff]
    %v71 = vld [vmem:[#allocation2 + $0x60] sm:$0xff]
    %v72 = vld [vmem:[#allocation2 + $0x68] sm:$0xff]
    %v73 = vld [vmem:[#allocation2 + $0x70] sm:$0xff]
    %v74 = vld [vmem:[#allocation2 + $0x78] sm:$0xff]
    %v75 = vld [vmem:[#allocation5] sm:$0xff]
    %v76 = vld [vmem:[#allocation5 + $0x8] sm:$0xff]
    %vm77 = vcmask 130048
    %v79 = vsel %vm77, %v59, 0
    %v82 = vsel %vm77, %v60, 0
    %v85 = vsel %vm77, %v61, 0
    %v88 = vsel %vm77, %v62, 0
    %v91 = vsel %vm77, %v63, 0
    %v94 = vsel %vm77, %v64, 0
    %v97 = vsel %vm77, %v65, 0
    %v100 = vsel %vm77, %v66, 0
    %v103 = vsel %vm77, %v67, 0
    %v106 = vsel %vm77, %v68, 0
    %v109 = vsel %vm77, %v69, 0
    %v112 = vsel %vm77, %v70, 0
    %v115 = vsel %vm77, %v71, 0
    %v118 = vsel %vm77, %v72, 0
    %v121 = vsel %vm77, %v73, 0
    %v124 = vsel %vm77, %v74, 0
    %126 = vmatprep.subr.mxu0 0.0
    %127 = vmatpush1.msra.mxu0 %v75
    %128 = vmatprep.subr.mxu0 0.0
    %129 = vmatpush1.msra.mxu0 %v76
    %130 = vmatprep.subr.mxu0 0.0
    %131 = vmatpush1.msra.mxu0 0.0
    %132 = vmatprep.subr.mxu0 0.0
    %133 = vmatpush1.msra.mxu0 0.0
    %134 = vmatprep.subr.mxu0 0.0
    %135 = vmatpush1.msra.mxu0 0.0
    %136 = vmatprep.subr.mxu0 0.0
    %137 = vmatpush1.msra.mxu0 0.0
    %138 = vmatprep.subr.mxu0 0.0
    %139 = vmatpush1.msra.mxu0 0.0
    %140 = vmatprep.subr.mxu0 0.0
    %141 = vmatpush1.msra.mxu0 0.0
    %142 = vmatprep.subr.mxu0 0.0
    %143 = vmatpush1.msra.mxu0 0.0
    %144 = vmatprep.subr.mxu0 0.0
    %145 = vmatpush1.msra.mxu0 0.0
    %146 = vmatprep.subr.mxu0 0.0
    %147 = vmatpush1.msra.mxu0 0.0
    %148 = vmatprep.subr.mxu0 0.0
    %149 = vmatpush1.msra.mxu0 0.0
    %150 = vmatprep.subr.mxu0 0.0
    %151 = vmatpush1.msra.mxu0 0.0
    %152 = vmatprep.subr.mxu0 0.0
    %153 = vmatpush1.msra.mxu0 0.0
    %154 = vmatprep.subr.mxu0 0.0
    %155 = vmatpush1.msra.mxu0 0.0
    %156 = vmatprep.subr.mxu0 0.0
    %157 = vmatpush1.msra.mxu0 0.0
    %158 = vmatprep.subr.mxu0 0.0
    %159 = vmatpush1.msra.mxu0 0.0
    %160 = vmatprep.subr.mxu0 0.0
    %161 = vmatpush1.msra.mxu0 0.0
    %162 = vmatprep.subr.mxu0 0.0
    %163 = vmatpush1.msra.mxu0 0.0
    %164 = vmatprep.subr.mxu0 0.0
    %165 = vmatpush1.msra.mxu0 0.0
    %166 = vmatprep.subr.mxu0 0.0
    %167 = vmatpush1.msra.mxu0 0.0
    %168 = vmatprep.subr.mxu0 0.0
    %169 = vmatpush1.msra.mxu0 0.0
    %170 = vmatprep.subr.mxu0 0.0
    %171 = vmatpush1.msra.mxu0 0.0
    %172 = vmatprep.subr.mxu0 0.0
    %173 = vmatpush1.msra.mxu0 0.0
    %174 = vmatprep.subr.mxu0 0.0
    %175 = vmatpush1.msra.mxu0 0.0
    %176 = vmatprep.subr.mxu0 0.0
    %177 = vmatpush1.msra.mxu0 0.0
    %178 = vmatprep.subr.mxu0 0.0
    %179 = vmatpush1.msra.mxu0 0.0
    %180 = vmatprep.subr.mxu0 0.0
    %181 = vmatpush1.msra.mxu0 0.0
    %182 = vmatprep.subr.mxu0 0.0
    %183 = vmatpush1.msra.mxu0 0.0
    %184 = vmatprep.subr.mxu0 0.0
    %185 = vmatpush1.msra.mxu0 0.0
    %186 = vmatprep.subr.mxu0 0.0
    %187 = vmatpush1.msra.mxu0 0.0
    %188 = vmatprep.subr.mxu0 0.0
    %189 = vmatpush1.msra.mxu0 0.0
    %190 = vmatprep.mubr.f32.mxu0 0.0
    %191 = vmatmul.mubr.f32.gmra.mrb[0].mxu0 %v79
    %v192 = vpop.f32.mrb[0].mxu0
    %v193 = vadd.f32 0.0, %v192
    %v194 = vpop.f32.mrb[0].mxu0
    %195 = vmatprep.mubr.f32.mxu0 0.0
    %196 = vmatmul.mubr.f32.gmra.mrb[0].mxu0 %v82
    %v197 = vpop.f32.mrb[0].mxu0
    %v198 = vadd.f32 0.0, %v197
    %v199 = vpop.f32.mrb[0].mxu0
    %200 = vmatprep.mubr.f32.mxu0 0.0
    %201 = vmatmul.mubr.f32.gmra.mrb[0].mxu0 %v85
    %v202 = vpop.f32.mrb[0].mxu0
    %v203 = vadd.f32 0.0, %v202
    %v204 = vpop.f32.mrb[0].mxu0
    %205 = vmatprep.mubr.f32.mxu0 0.0
    %206 = vmatmul.mubr.f32.gmra.mrb[0].mxu0 %v88
    %v207 = vpop.f32.mrb[0].mxu0
    %v208 = vadd.f32 0.0, %v207
    %v209 = vpop.f32.mrb[0].mxu0
    %210 = vmatprep.mubr.f32.mxu0 0.0
    %211 = vmatmul.mubr.f32.gmra.mrb[0].mxu0 %v91
    %v212 = vpop.f32.mrb[0].mxu0
    %v213 = vadd.f32 0.0, %v212
    %v214 = vpop.f32.mrb[0].mxu0
    %215 = vmatprep.mubr.f32.mxu0 0.0
    %216 = vmatmul.mubr.f32.gmra.mrb[0].mxu0 %v94
    %v217 = vpop.f32.mrb[0].mxu0
    %v218 = vadd.f32 0.0, %v217
    %v219 = vpop.f32.mrb[0].mxu0
    %220 = vmatprep.mubr.f32.mxu0 0.0
    %221 = vmatmul.mubr.f32.gmra.mrb[0].mxu0 %v97
    %v222 = vpop.f32.mrb[0].mxu0
    %v223 = vadd.f32 0.0, %v222
    %v224 = vpop.f32.mrb[0].mxu0
    %225 = vmatprep.mubr.f32.mxu0 0.0
    %226 = vmatmul.mubr.f32.gmra.mrb[0].mxu0 %v100
    %v227 = vpop.f32.mrb[0].mxu0
    %v228 = vadd.f32 0.0, %v227
    %v229 = vpop.f32.mrb[0].mxu0
    %230 = vmatprep.mubr.f32.mxu0 0.0
    %231 = vmatmul.mubr.f32.gmra.mrb[0].mxu0 %v103
    %v232 = vpop.f32.mrb[0].mxu0
    %v233 = vadd.f32 0.0, %v232
    %v234 = vpop.f32.mrb[0].mxu0
    %235 = vmatprep.mubr.f32.mxu0 0.0
    %236 = vmatmul.mubr.f32.gmra.mrb[0].mxu0 %v106
    %v237 = vpop.f32.mrb[0].mxu0
    %v238 = vadd.f32 0.0, %v237
    %v239 = vpop.f32.mrb[0].mxu0
    %240 = vmatprep.mubr.f32.mxu0 0.0
    %241 = vmatmul.mubr.f32.gmra.mrb[0].mxu0 %v109
    %v242 = vpop.f32.mrb[0].mxu0
    %v243 = vadd.f32 0.0, %v242
    %v244 = vpop.f32.mrb[0].mxu0
    %245 = vmatprep.mubr.f32.mxu0 0.0
    %246 = vmatmul.mubr.f32.gmra.mrb[0].mxu0 %v112
    %v247 = vpop.f32.mrb[0].mxu0
    %v248 = vadd.f32 0.0, %v247
    %v249 = vpop.f32.mrb[0].mxu0
    %250 = vmatprep.mubr.f32.mxu0 0.0
    %251 = vmatmul.mubr.f32.gmra.mrb[0].mxu0 %v115
    %v252 = vpop.f32.mrb[0].mxu0
    %v253 = vadd.f32 0.0, %v252
    %v254 = vpop.f32.mrb[0].mxu0
    %255 = vmatprep.mubr.f32.mxu0 0.0
    %256 = vmatmul.mubr.f32.gmra.mrb[0].mxu0 %v118
    %v257 = vpop.f32.mrb[0].mxu0
    %v258 = vadd.f32 0.0, %v257
    %v259 = vpop.f32.mrb[0].mxu0
    %260 = vmatprep.mubr.f32.mxu0 0.0
    %261 = vmatmul.mubr.f32.gmra.mrb[0].mxu0 %v121
    %v262 = vpop.f32.mrb[0].mxu0
    %v263 = vadd.f32 0.0, %v262
    %v264 = vpop.f32.mrb[0].mxu0
    %265 = vmatprep.mubr.f32.mxu0 0.0
    %266 = vmatmul.mubr.f32.gmra.mrb[0].mxu0 %v124
    %v267 = vpop.f32.mrb[0].mxu0
    %v268 = vadd.f32 0.0, %v267
    %v269 = vpop.f32.mrb[0].mxu0
    %270 = vdwg.mxu0
    %s271 = scalar_lea.vmem [#allocation7], 8
    %v272 = vld [vmem:[%s271] sm:$0xff]
    %s273 = scalar_lea.vmem %s3, 1
    %v274 = vld [vmem:[%s273] sm:$0x1]
    %276 = vrot.lane.b32.xlu0 %v193, 104
    %v277 = vpop.permute.xlu0 %276
    %278 = vrot.lane.b32.xlu0 %v193, 96
    %v279 = vpop.permute.xlu0 %278
    %vm280 = vcmask 31744
    %v281 = vsel %vm280, %v277, 0
    %v283 = vsel %vm280, %v279, 0
    %285 = vmatprep.subr.mxu0 0.0
    %286 = vmatpush1.xpose.msra.mxu0 %v283
    %287 = vmatprep.subr.mxu0 0.0
    %288 = vmatpush1.xpose.msra.mxu0 0.0
    %289 = vmatprep.subr.mxu0 0.0
    %290 = vmatpush1.xpose.msra.mxu0 0.0
    %291 = vmatprep.subr.mxu0 0.0
    %292 = vmatpush1.xpose.msra.mxu0 0.0
    %293 = vmatprep.subr.mxu0 0.0
    %294 = vmatpush1.xpose.msra.mxu0 0.0
    %295 = vmatprep.subr.mxu0 0.0
    %296 = vmatpush1.xpose.msra.mxu0 0.0
    %297 = vmatprep.subr.mxu0 0.0
    %298 = vmatpush1.xpose.msra.mxu0 0.0
    %299 = vmatprep.subr.mxu0 0.0
    %300 = vmatpush1.xpose.msra.mxu0 0.0
    %301 = vmatprep.subr.mxu0 0.0
    %302 = vmatpush1.xpose.msra.mxu0 0.0
    %303 = vmatprep.subr.mxu0 0.0
    %304 = vmatpush1.xpose.msra.mxu0 0.0
    %305 = vmatprep.subr.mxu0 0.0
    %306 = vmatpush1.xpose.msra.mxu0 0.0
    %307 = vmatprep.subr.mxu0 0.0
    %308 = vmatpush1.xpose.msra.mxu0 0.0
    %309 = vmatprep.subr.mxu0 0.0
    %310 = vmatpush1.xpose.msra.mxu0 0.0
    %311 = vmatprep.subr.mxu0 0.0
    %312 = vmatpush1.xpose.msra.mxu0 0.0
    %313 = vmatprep.subr.mxu0 0.0
    %314 = vmatpush1.xpose.msra.mxu0 0.0
    %315 = vmatprep.subr.mxu0 0.0
    %316 = vmatpush1.xpose.msra.mxu0 0.0
    %317 = vmatprep.subr.mxu0 0.0
    %318 = vmatpush1.xpose.msra.mxu0 0.0
    %319 = vmatprep.subr.mxu0 0.0
    %320 = vmatpush1.xpose.msra.mxu0 0.0
    %321 = vmatprep.subr.mxu0 0.0
    %322 = vmatpush1.xpose.msra.mxu0 0.0
    %323 = vmatprep.subr.mxu0 0.0
    %324 = vmatpush1.xpose.msra.mxu0 0.0
    %325 = vmatprep.subr.mxu0 0.0
    %326 = vmatpush1.xpose.msra.mxu0 0.0
    %327 = vmatprep.subr.mxu0 0.0
    %328 = vmatpush1.xpose.msra.mxu0 0.0
    %329 = vmatprep.subr.mxu0 0.0
    %330 = vmatpush1.xpose.msra.mxu0 0.0
    %331 = vmatprep.subr.mxu0 0.0
    %332 = vmatpush1.xpose.msra.mxu0 0.0
    %333 = vmatprep.subr.mxu0 0.0
    %334 = vmatpush1.xpose.msra.mxu0 0.0
    %335 = vmatprep.subr.mxu0 0.0
    %336 = vmatpush1.xpose.msra.mxu0 0.0
    %337 = vmatprep.subr.mxu0 0.0
    %338 = vmatpush1.xpose.msra.mxu0 0.0
    %339 = vmatprep.subr.mxu0 0.0
    %340 = vmatpush1.xpose.msra.mxu0 0.0
    %341 = vmatprep.subr.mxu0 0.0
    %342 = vmatpush1.xpose.msra.mxu0 0.0
    %343 = vmatprep.subr.mxu0 0.0
    %344 = vmatpush1.xpose.msra.mxu0 0.0
    %345 = vmatprep.subr.mxu0 0.0
    %346 = vmatpush1.xpose.msra.mxu0 0.0
    %347 = vmatprep.subr.mxu0 0.0
    %348 = vmatpush1.xpose.msra.mxu0 0.0
    %349 = vmatprep.mubr.f32.mxu0 0.0
    %350 = vmatmul.mubr.f32.gmra.mrb[0].mxu0 %v281
    %v351 = vpop.f32.mrb[0].mxu0
    %v352 = vadd.f32 0.0, %v351
    %v353 = vpop.f32.mrb[0].mxu0
    %354 = vdwg.mxu0
    %356 = vrot.lane.b32.xlu0 %v198, 104
    %v357 = vpop.permute.xlu0 %356
    %358 = vrot.lane.b32.xlu0 %v198, 96
    %v359 = vpop.permute.xlu0 %358
    %v360 = vsel %vm280, %v357, 0
    %v362 = vsel %vm280, %v359, 0
    %364 = vmatprep.subr.mxu0 0.0
    %365 = vmatpush1.xpose.msra.mxu0 %v362
    %366 = vmatprep.subr.mxu0 0.0
    %367 = vmatpush1.xpose.msra.mxu0 0.0
    %368 = vmatprep.subr.mxu0 0.0
    %369 = vmatpush1.xpose.msra.mxu0 0.0
    %370 = vmatprep.subr.mxu0 0.0
    %371 = vmatpush1.xpose.msra.mxu0 0.0
    %372 = vmatprep.subr.mxu0 0.0
    %373 = vmatpush1.xpose.msra.mxu0 0.0
    %374 = vmatprep.subr.mxu0 0.0
    %375 = vmatpush1.xpose.msra.mxu0 0.0
    %376 = vmatprep.subr.mxu0 0.0
    %377 = vmatpush1.xpose.msra.mxu0 0.0
    %378 = vmatprep.subr.mxu0 0.0
    %379 = vmatpush1.xpose.msra.mxu0 0.0
    %380 = vmatprep.subr.mxu0 0.0
    %381 = vmatpush1.xpose.msra.mxu0 0.0
    %382 = vmatprep.subr.mxu0 0.0
    %383 = vmatpush1.xpose.msra.mxu0 0.0
    %384 = vmatprep.subr.mxu0 0.0
    %385 = vmatpush1.xpose.msra.mxu0 0.0
    %386 = vmatprep.subr.mxu0 0.0
    %387 = vmatpush1.xpose.msra.mxu0 0.0
    %388 = vmatprep.subr.mxu0 0.0
    %389 = vmatpush1.xpose.msra.mxu0 0.0
    %390 = vmatprep.subr.mxu0 0.0
    %391 = vmatpush1.xpose.msra.mxu0 0.0
    %392 = vmatprep.subr.mxu0 0.0
    %393 = vmatpush1.xpose.msra.mxu0 0.0
    %394 = vmatprep.subr.mxu0 0.0
    %395 = vmatpush1.xpose.msra.mxu0 0.0
    %396 = vmatprep.subr.mxu0 0.0
    %397 = vmatpush1.xpose.msra.mxu0 0.0
    %398 = vmatprep.subr.mxu0 0.0
    %399 = vmatpush1.xpose.msra.mxu0 0.0
    %400 = vmatprep.subr.mxu0 0.0
    %401 = vmatpush1.xpose.msra.mxu0 0.0
    %402 = vmatprep.subr.mxu0 0.0
    %403 = vmatpush1.xpose.msra.mxu0 0.0
    %404 = vmatprep.subr.mxu0 0.0
    %405 = vmatpush1.xpose.msra.mxu0 0.0
    %406 = vmatprep.subr.mxu0 0.0
    %407 = vmatpush1.xpose.msra.mxu0 0.0
    %408 = vmatprep.subr.mxu0 0.0
    %409 = vmatpush1.xpose.msra.mxu0 0.0
    %410 = vmatprep.subr.mxu0 0.0
    %411 = vmatpush1.xpose.msra.mxu0 0.0
    %412 = vmatprep.subr.mxu0 0.0
    %413 = vmatpush1.xpose.msra.mxu0 0.0
    %414 = vmatprep.subr.mxu0 0.0
    %415 = vmatpush1.xpose.msra.mxu0 0.0
    %416 = vmatprep.subr.mxu0 0.0
    %417 = vmatpush1.xpose.msra.mxu0 0.0
    %418 = vmatprep.subr.mxu0 0.0
    %419 = vmatpush1.xpose.msra.mxu0 0.0
    %420 = vmatprep.subr.mxu0 0.0
    %421 = vmatpush1.xpose.msra.mxu0 0.0
    %422 = vmatprep.subr.mxu0 0.0
    %423 = vmatpush1.xpose.msra.mxu0 0.0
    %424 = vmatprep.subr.mxu0 0.0
    %425 = vmatpush1.xpose.msra.mxu0 0.0
    %426 = vmatprep.subr.mxu0 0.0
    %427 = vmatpush1.xpose.msra.mxu0 0.0
    %428 = vmatprep.mubr.f32.mxu0 0.0
    %429 = vmatmul.mubr.f32.gmra.mrb[0].mxu0 %v360
    %v430 = vpop.f32.mrb[0].mxu0
    %v431 = vadd.f32 0.0, %v430
    %v432 = vpop.f32.mrb[0].mxu0
    %433 = vdwg.mxu0
    %435 = vrot.lane.b32.xlu0 %v203, 104
    %v436 = vpop.permute.xlu0 %435
    %437 = vrot.lane.b32.xlu0 %v203, 96
    %v438 = vpop.permute.xlu0 %437
    %v439 = vsel %vm280, %v436, 0
    %v441 = vsel %vm280, %v438, 0
    %443 = vmatprep.subr.mxu0 0.0
    %444 = vmatpush1.xpose.msra.mxu0 %v441
    %445 = vmatprep.subr.mxu0 0.0
    %446 = vmatpush1.xpose.msra.mxu0 0.0
    %447 = vmatprep.subr.mxu0 0.0
    %448 = vmatpush1.xpose.msra.mxu0 0.0
    %449 = vmatprep.subr.mxu0 0.0
    %450 = vmatpush1.xpose.msra.mxu0 0.0
    %451 = vmatprep.subr.mxu0 0.0
    %452 = vmatpush1.xpose.msra.mxu0 0.0
    %453 = vmatprep.subr.mxu0 0.0
    %454 = vmatpush1.xpose.msra.mxu0 0.0
    %455 = vmatprep.subr.mxu0 0.0
    %456 = vmatpush1.xpose.msra.mxu0 0.0
    %457 = vmatprep.subr.mxu0 0.0
    %458 = vmatpush1.xpose.msra.mxu0 0.0
    %459 = vmatprep.subr.mxu0 0.0
    %460 = vmatpush1.xpose.msra.mxu0 0.0
    %461 = vmatprep.subr.mxu0 0.0
    %462 = vmatpush1.xpose.msra.mxu0 0.0
    %463 = vmatprep.subr.mxu0 0.0
    %464 = vmatpush1.xpose.msra.mxu0 0.0
    %465 = vmatprep.subr.mxu0 0.0
    %466 = vmatpush1.xpose.msra.mxu0 0.0
    %467 = vmatprep.subr.mxu0 0.0
    %468 = vmatpush1.xpose.msra.mxu0 0.0
    %469 = vmatprep.subr.mxu0 0.0
    %470 = vmatpush1.xpose.msra.mxu0 0.0
    %471 = vmatprep.subr.mxu0 0.0
    %472 = vmatpush1.xpose.msra.mxu0 0.0
    %473 = vmatprep.subr.mxu0 0.0
    %474 = vmatpush1.xpose.msra.mxu0 0.0
    %475 = vmatprep.subr.mxu0 0.0
    %476 = vmatpush1.xpose.msra.mxu0 0.0
    %477 = vmatprep.subr.mxu0 0.0
    %478 = vmatpush1.xpose.msra.mxu0 0.0
    %479 = vmatprep.subr.mxu0 0.0
    %480 = vmatpush1.xpose.msra.mxu0 0.0
    %481 = vmatprep.subr.mxu0 0.0
    %482 = vmatpush1.xpose.msra.mxu0 0.0
    %483 = vmatprep.subr.mxu0 0.0
    %484 = vmatpush1.xpose.msra.mxu0 0.0
    %485 = vmatprep.subr.mxu0 0.0
    %486 = vmatpush1.xpose.msra.mxu0 0.0
    %487 = vmatprep.subr.mxu0 0.0
    %488 = vmatpush1.xpose.msra.mxu0 0.0
    %489 = vmatprep.subr.mxu0 0.0
    %490 = vmatpush1.xpose.msra.mxu0 0.0
    %491 = vmatprep.subr.mxu0 0.0
    %492 = vmatpush1.xpose.msra.mxu0 0.0
    %493 = vmatprep.subr.mxu0 0.0
    %494 = vmatpush1.xpose.msra.mxu0 0.0
    %495 = vmatprep.subr.mxu0 0.0
    %496 = vmatpush1.xpose.msra.mxu0 0.0
    %497 = vmatprep.subr.mxu0 0.0
    %498 = vmatpush1.xpose.msra.mxu0 0.0
    %499 = vmatprep.subr.mxu0 0.0
    %500 = vmatpush1.xpose.msra.mxu0 0.0
    %501 = vmatprep.subr.mxu0 0.0
    %502 = vmatpush1.xpose.msra.mxu0 0.0
    %503 = vmatprep.subr.mxu0 0.0
    %504 = vmatpush1.xpose.msra.mxu0 0.0
    %505 = vmatprep.subr.mxu0 0.0
    %506 = vmatpush1.xpose.msra.mxu0 0.0
    %507 = vmatprep.mubr.f32.mxu0 0.0
    %508 = vmatmul.mubr.f32.gmra.mrb[0].mxu0 %v439
    %v509 = vpop.f32.mrb[0].mxu0
    %v510 = vadd.f32 0.0, %v509
    %v511 = vpop.f32.mrb[0].mxu0
    %512 = vdwg.mxu0
    %514 = vrot.lane.b32.xlu0 %v208, 104
    %v515 = vpop.permute.xlu0 %514
    %516 = vrot.lane.b32.xlu0 %v208, 96
    %v517 = vpop.permute.xlu0 %516
    %v518 = vsel %vm280, %v515, 0
    %v520 = vsel %vm280, %v517, 0
    %522 = vmatprep.subr.mxu0 0.0
    %523 = vmatpush1.xpose.msra.mxu0 %v520
    %524 = vmatprep.subr.mxu0 0.0
    %525 = vmatpush1.xpose.msra.mxu0 0.0
    %526 = vmatprep.subr.mxu0 0.0
    %527 = vmatpush1.xpose.msra.mxu0 0.0
    %528 = vmatprep.subr.mxu0 0.0
    %529 = vmatpush1.xpose.msra.mxu0 0.0
    %530 = vmatprep.subr.mxu0 0.0
    %531 = vmatpush1.xpose.msra.mxu0 0.0
    %532 = vmatprep.subr.mxu0 0.0
    %533 = vmatpush1.xpose.msra.mxu0 0.0
    %534 = vmatprep.subr.mxu0 0.0
    %535 = vmatpush1.xpose.msra.mxu0 0.0
    %536 = vmatprep.subr.mxu0 0.0
    %537 = vmatpush1.xpose.msra.mxu0 0.0
    %538 = vmatprep.subr.mxu0 0.0
    %539 = vmatpush1.xpose.msra.mxu0 0.0
    %540 = vmatprep.subr.mxu0 0.0
    %541 = vmatpush1.xpose.msra.mxu0 0.0
    %542 = vmatprep.subr.mxu0 0.0
    %543 = vmatpush1.xpose.msra.mxu0 0.0
    %544 = vmatprep.subr.mxu0 0.0
    %545 = vmatpush1.xpose.msra.mxu0 0.0
    %546 = vmatprep.subr.mxu0 0.0
    %547 = vmatpush1.xpose.msra.mxu0 0.0
    %548 = vmatprep.subr.mxu0 0.0
    %549 = vmatpush1.xpose.msra.mxu0 0.0
    %550 = vmatprep.subr.mxu0 0.0
    %551 = vmatpush1.xpose.msra.mxu0 0.0
    %552 = vmatprep.subr.mxu0 0.0
    %553 = vmatpush1.xpose.msra.mxu0 0.0
    %554 = vmatprep.subr.mxu0 0.0
    %555 = vmatpush1.xpose.msra.mxu0 0.0
    %556 = vmatprep.subr.mxu0 0.0
    %557 = vmatpush1.xpose.msra.mxu0 0.0
    %558 = vmatprep.subr.mxu0 0.0
    %559 = vmatpush1.xpose.msra.mxu0 0.0
    %560 = vmatprep.subr.mxu0 0.0
    %561 = vmatpush1.xpose.msra.mxu0 0.0
    %562 = vmatprep.subr.mxu0 0.0
    %563 = vmatpush1.xpose.msra.mxu0 0.0
    %564 = vmatprep.subr.mxu0 0.0
    %565 = vmatpush1.xpose.msra.mxu0 0.0
    %566 = vmatprep.subr.mxu0 0.0
    %567 = vmatpush1.xpose.msra.mxu0 0.0
    %568 = vmatprep.subr.mxu0 0.0
    %569 = vmatpush1.xpose.msra.mxu0 0.0
    %570 = vmatprep.subr.mxu0 0.0
    %571 = vmatpush1.xpose.msra.mxu0 0.0
    %572 = vmatprep.subr.mxu0 0.0
    %573 = vmatpush1.xpose.msra.mxu0 0.0
    %574 = vmatprep.subr.mxu0 0.0
    %575 = vmatpush1.xpose.msra.mxu0 0.0
    %576 = vmatprep.subr.mxu0 0.0
    %577 = vmatpush1.xpose.msra.mxu0 0.0
    %578 = vmatprep.subr.mxu0 0.0
    %579 = vmatpush1.xpose.msra.mxu0 0.0
    %580 = vmatprep.subr.mxu0 0.0
    %581 = vmatpush1.xpose.msra.mxu0 0.0
    %582 = vmatprep.subr.mxu0 0.0
    %583 = vmatpush1.xpose.msra.mxu0 0.0
    %584 = vmatprep.subr.mxu0 0.0
    %585 = vmatpush1.xpose.msra.mxu0 0.0
    %586 = vmatprep.mubr.f32.mxu0 0.0
    %587 = vmatmul.mubr.f32.gmra.mrb[0].mxu0 %v518
    %v588 = vpop.f32.mrb[0].mxu0
    %v589 = vadd.f32 0.0, %v588
    %v590 = vpop.f32.mrb[0].mxu0
    %591 = vdwg.mxu0
    %593 = vrot.lane.b32.xlu0 %v213, 104
    %v594 = vpop.permute.xlu0 %593
    %595 = vrot.lane.b32.xlu0 %v213, 96
    %v596 = vpop.permute.xlu0 %595
    %v597 = vsel %vm280, %v594, 0
    %v599 = vsel %vm280, %v596, 0
    %601 = vmatprep.subr.mxu0 0.0
    %602 = vmatpush1.xpose.msra.mxu0 %v599
    %603 = vmatprep.subr.mxu0 0.0
    %604 = vmatpush1.xpose.msra.mxu0 0.0
    %605 = vmatprep.subr.mxu0 0.0
    %606 = vmatpush1.xpose.msra.mxu0 0.0
    %607 = vmatprep.subr.mxu0 0.0
    %608 = vmatpush1.xpose.msra.mxu0 0.0
    %609 = vmatprep.subr.mxu0 0.0
    %610 = vmatpush1.xpose.msra.mxu0 0.0
    %611 = vmatprep.subr.mxu0 0.0
    %612 = vmatpush1.xpose.msra.mxu0 0.0
    %613 = vmatprep.subr.mxu0 0.0
    %614 = vmatpush1.xpose.msra.mxu0 0.0
    %615 = vmatprep.subr.mxu0 0.0
    %616 = vmatpush1.xpose.msra.mxu0 0.0
    %617 = vmatprep.subr.mxu0 0.0
    %618 = vmatpush1.xpose.msra.mxu0 0.0
    %619 = vmatprep.subr.mxu0 0.0
    %620 = vmatpush1.xpose.msra.mxu0 0.0
    %621 = vmatprep.subr.mxu0 0.0
    %622 = vmatpush1.xpose.msra.mxu0 0.0
    %623 = vmatprep.subr.mxu0 0.0
    %624 = vmatpush1.xpose.msra.mxu0 0.0
    %625 = vmatprep.subr.mxu0 0.0
    %626 = vmatpush1.xpose.msra.mxu0 0.0
    %627 = vmatprep.subr.mxu0 0.0
    %628 = vmatpush1.xpose.msra.mxu0 0.0
    %629 = vmatprep.subr.mxu0 0.0
    %630 = vmatpush1.xpose.msra.mxu0 0.0
    %631 = vmatprep.subr.mxu0 0.0
    %632 = vmatpush1.xpose.msra.mxu0 0.0
    %633 = vmatprep.subr.mxu0 0.0
    %634 = vmatpush1.xpose.msra.mxu0 0.0
    %635 = vmatprep.subr.mxu0 0.0
    %636 = vmatpush1.xpose.msra.mxu0 0.0
    %637 = vmatprep.subr.mxu0 0.0
    %638 = vmatpush1.xpose.msra.mxu0 0.0
    %639 = vmatprep.subr.mxu0 0.0
    %640 = vmatpush1.xpose.msra.mxu0 0.0
    %641 = vmatprep.subr.mxu0 0.0
    %642 = vmatpush1.xpose.msra.mxu0 0.0
    %643 = vmatprep.subr.mxu0 0.0
    %644 = vmatpush1.xpose.msra.mxu0 0.0
    %645 = vmatprep.subr.mxu0 0.0
    %646 = vmatpush1.xpose.msra.mxu0 0.0
    %647 = vmatprep.subr.mxu0 0.0
    %648 = vmatpush1.xpose.msra.mxu0 0.0
    %649 = vmatprep.subr.mxu0 0.0
    %650 = vmatpush1.xpose.msra.mxu0 0.0
    %651 = vmatprep.subr.mxu0 0.0
    %652 = vmatpush1.xpose.msra.mxu0 0.0
    %653 = vmatprep.subr.mxu0 0.0
    %654 = vmatpush1.xpose.msra.mxu0 0.0
    %655 = vmatprep.subr.mxu0 0.0
    %656 = vmatpush1.xpose.msra.mxu0 0.0
    %657 = vmatprep.subr.mxu0 0.0
    %658 = vmatpush1.xpose.msra.mxu0 0.0
    %659 = vmatprep.subr.mxu0 0.0
    %660 = vmatpush1.xpose.msra.mxu0 0.0
    %661 = vmatprep.subr.mxu0 0.0
    %662 = vmatpush1.xpose.msra.mxu0 0.0
    %663 = vmatprep.subr.mxu0 0.0
    %664 = vmatpush1.xpose.msra.mxu0 0.0
    %665 = vmatprep.mubr.f32.mxu0 0.0
    %666 = vmatmul.mubr.f32.gmra.mrb[0].mxu0 %v597
    %v667 = vpop.f32.mrb[0].mxu0
    %v668 = vadd.f32 0.0, %v667
    %v669 = vpop.f32.mrb[0].mxu0
    %670 = vdwg.mxu0
    %672 = vrot.lane.b32.xlu0 %v218, 104
    %v673 = vpop.permute.xlu0 %672
    %674 = vrot.lane.b32.xlu0 %v218, 96
    %v675 = vpop.permute.xlu0 %674
    %v676 = vsel %vm280, %v673, 0
    %v678 = vsel %vm280, %v675, 0
    %680 = vmatprep.subr.mxu0 0.0
    %681 = vmatpush1.xpose.msra.mxu0 %v678
    %682 = vmatprep.subr.mxu0 0.0
    %683 = vmatpush1.xpose.msra.mxu0 0.0
    %684 = vmatprep.subr.mxu0 0.0
    %685 = vmatpush1.xpose.msra.mxu0 0.0
    %686 = vmatprep.subr.mxu0 0.0
    %687 = vmatpush1.xpose.msra.mxu0 0.0
    %688 = vmatprep.subr.mxu0 0.0
    %689 = vmatpush1.xpose.msra.mxu0 0.0
    %690 = vmatprep.subr.mxu0 0.0
    %691 = vmatpush1.xpose.msra.mxu0 0.0
    %692 = vmatprep.subr.mxu0 0.0
    %693 = vmatpush1.xpose.msra.mxu0 0.0
    %694 = vmatprep.subr.mxu0 0.0
    %695 = vmatpush1.xpose.msra.mxu0 0.0
    %696 = vmatprep.subr.mxu0 0.0
    %697 = vmatpush1.xpose.msra.mxu0 0.0
    %698 = vmatprep.subr.mxu0 0.0
    %699 = vmatpush1.xpose.msra.mxu0 0.0
    %700 = vmatprep.subr.mxu0 0.0
    %701 = vmatpush1.xpose.msra.mxu0 0.0
    %702 = vmatprep.subr.mxu0 0.0
    %703 = vmatpush1.xpose.msra.mxu0 0.0
    %704 = vmatprep.subr.mxu0 0.0
    %705 = vmatpush1.xpose.msra.mxu0 0.0
    %706 = vmatprep.subr.mxu0 0.0
    %707 = vmatpush1.xpose.msra.mxu0 0.0
    %708 = vmatprep.subr.mxu0 0.0
    %709 = vmatpush1.xpose.msra.mxu0 0.0
    %710 = vmatprep.subr.mxu0 0.0
    %711 = vmatpush1.xpose.msra.mxu0 0.0
    %712 = vmatprep.subr.mxu0 0.0
    %713 = vmatpush1.xpose.msra.mxu0 0.0
    %714 = vmatprep.subr.mxu0 0.0
    %715 = vmatpush1.xpose.msra.mxu0 0.0
    %716 = vmatprep.subr.mxu0 0.0
    %717 = vmatpush1.xpose.msra.mxu0 0.0
    %718 = vmatprep.subr.mxu0 0.0
    %719 = vmatpush1.xpose.msra.mxu0 0.0
    %720 = vmatprep.subr.mxu0 0.0
    %721 = vmatpush1.xpose.msra.mxu0 0.0
    %722 = vmatprep.subr.mxu0 0.0
    %723 = vmatpush1.xpose.msra.mxu0 0.0
    %724 = vmatprep.subr.mxu0 0.0
    %725 = vmatpush1.xpose.msra.mxu0 0.0
    %726 = vmatprep.subr.mxu0 0.0
    %727 = vmatpush1.xpose.msra.mxu0 0.0
    %728 = vmatprep.subr.mxu0 0.0
    %729 = vmatpush1.xpose.msra.mxu0 0.0
    %730 = vmatprep.subr.mxu0 0.0
    %731 = vmatpush1.xpose.msra.mxu0 0.0
    %732 = vmatprep.subr.mxu0 0.0
    %733 = vmatpush1.xpose.msra.mxu0 0.0
    %734 = vmatprep.subr.mxu0 0.0
    %735 = vmatpush1.xpose.msra.mxu0 0.0
    %736 = vmatprep.subr.mxu0 0.0
    %737 = vmatpush1.xpose.msra.mxu0 0.0
    %738 = vmatprep.subr.mxu0 0.0
    %739 = vmatpush1.xpose.msra.mxu0 0.0
    %740 = vmatprep.subr.mxu0 0.0
    %741 = vmatpush1.xpose.msra.mxu0 0.0
    %742 = vmatprep.subr.mxu0 0.0
    %743 = vmatpush1.xpose.msra.mxu0 0.0
    %744 = vmatprep.mubr.f32.mxu0 0.0
    %745 = vmatmul.mubr.f32.gmra.mrb[0].mxu0 %v676
    %v746 = vpop.f32.mrb[0].mxu0
    %v747 = vadd.f32 0.0, %v746
    %v748 = vpop.f32.mrb[0].mxu0
    %749 = vdwg.mxu0
    %751 = vrot.lane.b32.xlu0 %v223, 104
    %v752 = vpop.permute.xlu0 %751
    %753 = vrot.lane.b32.xlu0 %v223, 96
    %v754 = vpop.permute.xlu0 %753
    %v755 = vsel %vm280, %v752, 0
    %v757 = vsel %vm280, %v754, 0
    %759 = vmatprep.subr.mxu0 0.0
    %760 = vmatpush1.xpose.msra.mxu0 %v757
    %761 = vmatprep.subr.mxu0 0.0
    %762 = vmatpush1.xpose.msra.mxu0 0.0
    %763 = vmatprep.subr.mxu0 0.0
    %764 = vmatpush1.xpose.msra.mxu0 0.0
    %765 = vmatprep.subr.mxu0 0.0
    %766 = vmatpush1.xpose.msra.mxu0 0.0
    %767 = vmatprep.subr.mxu0 0.0
    %768 = vmatpush1.xpose.msra.mxu0 0.0
    %769 = vmatprep.subr.mxu0 0.0
    %770 = vmatpush1.xpose.msra.mxu0 0.0
    %771 = vmatprep.subr.mxu0 0.0
    %772 = vmatpush1.xpose.msra.mxu0 0.0
    %773 = vmatprep.subr.mxu0 0.0
    %774 = vmatpush1.xpose.msra.mxu0 0.0
    %775 = vmatprep.subr.mxu0 0.0
    %776 = vmatpush1.xpose.msra.mxu0 0.0
    %777 = vmatprep.subr.mxu0 0.0
    %778 = vmatpush1.xpose.msra.mxu0 0.0
    %779 = vmatprep.subr.mxu0 0.0
    %780 = vmatpush1.xpose.msra.mxu0 0.0
    %781 = vmatprep.subr.mxu0 0.0
    %782 = vmatpush1.xpose.msra.mxu0 0.0
    %783 = vmatprep.subr.mxu0 0.0
    %784 = vmatpush1.xpose.msra.mxu0 0.0
    %785 = vmatprep.subr.mxu0 0.0
    %786 = vmatpush1.xpose.msra.mxu0 0.0
    %787 = vmatprep.subr.mxu0 0.0
    %788 = vmatpush1.xpose.msra.mxu0 0.0
    %789 = vmatprep.subr.mxu0 0.0
    %790 = vmatpush1.xpose.msra.mxu0 0.0
    %791 = vmatprep.subr.mxu0 0.0
    %792 = vmatpush1.xpose.msra.mxu0 0.0
    %793 = vmatprep.subr.mxu0 0.0
    %794 = vmatpush1.xpose.msra.mxu0 0.0
    %795 = vmatprep.subr.mxu0 0.0
    %796 = vmatpush1.xpose.msra.mxu0 0.0
    %797 = vmatprep.subr.mxu0 0.0
    %798 = vmatpush1.xpose.msra.mxu0 0.0
    %799 = vmatprep.subr.mxu0 0.0
    %800 = vmatpush1.xpose.msra.mxu0 0.0
    %801 = vmatprep.subr.mxu0 0.0
    %802 = vmatpush1.xpose.msra.mxu0 0.0
    %803 = vmatprep.subr.mxu0 0.0
    %804 = vmatpush1.xpose.msra.mxu0 0.0
    %805 = vmatprep.subr.mxu0 0.0
    %806 = vmatpush1.xpose.msra.mxu0 0.0
    %807 = vmatprep.subr.mxu0 0.0
    %808 = vmatpush1.xpose.msra.mxu0 0.0
    %809 = vmatprep.subr.mxu0 0.0
    %810 = vmatpush1.xpose.msra.mxu0 0.0
    %811 = vmatprep.subr.mxu0 0.0
    %812 = vmatpush1.xpose.msra.mxu0 0.0
    %813 = vmatprep.subr.mxu0 0.0
    %814 = vmatpush1.xpose.msra.mxu0 0.0
    %815 = vmatprep.subr.mxu0 0.0
    %816 = vmatpush1.xpose.msra.mxu0 0.0
    %817 = vmatprep.subr.mxu0 0.0
    %818 = vmatpush1.xpose.msra.mxu0 0.0
    %819 = vmatprep.subr.mxu0 0.0
    %820 = vmatpush1.xpose.msra.mxu0 0.0
    %821 = vmatprep.subr.mxu0 0.0
    %822 = vmatpush1.xpose.msra.mxu0 0.0
    %823 = vmatprep.mubr.f32.mxu0 0.0
    %824 = vmatmul.mubr.f32.gmra.mrb[0].mxu0 %v755
    %v825 = vpop.f32.mrb[0].mxu0
    %v826 = vadd.f32 0.0, %v825
    %v827 = vpop.f32.mrb[0].mxu0
    %828 = vdwg.mxu0
    %830 = vrot.lane.b32.xlu0 %v228, 104
    %v831 = vpop.permute.xlu0 %830
    %832 = vrot.lane.b32.xlu0 %v228, 96
    %v833 = vpop.permute.xlu0 %832
    %v834 = vsel %vm280, %v831, 0
    %v836 = vsel %vm280, %v833, 0
    %838 = vmatprep.subr.mxu0 0.0
    %839 = vmatpush1.xpose.msra.mxu0 %v836
    %840 = vmatprep.subr.mxu0 0.0
    %841 = vmatpush1.xpose.msra.mxu0 0.0
    %842 = vmatprep.subr.mxu0 0.0
    %843 = vmatpush1.xpose.msra.mxu0 0.0
    %844 = vmatprep.subr.mxu0 0.0
    %845 = vmatpush1.xpose.msra.mxu0 0.0
    %846 = vmatprep.subr.mxu0 0.0
    %847 = vmatpush1.xpose.msra.mxu0 0.0
    %848 = vmatprep.subr.mxu0 0.0
    %849 = vmatpush1.xpose.msra.mxu0 0.0
    %850 = vmatprep.subr.mxu0 0.0
    %851 = vmatpush1.xpose.msra.mxu0 0.0
    %852 = vmatprep.subr.mxu0 0.0
    %853 = vmatpush1.xpose.msra.mxu0 0.0
    %854 = vmatprep.subr.mxu0 0.0
    %855 = vmatpush1.xpose.msra.mxu0 0.0
    %856 = vmatprep.subr.mxu0 0.0
    %857 = vmatpush1.xpose.msra.mxu0 0.0
    %858 = vmatprep.subr.mxu0 0.0
    %859 = vmatpush1.xpose.msra.mxu0 0.0
    %860 = vmatprep.subr.mxu0 0.0
    %861 = vmatpush1.xpose.msra.mxu0 0.0
    %862 = vmatprep.subr.mxu0 0.0
    %863 = vmatpush1.xpose.msra.mxu0 0.0
    %864 = vmatprep.subr.mxu0 0.0
    %865 = vmatpush1.xpose.msra.mxu0 0.0
    %866 = vmatprep.subr.mxu0 0.0
    %867 = vmatpush1.xpose.msra.mxu0 0.0
    %868 = vmatprep.subr.mxu0 0.0
    %869 = vmatpush1.xpose.msra.mxu0 0.0
    %870 = vmatprep.subr.mxu0 0.0
    %871 = vmatpush1.xpose.msra.mxu0 0.0
    %872 = vmatprep.subr.mxu0 0.0
    %873 = vmatpush1.xpose.msra.mxu0 0.0
    %874 = vmatprep.subr.mxu0 0.0
    %875 = vmatpush1.xpose.msra.mxu0 0.0
    %876 = vmatprep.subr.mxu0 0.0
    %877 = vmatpush1.xpose.msra.mxu0 0.0
    %878 = vmatprep.subr.mxu0 0.0
    %879 = vmatpush1.xpose.msra.mxu0 0.0
    %880 = vmatprep.subr.mxu0 0.0
    %881 = vmatpush1.xpose.msra.mxu0 0.0
    %882 = vmatprep.subr.mxu0 0.0
    %883 = vmatpush1.xpose.msra.mxu0 0.0
    %884 = vmatprep.subr.mxu0 0.0
    %885 = vmatpush1.xpose.msra.mxu0 0.0
    %886 = vmatprep.subr.mxu0 0.0
    %887 = vmatpush1.xpose.msra.mxu0 0.0
    %888 = vmatprep.subr.mxu0 0.0
    %889 = vmatpush1.xpose.msra.mxu0 0.0
    %890 = vmatprep.subr.mxu0 0.0
    %891 = vmatpush1.xpose.msra.mxu0 0.0
    %892 = vmatprep.subr.mxu0 0.0
    %893 = vmatpush1.xpose.msra.mxu0 0.0
    %894 = vmatprep.subr.mxu0 0.0
    %895 = vmatpush1.xpose.msra.mxu0 0.0
    %896 = vmatprep.subr.mxu0 0.0
    %897 = vmatpush1.xpose.msra.mxu0 0.0
    %898 = vmatprep.subr.mxu0 0.0
    %899 = vmatpush1.xpose.msra.mxu0 0.0
    %900 = vmatprep.subr.mxu0 0.0
    %901 = vmatpush1.xpose.msra.mxu0 0.0
    %902 = vmatprep.mubr.f32.mxu0 0.0
    %903 = vmatmul.mubr.f32.gmra.mrb[0].mxu0 %v834
    %v904 = vpop.f32.mrb[0].mxu0
    %v905 = vadd.f32 0.0, %v904
    %v906 = vpop.f32.mrb[0].mxu0
    %907 = vdwg.mxu0
    %909 = vrot.lane.b32.xlu0 %v233, 104
    %v910 = vpop.permute.xlu0 %909
    %911 = vrot.lane.b32.xlu0 %v233, 96
    %v912 = vpop.permute.xlu0 %911
    %v913 = vsel %vm280, %v910, 0
    %v915 = vsel %vm280, %v912, 0
    %917 = vmatprep.subr.mxu0 0.0
    %918 = vmatpush1.xpose.msra.mxu0 %v915
    %919 = vmatprep.subr.mxu0 0.0
    %920 = vmatpush1.xpose.msra.mxu0 0.0
    %921 = vmatprep.subr.mxu0 0.0
    %922 = vmatpush1.xpose.msra.mxu0 0.0
    %923 = vmatprep.subr.mxu0 0.0
    %924 = vmatpush1.xpose.msra.mxu0 0.0
    %925 = vmatprep.subr.mxu0 0.0
    %926 = vmatpush1.xpose.msra.mxu0 0.0
    %927 = vmatprep.subr.mxu0 0.0
    %928 = vmatpush1.xpose.msra.mxu0 0.0
    %929 = vmatprep.subr.mxu0 0.0
    %930 = vmatpush1.xpose.msra.mxu0 0.0
    %931 = vmatprep.subr.mxu0 0.0
    %932 = vmatpush1.xpose.msra.mxu0 0.0
    %933 = vmatprep.subr.mxu0 0.0
    %934 = vmatpush1.xpose.msra.mxu0 0.0
    %935 = vmatprep.subr.mxu0 0.0
    %936 = vmatpush1.xpose.msra.mxu0 0.0
    %937 = vmatprep.subr.mxu0 0.0
    %938 = vmatpush1.xpose.msra.mxu0 0.0
    %939 = vmatprep.subr.mxu0 0.0
    %940 = vmatpush1.xpose.msra.mxu0 0.0
    %941 = vmatprep.subr.mxu0 0.0
    %942 = vmatpush1.xpose.msra.mxu0 0.0
    %943 = vmatprep.subr.mxu0 0.0
    %944 = vmatpush1.xpose.msra.mxu0 0.0
    %945 = vmatprep.subr.mxu0 0.0
    %946 = vmatpush1.xpose.msra.mxu0 0.0
    %947 = vmatprep.subr.mxu0 0.0
    %948 = vmatpush1.xpose.msra.mxu0 0.0
    %949 = vmatprep.subr.mxu0 0.0
    %950 = vmatpush1.xpose.msra.mxu0 0.0
    %951 = vmatprep.subr.mxu0 0.0
    %952 = vmatpush1.xpose.msra.mxu0 0.0
    %953 = vmatprep.subr.mxu0 0.0
    %954 = vmatpush1.xpose.msra.mxu0 0.0
    %955 = vmatprep.subr.mxu0 0.0
    %956 = vmatpush1.xpose.msra.mxu0 0.0
    %957 = vmatprep.subr.mxu0 0.0
    %958 = vmatpush1.xpose.msra.mxu0 0.0
    %959 = vmatprep.subr.mxu0 0.0
    %960 = vmatpush1.xpose.msra.mxu0 0.0
    %961 = vmatprep.subr.mxu0 0.0
    %962 = vmatpush1.xpose.msra.mxu0 0.0
    %963 = vmatprep.subr.mxu0 0.0
    %964 = vmatpush1.xpose.msra.mxu0 0.0
    %965 = vmatprep.subr.mxu0 0.0
    %966 = vmatpush1.xpose.msra.mxu0 0.0
    %967 = vmatprep.subr.mxu0 0.0
    %968 = vmatpush1.xpose.msra.mxu0 0.0
    %969 = vmatprep.subr.mxu0 0.0
    %970 = vmatpush1.xpose.msra.mxu0 0.0
    %971 = vmatprep.subr.mxu0 0.0
    %972 = vmatpush1.xpose.msra.mxu0 0.0
    %973 = vmatprep.subr.mxu0 0.0
    %974 = vmatpush1.xpose.msra.mxu0 0.0
    %975 = vmatprep.subr.mxu0 0.0
    %976 = vmatpush1.xpose.msra.mxu0 0.0
    %977 = vmatprep.subr.mxu0 0.0
    %978 = vmatpush1.xpose.msra.mxu0 0.0
    %979 = vmatprep.subr.mxu0 0.0
    %980 = vmatpush1.xpose.msra.mxu0 0.0
    %981 = vmatprep.mubr.f32.mxu0 0.0
    %982 = vmatmul.mubr.f32.gmra.mrb[0].mxu0 %v913
    %v983 = vpop.f32.mrb[0].mxu0
    %v984 = vadd.f32 0.0, %v983
    %v985 = vpop.f32.mrb[0].mxu0
    %986 = vdwg.mxu0
    %988 = vrot.lane.b32.xlu0 %v238, 104
    %v989 = vpop.permute.xlu0 %988
    %990 = vrot.lane.b32.xlu0 %v238, 96
    %v991 = vpop.permute.xlu0 %990
    %v992 = vsel %vm280, %v989, 0
    %v994 = vsel %vm280, %v991, 0
    %996 = vmatprep.subr.mxu0 0.0
    %997 = vmatpush1.xpose.msra.mxu0 %v994
    %998 = vmatprep.subr.mxu0 0.0
    %999 = vmatpush1.xpose.msra.mxu0 0.0
    %1000 = vmatprep.subr.mxu0 0.0
    %1001 = vmatpush1.xpose.msra.mxu0 0.0
    %1002 = vmatprep.subr.mxu0 0.0
    %1003 = vmatpush1.xpose.msra.mxu0 0.0
    %1004 = vmatprep.subr.mxu0 0.0
    %1005 = vmatpush1.xpose.msra.mxu0 0.0
    %1006 = vmatprep.subr.mxu0 0.0
    %1007 = vmatpush1.xpose.msra.mxu0 0.0
    %1008 = vmatprep.subr.mxu0 0.0
    %1009 = vmatpush1.xpose.msra.mxu0 0.0
    %1010 = vmatprep.subr.mxu0 0.0
    %1011 = vmatpush1.xpose.msra.mxu0 0.0
    %1012 = vmatprep.subr.mxu0 0.0
    %1013 = vmatpush1.xpose.msra.mxu0 0.0
    %1014 = vmatprep.subr.mxu0 0.0
    %1015 = vmatpush1.xpose.msra.mxu0 0.0
    %1016 = vmatprep.subr.mxu0 0.0
    %1017 = vmatpush1.xpose.msra.mxu0 0.0
    %1018 = vmatprep.subr.mxu0 0.0
    %1019 = vmatpush1.xpose.msra.mxu0 0.0
    %1020 = vmatprep.subr.mxu0 0.0
    %1021 = vmatpush1.xpose.msra.mxu0 0.0
    %1022 = vmatprep.subr.mxu0 0.0
    %1023 = vmatpush1.xpose.msra.mxu0 0.0
    %1024 = vmatprep.subr.mxu0 0.0
    %1025 = vmatpush1.xpose.msra.mxu0 0.0
    %1026 = vmatprep.subr.mxu0 0.0
    %1027 = vmatpush1.xpose.msra.mxu0 0.0
    %1028 = vmatprep.subr.mxu0 0.0
    %1029 = vmatpush1.xpose.msra.mxu0 0.0
    %1030 = vmatprep.subr.mxu0 0.0
    %1031 = vmatpush1.xpose.msra.mxu0 0.0
    %1032 = vmatprep.subr.mxu0 0.0
    %1033 = vmatpush1.xpose.msra.mxu0 0.0
    %1034 = vmatprep.subr.mxu0 0.0
    %1035 = vmatpush1.xpose.msra.mxu0 0.0
    %1036 = vmatprep.subr.mxu0 0.0
    %1037 = vmatpush1.xpose.msra.mxu0 0.0
    %1038 = vmatprep.subr.mxu0 0.0
    %1039 = vmatpush1.xpose.msra.mxu0 0.0
    %1040 = vmatprep.subr.mxu0 0.0
    %1041 = vmatpush1.xpose.msra.mxu0 0.0
    %1042 = vmatprep.subr.mxu0 0.0
    %1043 = vmatpush1.xpose.msra.mxu0 0.0
    %1044 = vmatprep.subr.mxu0 0.0
    %1045 = vmatpush1.xpose.msra.mxu0 0.0
    %1046 = vmatprep.subr.mxu0 0.0
    %1047 = vmatpush1.xpose.msra.mxu0 0.0
    %1048 = vmatprep.subr.mxu0 0.0
    %1049 = vmatpush1.xpose.msra.mxu0 0.0
    %1050 = vmatprep.subr.mxu0 0.0
    %1051 = vmatpush1.xpose.msra.mxu0 0.0
    %1052 = vmatprep.subr.mxu0 0.0
    %1053 = vmatpush1.xpose.msra.mxu0 0.0
    %1054 = vmatprep.subr.mxu0 0.0
    %1055 = vmatpush1.xpose.msra.mxu0 0.0
    %1056 = vmatprep.subr.mxu0 0.0
    %1057 = vmatpush1.xpose.msra.mxu0 0.0
    %1058 = vmatprep.subr.mxu0 0.0
    %1059 = vmatpush1.xpose.msra.mxu0 0.0
    %1060 = vmatprep.mubr.f32.mxu0 0.0
    %1061 = vmatmul.mubr.f32.gmra.mrb[0].mxu0 %v992
    %v1062 = vpop.f32.mrb[0].mxu0
    %v1063 = vadd.f32 0.0, %v1062
    %v1064 = vpop.f32.mrb[0].mxu0
    %1065 = vdwg.mxu0
    %1067 = vrot.lane.b32.xlu0 %v243, 104
    %v1068 = vpop.permute.xlu0 %1067
    %1069 = vrot.lane.b32.xlu0 %v243, 96
    %v1070 = vpop.permute.xlu0 %1069
    %v1071 = vsel %vm280, %v1068, 0
    %v1073 = vsel %vm280, %v1070, 0
    %1075 = vmatprep.subr.mxu0 0.0
    %1076 = vmatpush1.xpose.msra.mxu0 %v1073
    %1077 = vmatprep.subr.mxu0 0.0
    %1078 = vmatpush1.xpose.msra.mxu0 0.0
    %1079 = vmatprep.subr.mxu0 0.0
    %1080 = vmatpush1.xpose.msra.mxu0 0.0
    %1081 = vmatprep.subr.mxu0 0.0
    %1082 = vmatpush1.xpose.msra.mxu0 0.0
    %1083 = vmatprep.subr.mxu0 0.0
    %1084 = vmatpush1.xpose.msra.mxu0 0.0
    %1085 = vmatprep.subr.mxu0 0.0
    %1086 = vmatpush1.xpose.msra.mxu0 0.0
    %1087 = vmatprep.subr.mxu0 0.0
    %1088 = vmatpush1.xpose.msra.mxu0 0.0
    %1089 = vmatprep.subr.mxu0 0.0
    %1090 = vmatpush1.xpose.msra.mxu0 0.0
    %1091 = vmatprep.subr.mxu0 0.0
    %1092 = vmatpush1.xpose.msra.mxu0 0.0
    %1093 = vmatprep.subr.mxu0 0.0
    %1094 = vmatpush1.xpose.msra.mxu0 0.0
    %1095 = vmatprep.subr.mxu0 0.0
    %1096 = vmatpush1.xpose.msra.mxu0 0.0
    %1097 = vmatprep.subr.mxu0 0.0
    %1098 = vmatpush1.xpose.msra.mxu0 0.0
    %1099 = vmatprep.subr.mxu0 0.0
    %1100 = vmatpush1.xpose.msra.mxu0 0.0
    %1101 = vmatprep.subr.mxu0 0.0
    %1102 = vmatpush1.xpose.msra.mxu0 0.0
    %1103 = vmatprep.subr.mxu0 0.0
    %1104 = vmatpush1.xpose.msra.mxu0 0.0
    %1105 = vmatprep.subr.mxu0 0.0
    %1106 = vmatpush1.xpose.msra.mxu0 0.0
    %1107 = vmatprep.subr.mxu0 0.0
    %1108 = vmatpush1.xpose.msra.mxu0 0.0
    %1109 = vmatprep.subr.mxu0 0.0
    %1110 = vmatpush1.xpose.msra.mxu0 0.0
    %1111 = vmatprep.subr.mxu0 0.0
    %1112 = vmatpush1.xpose.msra.mxu0 0.0
    %1113 = vmatprep.subr.mxu0 0.0
    %1114 = vmatpush1.xpose.msra.mxu0 0.0
    %1115 = vmatprep.subr.mxu0 0.0
    %1116 = vmatpush1.xpose.msra.mxu0 0.0
    %1117 = vmatprep.subr.mxu0 0.0
    %1118 = vmatpush1.xpose.msra.mxu0 0.0
    %1119 = vmatprep.subr.mxu0 0.0
    %1120 = vmatpush1.xpose.msra.mxu0 0.0
    %1121 = vmatprep.subr.mxu0 0.0
    %1122 = vmatpush1.xpose.msra.mxu0 0.0
    %1123 = vmatprep.subr.mxu0 0.0
    %1124 = vmatpush1.xpose.msra.mxu0 0.0
    %1125 = vmatprep.subr.mxu0 0.0
    %1126 = vmatpush1.xpose.msra.mxu0 0.0
    %1127 = vmatprep.subr.mxu0 0.0
    %1128 = vmatpush1.xpose.msra.mxu0 0.0
    %1129 = vmatprep.subr.mxu0 0.0
    %1130 = vmatpush1.xpose.msra.mxu0 0.0
    %1131 = vmatprep.subr.mxu0 0.0
    %1132 = vmatpush1.xpose.msra.mxu0 0.0
    %1133 = vmatprep.subr.mxu0 0.0
    %1134 = vmatpush1.xpose.msra.mxu0 0.0
    %1135 = vmatprep.subr.mxu0 0.0
    %1136 = vmatpush1.xpose.msra.mxu0 0.0
    %1137 = vmatprep.subr.mxu0 0.0
    %1138 = vmatpush1.xpose.msra.mxu0 0.0
    %1139 = vmatprep.mubr.f32.mxu0 0.0
    %1140 = vmatmul.mubr.f32.gmra.mrb[0].mxu0 %v1071
    %v1141 = vpop.f32.mrb[0].mxu0
    %v1142 = vadd.f32 0.0, %v1141
    %v1143 = vpop.f32.mrb[0].mxu0
    %1144 = vdwg.mxu0
    %1146 = vrot.lane.b32.xlu0 %v248, 104
    %v1147 = vpop.permute.xlu0 %1146
    %1148 = vrot.lane.b32.xlu0 %v248, 96
    %v1149 = vpop.permute.xlu0 %1148
    %v1150 = vsel %vm280, %v1147, 0
    %v1152 = vsel %vm280, %v1149, 0
    %1154 = vmatprep.subr.mxu0 0.0
    %1155 = vmatpush1.xpose.msra.mxu0 %v1152
    %1156 = vmatprep.subr.mxu0 0.0
    %1157 = vmatpush1.xpose.msra.mxu0 0.0
    %1158 = vmatprep.subr.mxu0 0.0
    %1159 = vmatpush1.xpose.msra.mxu0 0.0
    %1160 = vmatprep.subr.mxu0 0.0
    %1161 = vmatpush1.xpose.msra.mxu0 0.0
    %1162 = vmatprep.subr.mxu0 0.0
    %1163 = vmatpush1.xpose.msra.mxu0 0.0
    %1164 = vmatprep.subr.mxu0 0.0
    %1165 = vmatpush1.xpose.msra.mxu0 0.0
    %1166 = vmatprep.subr.mxu0 0.0
    %1167 = vmatpush1.xpose.msra.mxu0 0.0
    %1168 = vmatprep.subr.mxu0 0.0
    %1169 = vmatpush1.xpose.msra.mxu0 0.0
    %1170 = vmatprep.subr.mxu0 0.0
    %1171 = vmatpush1.xpose.msra.mxu0 0.0
    %1172 = vmatprep.subr.mxu0 0.0
    %1173 = vmatpush1.xpose.msra.mxu0 0.0
    %1174 = vmatprep.subr.mxu0 0.0
    %1175 = vmatpush1.xpose.msra.mxu0 0.0
    %1176 = vmatprep.subr.mxu0 0.0
    %1177 = vmatpush1.xpose.msra.mxu0 0.0
    %1178 = vmatprep.subr.mxu0 0.0
    %1179 = vmatpush1.xpose.msra.mxu0 0.0
    %1180 = vmatprep.subr.mxu0 0.0
    %1181 = vmatpush1.xpose.msra.mxu0 0.0
    %1182 = vmatprep.subr.mxu0 0.0
    %1183 = vmatpush1.xpose.msra.mxu0 0.0
    %1184 = vmatprep.subr.mxu0 0.0
    %1185 = vmatpush1.xpose.msra.mxu0 0.0
    %1186 = vmatprep.subr.mxu0 0.0
    %1187 = vmatpush1.xpose.msra.mxu0 0.0
    %1188 = vmatprep.subr.mxu0 0.0
    %1189 = vmatpush1.xpose.msra.mxu0 0.0
    %1190 = vmatprep.subr.mxu0 0.0
    %1191 = vmatpush1.xpose.msra.mxu0 0.0
    %1192 = vmatprep.subr.mxu0 0.0
    %1193 = vmatpush1.xpose.msra.mxu0 0.0
    %1194 = vmatprep.subr.mxu0 0.0
    %1195 = vmatpush1.xpose.msra.mxu0 0.0
    %1196 = vmatprep.subr.mxu0 0.0
    %1197 = vmatpush1.xpose.msra.mxu0 0.0
    %1198 = vmatprep.subr.mxu0 0.0
    %1199 = vmatpush1.xpose.msra.mxu0 0.0
    %1200 = vmatprep.subr.mxu0 0.0
    %1201 = vmatpush1.xpose.msra.mxu0 0.0
    %1202 = vmatprep.subr.mxu0 0.0
    %1203 = vmatpush1.xpose.msra.mxu0 0.0
    %1204 = vmatprep.subr.mxu0 0.0
    %1205 = vmatpush1.xpose.msra.mxu0 0.0
    %1206 = vmatprep.subr.mxu0 0.0
    %1207 = vmatpush1.xpose.msra.mxu0 0.0
    %1208 = vmatprep.subr.mxu0 0.0
    %1209 = vmatpush1.xpose.msra.mxu0 0.0
    %1210 = vmatprep.subr.mxu0 0.0
    %1211 = vmatpush1.xpose.msra.mxu0 0.0
    %1212 = vmatprep.subr.mxu0 0.0
    %1213 = vmatpush1.xpose.msra.mxu0 0.0
    %1214 = vmatprep.subr.mxu0 0.0
    %1215 = vmatpush1.xpose.msra.mxu0 0.0
    %1216 = vmatprep.subr.mxu0 0.0
    %1217 = vmatpush1.xpose.msra.mxu0 0.0
    %1218 = vmatprep.mubr.f32.mxu0 0.0
    %1219 = vmatmul.mubr.f32.gmra.mrb[0].mxu0 %v1150
    %v1220 = vpop.f32.mrb[0].mxu0
    %v1221 = vadd.f32 0.0, %v1220
    %v1222 = vpop.f32.mrb[0].mxu0
    %1223 = vdwg.mxu0
    %1225 = vrot.lane.b32.xlu0 %v253, 104
    %v1226 = vpop.permute.xlu0 %1225
    %1227 = vrot.lane.b32.xlu0 %v253, 96
    %v1228 = vpop.permute.xlu0 %1227
    %v1229 = vsel %vm280, %v1226, 0
    %v1231 = vsel %vm280, %v1228, 0
    %1233 = vmatprep.subr.mxu0 0.0
    %1234 = vmatpush1.xpose.msra.mxu0 %v1231
    %1235 = vmatprep.subr.mxu0 0.0
    %1236 = vmatpush1.xpose.msra.mxu0 0.0
    %1237 = vmatprep.subr.mxu0 0.0
    %1238 = vmatpush1.xpose.msra.mxu0 0.0
    %1239 = vmatprep.subr.mxu0 0.0
    %1240 = vmatpush1.xpose.msra.mxu0 0.0
    %1241 = vmatprep.subr.mxu0 0.0
    %1242 = vmatpush1.xpose.msra.mxu0 0.0
    %1243 = vmatprep.subr.mxu0 0.0
    %1244 = vmatpush1.xpose.msra.mxu0 0.0
    %1245 = vmatprep.subr.mxu0 0.0
    %1246 = vmatpush1.xpose.msra.mxu0 0.0
    %1247 = vmatprep.subr.mxu0 0.0
    %1248 = vmatpush1.xpose.msra.mxu0 0.0
    %1249 = vmatprep.subr.mxu0 0.0
    %1250 = vmatpush1.xpose.msra.mxu0 0.0
    %1251 = vmatprep.subr.mxu0 0.0
    %1252 = vmatpush1.xpose.msra.mxu0 0.0
    %1253 = vmatprep.subr.mxu0 0.0
    %1254 = vmatpush1.xpose.msra.mxu0 0.0
    %1255 = vmatprep.subr.mxu0 0.0
    %1256 = vmatpush1.xpose.msra.mxu0 0.0
    %1257 = vmatprep.subr.mxu0 0.0
    %1258 = vmatpush1.xpose.msra.mxu0 0.0
    %1259 = vmatprep.subr.mxu0 0.0
    %1260 = vmatpush1.xpose.msra.mxu0 0.0
    %1261 = vmatprep.subr.mxu0 0.0
    %1262 = vmatpush1.xpose.msra.mxu0 0.0
    %1263 = vmatprep.subr.mxu0 0.0
    %1264 = vmatpush1.xpose.msra.mxu0 0.0
    %1265 = vmatprep.subr.mxu0 0.0
    %1266 = vmatpush1.xpose.msra.mxu0 0.0
    %1267 = vmatprep.subr.mxu0 0.0
    %1268 = vmatpush1.xpose.msra.mxu0 0.0
    %1269 = vmatprep.subr.mxu0 0.0
    %1270 = vmatpush1.xpose.msra.mxu0 0.0
    %1271 = vmatprep.subr.mxu0 0.0
    %1272 = vmatpush1.xpose.msra.mxu0 0.0
    %1273 = vmatprep.subr.mxu0 0.0
    %1274 = vmatpush1.xpose.msra.mxu0 0.0
    %1275 = vmatprep.subr.mxu0 0.0
    %1276 = vmatpush1.xpose.msra.mxu0 0.0
    %1277 = vmatprep.subr.mxu0 0.0
    %1278 = vmatpush1.xpose.msra.mxu0 0.0
    %1279 = vmatprep.subr.mxu0 0.0
    %1280 = vmatpush1.xpose.msra.mxu0 0.0
    %1281 = vmatprep.subr.mxu0 0.0
    %1282 = vmatpush1.xpose.msra.mxu0 0.0
    %1283 = vmatprep.subr.mxu0 0.0
    %1284 = vmatpush1.xpose.msra.mxu0 0.0
    %1285 = vmatprep.subr.mxu0 0.0
    %1286 = vmatpush1.xpose.msra.mxu0 0.0
    %1287 = vmatprep.subr.mxu0 0.0
    %1288 = vmatpush1.xpose.msra.mxu0 0.0
    %1289 = vmatprep.subr.mxu0 0.0
    %1290 = vmatpush1.xpose.msra.mxu0 0.0
    %1291 = vmatprep.subr.mxu0 0.0
    %1292 = vmatpush1.xpose.msra.mxu0 0.0
    %1293 = vmatprep.subr.mxu0 0.0
    %1294 = vmatpush1.xpose.msra.mxu0 0.0
    %1295 = vmatprep.subr.mxu0 0.0
    %1296 = vmatpush1.xpose.msra.mxu0 0.0
    %1297 = vmatprep.mubr.f32.mxu0 0.0
    %1298 = vmatmul.mubr.f32.gmra.mrb[0].mxu0 %v1229
    %v1299 = vpop.f32.mrb[0].mxu0
    %v1300 = vadd.f32 0.0, %v1299
    %v1301 = vpop.f32.mrb[0].mxu0
    %1302 = vdwg.mxu0
    %1304 = vrot.lane.b32.xlu0 %v258, 104
    %v1305 = vpop.permute.xlu0 %1304
    %1306 = vrot.lane.b32.xlu0 %v258, 96
    %v1307 = vpop.permute.xlu0 %1306
    %v1308 = vsel %vm280, %v1305, 0
    %v1310 = vsel %vm280, %v1307, 0
    %1312 = vmatprep.subr.mxu0 0.0
    %1313 = vmatpush1.xpose.msra.mxu0 %v1310
    %1314 = vmatprep.subr.mxu0 0.0
    %1315 = vmatpush1.xpose.msra.mxu0 0.0
    %1316 = vmatprep.subr.mxu0 0.0
    %1317 = vmatpush1.xpose.msra.mxu0 0.0
    %1318 = vmatprep.subr.mxu0 0.0
    %1319 = vmatpush1.xpose.msra.mxu0 0.0
    %1320 = vmatprep.subr.mxu0 0.0
    %1321 = vmatpush1.xpose.msra.mxu0 0.0
    %1322 = vmatprep.subr.mxu0 0.0
    %1323 = vmatpush1.xpose.msra.mxu0 0.0
    %1324 = vmatprep.subr.mxu0 0.0
    %1325 = vmatpush1.xpose.msra.mxu0 0.0
    %1326 = vmatprep.subr.mxu0 0.0
    %1327 = vmatpush1.xpose.msra.mxu0 0.0
    %1328 = vmatprep.subr.mxu0 0.0
    %1329 = vmatpush1.xpose.msra.mxu0 0.0
    %1330 = vmatprep.subr.mxu0 0.0
    %1331 = vmatpush1.xpose.msra.mxu0 0.0
    %1332 = vmatprep.subr.mxu0 0.0
    %1333 = vmatpush1.xpose.msra.mxu0 0.0
    %1334 = vmatprep.subr.mxu0 0.0
    %1335 = vmatpush1.xpose.msra.mxu0 0.0
    %1336 = vmatprep.subr.mxu0 0.0
    %1337 = vmatpush1.xpose.msra.mxu0 0.0
    %1338 = vmatprep.subr.mxu0 0.0
    %1339 = vmatpush1.xpose.msra.mxu0 0.0
    %1340 = vmatprep.subr.mxu0 0.0
    %1341 = vmatpush1.xpose.msra.mxu0 0.0
    %1342 = vmatprep.subr.mxu0 0.0
    %1343 = vmatpush1.xpose.msra.mxu0 0.0
    %1344 = vmatprep.subr.mxu0 0.0
    %1345 = vmatpush1.xpose.msra.mxu0 0.0
    %1346 = vmatprep.subr.mxu0 0.0
    %1347 = vmatpush1.xpose.msra.mxu0 0.0
    %1348 = vmatprep.subr.mxu0 0.0
    %1349 = vmatpush1.xpose.msra.mxu0 0.0
    %1350 = vmatprep.subr.mxu0 0.0
    %1351 = vmatpush1.xpose.msra.mxu0 0.0
    %1352 = vmatprep.subr.mxu0 0.0
    %1353 = vmatpush1.xpose.msra.mxu0 0.0
    %1354 = vmatprep.subr.mxu0 0.0
    %1355 = vmatpush1.xpose.msra.mxu0 0.0
    %1356 = vmatprep.subr.mxu0 0.0
    %1357 = vmatpush1.xpose.msra.mxu0 0.0
    %1358 = vmatprep.subr.mxu0 0.0
    %1359 = vmatpush1.xpose.msra.mxu0 0.0
    %1360 = vmatprep.subr.mxu0 0.0
    %1361 = vmatpush1.xpose.msra.mxu0 0.0
    %1362 = vmatprep.subr.mxu0 0.0
    %1363 = vmatpush1.xpose.msra.mxu0 0.0
    %1364 = vmatprep.subr.mxu0 0.0
    %1365 = vmatpush1.xpose.msra.mxu0 0.0
    %1366 = vmatprep.subr.mxu0 0.0
    %1367 = vmatpush1.xpose.msra.mxu0 0.0
    %1368 = vmatprep.subr.mxu0 0.0
    %1369 = vmatpush1.xpose.msra.mxu0 0.0
    %1370 = vmatprep.subr.mxu0 0.0
    %1371 = vmatpush1.xpose.msra.mxu0 0.0
    %1372 = vmatprep.subr.mxu0 0.0
    %1373 = vmatpush1.xpose.msra.mxu0 0.0
    %1374 = vmatprep.subr.mxu0 0.0
    %1375 = vmatpush1.xpose.msra.mxu0 0.0
    %1376 = vmatprep.mubr.f32.mxu0 0.0
    %1377 = vmatmul.mubr.f32.gmra.mrb[0].mxu0 %v1308
    %v1378 = vpop.f32.mrb[0].mxu0
    %v1379 = vadd.f32 0.0, %v1378
    %v1380 = vpop.f32.mrb[0].mxu0
    %1381 = vdwg.mxu0
    %1383 = vrot.lane.b32.xlu0 %v263, 104
    %v1384 = vpop.permute.xlu0 %1383
    %1385 = vrot.lane.b32.xlu0 %v263, 96
    %v1386 = vpop.permute.xlu0 %1385
    %v1387 = vsel %vm280, %v1384, 0
    %v1389 = vsel %vm280, %v1386, 0
    %1391 = vmatprep.subr.mxu0 0.0
    %1392 = vmatpush1.xpose.msra.mxu0 %v1389
    %1393 = vmatprep.subr.mxu0 0.0
    %1394 = vmatpush1.xpose.msra.mxu0 0.0
    %1395 = vmatprep.subr.mxu0 0.0
    %1396 = vmatpush1.xpose.msra.mxu0 0.0
    %1397 = vmatprep.subr.mxu0 0.0
    %1398 = vmatpush1.xpose.msra.mxu0 0.0
    %1399 = vmatprep.subr.mxu0 0.0
    %1400 = vmatpush1.xpose.msra.mxu0 0.0
    %1401 = vmatprep.subr.mxu0 0.0
    %1402 = vmatpush1.xpose.msra.mxu0 0.0
    %1403 = vmatprep.subr.mxu0 0.0
    %1404 = vmatpush1.xpose.msra.mxu0 0.0
    %1405 = vmatprep.subr.mxu0 0.0
    %1406 = vmatpush1.xpose.msra.mxu0 0.0
    %1407 = vmatprep.subr.mxu0 0.0
    %1408 = vmatpush1.xpose.msra.mxu0 0.0
    %1409 = vmatprep.subr.mxu0 0.0
    %1410 = vmatpush1.xpose.msra.mxu0 0.0
    %1411 = vmatprep.subr.mxu0 0.0
    %1412 = vmatpush1.xpose.msra.mxu0 0.0
    %1413 = vmatprep.subr.mxu0 0.0
    %1414 = vmatpush1.xpose.msra.mxu0 0.0
    %1415 = vmatprep.subr.mxu0 0.0
    %1416 = vmatpush1.xpose.msra.mxu0 0.0
    %1417 = vmatprep.subr.mxu0 0.0
    %1418 = vmatpush1.xpose.msra.mxu0 0.0
    %1419 = vmatprep.subr.mxu0 0.0
    %1420 = vmatpush1.xpose.msra.mxu0 0.0
    %1421 = vmatprep.subr.mxu0 0.0
    %1422 = vmatpush1.xpose.msra.mxu0 0.0
    %1423 = vmatprep.subr.mxu0 0.0
    %1424 = vmatpush1.xpose.msra.mxu0 0.0
    %1425 = vmatprep.subr.mxu0 0.0
    %1426 = vmatpush1.xpose.msra.mxu0 0.0
    %1427 = vmatprep.subr.mxu0 0.0
    %1428 = vmatpush1.xpose.msra.mxu0 0.0
    %1429 = vmatprep.subr.mxu0 0.0
    %1430 = vmatpush1.xpose.msra.mxu0 0.0
    %1431 = vmatprep.subr.mxu0 0.0
    %1432 = vmatpush1.xpose.msra.mxu0 0.0
    %1433 = vmatprep.subr.mxu0 0.0
    %1434 = vmatpush1.xpose.msra.mxu0 0.0
    %1435 = vmatprep.subr.mxu0 0.0
    %1436 = vmatpush1.xpose.msra.mxu0 0.0
    %1437 = vmatprep.subr.mxu0 0.0
    %1438 = vmatpush1.xpose.msra.mxu0 0.0
    %1439 = vmatprep.subr.mxu0 0.0
    %1440 = vmatpush1.xpose.msra.mxu0 0.0
    %1441 = vmatprep.subr.mxu0 0.0
    %1442 = vmatpush1.xpose.msra.mxu0 0.0
    %1443 = vmatprep.subr.mxu0 0.0
    %1444 = vmatpush1.xpose.msra.mxu0 0.0
    %1445 = vmatprep.subr.mxu0 0.0
    %1446 = vmatpush1.xpose.msra.mxu0 0.0
    %1447 = vmatprep.subr.mxu0 0.0
    %1448 = vmatpush1.xpose.msra.mxu0 0.0
    %1449 = vmatprep.subr.mxu0 0.0
    %1450 = vmatpush1.xpose.msra.mxu0 0.0
    %1451 = vmatprep.subr.mxu0 0.0
    %1452 = vmatpush1.xpose.msra.mxu0 0.0
    %1453 = vmatprep.subr.mxu0 0.0
    %1454 = vmatpush1.xpose.msra.mxu0 0.0
    %1455 = vmatprep.mubr.f32.mxu0 0.0
    %1456 = vmatmul.mubr.f32.gmra.mrb[0].mxu0 %v1387
    %v1457 = vpop.f32.mrb[0].mxu0
    %v1458 = vadd.f32 0.0, %v1457
    %v1459 = vpop.f32.mrb[0].mxu0
    %1460 = vdwg.mxu0
    %1462 = vrot.lane.b32.xlu0 %v268, 104
    %v1463 = vpop.permute.xlu0 %1462
    %1464 = vrot.lane.b32.xlu0 %v268, 96
    %v1465 = vpop.permute.xlu0 %1464
    %v1466 = vsel %vm280, %v1463, 0
    %v1468 = vsel %vm280, %v1465, 0
    %1470 = vmatprep.subr.mxu0 0.0
    %1471 = vmatpush1.xpose.msra.mxu0 %v1468
    %1472 = vmatprep.subr.mxu0 0.0
    %1473 = vmatpush1.xpose.msra.mxu0 0.0
    %1474 = vmatprep.subr.mxu0 0.0
    %1475 = vmatpush1.xpose.msra.mxu0 0.0
    %1476 = vmatprep.subr.mxu0 0.0
    %1477 = vmatpush1.xpose.msra.mxu0 0.0
    %1478 = vmatprep.subr.mxu0 0.0
    %1479 = vmatpush1.xpose.msra.mxu0 0.0
    %1480 = vmatprep.subr.mxu0 0.0
    %1481 = vmatpush1.xpose.msra.mxu0 0.0
    %1482 = vmatprep.subr.mxu0 0.0
    %1483 = vmatpush1.xpose.msra.mxu0 0.0
    %1484 = vmatprep.subr.mxu0 0.0
    %1485 = vmatpush1.xpose.msra.mxu0 0.0
    %1486 = vmatprep.subr.mxu0 0.0
    %1487 = vmatpush1.xpose.msra.mxu0 0.0
    %1488 = vmatprep.subr.mxu0 0.0
    %1489 = vmatpush1.xpose.msra.mxu0 0.0
    %1490 = vmatprep.subr.mxu0 0.0
    %1491 = vmatpush1.xpose.msra.mxu0 0.0
    %1492 = vmatprep.subr.mxu0 0.0
    %1493 = vmatpush1.xpose.msra.mxu0 0.0
    %1494 = vmatprep.subr.mxu0 0.0
    %1495 = vmatpush1.xpose.msra.mxu0 0.0
    %1496 = vmatprep.subr.mxu0 0.0
    %1497 = vmatpush1.xpose.msra.mxu0 0.0
    %1498 = vmatprep.subr.mxu0 0.0
    %1499 = vmatpush1.xpose.msra.mxu0 0.0
    %1500 = vmatprep.subr.mxu0 0.0
    %1501 = vmatpush1.xpose.msra.mxu0 0.0
    %1502 = vmatprep.subr.mxu0 0.0
    %1503 = vmatpush1.xpose.msra.mxu0 0.0
    %1504 = vmatprep.subr.mxu0 0.0
    %1505 = vmatpush1.xpose.msra.mxu0 0.0
    %1506 = vmatprep.subr.mxu0 0.0
    %1507 = vmatpush1.xpose.msra.mxu0 0.0
    %1508 = vmatprep.subr.mxu0 0.0
    %1509 = vmatpush1.xpose.msra.mxu0 0.0
    %1510 = vmatprep.subr.mxu0 0.0
    %1511 = vmatpush1.xpose.msra.mxu0 0.0
    %1512 = vmatprep.subr.mxu0 0.0
    %1513 = vmatpush1.xpose.msra.mxu0 0.0
    %1514 = vmatprep.subr.mxu0 0.0
    %1515 = vmatpush1.xpose.msra.mxu0 0.0
    %1516 = vmatprep.subr.mxu0 0.0
    %1517 = vmatpush1.xpose.msra.mxu0 0.0
    %1518 = vmatprep.subr.mxu0 0.0
    %1519 = vmatpush1.xpose.msra.mxu0 0.0
    %1520 = vmatprep.subr.mxu0 0.0
    %1521 = vmatpush1.xpose.msra.mxu0 0.0
    %1522 = vmatprep.subr.mxu0 0.0
    %1523 = vmatpush1.xpose.msra.mxu0 0.0
    %1524 = vmatprep.subr.mxu0 0.0
    %1525 = vmatpush1.xpose.msra.mxu0 0.0
    %1526 = vmatprep.subr.mxu0 0.0
    %1527 = vmatpush1.xpose.msra.mxu0 0.0
    %1528 = vmatprep.subr.mxu0 0.0
    %1529 = vmatpush1.xpose.msra.mxu0 0.0
    %1530 = vmatprep.subr.mxu0 0.0
    %1531 = vmatpush1.xpose.msra.mxu0 0.0
    %1532 = vmatprep.subr.mxu0 0.0
    %1533 = vmatpush1.xpose.msra.mxu0 0.0
    %1534 = vmatprep.mubr.f32.mxu0 0.0
    %1535 = vmatmul.mubr.f32.gmra.mrb[0].mxu0 %v1466
    %v1536 = vpop.f32.mrb[0].mxu0
    %v1537 = vadd.f32 0.0, %v1536
    %v1538 = vpop.f32.mrb[0].mxu0
    %1539 = vdwg.mxu0
    %v1540 = vmul.f32 %v352, 0.5
    %v1541 = vmul.f32 %v431, 0.5
    %v1542 = vmul.f32 %v510, 0.5
    %v1543 = vmul.f32 %v589, 0.5
    %v1544 = vmul.f32 %v668, 0.5
    %v1545 = vmul.f32 %v747, 0.5
    %v1546 = vmul.f32 %v826, 0.5
    %v1547 = vmul.f32 %v905, 0.5
    %v1548 = vmul.f32 %v984, 0.5
    %v1549 = vmul.f32 %v1063, 0.5
    %v1550 = vmul.f32 %v1142, 0.5
    %v1551 = vmul.f32 %v1221, 0.5
    %v1552 = vmul.f32 %v1300, 0.5
    %v1553 = vmul.f32 %v1379, 0.5
    %v1554 = vmul.f32 %v1458, 0.5
    %v1555 = vmul.f32 %v1537, 0.5
    %vm1556 = vcmask 64512
    %v1557 = vsel %vm1556, %v1540, -inf
    %1558 = vmax.xlane.f32.xlu0 %v1557
    %v1559 = vpop.xlane.xlu0 %1558
    %v1560 = vsel %vm1556, %v1541, -inf
    %1561 = vmax.xlane.f32.xlu0 %v1560
    %v1562 = vpop.xlane.xlu0 %1561
    %v1563 = vsel %vm1556, %v1542, -inf
    %1564 = vmax.xlane.f32.xlu0 %v1563
    %v1565 = vpop.xlane.xlu0 %1564
    %v1566 = vsel %vm1556, %v1543, -inf
    %1567 = vmax.xlane.f32.xlu0 %v1566
    %v1568 = vpop.xlane.xlu0 %1567
    %v1569 = vsel %vm1556, %v1544, -inf
    %1570 = vmax.xlane.f32.xlu0 %v1569
    %v1571 = vpop.xlane.xlu0 %1570
    %v1572 = vsel %vm1556, %v1545, -inf
    %1573 = vmax.xlane.f32.xlu0 %v1572
    %v1574 = vpop.xlane.xlu0 %1573
    %v1575 = vsel %vm1556, %v1546, -inf
    %1576 = vmax.xlane.f32.xlu0 %v1575
    %v1577 = vpop.xlane.xlu0 %1576
    %v1578 = vsel %vm1556, %v1547, -inf
    %1579 = vmax.xlane.f32.xlu0 %v1578
    %v1580 = vpop.xlane.xlu0 %1579
    %v1581 = vsel %vm1556, %v1548, -inf
    %1582 = vmax.xlane.f32.xlu0 %v1581
    %v1583 = vpop.xlane.xlu0 %1582
    %v1584 = vsel %vm1556, %v1549, -inf
    %1585 = vmax.xlane.f32.xlu0 %v1584
    %v1586 = vpop.xlane.xlu0 %1585
    %v1587 = vsel %vm1556, %v1550, -inf
    %1588 = vmax.xlane.f32.xlu0 %v1587
    %v1589 = vpop.xlane.xlu0 %1588
    %v1590 = vsel %vm1556, %v1551, -inf
    %1591 = vmax.xlane.f32.xlu0 %v1590
    %v1592 = vpop.xlane.xlu0 %1591
    %v1593 = vsel %vm1556, %v1552, -inf
    %1594 = vmax.xlane.f32.xlu0 %v1593
    %v1595 = vpop.xlane.xlu0 %1594
    %v1596 = vsel %vm1556, %v1553, -inf
    %1597 = vmax.xlane.f32.xlu0 %v1596
    %v1598 = vpop.xlane.xlu0 %1597
    %v1599 = vsel %vm1556, %v1554, -inf
    %1600 = vmax.xlane.f32.xlu0 %v1599
    %v1601 = vpop.xlane.xlu0 %1600
    %v1602 = vsel %vm1556, %v1555, -inf
    %1603 = vmax.xlane.f32.xlu0 %v1602
    %v1604 = vpop.xlane.xlu0 %1603
    %v1605 = vsub.f32 %v1540, %v1559
    %v1606 = vsub.f32 %v1541, %v1562
    %v1607 = vsub.f32 %v1542, %v1565
    %v1608 = vsub.f32 %v1543, %v1568
    %v1609 = vsub.f32 %v1544, %v1571
    %v1610 = vsub.f32 %v1545, %v1574
    %v1611 = vsub.f32 %v1546, %v1577
    %v1612 = vsub.f32 %v1547, %v1580
    %v1613 = vsub.f32 %v1548, %v1583
    %v1614 = vsub.f32 %v1549, %v1586
    %v1615 = vsub.f32 %v1550, %v1589
    %v1616 = vsub.f32 %v1551, %v1592
    %v1617 = vsub.f32 %v1552, %v1595
    %v1618 = vsub.f32 %v1553, %v1598
    %v1619 = vsub.f32 %v1554, %v1601
    %v1620 = vsub.f32 %v1555, %v1604
    %v1621 = vmul.f32 %v1605, 1.442695
    %v1622 = vpow.pop %v1621
    %v1623 = vmul.f32 %v1606, 1.442695
    %v1624 = vpow.pop %v1623
    %v1625 = vmul.f32 %v1607, 1.442695
    %v1626 = vpow.pop %v1625
    %v1627 = vmul.f32 %v1608, 1.442695
    %v1628 = vpow.pop %v1627
    %v1629 = vmul.f32 %v1609, 1.442695
    %v1630 = vpow.pop %v1629
    %v1631 = vmul.f32 %v1610, 1.442695
    %v1632 = vpow.pop %v1631
    %v1633 = vmul.f32 %v1611, 1.442695
    %v1634 = vpow.pop %v1633
    %v1635 = vmul.f32 %v1612, 1.442695
    %v1636 = vpow.pop %v1635
    %v1637 = vmul.f32 %v1613, 1.442695
    %v1638 = vpow.pop %v1637
    %v1639 = vmul.f32 %v1614, 1.442695
    %v1640 = vpow.pop %v1639
    %v1641 = vmul.f32 %v1615, 1.442695
    %v1642 = vpow.pop %v1641
    %v1643 = vmul.f32 %v1616, 1.442695
    %v1644 = vpow.pop %v1643
    %v1645 = vmul.f32 %v1617, 1.442695
    %v1646 = vpow.pop %v1645
    %v1647 = vmul.f32 %v1618, 1.442695
    %v1648 = vpow.pop %v1647
    %v1649 = vmul.f32 %v1619, 1.442695
    %v1650 = vpow.pop %v1649
    %v1651 = vmul.f32 %v1620, 1.442695
    %v1652 = vpow.pop %v1651
    %v1653 = vsel %vm1556, %v1622, 0.0
    %1654 = vadd.xlane.f32.xlu0 %v1653
    %v1655 = vpop.xlane.xlu0 %1654
    %v1656 = vsel %vm1556, %v1624, 0.0
    %1657 = vadd.xlane.f32.xlu0 %v1656
    %v1658 = vpop.xlane.xlu0 %1657
    %v1659 = vsel %vm1556, %v1626, 0.0
    %1660 = vadd.xlane.f32.xlu0 %v1659
    %v1661 = vpop.xlane.xlu0 %1660
    %v1662 = vsel %vm1556, %v1628, 0.0
    %1663 = vadd.xlane.f32.xlu0 %v1662
    %v1664 = vpop.xlane.xlu0 %1663
    %v1665 = vsel %vm1556, %v1630, 0.0
    %1666 = vadd.xlane.f32.xlu0 %v1665
    %v1667 = vpop.xlane.xlu0 %1666
    %v1668 = vsel %vm1556, %v1632, 0.0
    %1669 = vadd.xlane.f32.xlu0 %v1668
    %v1670 = vpop.xlane.xlu0 %1669
    %v1671 = vsel %vm1556, %v1634, 0.0
    %1672 = vadd.xlane.f32.xlu0 %v1671
    %v1673 = vpop.xlane.xlu0 %1672
    %v1674 = vsel %vm1556, %v1636, 0.0
    %1675 = vadd.xlane.f32.xlu0 %v1674
    %v1676 = vpop.xlane.xlu0 %1675
    %v1677 = vsel %vm1556, %v1638, 0.0
    %1678 = vadd.xlane.f32.xlu0 %v1677
    %v1679 = vpop.xlane.xlu0 %1678
    %v1680 = vsel %vm1556, %v1640, 0.0
    %1681 = vadd.xlane.f32.xlu0 %v1680
    %v1682 = vpop.xlane.xlu0 %1681
    %v1683 = vsel %vm1556, %v1642, 0.0
    %1684 = vadd.xlane.f32.xlu0 %v1683
    %v1685 = vpop.xlane.xlu0 %1684
    %v1686 = vsel %vm1556, %v1644, 0.0
    %1687 = vadd.xlane.f32.xlu0 %v1686
    %v1688 = vpop.xlane.xlu0 %1687
    %v1689 = vsel %vm1556, %v1646, 0.0
    %1690 = vadd.xlane.f32.xlu0 %v1689
    %v1691 = vpop.xlane.xlu0 %1690
    %v1692 = vsel %vm1556, %v1648, 0.0
    %1693 = vadd.xlane.f32.xlu0 %v1692
    %v1694 = vpop.xlane.xlu0 %1693
    %v1695 = vsel %vm1556, %v1650, 0.0
    %1696 = vadd.xlane.f32.xlu0 %v1695
    %v1697 = vpop.xlane.xlu0 %1696
    %v1698 = vsel %vm1556, %v1652, 0.0
    %1699 = vadd.xlane.f32.xlu0 %v1698
    %v1700 = vpop.xlane.xlu0 %1699
    %v1701 = vrcp.pop %v1655
    %v1702 = vrcp.pop %v1658
    %v1703 = vrcp.pop %v1661
    %v1704 = vrcp.pop %v1664
    %v1705 = vrcp.pop %v1667
    %v1706 = vrcp.pop %v1670
    %v1707 = vrcp.pop %v1673
    %v1708 = vrcp.pop %v1676
    %v1709 = vrcp.pop %v1679
    %v1710 = vrcp.pop %v1682
    %v1711 = vrcp.pop %v1685
    %v1712 = vrcp.pop %v1688
    %v1713 = vrcp.pop %v1691
    %v1714 = vrcp.pop %v1694
    %v1715 = vrcp.pop %v1697
    %v1716 = vrcp.pop %v1700
    %v1717 = vmul.f32 %v1622, %v1701
    %v1718 = vmul.f32 %v1624, %v1702
    %v1719 = vmul.f32 %v1626, %v1703
    %v1720 = vmul.f32 %v1628, %v1704
    %v1721 = vmul.f32 %v1630, %v1705
    %v1722 = vmul.f32 %v1632, %v1706
    %v1723 = vmul.f32 %v1634, %v1707
    %v1724 = vmul.f32 %v1636, %v1708
    %v1725 = vmul.f32 %v1638, %v1709
    %v1726 = vmul.f32 %v1640, %v1710
    %v1727 = vmul.f32 %v1642, %v1711
    %v1728 = vmul.f32 %v1644, %v1712
    %v1729 = vmul.f32 %v1646, %v1713
    %v1730 = vmul.f32 %v1648, %v1714
    %v1731 = vmul.f32 %v1650, %v1715
    %v1732 = vmul.f32 %v1652, %v1716
    %1733 = vrot.lane.b32.xlu0 %v193, 88
    %v1734 = vpop.permute.xlu0 %1733
    %v1737 = vsel %vm1556, %v1717, 0
    %1739 = vmatprep.subr.mxu0 0.0
    %1740 = vmatpush1.msra.mxu0 %v1734
    %1741 = vmatprep.subr.mxu0 0.0
    %1742 = vmatpush1.msra.mxu0 0.0
    %1743 = vmatprep.subr.mxu0 0.0
    %1744 = vmatpush1.msra.mxu0 0.0
    %1745 = vmatprep.subr.mxu0 0.0
    %1746 = vmatpush1.msra.mxu0 0.0
    %1747 = vmatprep.subr.mxu0 0.0
    %1748 = vmatpush1.msra.mxu0 0.0
    %1749 = vmatprep.subr.mxu0 0.0
    %1750 = vmatpush1.msra.mxu0 0.0
    %1751 = vmatprep.subr.mxu0 0.0
    %1752 = vmatpush1.msra.mxu0 0.0
    %1753 = vmatprep.subr.mxu0 0.0
    %1754 = vmatpush1.msra.mxu0 0.0
    %1755 = vmatprep.subr.mxu0 0.0
    %1756 = vmatpush1.msra.mxu0 0.0
    %1757 = vmatprep.subr.mxu0 0.0
    %1758 = vmatpush1.msra.mxu0 0.0
    %1759 = vmatprep.subr.mxu0 0.0
    %1760 = vmatpush1.msra.mxu0 0.0
    %1761 = vmatprep.subr.mxu0 0.0
    %1762 = vmatpush1.msra.mxu0 0.0
    %1763 = vmatprep.subr.mxu0 0.0
    %1764 = vmatpush1.msra.mxu0 0.0
    %1765 = vmatprep.subr.mxu0 0.0
    %1766 = vmatpush1.msra.mxu0 0.0
    %1767 = vmatprep.subr.mxu0 0.0
    %1768 = vmatpush1.msra.mxu0 0.0
    %1769 = vmatprep.subr.mxu0 0.0
    %1770 = vmatpush1.msra.mxu0 0.0
    %1771 = vmatprep.subr.mxu0 0.0
    %1772 = vmatpush1.msra.mxu0 0.0
    %1773 = vmatprep.subr.mxu0 0.0
    %1774 = vmatpush1.msra.mxu0 0.0
    %1775 = vmatprep.subr.mxu0 0.0
    %1776 = vmatpush1.msra.mxu0 0.0
    %1777 = vmatprep.subr.mxu0 0.0
    %1778 = vmatpush1.msra.mxu0 0.0
    %1779 = vmatprep.subr.mxu0 0.0
    %1780 = vmatpush1.msra.mxu0 0.0
    %1781 = vmatprep.subr.mxu0 0.0
    %1782 = vmatpush1.msra.mxu0 0.0
    %1783 = vmatprep.subr.mxu0 0.0
    %1784 = vmatpush1.msra.mxu0 0.0
    %1785 = vmatprep.subr.mxu0 0.0
    %1786 = vmatpush1.msra.mxu0 0.0
    %1787 = vmatprep.subr.mxu0 0.0
    %1788 = vmatpush1.msra.mxu0 0.0
    %1789 = vmatprep.subr.mxu0 0.0
    %1790 = vmatpush1.msra.mxu0 0.0
    %1791 = vmatprep.subr.mxu0 0.0
    %1792 = vmatpush1.msra.mxu0 0.0
    %1793 = vmatprep.subr.mxu0 0.0
    %1794 = vmatpush1.msra.mxu0 0.0
    %1795 = vmatprep.subr.mxu0 0.0
    %1796 = vmatpush1.msra.mxu0 0.0
    %1797 = vmatprep.subr.mxu0 0.0
    %1798 = vmatpush1.msra.mxu0 0.0
    %1799 = vmatprep.subr.mxu0 0.0
    %1800 = vmatpush1.msra.mxu0 0.0
    %1801 = vmatprep.subr.mxu0 0.0
    %1802 = vmatpush1.msra.mxu0 0.0
    %1803 = vmatprep.mubr.f32.mxu0 0.0
    %1804 = vmatmul.mubr.f32.gmra.mrb[0].mxu0 %v1737
    %v1805 = vpop.f32.mrb[0].mxu0
    %v1806 = vadd.f32 0.0, %v1805
    %v1807 = vpop.f32.mrb[0].mxu0
    %1808 = vdwg.mxu0
    %1809 = vrot.lane.b32.xlu0 %v198, 88
    %v1810 = vpop.permute.xlu0 %1809
    %v1813 = vsel %vm1556, %v1718, 0
    %1815 = vmatprep.subr.mxu0 0.0
    %1816 = vmatpush1.msra.mxu0 %v1810
    %1817 = vmatprep.subr.mxu0 0.0
    %1818 = vmatpush1.msra.mxu0 0.0
    %1819 = vmatprep.subr.mxu0 0.0
    %1820 = vmatpush1.msra.mxu0 0.0
    %1821 = vmatprep.subr.mxu0 0.0
    %1822 = vmatpush1.msra.mxu0 0.0
    %1823 = vmatprep.subr.mxu0 0.0
    %1824 = vmatpush1.msra.mxu0 0.0
    %1825 = vmatprep.subr.mxu0 0.0
    %1826 = vmatpush1.msra.mxu0 0.0
    %1827 = vmatprep.subr.mxu0 0.0
    %1828 = vmatpush1.msra.mxu0 0.0
    %1829 = vmatprep.subr.mxu0 0.0
    %1830 = vmatpush1.msra.mxu0 0.0
    %1831 = vmatprep.subr.mxu0 0.0
    %1832 = vmatpush1.msra.mxu0 0.0
    %1833 = vmatprep.subr.mxu0 0.0
    %1834 = vmatpush1.msra.mxu0 0.0
    %1835 = vmatprep.subr.mxu0 0.0
    %1836 = vmatpush1.msra.mxu0 0.0
    %1837 = vmatprep.subr.mxu0 0.0
    %1838 = vmatpush1.msra.mxu0 0.0
    %1839 = vmatprep.subr.mxu0 0.0
    %1840 = vmatpush1.msra.mxu0 0.0
    %1841 = vmatprep.subr.mxu0 0.0
    %1842 = vmatpush1.msra.mxu0 0.0
    %1843 = vmatprep.subr.mxu0 0.0
    %1844 = vmatpush1.msra.mxu0 0.0
    %1845 = vmatprep.subr.mxu0 0.0
    %1846 = vmatpush1.msra.mxu0 0.0
    %1847 = vmatprep.subr.mxu0 0.0
    %1848 = vmatpush1.msra.mxu0 0.0
    %1849 = vmatprep.subr.mxu0 0.0
    %1850 = vmatpush1.msra.mxu0 0.0
    %1851 = vmatprep.subr.mxu0 0.0
    %1852 = vmatpush1.msra.mxu0 0.0
    %1853 = vmatprep.subr.mxu0 0.0
    %1854 = vmatpush1.msra.mxu0 0.0
    %1855 = vmatprep.subr.mxu0 0.0
    %1856 = vmatpush1.msra.mxu0 0.0
    %1857 = vmatprep.subr.mxu0 0.0
    %1858 = vmatpush1.msra.mxu0 0.0
    %1859 = vmatprep.subr.mxu0 0.0
    %1860 = vmatpush1.msra.mxu0 0.0
    %1861 = vmatprep.subr.mxu0 0.0
    %1862 = vmatpush1.msra.mxu0 0.0
    %1863 = vmatprep.subr.mxu0 0.0
    %1864 = vmatpush1.msra.mxu0 0.0
    %1865 = vmatprep.subr.mxu0 0.0
    %1866 = vmatpush1.msra.mxu0 0.0
    %1867 = vmatprep.subr.mxu0 0.0
    %1868 = vmatpush1.msra.mxu0 0.0
    %1869 = vmatprep.subr.mxu0 0.0
    %1870 = vmatpush1.msra.mxu0 0.0
    %1871 = vmatprep.subr.mxu0 0.0
    %1872 = vmatpush1.msra.mxu0 0.0
    %1873 = vmatprep.subr.mxu0 0.0
    %1874 = vmatpush1.msra.mxu0 0.0
    %1875 = vmatprep.subr.mxu0 0.0
    %1876 = vmatpush1.msra.mxu0 0.0
    %1877 = vmatprep.subr.mxu0 0.0
    %1878 = vmatpush1.msra.mxu0 0.0
    %1879 = vmatprep.mubr.f32.mxu0 0.0
    %1880 = vmatmul.mubr.f32.gmra.mrb[0].mxu0 %v1813
    %v1881 = vpop.f32.mrb[0].mxu0
    %v1882 = vadd.f32 0.0, %v1881
    %v1883 = vpop.f32.mrb[0].mxu0
    %1884 = vdwg.mxu0
    %1885 = vrot.lane.b32.xlu0 %v203, 88
    %v1886 = vpop.permute.xlu0 %1885
    %v1889 = vsel %vm1556, %v1719, 0
    %1891 = vmatprep.subr.mxu0 0.0
    %1892 = vmatpush1.msra.mxu0 %v1886
    %1893 = vmatprep.subr.mxu0 0.0
    %1894 = vmatpush1.msra.mxu0 0.0
    %1895 = vmatprep.subr.mxu0 0.0
    %1896 = vmatpush1.msra.mxu0 0.0
    %1897 = vmatprep.subr.mxu0 0.0
    %1898 = vmatpush1.msra.mxu0 0.0
    %1899 = vmatprep.subr.mxu0 0.0
    %1900 = vmatpush1.msra.mxu0 0.0
    %1901 = vmatprep.subr.mxu0 0.0
    %1902 = vmatpush1.msra.mxu0 0.0
    %1903 = vmatprep.subr.mxu0 0.0
    %1904 = vmatpush1.msra.mxu0 0.0
    %1905 = vmatprep.subr.mxu0 0.0
    %1906 = vmatpush1.msra.mxu0 0.0
    %1907 = vmatprep.subr.mxu0 0.0
    %1908 = vmatpush1.msra.mxu0 0.0
    %1909 = vmatprep.subr.mxu0 0.0
    %1910 = vmatpush1.msra.mxu0 0.0
    %1911 = vmatprep.subr.mxu0 0.0
    %1912 = vmatpush1.msra.mxu0 0.0
    %1913 = vmatprep.subr.mxu0 0.0
    %1914 = vmatpush1.msra.mxu0 0.0
    %1915 = vmatprep.subr.mxu0 0.0
    %1916 = vmatpush1.msra.mxu0 0.0
    %1917 = vmatprep.subr.mxu0 0.0
    %1918 = vmatpush1.msra.mxu0 0.0
    %1919 = vmatprep.subr.mxu0 0.0
    %1920 = vmatpush1.msra.mxu0 0.0
    %1921 = vmatprep.subr.mxu0 0.0
    %1922 = vmatpush1.msra.mxu0 0.0
    %1923 = vmatprep.subr.mxu0 0.0
    %1924 = vmatpush1.msra.mxu0 0.0
    %1925 = vmatprep.subr.mxu0 0.0
    %1926 = vmatpush1.msra.mxu0 0.0
    %1927 = vmatprep.subr.mxu0 0.0
    %1928 = vmatpush1.msra.mxu0 0.0
    %1929 = vmatprep.subr.mxu0 0.0
    %1930 = vmatpush1.msra.mxu0 0.0
    %1931 = vmatprep.subr.mxu0 0.0
    %1932 = vmatpush1.msra.mxu0 0.0
    %1933 = vmatprep.subr.mxu0 0.0
    %1934 = vmatpush1.msra.mxu0 0.0
    %1935 = vmatprep.subr.mxu0 0.0
    %1936 = vmatpush1.msra.mxu0 0.0
    %1937 = vmatprep.subr.mxu0 0.0
    %1938 = vmatpush1.msra.mxu0 0.0
    %1939 = vmatprep.subr.mxu0 0.0
    %1940 = vmatpush1.msra.mxu0 0.0
    %1941 = vmatprep.subr.mxu0 0.0
    %1942 = vmatpush1.msra.mxu0 0.0
    %1943 = vmatprep.subr.mxu0 0.0
    %1944 = vmatpush1.msra.mxu0 0.0
    %1945 = vmatprep.subr.mxu0 0.0
    %1946 = vmatpush1.msra.mxu0 0.0
    %1947 = vmatprep.subr.mxu0 0.0
    %1948 = vmatpush1.msra.mxu0 0.0
    %1949 = vmatprep.subr.mxu0 0.0
    %1950 = vmatpush1.msra.mxu0 0.0
    %1951 = vmatprep.subr.mxu0 0.0
    %1952 = vmatpush1.msra.mxu0 0.0
    %1953 = vmatprep.subr.mxu0 0.0
    %1954 = vmatpush1.msra.mxu0 0.0
    %1955 = vmatprep.mubr.f32.mxu0 0.0
    %1956 = vmatmul.mubr.f32.gmra.mrb[0].mxu0 %v1889
    %v1957 = vpop.f32.mrb[0].mxu0
    %v1958 = vadd.f32 0.0, %v1957
    %v1959 = vpop.f32.mrb[0].mxu0
    %1960 = vdwg.mxu0
    %1961 = vrot.lane.b32.xlu0 %v208, 88
    %v1962 = vpop.permute.xlu0 %1961
    %v1965 = vsel %vm1556, %v1720, 0
    %1967 = vmatprep.subr.mxu0 0.0
    %1968 = vmatpush1.msra.mxu0 %v1962
    %1969 = vmatprep.subr.mxu0 0.0
    %1970 = vmatpush1.msra.mxu0 0.0
    %1971 = vmatprep.subr.mxu0 0.0
    %1972 = vmatpush1.msra.mxu0 0.0
    %1973 = vmatprep.subr.mxu0 0.0
    %1974 = vmatpush1.msra.mxu0 0.0
    %1975 = vmatprep.subr.mxu0 0.0
    %1976 = vmatpush1.msra.mxu0 0.0
    %1977 = vmatprep.subr.mxu0 0.0
    %1978 = vmatpush1.msra.mxu0 0.0
    %1979 = vmatprep.subr.mxu0 0.0
    %1980 = vmatpush1.msra.mxu0 0.0
    %1981 = vmatprep.subr.mxu0 0.0
    %1982 = vmatpush1.msra.mxu0 0.0
    %1983 = vmatprep.subr.mxu0 0.0
    %1984 = vmatpush1.msra.mxu0 0.0
    %1985 = vmatprep.subr.mxu0 0.0
    %1986 = vmatpush1.msra.mxu0 0.0
    %1987 = vmatprep.subr.mxu0 0.0
    %1988 = vmatpush1.msra.mxu0 0.0
    %1989 = vmatprep.subr.mxu0 0.0
    %1990 = vmatpush1.msra.mxu0 0.0
    %1991 = vmatprep.subr.mxu0 0.0
    %1992 = vmatpush1.msra.mxu0 0.0
    %1993 = vmatprep.subr.mxu0 0.0
    %1994 = vmatpush1.msra.mxu0 0.0
    %1995 = vmatprep.subr.mxu0 0.0
    %1996 = vmatpush1.msra.mxu0 0.0
    %1997 = vmatprep.subr.mxu0 0.0
    %1998 = vmatpush1.msra.mxu0 0.0
    %1999 = vmatprep.subr.mxu0 0.0
    %2000 = vmatpush1.msra.mxu0 0.0
    %2001 = vmatprep.subr.mxu0 0.0
    %2002 = vmatpush1.msra.mxu0 0.0
    %2003 = vmatprep.subr.mxu0 0.0
    %2004 = vmatpush1.msra.mxu0 0.0
    %2005 = vmatprep.subr.mxu0 0.0
    %2006 = vmatpush1.msra.mxu0 0.0
    %2007 = vmatprep.subr.mxu0 0.0
    %2008 = vmatpush1.msra.mxu0 0.0
    %2009 = vmatprep.subr.mxu0 0.0
    %2010 = vmatpush1.msra.mxu0 0.0
    %2011 = vmatprep.subr.mxu0 0.0
    %2012 = vmatpush1.msra.mxu0 0.0
    %2013 = vmatprep.subr.mxu0 0.0
    %2014 = vmatpush1.msra.mxu0 0.0
    %2015 = vmatprep.subr.mxu0 0.0
    %2016 = vmatpush1.msra.mxu0 0.0
    %2017 = vmatprep.subr.mxu0 0.0
    %2018 = vmatpush1.msra.mxu0 0.0
    %2019 = vmatprep.subr.mxu0 0.0
    %2020 = vmatpush1.msra.mxu0 0.0
    %2021 = vmatprep.subr.mxu0 0.0
    %2022 = vmatpush1.msra.mxu0 0.0
    %2023 = vmatprep.subr.mxu0 0.0
    %2024 = vmatpush1.msra.mxu0 0.0
    %2025 = vmatprep.subr.mxu0 0.0
    %2026 = vmatpush1.msra.mxu0 0.0
    %2027 = vmatprep.subr.mxu0 0.0
    %2028 = vmatpush1.msra.mxu0 0.0
    %2029 = vmatprep.subr.mxu0 0.0
    %2030 = vmatpush1.msra.mxu0 0.0
    %2031 = vmatprep.mubr.f32.mxu0 0.0
    %2032 = vmatmul.mubr.f32.gmra.mrb[0].mxu0 %v1965
    %v2033 = vpop.f32.mrb[0].mxu0
    %v2034 = vadd.f32 0.0, %v2033
    %v2035 = vpop.f32.mrb[0].mxu0
    %2036 = vdwg.mxu0
    %2037 = vrot.lane.b32.xlu0 %v213, 88
    %v2038 = vpop.permute.xlu0 %2037
    %v2041 = vsel %vm1556, %v1721, 0
    %2043 = vmatprep.subr.mxu0 0.0
    %2044 = vmatpush1.msra.mxu0 %v2038
    %2045 = vmatprep.subr.mxu0 0.0
    %2046 = vmatpush1.msra.mxu0 0.0
    %2047 = vmatprep.subr.mxu0 0.0
    %2048 = vmatpush1.msra.mxu0 0.0
    %2049 = vmatprep.subr.mxu0 0.0
    %2050 = vmatpush1.msra.mxu0 0.0
    %2051 = vmatprep.subr.mxu0 0.0
    %2052 = vmatpush1.msra.mxu0 0.0
    %2053 = vmatprep.subr.mxu0 0.0
    %2054 = vmatpush1.msra.mxu0 0.0
    %2055 = vmatprep.subr.mxu0 0.0
    %2056 = vmatpush1.msra.mxu0 0.0
    %2057 = vmatprep.subr.mxu0 0.0
    %2058 = vmatpush1.msra.mxu0 0.0
    %2059 = vmatprep.subr.mxu0 0.0
    %2060 = vmatpush1.msra.mxu0 0.0
    %2061 = vmatprep.subr.mxu0 0.0
    %2062 = vmatpush1.msra.mxu0 0.0
    %2063 = vmatprep.subr.mxu0 0.0
    %2064 = vmatpush1.msra.mxu0 0.0
    %2065 = vmatprep.subr.mxu0 0.0
    %2066 = vmatpush1.msra.mxu0 0.0
    %2067 = vmatprep.subr.mxu0 0.0
    %2068 = vmatpush1.msra.mxu0 0.0
    %2069 = vmatprep.subr.mxu0 0.0
    %2070 = vmatpush1.msra.mxu0 0.0
    %2071 = vmatprep.subr.mxu0 0.0
    %2072 = vmatpush1.msra.mxu0 0.0
    %2073 = vmatprep.subr.mxu0 0.0
    %2074 = vmatpush1.msra.mxu0 0.0
    %2075 = vmatprep.subr.mxu0 0.0
    %2076 = vmatpush1.msra.mxu0 0.0
    %2077 = vmatprep.subr.mxu0 0.0
    %2078 = vmatpush1.msra.mxu0 0.0
    %2079 = vmatprep.subr.mxu0 0.0
    %2080 = vmatpush1.msra.mxu0 0.0
    %2081 = vmatprep.subr.mxu0 0.0
    %2082 = vmatpush1.msra.mxu0 0.0
    %2083 = vmatprep.subr.mxu0 0.0
    %2084 = vmatpush1.msra.mxu0 0.0
    %2085 = vmatprep.subr.mxu0 0.0
    %2086 = vmatpush1.msra.mxu0 0.0
    %2087 = vmatprep.subr.mxu0 0.0
    %2088 = vmatpush1.msra.mxu0 0.0
    %2089 = vmatprep.subr.mxu0 0.0
    %2090 = vmatpush1.msra.mxu0 0.0
    %2091 = vmatprep.subr.mxu0 0.0
    %2092 = vmatpush1.msra.mxu0 0.0
    %2093 = vmatprep.subr.mxu0 0.0
    %2094 = vmatpush1.msra.mxu0 0.0
    %2095 = vmatprep.subr.mxu0 0.0
    %2096 = vmatpush1.msra.mxu0 0.0
    %2097 = vmatprep.subr.mxu0 0.0
    %2098 = vmatpush1.msra.mxu0 0.0
    %2099 = vmatprep.subr.mxu0 0.0
    %2100 = vmatpush1.msra.mxu0 0.0
    %2101 = vmatprep.subr.mxu0 0.0
    %2102 = vmatpush1.msra.mxu0 0.0
    %2103 = vmatprep.subr.mxu0 0.0
    %2104 = vmatpush1.msra.mxu0 0.0
    %2105 = vmatprep.subr.mxu0 0.0
    %2106 = vmatpush1.msra.mxu0 0.0
    %2107 = vmatprep.mubr.f32.mxu0 0.0
    %2108 = vmatmul.mubr.f32.gmra.mrb[0].mxu0 %v2041
    %v2109 = vpop.f32.mrb[0].mxu0
    %v2110 = vadd.f32 0.0, %v2109
    %v2111 = vpop.f32.mrb[0].mxu0
    %2112 = vdwg.mxu0
    %2113 = vrot.lane.b32.xlu0 %v218, 88
    %v2114 = vpop.permute.xlu0 %2113
    %v2117 = vsel %vm1556, %v1722, 0
    %2119 = vmatprep.subr.mxu0 0.0
    %2120 = vmatpush1.msra.mxu0 %v2114
    %2121 = vmatprep.subr.mxu0 0.0
    %2122 = vmatpush1.msra.mxu0 0.0
    %2123 = vmatprep.subr.mxu0 0.0
    %2124 = vmatpush1.msra.mxu0 0.0
    %2125 = vmatprep.subr.mxu0 0.0
    %2126 = vmatpush1.msra.mxu0 0.0
    %2127 = vmatprep.subr.mxu0 0.0
    %2128 = vmatpush1.msra.mxu0 0.0
    %2129 = vmatprep.subr.mxu0 0.0
    %2130 = vmatpush1.msra.mxu0 0.0
    %2131 = vmatprep.subr.mxu0 0.0
    %2132 = vmatpush1.msra.mxu0 0.0
    %2133 = vmatprep.subr.mxu0 0.0
    %2134 = vmatpush1.msra.mxu0 0.0
    %2135 = vmatprep.subr.mxu0 0.0
    %2136 = vmatpush1.msra.mxu0 0.0
    %2137 = vmatprep.subr.mxu0 0.0
    %2138 = vmatpush1.msra.mxu0 0.0
    %2139 = vmatprep.subr.mxu0 0.0
    %2140 = vmatpush1.msra.mxu0 0.0
    %2141 = vmatprep.subr.mxu0 0.0
    %2142 = vmatpush1.msra.mxu0 0.0
    %2143 = vmatprep.subr.mxu0 0.0
    %2144 = vmatpush1.msra.mxu0 0.0
    %2145 = vmatprep.subr.mxu0 0.0
    %2146 = vmatpush1.msra.mxu0 0.0
    %2147 = vmatprep.subr.mxu0 0.0
    %2148 = vmatpush1.msra.mxu0 0.0
    %2149 = vmatprep.subr.mxu0 0.0
    %2150 = vmatpush1.msra.mxu0 0.0
    %2151 = vmatprep.subr.mxu0 0.0
    %2152 = vmatpush1.msra.mxu0 0.0
    %2153 = vmatprep.subr.mxu0 0.0
    %2154 = vmatpush1.msra.mxu0 0.0
    %2155 = vmatprep.subr.mxu0 0.0
    %2156 = vmatpush1.msra.mxu0 0.0
    %2157 = vmatprep.subr.mxu0 0.0
    %2158 = vmatpush1.msra.mxu0 0.0
    %2159 = vmatprep.subr.mxu0 0.0
    %2160 = vmatpush1.msra.mxu0 0.0
    %2161 = vmatprep.subr.mxu0 0.0
    %2162 = vmatpush1.msra.mxu0 0.0
    %2163 = vmatprep.subr.mxu0 0.0
    %2164 = vmatpush1.msra.mxu0 0.0
    %2165 = vmatprep.subr.mxu0 0.0
    %2166 = vmatpush1.msra.mxu0 0.0
    %2167 = vmatprep.subr.mxu0 0.0
    %2168 = vmatpush1.msra.mxu0 0.0
    %2169 = vmatprep.subr.mxu0 0.0
    %2170 = vmatpush1.msra.mxu0 0.0
    %2171 = vmatprep.subr.mxu0 0.0
    %2172 = vmatpush1.msra.mxu0 0.0
    %2173 = vmatprep.subr.mxu0 0.0
    %2174 = vmatpush1.msra.mxu0 0.0
    %2175 = vmatprep.subr.mxu0 0.0
    %2176 = vmatpush1.msra.mxu0 0.0
    %2177 = vmatprep.subr.mxu0 0.0
    %2178 = vmatpush1.msra.mxu0 0.0
    %2179 = vmatprep.subr.mxu0 0.0
    %2180 = vmatpush1.msra.mxu0 0.0
    %2181 = vmatprep.subr.mxu0 0.0
    %2182 = vmatpush1.msra.mxu0 0.0
    %2183 = vmatprep.mubr.f32.mxu0 0.0
    %2184 = vmatmul.mubr.f32.gmra.mrb[0].mxu0 %v2117
    %v2185 = vpop.f32.mrb[0].mxu0
    %v2186 = vadd.f32 0.0, %v2185
    %v2187 = vpop.f32.mrb[0].mxu0
    %2188 = vdwg.mxu0
    %2189 = vrot.lane.b32.xlu0 %v223, 88
    %v2190 = vpop.permute.xlu0 %2189
    %v2193 = vsel %vm1556, %v1723, 0
    %2195 = vmatprep.subr.mxu0 0.0
    %2196 = vmatpush1.msra.mxu0 %v2190
    %2197 = vmatprep.subr.mxu0 0.0
    %2198 = vmatpush1.msra.mxu0 0.0
    %2199 = vmatprep.subr.mxu0 0.0
    %2200 = vmatpush1.msra.mxu0 0.0
    %2201 = vmatprep.subr.mxu0 0.0
    %2202 = vmatpush1.msra.mxu0 0.0
    %2203 = vmatprep.subr.mxu0 0.0
    %2204 = vmatpush1.msra.mxu0 0.0
    %2205 = vmatprep.subr.mxu0 0.0
    %2206 = vmatpush1.msra.mxu0 0.0
    %2207 = vmatprep.subr.mxu0 0.0
    %2208 = vmatpush1.msra.mxu0 0.0
    %2209 = vmatprep.subr.mxu0 0.0
    %2210 = vmatpush1.msra.mxu0 0.0
    %2211 = vmatprep.subr.mxu0 0.0
    %2212 = vmatpush1.msra.mxu0 0.0
    %2213 = vmatprep.subr.mxu0 0.0
    %2214 = vmatpush1.msra.mxu0 0.0
    %2215 = vmatprep.subr.mxu0 0.0
    %2216 = vmatpush1.msra.mxu0 0.0
    %2217 = vmatprep.subr.mxu0 0.0
    %2218 = vmatpush1.msra.mxu0 0.0
    %2219 = vmatprep.subr.mxu0 0.0
    %2220 = vmatpush1.msra.mxu0 0.0
    %2221 = vmatprep.subr.mxu0 0.0
    %2222 = vmatpush1.msra.mxu0 0.0
    %2223 = vmatprep.subr.mxu0 0.0
    %2224 = vmatpush1.msra.mxu0 0.0
    %2225 = vmatprep.subr.mxu0 0.0
    %2226 = vmatpush1.msra.mxu0 0.0
    %2227 = vmatprep.subr.mxu0 0.0
    %2228 = vmatpush1.msra.mxu0 0.0
    %2229 = vmatprep.subr.mxu0 0.0
    %2230 = vmatpush1.msra.mxu0 0.0
    %2231 = vmatprep.subr.mxu0 0.0
    %2232 = vmatpush1.msra.mxu0 0.0
    %2233 = vmatprep.subr.mxu0 0.0
    %2234 = vmatpush1.msra.mxu0 0.0
    %2235 = vmatprep.subr.mxu0 0.0
    %2236 = vmatpush1.msra.mxu0 0.0
    %2237 = vmatprep.subr.mxu0 0.0
    %2238 = vmatpush1.msra.mxu0 0.0
    %2239 = vmatprep.subr.mxu0 0.0
    %2240 = vmatpush1.msra.mxu0 0.0
    %2241 = vmatprep.subr.mxu0 0.0
    %2242 = vmatpush1.msra.mxu0 0.0
    %2243 = vmatprep.subr.mxu0 0.0
    %2244 = vmatpush1.msra.mxu0 0.0
    %2245 = vmatprep.subr.mxu0 0.0
    %2246 = vmatpush1.msra.mxu0 0.0
    %2247 = vmatprep.subr.mxu0 0.0
    %2248 = vmatpush1.msra.mxu0 0.0
    %2249 = vmatprep.subr.mxu0 0.0
    %2250 = vmatpush1.msra.mxu0 0.0
    %2251 = vmatprep.subr.mxu0 0.0
    %2252 = vmatpush1.msra.mxu0 0.0
    %2253 = vmatprep.subr.mxu0 0.0
    %2254 = vmatpush1.msra.mxu0 0.0
    %2255 = vmatprep.subr.mxu0 0.0
    %2256 = vmatpush1.msra.mxu0 0.0
    %2257 = vmatprep.subr.mxu0 0.0
    %2258 = vmatpush1.msra.mxu0 0.0
    %2259 = vmatprep.mubr.f32.mxu0 0.0
    %2260 = vmatmul.mubr.f32.gmra.mrb[0].mxu0 %v2193
    %v2261 = vpop.f32.mrb[0].mxu0
    %v2262 = vadd.f32 0.0, %v2261
    %v2263 = vpop.f32.mrb[0].mxu0
    %2264 = vdwg.mxu0
    %2265 = vrot.lane.b32.xlu0 %v228, 88
    %v2266 = vpop.permute.xlu0 %2265
    %v2269 = vsel %vm1556, %v1724, 0
    %2271 = vmatprep.subr.mxu0 0.0
    %2272 = vmatpush1.msra.mxu0 %v2266
    %2273 = vmatprep.subr.mxu0 0.0
    %2274 = vmatpush1.msra.mxu0 0.0
    %2275 = vmatprep.subr.mxu0 0.0
    %2276 = vmatpush1.msra.mxu0 0.0
    %2277 = vmatprep.subr.mxu0 0.0
    %2278 = vmatpush1.msra.mxu0 0.0
    %2279 = vmatprep.subr.mxu0 0.0
    %2280 = vmatpush1.msra.mxu0 0.0
    %2281 = vmatprep.subr.mxu0 0.0
    %2282 = vmatpush1.msra.mxu0 0.0
    %2283 = vmatprep.subr.mxu0 0.0
    %2284 = vmatpush1.msra.mxu0 0.0
    %2285 = vmatprep.subr.mxu0 0.0
    %2286 = vmatpush1.msra.mxu0 0.0
    %2287 = vmatprep.subr.mxu0 0.0
    %2288 = vmatpush1.msra.mxu0 0.0
    %2289 = vmatprep.subr.mxu0 0.0
    %2290 = vmatpush1.msra.mxu0 0.0
    %2291 = vmatprep.subr.mxu0 0.0
    %2292 = vmatpush1.msra.mxu0 0.0
    %2293 = vmatprep.subr.mxu0 0.0
    %2294 = vmatpush1.msra.mxu0 0.0
    %2295 = vmatprep.subr.mxu0 0.0
    %2296 = vmatpush1.msra.mxu0 0.0
    %2297 = vmatprep.subr.mxu0 0.0
    %2298 = vmatpush1.msra.mxu0 0.0
    %2299 = vmatprep.subr.mxu0 0.0
    %2300 = vmatpush1.msra.mxu0 0.0
    %2301 = vmatprep.subr.mxu0 0.0
    %2302 = vmatpush1.msra.mxu0 0.0
    %2303 = vmatprep.subr.mxu0 0.0
    %2304 = vmatpush1.msra.mxu0 0.0
    %2305 = vmatprep.subr.mxu0 0.0
    %2306 = vmatpush1.msra.mxu0 0.0
    %2307 = vmatprep.subr.mxu0 0.0
    %2308 = vmatpush1.msra.mxu0 0.0
    %2309 = vmatprep.subr.mxu0 0.0
    %2310 = vmatpush1.msra.mxu0 0.0
    %2311 = vmatprep.subr.mxu0 0.0
    %2312 = vmatpush1.msra.mxu0 0.0
    %2313 = vmatprep.subr.mxu0 0.0
    %2314 = vmatpush1.msra.mxu0 0.0
    %2315 = vmatprep.subr.mxu0 0.0
    %2316 = vmatpush1.msra.mxu0 0.0
    %2317 = vmatprep.subr.mxu0 0.0
    %2318 = vmatpush1.msra.mxu0 0.0
    %2319 = vmatprep.subr.mxu0 0.0
    %2320 = vmatpush1.msra.mxu0 0.0
    %2321 = vmatprep.subr.mxu0 0.0
    %2322 = vmatpush1.msra.mxu0 0.0
    %2323 = vmatprep.subr.mxu0 0.0
    %2324 = vmatpush1.msra.mxu0 0.0
    %2325 = vmatprep.subr.mxu0 0.0
    %2326 = vmatpush1.msra.mxu0 0.0
    %2327 = vmatprep.subr.mxu0 0.0
    %2328 = vmatpush1.msra.mxu0 0.0
    %2329 = vmatprep.subr.mxu0 0.0
    %2330 = vmatpush1.msra.mxu0 0.0
    %2331 = vmatprep.subr.mxu0 0.0
    %2332 = vmatpush1.msra.mxu0 0.0
    %2333 = vmatprep.subr.mxu0 0.0
    %2334 = vmatpush1.msra.mxu0 0.0
    %2335 = vmatprep.mubr.f32.mxu0 0.0
    %2336 = vmatmul.mubr.f32.gmra.mrb[0].mxu0 %v2269
    %v2337 = vpop.f32.mrb[0].mxu0
    %v2338 = vadd.f32 0.0, %v2337
    %v2339 = vpop.f32.mrb[0].mxu0
    %2340 = vdwg.mxu0
    %2341 = vrot.lane.b32.xlu0 %v233, 88
    %v2342 = vpop.permute.xlu0 %2341
    %v2345 = vsel %vm1556, %v1725, 0
    %2347 = vmatprep.subr.mxu0 0.0
    %2348 = vmatpush1.msra.mxu0 %v2342
    %2349 = vmatprep.subr.mxu0 0.0
    %2350 = vmatpush1.msra.mxu0 0.0
    %2351 = vmatprep.subr.mxu0 0.0
    %2352 = vmatpush1.msra.mxu0 0.0
    %2353 = vmatprep.subr.mxu0 0.0
    %2354 = vmatpush1.msra.mxu0 0.0
    %2355 = vmatprep.subr.mxu0 0.0
    %2356 = vmatpush1.msra.mxu0 0.0
    %2357 = vmatprep.subr.mxu0 0.0
    %2358 = vmatpush1.msra.mxu0 0.0
    %2359 = vmatprep.subr.mxu0 0.0
    %2360 = vmatpush1.msra.mxu0 0.0
    %2361 = vmatprep.subr.mxu0 0.0
    %2362 = vmatpush1.msra.mxu0 0.0
    %2363 = vmatprep.subr.mxu0 0.0
    %2364 = vmatpush1.msra.mxu0 0.0
    %2365 = vmatprep.subr.mxu0 0.0
    %2366 = vmatpush1.msra.mxu0 0.0
    %2367 = vmatprep.subr.mxu0 0.0
    %2368 = vmatpush1.msra.mxu0 0.0
    %2369 = vmatprep.subr.mxu0 0.0
    %2370 = vmatpush1.msra.mxu0 0.0
    %2371 = vmatprep.subr.mxu0 0.0
    %2372 = vmatpush1.msra.mxu0 0.0
    %2373 = vmatprep.subr.mxu0 0.0
    %2374 = vmatpush1.msra.mxu0 0.0
    %2375 = vmatprep.subr.mxu0 0.0
    %2376 = vmatpush1.msra.mxu0 0.0
    %2377 = vmatprep.subr.mxu0 0.0
    %2378 = vmatpush1.msra.mxu0 0.0
    %2379 = vmatprep.subr.mxu0 0.0
    %2380 = vmatpush1.msra.mxu0 0.0
    %2381 = vmatprep.subr.mxu0 0.0
    %2382 = vmatpush1.msra.mxu0 0.0
    %2383 = vmatprep.subr.mxu0 0.0
    %2384 = vmatpush1.msra.mxu0 0.0
    %2385 = vmatprep.subr.mxu0 0.0
    %2386 = vmatpush1.msra.mxu0 0.0
    %2387 = vmatprep.subr.mxu0 0.0
    %2388 = vmatpush1.msra.mxu0 0.0
    %2389 = vmatprep.subr.mxu0 0.0
    %2390 = vmatpush1.msra.mxu0 0.0
    %2391 = vmatprep.subr.mxu0 0.0
    %2392 = vmatpush1.msra.mxu0 0.0
    %2393 = vmatprep.subr.mxu0 0.0
    %2394 = vmatpush1.msra.mxu0 0.0
    %2395 = vmatprep.subr.mxu0 0.0
    %2396 = vmatpush1.msra.mxu0 0.0
    %2397 = vmatprep.subr.mxu0 0.0
    %2398 = vmatpush1.msra.mxu0 0.0
    %2399 = vmatprep.subr.mxu0 0.0
    %2400 = vmatpush1.msra.mxu0 0.0
    %2401 = vmatprep.subr.mxu0 0.0
    %2402 = vmatpush1.msra.mxu0 0.0
    %2403 = vmatprep.subr.mxu0 0.0
    %2404 = vmatpush1.msra.mxu0 0.0
    %2405 = vmatprep.subr.mxu0 0.0
    %2406 = vmatpush1.msra.mxu0 0.0
    %2407 = vmatprep.subr.mxu0 0.0
    %2408 = vmatpush1.msra.mxu0 0.0
    %2409 = vmatprep.subr.mxu0 0.0
    %2410 = vmatpush1.msra.mxu0 0.0
    %2411 = vmatprep.mubr.f32.mxu0 0.0
    %2412 = vmatmul.mubr.f32.gmra.mrb[0].mxu0 %v2345
    %v2413 = vpop.f32.mrb[0].mxu0
    %v2414 = vadd.f32 0.0, %v2413
    %v2415 = vpop.f32.mrb[0].mxu0
    %2416 = vdwg.mxu0
    %2417 = vrot.lane.b32.xlu0 %v238, 88
    %v2418 = vpop.permute.xlu0 %2417
    %v2421 = vsel %vm1556, %v1726, 0
    %2423 = vmatprep.subr.mxu0 0.0
    %2424 = vmatpush1.msra.mxu0 %v2418
    %2425 = vmatprep.subr.mxu0 0.0
    %2426 = vmatpush1.msra.mxu0 0.0
    %2427 = vmatprep.subr.mxu0 0.0
    %2428 = vmatpush1.msra.mxu0 0.0
    %2429 = vmatprep.subr.mxu0 0.0
    %2430 = vmatpush1.msra.mxu0 0.0
    %2431 = vmatprep.subr.mxu0 0.0
    %2432 = vmatpush1.msra.mxu0 0.0
    %2433 = vmatprep.subr.mxu0 0.0
    %2434 = vmatpush1.msra.mxu0 0.0
    %2435 = vmatprep.subr.mxu0 0.0
    %2436 = vmatpush1.msra.mxu0 0.0
    %2437 = vmatprep.subr.mxu0 0.0
    %2438 = vmatpush1.msra.mxu0 0.0
    %2439 = vmatprep.subr.mxu0 0.0
    %2440 = vmatpush1.msra.mxu0 0.0
    %2441 = vmatprep.subr.mxu0 0.0
    %2442 = vmatpush1.msra.mxu0 0.0
    %2443 = vmatprep.subr.mxu0 0.0
    %2444 = vmatpush1.msra.mxu0 0.0
    %2445 = vmatprep.subr.mxu0 0.0
    %2446 = vmatpush1.msra.mxu0 0.0
    %2447 = vmatprep.subr.mxu0 0.0
    %2448 = vmatpush1.msra.mxu0 0.0
    %2449 = vmatprep.subr.mxu0 0.0
    %2450 = vmatpush1.msra.mxu0 0.0
    %2451 = vmatprep.subr.mxu0 0.0
    %2452 = vmatpush1.msra.mxu0 0.0
    %2453 = vmatprep.subr.mxu0 0.0
    %2454 = vmatpush1.msra.mxu0 0.0
    %2455 = vmatprep.subr.mxu0 0.0
    %2456 = vmatpush1.msra.mxu0 0.0
    %2457 = vmatprep.subr.mxu0 0.0
    %2458 = vmatpush1.msra.mxu0 0.0
    %2459 = vmatprep.subr.mxu0 0.0
    %2460 = vmatpush1.msra.mxu0 0.0
    %2461 = vmatprep.subr.mxu0 0.0
    %2462 = vmatpush1.msra.mxu0 0.0
    %2463 = vmatprep.subr.mxu0 0.0
    %2464 = vmatpush1.msra.mxu0 0.0
    %2465 = vmatprep.subr.mxu0 0.0
    %2466 = vmatpush1.msra.mxu0 0.0
    %2467 = vmatprep.subr.mxu0 0.0
    %2468 = vmatpush1.msra.mxu0 0.0
    %2469 = vmatprep.subr.mxu0 0.0
    %2470 = vmatpush1.msra.mxu0 0.0
    %2471 = vmatprep.subr.mxu0 0.0
    %2472 = vmatpush1.msra.mxu0 0.0
    %2473 = vmatprep.subr.mxu0 0.0
    %2474 = vmatpush1.msra.mxu0 0.0
    %2475 = vmatprep.subr.mxu0 0.0
    %2476 = vmatpush1.msra.mxu0 0.0
    %2477 = vmatprep.subr.mxu0 0.0
    %2478 = vmatpush1.msra.mxu0 0.0
    %2479 = vmatprep.subr.mxu0 0.0
    %2480 = vmatpush1.msra.mxu0 0.0
    %2481 = vmatprep.subr.mxu0 0.0
    %2482 = vmatpush1.msra.mxu0 0.0
    %2483 = vmatprep.subr.mxu0 0.0
    %2484 = vmatpush1.msra.mxu0 0.0
    %2485 = vmatprep.subr.mxu0 0.0
    %2486 = vmatpush1.msra.mxu0 0.0
    %2487 = vmatprep.mubr.f32.mxu0 0.0
    %2488 = vmatmul.mubr.f32.gmra.mrb[0].mxu0 %v2421
    %v2489 = vpop.f32.mrb[0].mxu0
    %v2490 = vadd.f32 0.0, %v2489
    %v2491 = vpop.f32.mrb[0].mxu0
    %2492 = vdwg.mxu0
    %2493 = vrot.lane.b32.xlu0 %v243, 88
    %v2494 = vpop.permute.xlu0 %2493
    %v2497 = vsel %vm1556, %v1727, 0
    %2499 = vmatprep.subr.mxu0 0.0
    %2500 = vmatpush1.msra.mxu0 %v2494
    %2501 = vmatprep.subr.mxu0 0.0
    %2502 = vmatpush1.msra.mxu0 0.0
    %2503 = vmatprep.subr.mxu0 0.0
    %2504 = vmatpush1.msra.mxu0 0.0
    %2505 = vmatprep.subr.mxu0 0.0
    %2506 = vmatpush1.msra.mxu0 0.0
    %2507 = vmatprep.subr.mxu0 0.0
    %2508 = vmatpush1.msra.mxu0 0.0
    %2509 = vmatprep.subr.mxu0 0.0
    %2510 = vmatpush1.msra.mxu0 0.0
    %2511 = vmatprep.subr.mxu0 0.0
    %2512 = vmatpush1.msra.mxu0 0.0
    %2513 = vmatprep.subr.mxu0 0.0
    %2514 = vmatpush1.msra.mxu0 0.0
    %2515 = vmatprep.subr.mxu0 0.0
    %2516 = vmatpush1.msra.mxu0 0.0
    %2517 = vmatprep.subr.mxu0 0.0
    %2518 = vmatpush1.msra.mxu0 0.0
    %2519 = vmatprep.subr.mxu0 0.0
    %2520 = vmatpush1.msra.mxu0 0.0
    %2521 = vmatprep.subr.mxu0 0.0
    %2522 = vmatpush1.msra.mxu0 0.0
    %2523 = vmatprep.subr.mxu0 0.0
    %2524 = vmatpush1.msra.mxu0 0.0
    %2525 = vmatprep.subr.mxu0 0.0
    %2526 = vmatpush1.msra.mxu0 0.0
    %2527 = vmatprep.subr.mxu0 0.0
    %2528 = vmatpush1.msra.mxu0 0.0
    %2529 = vmatprep.subr.mxu0 0.0
    %2530 = vmatpush1.msra.mxu0 0.0
    %2531 = vmatprep.subr.mxu0 0.0
    %2532 = vmatpush1.msra.mxu0 0.0
    %2533 = vmatprep.subr.mxu0 0.0
    %2534 = vmatpush1.msra.mxu0 0.0
    %2535 = vmatprep.subr.mxu0 0.0
    %2536 = vmatpush1.msra.mxu0 0.0
    %2537 = vmatprep.subr.mxu0 0.0
    %2538 = vmatpush1.msra.mxu0 0.0
    %2539 = vmatprep.subr.mxu0 0.0
    %2540 = vmatpush1.msra.mxu0 0.0
    %2541 = vmatprep.subr.mxu0 0.0
    %2542 = vmatpush1.msra.mxu0 0.0
    %2543 = vmatprep.subr.mxu0 0.0
    %2544 = vmatpush1.msra.mxu0 0.0
    %2545 = vmatprep.subr.mxu0 0.0
    %2546 = vmatpush1.msra.mxu0 0.0
    %2547 = vmatprep.subr.mxu0 0.0
    %2548 = vmatpush1.msra.mxu0 0.0
    %2549 = vmatprep.subr.mxu0 0.0
    %2550 = vmatpush1.msra.mxu0 0.0
    %2551 = vmatprep.subr.mxu0 0.0
    %2552 = vmatpush1.msra.mxu0 0.0
    %2553 = vmatprep.subr.mxu0 0.0
    %2554 = vmatpush1.msra.mxu0 0.0
    %2555 = vmatprep.subr.mxu0 0.0
    %2556 = vmatpush1.msra.mxu0 0.0
    %2557 = vmatprep.subr.mxu0 0.0
    %2558 = vmatpush1.msra.mxu0 0.0
    %2559 = vmatprep.subr.mxu0 0.0
    %2560 = vmatpush1.msra.mxu0 0.0
    %2561 = vmatprep.subr.mxu0 0.0
    %2562 = vmatpush1.msra.mxu0 0.0
    %2563 = vmatprep.mubr.f32.mxu0 0.0
    %2564 = vmatmul.mubr.f32.gmra.mrb[0].mxu0 %v2497
    %v2565 = vpop.f32.mrb[0].mxu0
    %v2566 = vadd.f32 0.0, %v2565
    %v2567 = vpop.f32.mrb[0].mxu0
    %2568 = vdwg.mxu0
    %2569 = vrot.lane.b32.xlu0 %v248, 88
    %v2570 = vpop.permute.xlu0 %2569
    %v2573 = vsel %vm1556, %v1728, 0
    %2575 = vmatprep.subr.mxu0 0.0
    %2576 = vmatpush1.msra.mxu0 %v2570
    %2577 = vmatprep.subr.mxu0 0.0
    %2578 = vmatpush1.msra.mxu0 0.0
    %2579 = vmatprep.subr.mxu0 0.0
    %2580 = vmatpush1.msra.mxu0 0.0
    %2581 = vmatprep.subr.mxu0 0.0
    %2582 = vmatpush1.msra.mxu0 0.0
    %2583 = vmatprep.subr.mxu0 0.0
    %2584 = vmatpush1.msra.mxu0 0.0
    %2585 = vmatprep.subr.mxu0 0.0
    %2586 = vmatpush1.msra.mxu0 0.0
    %2587 = vmatprep.subr.mxu0 0.0
    %2588 = vmatpush1.msra.mxu0 0.0
    %2589 = vmatprep.subr.mxu0 0.0
    %2590 = vmatpush1.msra.mxu0 0.0
    %2591 = vmatprep.subr.mxu0 0.0
    %2592 = vmatpush1.msra.mxu0 0.0
    %2593 = vmatprep.subr.mxu0 0.0
    %2594 = vmatpush1.msra.mxu0 0.0
    %2595 = vmatprep.subr.mxu0 0.0
    %2596 = vmatpush1.msra.mxu0 0.0
    %2597 = vmatprep.subr.mxu0 0.0
    %2598 = vmatpush1.msra.mxu0 0.0
    %2599 = vmatprep.subr.mxu0 0.0
    %2600 = vmatpush1.msra.mxu0 0.0
    %2601 = vmatprep.subr.mxu0 0.0
    %2602 = vmatpush1.msra.mxu0 0.0
    %2603 = vmatprep.subr.mxu0 0.0
    %2604 = vmatpush1.msra.mxu0 0.0
    %2605 = vmatprep.subr.mxu0 0.0
    %2606 = vmatpush1.msra.mxu0 0.0
    %2607 = vmatprep.subr.mxu0 0.0
    %2608 = vmatpush1.msra.mxu0 0.0
    %2609 = vmatprep.subr.mxu0 0.0
    %2610 = vmatpush1.msra.mxu0 0.0
    %2611 = vmatprep.subr.mxu0 0.0
    %2612 = vmatpush1.msra.mxu0 0.0
    %2613 = vmatprep.subr.mxu0 0.0
    %2614 = vmatpush1.msra.mxu0 0.0
    %2615 = vmatprep.subr.mxu0 0.0
    %2616 = vmatpush1.msra.mxu0 0.0
    %2617 = vmatprep.subr.mxu0 0.0
    %2618 = vmatpush1.msra.mxu0 0.0
    %2619 = vmatprep.subr.mxu0 0.0
    %2620 = vmatpush1.msra.mxu0 0.0
    %2621 = vmatprep.subr.mxu0 0.0
    %2622 = vmatpush1.msra.mxu0 0.0
    %2623 = vmatprep.subr.mxu0 0.0
    %2624 = vmatpush1.msra.mxu0 0.0
    %2625 = vmatprep.subr.mxu0 0.0
    %2626 = vmatpush1.msra.mxu0 0.0
    %2627 = vmatprep.subr.mxu0 0.0
    %2628 = vmatpush1.msra.mxu0 0.0
    %2629 = vmatprep.subr.mxu0 0.0
    %2630 = vmatpush1.msra.mxu0 0.0
    %2631 = vmatprep.subr.mxu0 0.0
    %2632 = vmatpush1.msra.mxu0 0.0
    %2633 = vmatprep.subr.mxu0 0.0
    %2634 = vmatpush1.msra.mxu0 0.0
    %2635 = vmatprep.subr.mxu0 0.0
    %2636 = vmatpush1.msra.mxu0 0.0
    %2637 = vmatprep.subr.mxu0 0.0
    %2638 = vmatpush1.msra.mxu0 0.0
    %2639 = vmatprep.mubr.f32.mxu0 0.0
    %2640 = vmatmul.mubr.f32.gmra.mrb[0].mxu0 %v2573
    %v2641 = vpop.f32.mrb[0].mxu0
    %v2642 = vadd.f32 0.0, %v2641
    %v2643 = vpop.f32.mrb[0].mxu0
    %2644 = vdwg.mxu0
    %2645 = vrot.lane.b32.xlu0 %v253, 88
    %v2646 = vpop.permute.xlu0 %2645
    %v2649 = vsel %vm1556, %v1729, 0
    %2651 = vmatprep.subr.mxu0 0.0
    %2652 = vmatpush1.msra.mxu0 %v2646
    %2653 = vmatprep.subr.mxu0 0.0
    %2654 = vmatpush1.msra.mxu0 0.0
    %2655 = vmatprep.subr.mxu0 0.0
    %2656 = vmatpush1.msra.mxu0 0.0
    %2657 = vmatprep.subr.mxu0 0.0
    %2658 = vmatpush1.msra.mxu0 0.0
    %2659 = vmatprep.subr.mxu0 0.0
    %2660 = vmatpush1.msra.mxu0 0.0
    %2661 = vmatprep.subr.mxu0 0.0
    %2662 = vmatpush1.msra.mxu0 0.0
    %2663 = vmatprep.subr.mxu0 0.0
    %2664 = vmatpush1.msra.mxu0 0.0
    %2665 = vmatprep.subr.mxu0 0.0
    %2666 = vmatpush1.msra.mxu0 0.0
    %2667 = vmatprep.subr.mxu0 0.0
    %2668 = vmatpush1.msra.mxu0 0.0
    %2669 = vmatprep.subr.mxu0 0.0
    %2670 = vmatpush1.msra.mxu0 0.0
    %2671 = vmatprep.subr.mxu0 0.0
    %2672 = vmatpush1.msra.mxu0 0.0
    %2673 = vmatprep.subr.mxu0 0.0
    %2674 = vmatpush1.msra.mxu0 0.0
    %2675 = vmatprep.subr.mxu0 0.0
    %2676 = vmatpush1.msra.mxu0 0.0
    %2677 = vmatprep.subr.mxu0 0.0
    %2678 = vmatpush1.msra.mxu0 0.0
    %2679 = vmatprep.subr.mxu0 0.0
    %2680 = vmatpush1.msra.mxu0 0.0
    %2681 = vmatprep.subr.mxu0 0.0
    %2682 = vmatpush1.msra.mxu0 0.0
    %2683 = vmatprep.subr.mxu0 0.0
    %2684 = vmatpush1.msra.mxu0 0.0
    %2685 = vmatprep.subr.mxu0 0.0
    %2686 = vmatpush1.msra.mxu0 0.0
    %2687 = vmatprep.subr.mxu0 0.0
    %2688 = vmatpush1.msra.mxu0 0.0
    %2689 = vmatprep.subr.mxu0 0.0
    %2690 = vmatpush1.msra.mxu0 0.0
    %2691 = vmatprep.subr.mxu0 0.0
    %2692 = vmatpush1.msra.mxu0 0.0
    %2693 = vmatprep.subr.mxu0 0.0
    %2694 = vmatpush1.msra.mxu0 0.0
    %2695 = vmatprep.subr.mxu0 0.0
    %2696 = vmatpush1.msra.mxu0 0.0
    %2697 = vmatprep.subr.mxu0 0.0
    %2698 = vmatpush1.msra.mxu0 0.0
    %2699 = vmatprep.subr.mxu0 0.0
    %2700 = vmatpush1.msra.mxu0 0.0
    %2701 = vmatprep.subr.mxu0 0.0
    %2702 = vmatpush1.msra.mxu0 0.0
    %2703 = vmatprep.subr.mxu0 0.0
    %2704 = vmatpush1.msra.mxu0 0.0
    %2705 = vmatprep.subr.mxu0 0.0
    %2706 = vmatpush1.msra.mxu0 0.0
    %2707 = vmatprep.subr.mxu0 0.0
    %2708 = vmatpush1.msra.mxu0 0.0
    %2709 = vmatprep.subr.mxu0 0.0
    %2710 = vmatpush1.msra.mxu0 0.0
    %2711 = vmatprep.subr.mxu0 0.0
    %2712 = vmatpush1.msra.mxu0 0.0
    %2713 = vmatprep.subr.mxu0 0.0
    %2714 = vmatpush1.msra.mxu0 0.0
    %2715 = vmatprep.mubr.f32.mxu0 0.0
    %2716 = vmatmul.mubr.f32.gmra.mrb[0].mxu0 %v2649
    %v2717 = vpop.f32.mrb[0].mxu0
    %v2718 = vadd.f32 0.0, %v2717
    %v2719 = vpop.f32.mrb[0].mxu0
    %2720 = vdwg.mxu0
    %2721 = vrot.lane.b32.xlu0 %v258, 88
    %v2722 = vpop.permute.xlu0 %2721
    %v2725 = vsel %vm1556, %v1730, 0
    %2727 = vmatprep.subr.mxu0 0.0
    %2728 = vmatpush1.msra.mxu0 %v2722
    %2729 = vmatprep.subr.mxu0 0.0
    %2730 = vmatpush1.msra.mxu0 0.0
    %2731 = vmatprep.subr.mxu0 0.0
    %2732 = vmatpush1.msra.mxu0 0.0
    %2733 = vmatprep.subr.mxu0 0.0
    %2734 = vmatpush1.msra.mxu0 0.0
    %2735 = vmatprep.subr.mxu0 0.0
    %2736 = vmatpush1.msra.mxu0 0.0
    %2737 = vmatprep.subr.mxu0 0.0
    %2738 = vmatpush1.msra.mxu0 0.0
    %2739 = vmatprep.subr.mxu0 0.0
    %2740 = vmatpush1.msra.mxu0 0.0
    %2741 = vmatprep.subr.mxu0 0.0
    %2742 = vmatpush1.msra.mxu0 0.0
    %2743 = vmatprep.subr.mxu0 0.0
    %2744 = vmatpush1.msra.mxu0 0.0
    %2745 = vmatprep.subr.mxu0 0.0
    %2746 = vmatpush1.msra.mxu0 0.0
    %2747 = vmatprep.subr.mxu0 0.0
    %2748 = vmatpush1.msra.mxu0 0.0
    %2749 = vmatprep.subr.mxu0 0.0
    %2750 = vmatpush1.msra.mxu0 0.0
    %2751 = vmatprep.subr.mxu0 0.0
    %2752 = vmatpush1.msra.mxu0 0.0
    %2753 = vmatprep.subr.mxu0 0.0
    %2754 = vmatpush1.msra.mxu0 0.0
    %2755 = vmatprep.subr.mxu0 0.0
    %2756 = vmatpush1.msra.mxu0 0.0
    %2757 = vmatprep.subr.mxu0 0.0
    %2758 = vmatpush1.msra.mxu0 0.0
    %2759 = vmatprep.subr.mxu0 0.0
    %2760 = vmatpush1.msra.mxu0 0.0
    %2761 = vmatprep.subr.mxu0 0.0
    %2762 = vmatpush1.msra.mxu0 0.0
    %2763 = vmatprep.subr.mxu0 0.0
    %2764 = vmatpush1.msra.mxu0 0.0
    %2765 = vmatprep.subr.mxu0 0.0
    %2766 = vmatpush1.msra.mxu0 0.0
    %2767 = vmatprep.subr.mxu0 0.0
    %2768 = vmatpush1.msra.mxu0 0.0
    %2769 = vmatprep.subr.mxu0 0.0
    %2770 = vmatpush1.msra.mxu0 0.0
    %2771 = vmatprep.subr.mxu0 0.0
    %2772 = vmatpush1.msra.mxu0 0.0
    %2773 = vmatprep.subr.mxu0 0.0
    %2774 = vmatpush1.msra.mxu0 0.0
    %2775 = vmatprep.subr.mxu0 0.0
    %2776 = vmatpush1.msra.mxu0 0.0
    %2777 = vmatprep.subr.mxu0 0.0
    %2778 = vmatpush1.msra.mxu0 0.0
    %2779 = vmatprep.subr.mxu0 0.0
    %2780 = vmatpush1.msra.mxu0 0.0
    %2781 = vmatprep.subr.mxu0 0.0
    %2782 = vmatpush1.msra.mxu0 0.0
    %2783 = vmatprep.subr.mxu0 0.0
    %2784 = vmatpush1.msra.mxu0 0.0
    %2785 = vmatprep.subr.mxu0 0.0
    %2786 = vmatpush1.msra.mxu0 0.0
    %2787 = vmatprep.subr.mxu0 0.0
    %2788 = vmatpush1.msra.mxu0 0.0
    %2789 = vmatprep.subr.mxu0 0.0
    %2790 = vmatpush1.msra.mxu0 0.0
    %2791 = vmatprep.mubr.f32.mxu0 0.0
    %2792 = vmatmul.mubr.f32.gmra.mrb[0].mxu0 %v2725
    %v2793 = vpop.f32.mrb[0].mxu0
    %v2794 = vadd.f32 0.0, %v2793
    %v2795 = vpop.f32.mrb[0].mxu0
    %2796 = vdwg.mxu0
    %2797 = vrot.lane.b32.xlu0 %v263, 88
    %v2798 = vpop.permute.xlu0 %2797
    %v2801 = vsel %vm1556, %v1731, 0
    %2803 = vmatprep.subr.mxu0 0.0
    %2804 = vmatpush1.msra.mxu0 %v2798
    %2805 = vmatprep.subr.mxu0 0.0
    %2806 = vmatpush1.msra.mxu0 0.0
    %2807 = vmatprep.subr.mxu0 0.0
    %2808 = vmatpush1.msra.mxu0 0.0
    %2809 = vmatprep.subr.mxu0 0.0
    %2810 = vmatpush1.msra.mxu0 0.0
    %2811 = vmatprep.subr.mxu0 0.0
    %2812 = vmatpush1.msra.mxu0 0.0
    %2813 = vmatprep.subr.mxu0 0.0
    %2814 = vmatpush1.msra.mxu0 0.0
    %2815 = vmatprep.subr.mxu0 0.0
    %2816 = vmatpush1.msra.mxu0 0.0
    %2817 = vmatprep.subr.mxu0 0.0
    %2818 = vmatpush1.msra.mxu0 0.0
    %2819 = vmatprep.subr.mxu0 0.0
    %2820 = vmatpush1.msra.mxu0 0.0
    %2821 = vmatprep.subr.mxu0 0.0
    %2822 = vmatpush1.msra.mxu0 0.0
    %2823 = vmatprep.subr.mxu0 0.0
    %2824 = vmatpush1.msra.mxu0 0.0
    %2825 = vmatprep.subr.mxu0 0.0
    %2826 = vmatpush1.msra.mxu0 0.0
    %2827 = vmatprep.subr.mxu0 0.0
    %2828 = vmatpush1.msra.mxu0 0.0
    %2829 = vmatprep.subr.mxu0 0.0
    %2830 = vmatpush1.msra.mxu0 0.0
    %2831 = vmatprep.subr.mxu0 0.0
    %2832 = vmatpush1.msra.mxu0 0.0
    %2833 = vmatprep.subr.mxu0 0.0
    %2834 = vmatpush1.msra.mxu0 0.0
    %2835 = vmatprep.subr.mxu0 0.0
    %2836 = vmatpush1.msra.mxu0 0.0
    %2837 = vmatprep.subr.mxu0 0.0
    %2838 = vmatpush1.msra.mxu0 0.0
    %2839 = vmatprep.subr.mxu0 0.0
    %2840 = vmatpush1.msra.mxu0 0.0
    %2841 = vmatprep.subr.mxu0 0.0
    %2842 = vmatpush1.msra.mxu0 0.0
    %2843 = vmatprep.subr.mxu0 0.0
    %2844 = vmatpush1.msra.mxu0 0.0
    %2845 = vmatprep.subr.mxu0 0.0
    %2846 = vmatpush1.msra.mxu0 0.0
    %2847 = vmatprep.subr.mxu0 0.0
    %2848 = vmatpush1.msra.mxu0 0.0
    %2849 = vmatprep.subr.mxu0 0.0
    %2850 = vmatpush1.msra.mxu0 0.0
    %2851 = vmatprep.subr.mxu0 0.0
    %2852 = vmatpush1.msra.mxu0 0.0
    %2853 = vmatprep.subr.mxu0 0.0
    %2854 = vmatpush1.msra.mxu0 0.0
    %2855 = vmatprep.subr.mxu0 0.0
    %2856 = vmatpush1.msra.mxu0 0.0
    %2857 = vmatprep.subr.mxu0 0.0
    %2858 = vmatpush1.msra.mxu0 0.0
    %2859 = vmatprep.subr.mxu0 0.0
    %2860 = vmatpush1.msra.mxu0 0.0
    %2861 = vmatprep.subr.mxu0 0.0
    %2862 = vmatpush1.msra.mxu0 0.0
    %2863 = vmatprep.subr.mxu0 0.0
    %2864 = vmatpush1.msra.mxu0 0.0
    %2865 = vmatprep.subr.mxu0 0.0
    %2866 = vmatpush1.msra.mxu0 0.0
    %2867 = vmatprep.mubr.f32.mxu0 0.0
    %2868 = vmatmul.mubr.f32.gmra.mrb[0].mxu0 %v2801
    %v2869 = vpop.f32.mrb[0].mxu0
    %v2870 = vadd.f32 0.0, %v2869
    %v2871 = vpop.f32.mrb[0].mxu0
    %2872 = vdwg.mxu0
    %2873 = vrot.lane.b32.xlu0 %v268, 88
    %v2874 = vpop.permute.xlu0 %2873
    %v2877 = vsel %vm1556, %v1732, 0
    %2879 = vmatprep.subr.mxu0 0.0
    %2880 = vmatpush1.msra.mxu0 %v2874
    %2881 = vmatprep.subr.mxu0 0.0
    %2882 = vmatpush1.msra.mxu0 0.0
    %2883 = vmatprep.subr.mxu0 0.0
    %2884 = vmatpush1.msra.mxu0 0.0
    %2885 = vmatprep.subr.mxu0 0.0
    %2886 = vmatpush1.msra.mxu0 0.0
    %2887 = vmatprep.subr.mxu0 0.0
    %2888 = vmatpush1.msra.mxu0 0.0
    %2889 = vmatprep.subr.mxu0 0.0
    %2890 = vmatpush1.msra.mxu0 0.0
    %2891 = vmatprep.subr.mxu0 0.0
    %2892 = vmatpush1.msra.mxu0 0.0
    %2893 = vmatprep.subr.mxu0 0.0
    %2894 = vmatpush1.msra.mxu0 0.0
    %2895 = vmatprep.subr.mxu0 0.0
    %2896 = vmatpush1.msra.mxu0 0.0
    %2897 = vmatprep.subr.mxu0 0.0
    %2898 = vmatpush1.msra.mxu0 0.0
    %2899 = vmatprep.subr.mxu0 0.0
    %2900 = vmatpush1.msra.mxu0 0.0
    %2901 = vmatprep.subr.mxu0 0.0
    %2902 = vmatpush1.msra.mxu0 0.0
    %2903 = vmatprep.subr.mxu0 0.0
    %2904 = vmatpush1.msra.mxu0 0.0
    %2905 = vmatprep.subr.mxu0 0.0
    %2906 = vmatpush1.msra.mxu0 0.0
    %2907 = vmatprep.subr.mxu0 0.0
    %2908 = vmatpush1.msra.mxu0 0.0
    %2909 = vmatprep.subr.mxu0 0.0
    %2910 = vmatpush1.msra.mxu0 0.0
    %2911 = vmatprep.subr.mxu0 0.0
    %2912 = vmatpush1.msra.mxu0 0.0
    %2913 = vmatprep.subr.mxu0 0.0
    %2914 = vmatpush1.msra.mxu0 0.0
    %2915 = vmatprep.subr.mxu0 0.0
    %2916 = vmatpush1.msra.mxu0 0.0
    %2917 = vmatprep.subr.mxu0 0.0
    %2918 = vmatpush1.msra.mxu0 0.0
    %2919 = vmatprep.subr.mxu0 0.0
    %2920 = vmatpush1.msra.mxu0 0.0
    %2921 = vmatprep.subr.mxu0 0.0
    %2922 = vmatpush1.msra.mxu0 0.0
    %2923 = vmatprep.subr.mxu0 0.0
    %2924 = vmatpush1.msra.mxu0 0.0
    %2925 = vmatprep.subr.mxu0 0.0
    %2926 = vmatpush1.msra.mxu0 0.0
    %2927 = vmatprep.subr.mxu0 0.0
    %2928 = vmatpush1.msra.mxu0 0.0
    %2929 = vmatprep.subr.mxu0 0.0
    %2930 = vmatpush1.msra.mxu0 0.0
    %2931 = vmatprep.subr.mxu0 0.0
    %2932 = vmatpush1.msra.mxu0 0.0
    %2933 = vmatprep.subr.mxu0 0.0
    %2934 = vmatpush1.msra.mxu0 0.0
    %2935 = vmatprep.subr.mxu0 0.0
    %2936 = vmatpush1.msra.mxu0 0.0
    %2937 = vmatprep.subr.mxu0 0.0
    %2938 = vmatpush1.msra.mxu0 0.0
    %2939 = vmatprep.subr.mxu0 0.0
    %2940 = vmatpush1.msra.mxu0 0.0
    %2941 = vmatprep.subr.mxu0 0.0
    %2942 = vmatpush1.msra.mxu0 0.0
    %2943 = vmatprep.mubr.f32.mxu0 0.0
    %2944 = vmatmul.mubr.f32.gmra.mrb[0].mxu0 %v2877
    %v2945 = vpop.f32.mrb[0].mxu0
    %v2946 = vadd.f32 0.0, %v2945
    %v2947 = vpop.f32.mrb[0].mxu0
    %2948 = vdwg.mxu0
    %2949 = vrot.lane.b32.xlu0 %v193, 100
    %v2950 = vpop.permute.xlu0 %2949
    %2951 = vrot.lane.b32.xlu0 %v193, 92
    %v2952 = vpop.permute.xlu0 %2951
    %v2953 = vsel %vm280, %v2950, 0
    %v2955 = vsel %vm280, %v2952, 0
    %2957 = vmatprep.subr.mxu0 0.0
    %2958 = vmatpush1.xpose.msra.mxu0 %v2955
    %2959 = vmatprep.subr.mxu0 0.0
    %2960 = vmatpush1.xpose.msra.mxu0 0.0
    %2961 = vmatprep.subr.mxu0 0.0
    %2962 = vmatpush1.xpose.msra.mxu0 0.0
    %2963 = vmatprep.subr.mxu0 0.0
    %2964 = vmatpush1.xpose.msra.mxu0 0.0
    %2965 = vmatprep.subr.mxu0 0.0
    %2966 = vmatpush1.xpose.msra.mxu0 0.0
    %2967 = vmatprep.subr.mxu0 0.0
    %2968 = vmatpush1.xpose.msra.mxu0 0.0
    %2969 = vmatprep.subr.mxu0 0.0
    %2970 = vmatpush1.xpose.msra.mxu0 0.0
    %2971 = vmatprep.subr.mxu0 0.0
    %2972 = vmatpush1.xpose.msra.mxu0 0.0
    %2973 = vmatprep.subr.mxu0 0.0
    %2974 = vmatpush1.xpose.msra.mxu0 0.0
    %2975 = vmatprep.subr.mxu0 0.0
    %2976 = vmatpush1.xpose.msra.mxu0 0.0
    %2977 = vmatprep.subr.mxu0 0.0
    %2978 = vmatpush1.xpose.msra.mxu0 0.0
    %2979 = vmatprep.subr.mxu0 0.0
    %2980 = vmatpush1.xpose.msra.mxu0 0.0
    %2981 = vmatprep.subr.mxu0 0.0
    %2982 = vmatpush1.xpose.msra.mxu0 0.0
    %2983 = vmatprep.subr.mxu0 0.0
    %2984 = vmatpush1.xpose.msra.mxu0 0.0
    %2985 = vmatprep.subr.mxu0 0.0
    %2986 = vmatpush1.xpose.msra.mxu0 0.0
    %2987 = vmatprep.subr.mxu0 0.0
    %2988 = vmatpush1.xpose.msra.mxu0 0.0
    %2989 = vmatprep.subr.mxu0 0.0
    %2990 = vmatpush1.xpose.msra.mxu0 0.0
    %2991 = vmatprep.subr.mxu0 0.0
    %2992 = vmatpush1.xpose.msra.mxu0 0.0
    %2993 = vmatprep.subr.mxu0 0.0
    %2994 = vmatpush1.xpose.msra.mxu0 0.0
    %2995 = vmatprep.subr.mxu0 0.0
    %2996 = vmatpush1.xpose.msra.mxu0 0.0
    %2997 = vmatprep.subr.mxu0 0.0
    %2998 = vmatpush1.xpose.msra.mxu0 0.0
    %2999 = vmatprep.subr.mxu0 0.0
    %3000 = vmatpush1.xpose.msra.mxu0 0.0
    %3001 = vmatprep.subr.mxu0 0.0
    %3002 = vmatpush1.xpose.msra.mxu0 0.0
    %3003 = vmatprep.subr.mxu0 0.0
    %3004 = vmatpush1.xpose.msra.mxu0 0.0
    %3005 = vmatprep.subr.mxu0 0.0
    %3006 = vmatpush1.xpose.msra.mxu0 0.0
    %3007 = vmatprep.subr.mxu0 0.0
    %3008 = vmatpush1.xpose.msra.mxu0 0.0
    %3009 = vmatprep.subr.mxu0 0.0
    %3010 = vmatpush1.xpose.msra.mxu0 0.0
    %3011 = vmatprep.subr.mxu0 0.0
    %3012 = vmatpush1.xpose.msra.mxu0 0.0
    %3013 = vmatprep.subr.mxu0 0.0
    %3014 = vmatpush1.xpose.msra.mxu0 0.0
    %3015 = vmatprep.subr.mxu0 0.0
    %3016 = vmatpush1.xpose.msra.mxu0 0.0
    %3017 = vmatprep.subr.mxu0 0.0
    %3018 = vmatpush1.xpose.msra.mxu0 0.0
    %3019 = vmatprep.subr.mxu0 0.0
    %3020 = vmatpush1.xpose.msra.mxu0 0.0
    %3021 = vmatprep.mubr.f32.mxu0 0.0
    %3022 = vmatmul.mubr.f32.gmra.mrb[0].mxu0 %v2953
    %v3023 = vpop.f32.mrb[0].mxu0
    %v3024 = vadd.f32 0.0, %v3023
    %v3025 = vpop.f32.mrb[0].mxu0
    %3026 = vdwg.mxu0
    %3027 = vrot.lane.b32.xlu0 %v198, 100
    %v3028 = vpop.permute.xlu0 %3027
    %3029 = vrot.lane.b32.xlu0 %v198, 92
    %v3030 = vpop.permute.xlu0 %3029
    %v3031 = vsel %vm280, %v3028, 0
    %v3033 = vsel %vm280, %v3030, 0
    %3035 = vmatprep.subr.mxu0 0.0
    %3036 = vmatpush1.xpose.msra.mxu0 %v3033
    %3037 = vmatprep.subr.mxu0 0.0
    %3038 = vmatpush1.xpose.msra.mxu0 0.0
    %3039 = vmatprep.subr.mxu0 0.0
    %3040 = vmatpush1.xpose.msra.mxu0 0.0
    %3041 = vmatprep.subr.mxu0 0.0
    %3042 = vmatpush1.xpose.msra.mxu0 0.0
    %3043 = vmatprep.subr.mxu0 0.0
    %3044 = vmatpush1.xpose.msra.mxu0 0.0
    %3045 = vmatprep.subr.mxu0 0.0
    %3046 = vmatpush1.xpose.msra.mxu0 0.0
    %3047 = vmatprep.subr.mxu0 0.0
    %3048 = vmatpush1.xpose.msra.mxu0 0.0
    %3049 = vmatprep.subr.mxu0 0.0
    %3050 = vmatpush1.xpose.msra.mxu0 0.0
    %3051 = vmatprep.subr.mxu0 0.0
    %3052 = vmatpush1.xpose.msra.mxu0 0.0
    %3053 = vmatprep.subr.mxu0 0.0
    %3054 = vmatpush1.xpose.msra.mxu0 0.0
    %3055 = vmatprep.subr.mxu0 0.0
    %3056 = vmatpush1.xpose.msra.mxu0 0.0
    %3057 = vmatprep.subr.mxu0 0.0
    %3058 = vmatpush1.xpose.msra.mxu0 0.0
    %3059 = vmatprep.subr.mxu0 0.0
    %3060 = vmatpush1.xpose.msra.mxu0 0.0
    %3061 = vmatprep.subr.mxu0 0.0
    %3062 = vmatpush1.xpose.msra.mxu0 0.0
    %3063 = vmatprep.subr.mxu0 0.0
    %3064 = vmatpush1.xpose.msra.mxu0 0.0
    %3065 = vmatprep.subr.mxu0 0.0
    %3066 = vmatpush1.xpose.msra.mxu0 0.0
    %3067 = vmatprep.subr.mxu0 0.0
    %3068 = vmatpush1.xpose.msra.mxu0 0.0
    %3069 = vmatprep.subr.mxu0 0.0
    %3070 = vmatpush1.xpose.msra.mxu0 0.0
    %3071 = vmatprep.subr.mxu0 0.0
    %3072 = vmatpush1.xpose.msra.mxu0 0.0
    %3073 = vmatprep.subr.mxu0 0.0
    %3074 = vmatpush1.xpose.msra.mxu0 0.0
    %3075 = vmatprep.subr.mxu0 0.0
    %3076 = vmatpush1.xpose.msra.mxu0 0.0
    %3077 = vmatprep.subr.mxu0 0.0
    %3078 = vmatpush1.xpose.msra.mxu0 0.0
    %3079 = vmatprep.subr.mxu0 0.0
    %3080 = vmatpush1.xpose.msra.mxu0 0.0
    %3081 = vmatprep.subr.mxu0 0.0
    %3082 = vmatpush1.xpose.msra.mxu0 0.0
    %3083 = vmatprep.subr.mxu0 0.0
    %3084 = vmatpush1.xpose.msra.mxu0 0.0
    %3085 = vmatprep.subr.mxu0 0.0
    %3086 = vmatpush1.xpose.msra.mxu0 0.0
    %3087 = vmatprep.subr.mxu0 0.0
    %3088 = vmatpush1.xpose.msra.mxu0 0.0
    %3089 = vmatprep.subr.mxu0 0.0
    %3090 = vmatpush1.xpose.msra.mxu0 0.0
    %3091 = vmatprep.subr.mxu0 0.0
    %3092 = vmatpush1.xpose.msra.mxu0 0.0
    %3093 = vmatprep.subr.mxu0 0.0
    %3094 = vmatpush1.xpose.msra.mxu0 0.0
    %3095 = vmatprep.subr.mxu0 0.0
    %3096 = vmatpush1.xpose.msra.mxu0 0.0
    %3097 = vmatprep.subr.mxu0 0.0
    %3098 = vmatpush1.xpose.msra.mxu0 0.0
    %3099 = vmatprep.mubr.f32.mxu0 0.0
    %3100 = vmatmul.mubr.f32.gmra.mrb[0].mxu0 %v3031
    %v3101 = vpop.f32.mrb[0].mxu0
    %v3102 = vadd.f32 0.0, %v3101
    %v3103 = vpop.f32.mrb[0].mxu0
    %3104 = vdwg.mxu0
    %3105 = vrot.lane.b32.xlu0 %v203, 100
    %v3106 = vpop.permute.xlu0 %3105
    %3107 = vrot.lane.b32.xlu0 %v203, 92
    %v3108 = vpop.permute.xlu0 %3107
    %v3109 = vsel %vm280, %v3106, 0
    %v3111 = vsel %vm280, %v3108, 0
    %3113 = vmatprep.subr.mxu0 0.0
    %3114 = vmatpush1.xpose.msra.mxu0 %v3111
    %3115 = vmatprep.subr.mxu0 0.0
    %3116 = vmatpush1.xpose.msra.mxu0 0.0
    %3117 = vmatprep.subr.mxu0 0.0
    %3118 = vmatpush1.xpose.msra.mxu0 0.0
    %3119 = vmatprep.subr.mxu0 0.0
    %3120 = vmatpush1.xpose.msra.mxu0 0.0
    %3121 = vmatprep.subr.mxu0 0.0
    %3122 = vmatpush1.xpose.msra.mxu0 0.0
    %3123 = vmatprep.subr.mxu0 0.0
    %3124 = vmatpush1.xpose.msra.mxu0 0.0
    %3125 = vmatprep.subr.mxu0 0.0
    %3126 = vmatpush1.xpose.msra.mxu0 0.0
    %3127 = vmatprep.subr.mxu0 0.0
    %3128 = vmatpush1.xpose.msra.mxu0 0.0
    %3129 = vmatprep.subr.mxu0 0.0
    %3130 = vmatpush1.xpose.msra.mxu0 0.0
    %3131 = vmatprep.subr.mxu0 0.0
    %3132 = vmatpush1.xpose.msra.mxu0 0.0
    %3133 = vmatprep.subr.mxu0 0.0
    %3134 = vmatpush1.xpose.msra.mxu0 0.0
    %3135 = vmatprep.subr.mxu0 0.0
    %3136 = vmatpush1.xpose.msra.mxu0 0.0
    %3137 = vmatprep.subr.mxu0 0.0
    %3138 = vmatpush1.xpose.msra.mxu0 0.0
    %3139 = vmatprep.subr.mxu0 0.0
    %3140 = vmatpush1.xpose.msra.mxu0 0.0
    %3141 = vmatprep.subr.mxu0 0.0
    %3142 = vmatpush1.xpose.msra.mxu0 0.0
    %3143 = vmatprep.subr.mxu0 0.0
    %3144 = vmatpush1.xpose.msra.mxu0 0.0
    %3145 = vmatprep.subr.mxu0 0.0
    %3146 = vmatpush1.xpose.msra.mxu0 0.0
    %3147 = vmatprep.subr.mxu0 0.0
    %3148 = vmatpush1.xpose.msra.mxu0 0.0
    %3149 = vmatprep.subr.mxu0 0.0
    %3150 = vmatpush1.xpose.msra.mxu0 0.0
    %3151 = vmatprep.subr.mxu0 0.0
    %3152 = vmatpush1.xpose.msra.mxu0 0.0
    %3153 = vmatprep.subr.mxu0 0.0
    %3154 = vmatpush1.xpose.msra.mxu0 0.0
    %3155 = vmatprep.subr.mxu0 0.0
    %3156 = vmatpush1.xpose.msra.mxu0 0.0
    %3157 = vmatprep.subr.mxu0 0.0
    %3158 = vmatpush1.xpose.msra.mxu0 0.0
    %3159 = vmatprep.subr.mxu0 0.0
    %3160 = vmatpush1.xpose.msra.mxu0 0.0
    %3161 = vmatprep.subr.mxu0 0.0
    %3162 = vmatpush1.xpose.msra.mxu0 0.0
    %3163 = vmatprep.subr.mxu0 0.0
    %3164 = vmatpush1.xpose.msra.mxu0 0.0
    %3165 = vmatprep.subr.mxu0 0.0
    %3166 = vmatpush1.xpose.msra.mxu0 0.0
    %3167 = vmatprep.subr.mxu0 0.0
    %3168 = vmatpush1.xpose.msra.mxu0 0.0
    %3169 = vmatprep.subr.mxu0 0.0
    %3170 = vmatpush1.xpose.msra.mxu0 0.0
    %3171 = vmatprep.subr.mxu0 0.0
    %3172 = vmatpush1.xpose.msra.mxu0 0.0
    %3173 = vmatprep.subr.mxu0 0.0
    %3174 = vmatpush1.xpose.msra.mxu0 0.0
    %3175 = vmatprep.subr.mxu0 0.0
    %3176 = vmatpush1.xpose.msra.mxu0 0.0
    %3177 = vmatprep.mubr.f32.mxu0 0.0
    %3178 = vmatmul.mubr.f32.gmra.mrb[0].mxu0 %v3109
    %v3179 = vpop.f32.mrb[0].mxu0
    %v3180 = vadd.f32 0.0, %v3179
    %v3181 = vpop.f32.mrb[0].mxu0
    %3182 = vdwg.mxu0
    %3183 = vrot.lane.b32.xlu0 %v208, 100
    %v3184 = vpop.permute.xlu0 %3183
    %3185 = vrot.lane.b32.xlu0 %v208, 92
    %v3186 = vpop.permute.xlu0 %3185
    %v3187 = vsel %vm280, %v3184, 0
    %v3189 = vsel %vm280, %v3186, 0
    %3191 = vmatprep.subr.mxu0 0.0
    %3192 = vmatpush1.xpose.msra.mxu0 %v3189
    %3193 = vmatprep.subr.mxu0 0.0
    %3194 = vmatpush1.xpose.msra.mxu0 0.0
    %3195 = vmatprep.subr.mxu0 0.0
    %3196 = vmatpush1.xpose.msra.mxu0 0.0
    %3197 = vmatprep.subr.mxu0 0.0
    %3198 = vmatpush1.xpose.msra.mxu0 0.0
    %3199 = vmatprep.subr.mxu0 0.0
    %3200 = vmatpush1.xpose.msra.mxu0 0.0
    %3201 = vmatprep.subr.mxu0 0.0
    %3202 = vmatpush1.xpose.msra.mxu0 0.0
    %3203 = vmatprep.subr.mxu0 0.0
    %3204 = vmatpush1.xpose.msra.mxu0 0.0
    %3205 = vmatprep.subr.mxu0 0.0
    %3206 = vmatpush1.xpose.msra.mxu0 0.0
    %3207 = vmatprep.subr.mxu0 0.0
    %3208 = vmatpush1.xpose.msra.mxu0 0.0
    %3209 = vmatprep.subr.mxu0 0.0
    %3210 = vmatpush1.xpose.msra.mxu0 0.0
    %3211 = vmatprep.subr.mxu0 0.0
    %3212 = vmatpush1.xpose.msra.mxu0 0.0
    %3213 = vmatprep.subr.mxu0 0.0
    %3214 = vmatpush1.xpose.msra.mxu0 0.0
    %3215 = vmatprep.subr.mxu0 0.0
    %3216 = vmatpush1.xpose.msra.mxu0 0.0
    %3217 = vmatprep.subr.mxu0 0.0
    %3218 = vmatpush1.xpose.msra.mxu0 0.0
    %3219 = vmatprep.subr.mxu0 0.0
    %3220 = vmatpush1.xpose.msra.mxu0 0.0
    %3221 = vmatprep.subr.mxu0 0.0
    %3222 = vmatpush1.xpose.msra.mxu0 0.0
    %3223 = vmatprep.subr.mxu0 0.0
    %3224 = vmatpush1.xpose.msra.mxu0 0.0
    %3225 = vmatprep.subr.mxu0 0.0
    %3226 = vmatpush1.xpose.msra.mxu0 0.0
    %3227 = vmatprep.subr.mxu0 0.0
    %3228 = vmatpush1.xpose.msra.mxu0 0.0
    %3229 = vmatprep.subr.mxu0 0.0
    %3230 = vmatpush1.xpose.msra.mxu0 0.0
    %3231 = vmatprep.subr.mxu0 0.0
    %3232 = vmatpush1.xpose.msra.mxu0 0.0
    %3233 = vmatprep.subr.mxu0 0.0
    %3234 = vmatpush1.xpose.msra.mxu0 0.0
    %3235 = vmatprep.subr.mxu0 0.0
    %3236 = vmatpush1.xpose.msra.mxu0 0.0
    %3237 = vmatprep.subr.mxu0 0.0
    %3238 = vmatpush1.xpose.msra.mxu0 0.0
    %3239 = vmatprep.subr.mxu0 0.0
    %3240 = vmatpush1.xpose.msra.mxu0 0.0
    %3241 = vmatprep.subr.mxu0 0.0
    %3242 = vmatpush1.xpose.msra.mxu0 0.0
    %3243 = vmatprep.subr.mxu0 0.0
    %3244 = vmatpush1.xpose.msra.mxu0 0.0
    %3245 = vmatprep.subr.mxu0 0.0
    %3246 = vmatpush1.xpose.msra.mxu0 0.0
    %3247 = vmatprep.subr.mxu0 0.0
    %3248 = vmatpush1.xpose.msra.mxu0 0.0
    %3249 = vmatprep.subr.mxu0 0.0
    %3250 = vmatpush1.xpose.msra.mxu0 0.0
    %3251 = vmatprep.subr.mxu0 0.0
    %3252 = vmatpush1.xpose.msra.mxu0 0.0
    %3253 = vmatprep.subr.mxu0 0.0
    %3254 = vmatpush1.xpose.msra.mxu0 0.0
    %3255 = vmatprep.mubr.f32.mxu0 0.0
    %3256 = vmatmul.mubr.f32.gmra.mrb[0].mxu0 %v3187
    %v3257 = vpop.f32.mrb[0].mxu0
    %v3258 = vadd.f32 0.0, %v3257
    %v3259 = vpop.f32.mrb[0].mxu0
    %3260 = vdwg.mxu0
    %3261 = vrot.lane.b32.xlu0 %v213, 100
    %v3262 = vpop.permute.xlu0 %3261
    %3263 = vrot.lane.b32.xlu0 %v213, 92
    %v3264 = vpop.permute.xlu0 %3263
    %v3265 = vsel %vm280, %v3262, 0
    %v3267 = vsel %vm280, %v3264, 0
    %3269 = vmatprep.subr.mxu0 0.0
    %3270 = vmatpush1.xpose.msra.mxu0 %v3267
    %3271 = vmatprep.subr.mxu0 0.0
    %3272 = vmatpush1.xpose.msra.mxu0 0.0
    %3273 = vmatprep.subr.mxu0 0.0
    %3274 = vmatpush1.xpose.msra.mxu0 0.0
    %3275 = vmatprep.subr.mxu0 0.0
    %3276 = vmatpush1.xpose.msra.mxu0 0.0
    %3277 = vmatprep.subr.mxu0 0.0
    %3278 = vmatpush1.xpose.msra.mxu0 0.0
    %3279 = vmatprep.subr.mxu0 0.0
    %3280 = vmatpush1.xpose.msra.mxu0 0.0
    %3281 = vmatprep.subr.mxu0 0.0
    %3282 = vmatpush1.xpose.msra.mxu0 0.0
    %3283 = vmatprep.subr.mxu0 0.0
    %3284 = vmatpush1.xpose.msra.mxu0 0.0
    %3285 = vmatprep.subr.mxu0 0.0
    %3286 = vmatpush1.xpose.msra.mxu0 0.0
    %3287 = vmatprep.subr.mxu0 0.0
    %3288 = vmatpush1.xpose.msra.mxu0 0.0
    %3289 = vmatprep.subr.mxu0 0.0
    %3290 = vmatpush1.xpose.msra.mxu0 0.0
    %3291 = vmatprep.subr.mxu0 0.0
    %3292 = vmatpush1.xpose.msra.mxu0 0.0
    %3293 = vmatprep.subr.mxu0 0.0
    %3294 = vmatpush1.xpose.msra.mxu0 0.0
    %3295 = vmatprep.subr.mxu0 0.0
    %3296 = vmatpush1.xpose.msra.mxu0 0.0
    %3297 = vmatprep.subr.mxu0 0.0
    %3298 = vmatpush1.xpose.msra.mxu0 0.0
    %3299 = vmatprep.subr.mxu0 0.0
    %3300 = vmatpush1.xpose.msra.mxu0 0.0
    %3301 = vmatprep.subr.mxu0 0.0
    %3302 = vmatpush1.xpose.msra.mxu0 0.0
    %3303 = vmatprep.subr.mxu0 0.0
    %3304 = vmatpush1.xpose.msra.mxu0 0.0
    %3305 = vmatprep.subr.mxu0 0.0
    %3306 = vmatpush1.xpose.msra.mxu0 0.0
    %3307 = vmatprep.subr.mxu0 0.0
    %3308 = vmatpush1.xpose.msra.mxu0 0.0
    %3309 = vmatprep.subr.mxu0 0.0
    %3310 = vmatpush1.xpose.msra.mxu0 0.0
    %3311 = vmatprep.subr.mxu0 0.0
    %3312 = vmatpush1.xpose.msra.mxu0 0.0
    %3313 = vmatprep.subr.mxu0 0.0
    %3314 = vmatpush1.xpose.msra.mxu0 0.0
    %3315 = vmatprep.subr.mxu0 0.0
    %3316 = vmatpush1.xpose.msra.mxu0 0.0
    %3317 = vmatprep.subr.mxu0 0.0
    %3318 = vmatpush1.xpose.msra.mxu0 0.0
    %3319 = vmatprep.subr.mxu0 0.0
    %3320 = vmatpush1.xpose.msra.mxu0 0.0
    %3321 = vmatprep.subr.mxu0 0.0
    %3322 = vmatpush1.xpose.msra.mxu0 0.0
    %3323 = vmatprep.subr.mxu0 0.0
    %3324 = vmatpush1.xpose.msra.mxu0 0.0
    %3325 = vmatprep.subr.mxu0 0.0
    %3326 = vmatpush1.xpose.msra.mxu0 0.0
    %3327 = vmatprep.subr.mxu0 0.0
    %3328 = vmatpush1.xpose.msra.mxu0 0.0
    %3329 = vmatprep.subr.mxu0 0.0
    %3330 = vmatpush1.xpose.msra.mxu0 0.0
    %3331 = vmatprep.subr.mxu0 0.0
    %3332 = vmatpush1.xpose.msra.mxu0 0.0
    %3333 = vmatprep.mubr.f32.mxu0 0.0
    %3334 = vmatmul.mubr.f32.gmra.mrb[0].mxu0 %v3265
    %v3335 = vpop.f32.mrb[0].mxu0
    %v3336 = vadd.f32 0.0, %v3335
    %v3337 = vpop.f32.mrb[0].mxu0
    %3338 = vdwg.mxu0
    %3339 = vrot.lane.b32.xlu0 %v218, 100
    %v3340 = vpop.permute.xlu0 %3339
    %3341 = vrot.lane.b32.xlu0 %v218, 92
    %v3342 = vpop.permute.xlu0 %3341
    %v3343 = vsel %vm280, %v3340, 0
    %v3345 = vsel %vm280, %v3342, 0
    %3347 = vmatprep.subr.mxu0 0.0
    %3348 = vmatpush1.xpose.msra.mxu0 %v3345
    %3349 = vmatprep.subr.mxu0 0.0
    %3350 = vmatpush1.xpose.msra.mxu0 0.0
    %3351 = vmatprep.subr.mxu0 0.0
    %3352 = vmatpush1.xpose.msra.mxu0 0.0
    %3353 = vmatprep.subr.mxu0 0.0
    %3354 = vmatpush1.xpose.msra.mxu0 0.0
    %3355 = vmatprep.subr.mxu0 0.0
    %3356 = vmatpush1.xpose.msra.mxu0 0.0
    %3357 = vmatprep.subr.mxu0 0.0
    %3358 = vmatpush1.xpose.msra.mxu0 0.0
    %3359 = vmatprep.subr.mxu0 0.0
    %3360 = vmatpush1.xpose.msra.mxu0 0.0
    %3361 = vmatprep.subr.mxu0 0.0
    %3362 = vmatpush1.xpose.msra.mxu0 0.0
    %3363 = vmatprep.subr.mxu0 0.0
    %3364 = vmatpush1.xpose.msra.mxu0 0.0
    %3365 = vmatprep.subr.mxu0 0.0
    %3366 = vmatpush1.xpose.msra.mxu0 0.0
    %3367 = vmatprep.subr.mxu0 0.0
    %3368 = vmatpush1.xpose.msra.mxu0 0.0
    %3369 = vmatprep.subr.mxu0 0.0
    %3370 = vmatpush1.xpose.msra.mxu0 0.0
    %3371 = vmatprep.subr.mxu0 0.0
    %3372 = vmatpush1.xpose.msra.mxu0 0.0
    %3373 = vmatprep.subr.mxu0 0.0
    %3374 = vmatpush1.xpose.msra.mxu0 0.0
    %3375 = vmatprep.subr.mxu0 0.0
    %3376 = vmatpush1.xpose.msra.mxu0 0.0
    %3377 = vmatprep.subr.mxu0 0.0
    %3378 = vmatpush1.xpose.msra.mxu0 0.0
    %3379 = vmatprep.subr.mxu0 0.0
    %3380 = vmatpush1.xpose.msra.mxu0 0.0
    %3381 = vmatprep.subr.mxu0 0.0
    %3382 = vmatpush1.xpose.msra.mxu0 0.0
    %3383 = vmatprep.subr.mxu0 0.0
    %3384 = vmatpush1.xpose.msra.mxu0 0.0
    %3385 = vmatprep.subr.mxu0 0.0
    %3386 = vmatpush1.xpose.msra.mxu0 0.0
    %3387 = vmatprep.subr.mxu0 0.0
    %3388 = vmatpush1.xpose.msra.mxu0 0.0
    %3389 = vmatprep.subr.mxu0 0.0
    %3390 = vmatpush1.xpose.msra.mxu0 0.0
    %3391 = vmatprep.subr.mxu0 0.0
    %3392 = vmatpush1.xpose.msra.mxu0 0.0
    %3393 = vmatprep.subr.mxu0 0.0
    %3394 = vmatpush1.xpose.msra.mxu0 0.0
    %3395 = vmatprep.subr.mxu0 0.0
    %3396 = vmatpush1.xpose.msra.mxu0 0.0
    %3397 = vmatprep.subr.mxu0 0.0
    %3398 = vmatpush1.xpose.msra.mxu0 0.0
    %3399 = vmatprep.subr.mxu0 0.0
    %3400 = vmatpush1.xpose.msra.mxu0 0.0
    %3401 = vmatprep.subr.mxu0 0.0
    %3402 = vmatpush1.xpose.msra.mxu0 0.0
    %3403 = vmatprep.subr.mxu0 0.0
    %3404 = vmatpush1.xpose.msra.mxu0 0.0
    %3405 = vmatprep.subr.mxu0 0.0
    %3406 = vmatpush1.xpose.msra.mxu0 0.0
    %3407 = vmatprep.subr.mxu0 0.0
    %3408 = vmatpush1.xpose.msra.mxu0 0.0
    %3409 = vmatprep.subr.mxu0 0.0
    %3410 = vmatpush1.xpose.msra.mxu0 0.0
    %3411 = vmatprep.mubr.f32.mxu0 0.0
    %3412 = vmatmul.mubr.f32.gmra.mrb[0].mxu0 %v3343
    %v3413 = vpop.f32.mrb[0].mxu0
    %v3414 = vadd.f32 0.0, %v3413
    %v3415 = vpop.f32.mrb[0].mxu0
    %3416 = vdwg.mxu0
    %3417 = vrot.lane.b32.xlu0 %v223, 100
    %v3418 = vpop.permute.xlu0 %3417
    %3419 = vrot.lane.b32.xlu0 %v223, 92
    %v3420 = vpop.permute.xlu0 %3419
    %v3421 = vsel %vm280, %v3418, 0
    %v3423 = vsel %vm280, %v3420, 0
    %3425 = vmatprep.subr.mxu0 0.0
    %3426 = vmatpush1.xpose.msra.mxu0 %v3423
    %3427 = vmatprep.subr.mxu0 0.0
    %3428 = vmatpush1.xpose.msra.mxu0 0.0
    %3429 = vmatprep.subr.mxu0 0.0
    %3430 = vmatpush1.xpose.msra.mxu0 0.0
    %3431 = vmatprep.subr.mxu0 0.0
    %3432 = vmatpush1.xpose.msra.mxu0 0.0
    %3433 = vmatprep.subr.mxu0 0.0
    %3434 = vmatpush1.xpose.msra.mxu0 0.0
    %3435 = vmatprep.subr.mxu0 0.0
    %3436 = vmatpush1.xpose.msra.mxu0 0.0
    %3437 = vmatprep.subr.mxu0 0.0
    %3438 = vmatpush1.xpose.msra.mxu0 0.0
    %3439 = vmatprep.subr.mxu0 0.0
    %3440 = vmatpush1.xpose.msra.mxu0 0.0
    %3441 = vmatprep.subr.mxu0 0.0
    %3442 = vmatpush1.xpose.msra.mxu0 0.0
    %3443 = vmatprep.subr.mxu0 0.0
    %3444 = vmatpush1.xpose.msra.mxu0 0.0
    %3445 = vmatprep.subr.mxu0 0.0
    %3446 = vmatpush1.xpose.msra.mxu0 0.0
    %3447 = vmatprep.subr.mxu0 0.0
    %3448 = vmatpush1.xpose.msra.mxu0 0.0
    %3449 = vmatprep.subr.mxu0 0.0
    %3450 = vmatpush1.xpose.msra.mxu0 0.0
    %3451 = vmatprep.subr.mxu0 0.0
    %3452 = vmatpush1.xpose.msra.mxu0 0.0
    %3453 = vmatprep.subr.mxu0 0.0
    %3454 = vmatpush1.xpose.msra.mxu0 0.0
    %3455 = vmatprep.subr.mxu0 0.0
    %3456 = vmatpush1.xpose.msra.mxu0 0.0
    %3457 = vmatprep.subr.mxu0 0.0
    %3458 = vmatpush1.xpose.msra.mxu0 0.0
    %3459 = vmatprep.subr.mxu0 0.0
    %3460 = vmatpush1.xpose.msra.mxu0 0.0
    %3461 = vmatprep.subr.mxu0 0.0
    %3462 = vmatpush1.xpose.msra.mxu0 0.0
    %3463 = vmatprep.subr.mxu0 0.0
    %3464 = vmatpush1.xpose.msra.mxu0 0.0
    %3465 = vmatprep.subr.mxu0 0.0
    %3466 = vmatpush1.xpose.msra.mxu0 0.0
    %3467 = vmatprep.subr.mxu0 0.0
    %3468 = vmatpush1.xpose.msra.mxu0 0.0
    %3469 = vmatprep.subr.mxu0 0.0
    %3470 = vmatpush1.xpose.msra.mxu0 0.0
    %3471 = vmatprep.subr.mxu0 0.0
    %3472 = vmatpush1.xpose.msra.mxu0 0.0
    %3473 = vmatprep.subr.mxu0 0.0
    %3474 = vmatpush1.xpose.msra.mxu0 0.0
    %3475 = vmatprep.subr.mxu0 0.0
    %3476 = vmatpush1.xpose.msra.mxu0 0.0
    %3477 = vmatprep.subr.mxu0 0.0
    %3478 = vmatpush1.xpose.msra.mxu0 0.0
    %3479 = vmatprep.subr.mxu0 0.0
    %3480 = vmatpush1.xpose.msra.mxu0 0.0
    %3481 = vmatprep.subr.mxu0 0.0
    %3482 = vmatpush1.xpose.msra.mxu0 0.0
    %3483 = vmatprep.subr.mxu0 0.0
    %3484 = vmatpush1.xpose.msra.mxu0 0.0
    %3485 = vmatprep.subr.mxu0 0.0
    %3486 = vmatpush1.xpose.msra.mxu0 0.0
    %3487 = vmatprep.subr.mxu0 0.0
    %3488 = vmatpush1.xpose.msra.mxu0 0.0
    %3489 = vmatprep.mubr.f32.mxu0 0.0
    %3490 = vmatmul.mubr.f32.gmra.mrb[0].mxu0 %v3421
    %v3491 = vpop.f32.mrb[0].mxu0
    %v3492 = vadd.f32 0.0, %v3491
    %v3493 = vpop.f32.mrb[0].mxu0
    %3494 = vdwg.mxu0
    %3495 = vrot.lane.b32.xlu0 %v228, 100
    %v3496 = vpop.permute.xlu0 %3495
    %3497 = vrot.lane.b32.xlu0 %v228, 92
    %v3498 = vpop.permute.xlu0 %3497
    %v3499 = vsel %vm280, %v3496, 0
    %v3501 = vsel %vm280, %v3498, 0
    %3503 = vmatprep.subr.mxu0 0.0
    %3504 = vmatpush1.xpose.msra.mxu0 %v3501
    %3505 = vmatprep.subr.mxu0 0.0
    %3506 = vmatpush1.xpose.msra.mxu0 0.0
    %3507 = vmatprep.subr.mxu0 0.0
    %3508 = vmatpush1.xpose.msra.mxu0 0.0
    %3509 = vmatprep.subr.mxu0 0.0
    %3510 = vmatpush1.xpose.msra.mxu0 0.0
    %3511 = vmatprep.subr.mxu0 0.0
    %3512 = vmatpush1.xpose.msra.mxu0 0.0
    %3513 = vmatprep.subr.mxu0 0.0
    %3514 = vmatpush1.xpose.msra.mxu0 0.0
    %3515 = vmatprep.subr.mxu0 0.0
    %3516 = vmatpush1.xpose.msra.mxu0 0.0
    %3517 = vmatprep.subr.mxu0 0.0
    %3518 = vmatpush1.xpose.msra.mxu0 0.0
    %3519 = vmatprep.subr.mxu0 0.0
    %3520 = vmatpush1.xpose.msra.mxu0 0.0
    %3521 = vmatprep.subr.mxu0 0.0
    %3522 = vmatpush1.xpose.msra.mxu0 0.0
    %3523 = vmatprep.subr.mxu0 0.0
    %3524 = vmatpush1.xpose.msra.mxu0 0.0
    %3525 = vmatprep.subr.mxu0 0.0
    %3526 = vmatpush1.xpose.msra.mxu0 0.0
    %3527 = vmatprep.subr.mxu0 0.0
    %3528 = vmatpush1.xpose.msra.mxu0 0.0
    %3529 = vmatprep.subr.mxu0 0.0
    %3530 = vmatpush1.xpose.msra.mxu0 0.0
    %3531 = vmatprep.subr.mxu0 0.0
    %3532 = vmatpush1.xpose.msra.mxu0 0.0
    %3533 = vmatprep.subr.mxu0 0.0
    %3534 = vmatpush1.xpose.msra.mxu0 0.0
    %3535 = vmatprep.subr.mxu0 0.0
    %3536 = vmatpush1.xpose.msra.mxu0 0.0
    %3537 = vmatprep.subr.mxu0 0.0
    %3538 = vmatpush1.xpose.msra.mxu0 0.0
    %3539 = vmatprep.subr.mxu0 0.0
    %3540 = vmatpush1.xpose.msra.mxu0 0.0
    %3541 = vmatprep.subr.mxu0 0.0
    %3542 = vmatpush1.xpose.msra.mxu0 0.0
    %3543 = vmatprep.subr.mxu0 0.0
    %3544 = vmatpush1.xpose.msra.mxu0 0.0
    %3545 = vmatprep.subr.mxu0 0.0
    %3546 = vmatpush1.xpose.msra.mxu0 0.0
    %3547 = vmatprep.subr.mxu0 0.0
    %3548 = vmatpush1.xpose.msra.mxu0 0.0
    %3549 = vmatprep.subr.mxu0 0.0
    %3550 = vmatpush1.xpose.msra.mxu0 0.0
    %3551 = vmatprep.subr.mxu0 0.0
    %3552 = vmatpush1.xpose.msra.mxu0 0.0
    %3553 = vmatprep.subr.mxu0 0.0
    %3554 = vmatpush1.xpose.msra.mxu0 0.0
    %3555 = vmatprep.subr.mxu0 0.0
    %3556 = vmatpush1.xpose.msra.mxu0 0.0
    %3557 = vmatprep.subr.mxu0 0.0
    %3558 = vmatpush1.xpose.msra.mxu0 0.0
    %3559 = vmatprep.subr.mxu0 0.0
    %3560 = vmatpush1.xpose.msra.mxu0 0.0
    %3561 = vmatprep.subr.mxu0 0.0
    %3562 = vmatpush1.xpose.msra.mxu0 0.0
    %3563 = vmatprep.subr.mxu0 0.0
    %3564 = vmatpush1.xpose.msra.mxu0 0.0
    %3565 = vmatprep.subr.mxu0 0.0
    %3566 = vmatpush1.xpose.msra.mxu0 0.0
    %3567 = vmatprep.mubr.f32.mxu0 0.0
    %3568 = vmatmul.mubr.f32.gmra.mrb[0].mxu0 %v3499
    %v3569 = vpop.f32.mrb[0].mxu0
    %v3570 = vadd.f32 0.0, %v3569
    %v3571 = vpop.f32.mrb[0].mxu0
    %3572 = vdwg.mxu0
    %3573 = vrot.lane.b32.xlu0 %v233, 100
    %v3574 = vpop.permute.xlu0 %3573
    %3575 = vrot.lane.b32.xlu0 %v233, 92
    %v3576 = vpop.permute.xlu0 %3575
    %v3577 = vsel %vm280, %v3574, 0
    %v3579 = vsel %vm280, %v3576, 0
    %3581 = vmatprep.subr.mxu0 0.0
    %3582 = vmatpush1.xpose.msra.mxu0 %v3579
    %3583 = vmatprep.subr.mxu0 0.0
    %3584 = vmatpush1.xpose.msra.mxu0 0.0
    %3585 = vmatprep.subr.mxu0 0.0
    %3586 = vmatpush1.xpose.msra.mxu0 0.0
    %3587 = vmatprep.subr.mxu0 0.0
    %3588 = vmatpush1.xpose.msra.mxu0 0.0
    %3589 = vmatprep.subr.mxu0 0.0
    %3590 = vmatpush1.xpose.msra.mxu0 0.0
    %3591 = vmatprep.subr.mxu0 0.0
    %3592 = vmatpush1.xpose.msra.mxu0 0.0
    %3593 = vmatprep.subr.mxu0 0.0
    %3594 = vmatpush1.xpose.msra.mxu0 0.0
    %3595 = vmatprep.subr.mxu0 0.0
    %3596 = vmatpush1.xpose.msra.mxu0 0.0
    %3597 = vmatprep.subr.mxu0 0.0
    %3598 = vmatpush1.xpose.msra.mxu0 0.0
    %3599 = vmatprep.subr.mxu0 0.0
    %3600 = vmatpush1.xpose.msra.mxu0 0.0
    %3601 = vmatprep.subr.mxu0 0.0
    %3602 = vmatpush1.xpose.msra.mxu0 0.0
    %3603 = vmatprep.subr.mxu0 0.0
    %3604 = vmatpush1.xpose.msra.mxu0 0.0
    %3605 = vmatprep.subr.mxu0 0.0
    %3606 = vmatpush1.xpose.msra.mxu0 0.0
    %3607 = vmatprep.subr.mxu0 0.0
    %3608 = vmatpush1.xpose.msra.mxu0 0.0
    %3609 = vmatprep.subr.mxu0 0.0
    %3610 = vmatpush1.xpose.msra.mxu0 0.0
    %3611 = vmatprep.subr.mxu0 0.0
    %3612 = vmatpush1.xpose.msra.mxu0 0.0
    %3613 = vmatprep.subr.mxu0 0.0
    %3614 = vmatpush1.xpose.msra.mxu0 0.0
    %3615 = vmatprep.subr.mxu0 0.0
    %3616 = vmatpush1.xpose.msra.mxu0 0.0
    %3617 = vmatprep.subr.mxu0 0.0
    %3618 = vmatpush1.xpose.msra.mxu0 0.0
    %3619 = vmatprep.subr.mxu0 0.0
    %3620 = vmatpush1.xpose.msra.mxu0 0.0
    %3621 = vmatprep.subr.mxu0 0.0
    %3622 = vmatpush1.xpose.msra.mxu0 0.0
    %3623 = vmatprep.subr.mxu0 0.0
    %3624 = vmatpush1.xpose.msra.mxu0 0.0
    %3625 = vmatprep.subr.mxu0 0.0
    %3626 = vmatpush1.xpose.msra.mxu0 0.0
    %3627 = vmatprep.subr.mxu0 0.0
    %3628 = vmatpush1.xpose.msra.mxu0 0.0
    %3629 = vmatprep.subr.mxu0 0.0
    %3630 = vmatpush1.xpose.msra.mxu0 0.0
    %3631 = vmatprep.subr.mxu0 0.0
    %3632 = vmatpush1.xpose.msra.mxu0 0.0
    %3633 = vmatprep.subr.mxu0 0.0
    %3634 = vmatpush1.xpose.msra.mxu0 0.0
    %3635 = vmatprep.subr.mxu0 0.0
    %3636 = vmatpush1.xpose.msra.mxu0 0.0
    %3637 = vmatprep.subr.mxu0 0.0
    %3638 = vmatpush1.xpose.msra.mxu0 0.0
    %3639 = vmatprep.subr.mxu0 0.0
    %3640 = vmatpush1.xpose.msra.mxu0 0.0
    %3641 = vmatprep.subr.mxu0 0.0
    %3642 = vmatpush1.xpose.msra.mxu0 0.0
    %3643 = vmatprep.subr.mxu0 0.0
    %3644 = vmatpush1.xpose.msra.mxu0 0.0
    %3645 = vmatprep.mubr.f32.mxu0 0.0
    %3646 = vmatmul.mubr.f32.gmra.mrb[0].mxu0 %v3577
    %v3647 = vpop.f32.mrb[0].mxu0
    %v3648 = vadd.f32 0.0, %v3647
    %v3649 = vpop.f32.mrb[0].mxu0
    %3650 = vdwg.mxu0
    %3651 = vrot.lane.b32.xlu0 %v238, 100
    %v3652 = vpop.permute.xlu0 %3651
    %3653 = vrot.lane.b32.xlu0 %v238, 92
    %v3654 = vpop.permute.xlu0 %3653
    %v3655 = vsel %vm280, %v3652, 0
    %v3657 = vsel %vm280, %v3654, 0
    %3659 = vmatprep.subr.mxu0 0.0
    %3660 = vmatpush1.xpose.msra.mxu0 %v3657
    %3661 = vmatprep.subr.mxu0 0.0
    %3662 = vmatpush1.xpose.msra.mxu0 0.0
    %3663 = vmatprep.subr.mxu0 0.0
    %3664 = vmatpush1.xpose.msra.mxu0 0.0
    %3665 = vmatprep.subr.mxu0 0.0
    %3666 = vmatpush1.xpose.msra.mxu0 0.0
    %3667 = vmatprep.subr.mxu0 0.0
    %3668 = vmatpush1.xpose.msra.mxu0 0.0
    %3669 = vmatprep.subr.mxu0 0.0
    %3670 = vmatpush1.xpose.msra.mxu0 0.0
    %3671 = vmatprep.subr.mxu0 0.0
    %3672 = vmatpush1.xpose.msra.mxu0 0.0
    %3673 = vmatprep.subr.mxu0 0.0
    %3674 = vmatpush1.xpose.msra.mxu0 0.0
    %3675 = vmatprep.subr.mxu0 0.0
    %3676 = vmatpush1.xpose.msra.mxu0 0.0
    %3677 = vmatprep.subr.mxu0 0.0
    %3678 = vmatpush1.xpose.msra.mxu0 0.0
    %3679 = vmatprep.subr.mxu0 0.0
    %3680 = vmatpush1.xpose.msra.mxu0 0.0
    %3681 = vmatprep.subr.mxu0 0.0
    %3682 = vmatpush1.xpose.msra.mxu0 0.0
    %3683 = vmatprep.subr.mxu0 0.0
    %3684 = vmatpush1.xpose.msra.mxu0 0.0
    %3685 = vmatprep.subr.mxu0 0.0
    %3686 = vmatpush1.xpose.msra.mxu0 0.0
    %3687 = vmatprep.subr.mxu0 0.0
    %3688 = vmatpush1.xpose.msra.mxu0 0.0
    %3689 = vmatprep.subr.mxu0 0.0
    %3690 = vmatpush1.xpose.msra.mxu0 0.0
    %3691 = vmatprep.subr.mxu0 0.0
    %3692 = vmatpush1.xpose.msra.mxu0 0.0
    %3693 = vmatprep.subr.mxu0 0.0
    %3694 = vmatpush1.xpose.msra.mxu0 0.0
    %3695 = vmatprep.subr.mxu0 0.0
    %3696 = vmatpush1.xpose.msra.mxu0 0.0
    %3697 = vmatprep.subr.mxu0 0.0
    %3698 = vmatpush1.xpose.msra.mxu0 0.0
    %3699 = vmatprep.subr.mxu0 0.0
    %3700 = vmatpush1.xpose.msra.mxu0 0.0
    %3701 = vmatprep.subr.mxu0 0.0
    %3702 = vmatpush1.xpose.msra.mxu0 0.0
    %3703 = vmatprep.subr.mxu0 0.0
    %3704 = vmatpush1.xpose.msra.mxu0 0.0
    %3705 = vmatprep.subr.mxu0 0.0
    %3706 = vmatpush1.xpose.msra.mxu0 0.0
    %3707 = vmatprep.subr.mxu0 0.0
    %3708 = vmatpush1.xpose.msra.mxu0 0.0
    %3709 = vmatprep.subr.mxu0 0.0
    %3710 = vmatpush1.xpose.msra.mxu0 0.0
    %3711 = vmatprep.subr.mxu0 0.0
    %3712 = vmatpush1.xpose.msra.mxu0 0.0
    %3713 = vmatprep.subr.mxu0 0.0
    %3714 = vmatpush1.xpose.msra.mxu0 0.0
    %3715 = vmatprep.subr.mxu0 0.0
    %3716 = vmatpush1.xpose.msra.mxu0 0.0
    %3717 = vmatprep.subr.mxu0 0.0
    %3718 = vmatpush1.xpose.msra.mxu0 0.0
    %3719 = vmatprep.subr.mxu0 0.0
    %3720 = vmatpush1.xpose.msra.mxu0 0.0
    %3721 = vmatprep.subr.mxu0 0.0
    %3722 = vmatpush1.xpose.msra.mxu0 0.0
    %3723 = vmatprep.mubr.f32.mxu0 0.0
    %3724 = vmatmul.mubr.f32.gmra.mrb[0].mxu0 %v3655
    %v3725 = vpop.f32.mrb[0].mxu0
    %v3726 = vadd.f32 0.0, %v3725
    %v3727 = vpop.f32.mrb[0].mxu0
    %3728 = vdwg.mxu0
    %3729 = vrot.lane.b32.xlu0 %v243, 100
    %v3730 = vpop.permute.xlu0 %3729
    %3731 = vrot.lane.b32.xlu0 %v243, 92
    %v3732 = vpop.permute.xlu0 %3731
    %v3733 = vsel %vm280, %v3730, 0
    %v3735 = vsel %vm280, %v3732, 0
    %3737 = vmatprep.subr.mxu0 0.0
    %3738 = vmatpush1.xpose.msra.mxu0 %v3735
    %3739 = vmatprep.subr.mxu0 0.0
    %3740 = vmatpush1.xpose.msra.mxu0 0.0
    %3741 = vmatprep.subr.mxu0 0.0
    %3742 = vmatpush1.xpose.msra.mxu0 0.0
    %3743 = vmatprep.subr.mxu0 0.0
    %3744 = vmatpush1.xpose.msra.mxu0 0.0
    %3745 = vmatprep.subr.mxu0 0.0
    %3746 = vmatpush1.xpose.msra.mxu0 0.0
    %3747 = vmatprep.subr.mxu0 0.0
    %3748 = vmatpush1.xpose.msra.mxu0 0.0
    %3749 = vmatprep.subr.mxu0 0.0
    %3750 = vmatpush1.xpose.msra.mxu0 0.0
    %3751 = vmatprep.subr.mxu0 0.0
    %3752 = vmatpush1.xpose.msra.mxu0 0.0
    %3753 = vmatprep.subr.mxu0 0.0
    %3754 = vmatpush1.xpose.msra.mxu0 0.0
    %3755 = vmatprep.subr.mxu0 0.0
    %3756 = vmatpush1.xpose.msra.mxu0 0.0
    %3757 = vmatprep.subr.mxu0 0.0
    %3758 = vmatpush1.xpose.msra.mxu0 0.0
    %3759 = vmatprep.subr.mxu0 0.0
    %3760 = vmatpush1.xpose.msra.mxu0 0.0
    %3761 = vmatprep.subr.mxu0 0.0
    %3762 = vmatpush1.xpose.msra.mxu0 0.0
    %3763 = vmatprep.subr.mxu0 0.0
    %3764 = vmatpush1.xpose.msra.mxu0 0.0
    %3765 = vmatprep.subr.mxu0 0.0
    %3766 = vmatpush1.xpose.msra.mxu0 0.0
    %3767 = vmatprep.subr.mxu0 0.0
    %3768 = vmatpush1.xpose.msra.mxu0 0.0
    %3769 = vmatprep.subr.mxu0 0.0
    %3770 = vmatpush1.xpose.msra.mxu0 0.0
    %3771 = vmatprep.subr.mxu0 0.0
    %3772 = vmatpush1.xpose.msra.mxu0 0.0
    %3773 = vmatprep.subr.mxu0 0.0
    %3774 = vmatpush1.xpose.msra.mxu0 0.0
    %3775 = vmatprep.subr.mxu0 0.0
    %3776 = vmatpush1.xpose.msra.mxu0 0.0
    %3777 = vmatprep.subr.mxu0 0.0
    %3778 = vmatpush1.xpose.msra.mxu0 0.0
    %3779 = vmatprep.subr.mxu0 0.0
    %3780 = vmatpush1.xpose.msra.mxu0 0.0
    %3781 = vmatprep.subr.mxu0 0.0
    %3782 = vmatpush1.xpose.msra.mxu0 0.0
    %3783 = vmatprep.subr.mxu0 0.0
    %3784 = vmatpush1.xpose.msra.mxu0 0.0
    %3785 = vmatprep.subr.mxu0 0.0
    %3786 = vmatpush1.xpose.msra.mxu0 0.0
    %3787 = vmatprep.subr.mxu0 0.0
    %3788 = vmatpush1.xpose.msra.mxu0 0.0
    %3789 = vmatprep.subr.mxu0 0.0
    %3790 = vmatpush1.xpose.msra.mxu0 0.0
    %3791 = vmatprep.subr.mxu0 0.0
    %3792 = vmatpush1.xpose.msra.mxu0 0.0
    %3793 = vmatprep.subr.mxu0 0.0
    %3794 = vmatpush1.xpose.msra.mxu0 0.0
    %3795 = vmatprep.subr.mxu0 0.0
    %3796 = vmatpush1.xpose.msra.mxu0 0.0
    %3797 = vmatprep.subr.mxu0 0.0
    %3798 = vmatpush1.xpose.msra.mxu0 0.0
    %3799 = vmatprep.subr.mxu0 0.0
    %3800 = vmatpush1.xpose.msra.mxu0 0.0
    %3801 = vmatprep.mubr.f32.mxu0 0.0
    %3802 = vmatmul.mubr.f32.gmra.mrb[0].mxu0 %v3733
    %v3803 = vpop.f32.mrb[0].mxu0
    %v3804 = vadd.f32 0.0, %v3803
    %v3805 = vpop.f32.mrb[0].mxu0
    %3806 = vdwg.mxu0
    %3807 = vrot.lane.b32.xlu0 %v248, 100
    %v3808 = vpop.permute.xlu0 %3807
    %3809 = vrot.lane.b32.xlu0 %v248, 92
    %v3810 = vpop.permute.xlu0 %3809
    %v3811 = vsel %vm280, %v3808, 0
    %v3813 = vsel %vm280, %v3810, 0
    %3815 = vmatprep.subr.mxu0 0.0
    %3816 = vmatpush1.xpose.msra.mxu0 %v3813
    %3817 = vmatprep.subr.mxu0 0.0
    %3818 = vmatpush1.xpose.msra.mxu0 0.0
    %3819 = vmatprep.subr.mxu0 0.0
    %3820 = vmatpush1.xpose.msra.mxu0 0.0
    %3821 = vmatprep.subr.mxu0 0.0
    %3822 = vmatpush1.xpose.msra.mxu0 0.0
    %3823 = vmatprep.subr.mxu0 0.0
    %3824 = vmatpush1.xpose.msra.mxu0 0.0
    %3825 = vmatprep.subr.mxu0 0.0
    %3826 = vmatpush1.xpose.msra.mxu0 0.0
    %3827 = vmatprep.subr.mxu0 0.0
    %3828 = vmatpush1.xpose.msra.mxu0 0.0
    %3829 = vmatprep.subr.mxu0 0.0
    %3830 = vmatpush1.xpose.msra.mxu0 0.0
    %3831 = vmatprep.subr.mxu0 0.0
    %3832 = vmatpush1.xpose.msra.mxu0 0.0
    %3833 = vmatprep.subr.mxu0 0.0
    %3834 = vmatpush1.xpose.msra.mxu0 0.0
    %3835 = vmatprep.subr.mxu0 0.0
    %3836 = vmatpush1.xpose.msra.mxu0 0.0
    %3837 = vmatprep.subr.mxu0 0.0
    %3838 = vmatpush1.xpose.msra.mxu0 0.0
    %3839 = vmatprep.subr.mxu0 0.0
    %3840 = vmatpush1.xpose.msra.mxu0 0.0
    %3841 = vmatprep.subr.mxu0 0.0
    %3842 = vmatpush1.xpose.msra.mxu0 0.0
    %3843 = vmatprep.subr.mxu0 0.0
    %3844 = vmatpush1.xpose.msra.mxu0 0.0
    %3845 = vmatprep.subr.mxu0 0.0
    %3846 = vmatpush1.xpose.msra.mxu0 0.0
    %3847 = vmatprep.subr.mxu0 0.0
    %3848 = vmatpush1.xpose.msra.mxu0 0.0
    %3849 = vmatprep.subr.mxu0 0.0
    %3850 = vmatpush1.xpose.msra.mxu0 0.0
    %3851 = vmatprep.subr.mxu0 0.0
    %3852 = vmatpush1.xpose.msra.mxu0 0.0
    %3853 = vmatprep.subr.mxu0 0.0
    %3854 = vmatpush1.xpose.msra.mxu0 0.0
    %3855 = vmatprep.subr.mxu0 0.0
    %3856 = vmatpush1.xpose.msra.mxu0 0.0
    %3857 = vmatprep.subr.mxu0 0.0
    %3858 = vmatpush1.xpose.msra.mxu0 0.0
    %3859 = vmatprep.subr.mxu0 0.0
    %3860 = vmatpush1.xpose.msra.mxu0 0.0
    %3861 = vmatprep.subr.mxu0 0.0
    %3862 = vmatpush1.xpose.msra.mxu0 0.0
    %3863 = vmatprep.subr.mxu0 0.0
    %3864 = vmatpush1.xpose.msra.mxu0 0.0
    %3865 = vmatprep.subr.mxu0 0.0
    %3866 = vmatpush1.xpose.msra.mxu0 0.0
    %3867 = vmatprep.subr.mxu0 0.0
    %3868 = vmatpush1.xpose.msra.mxu0 0.0
    %3869 = vmatprep.subr.mxu0 0.0
    %3870 = vmatpush1.xpose.msra.mxu0 0.0
    %3871 = vmatprep.subr.mxu0 0.0
    %3872 = vmatpush1.xpose.msra.mxu0 0.0
    %3873 = vmatprep.subr.mxu0 0.0
    %3874 = vmatpush1.xpose.msra.mxu0 0.0
    %3875 = vmatprep.subr.mxu0 0.0
    %3876 = vmatpush1.xpose.msra.mxu0 0.0
    %3877 = vmatprep.subr.mxu0 0.0
    %3878 = vmatpush1.xpose.msra.mxu0 0.0
    %3879 = vmatprep.mubr.f32.mxu0 0.0
    %3880 = vmatmul.mubr.f32.gmra.mrb[0].mxu0 %v3811
    %v3881 = vpop.f32.mrb[0].mxu0
    %v3882 = vadd.f32 0.0, %v3881
    %v3883 = vpop.f32.mrb[0].mxu0
    %3884 = vdwg.mxu0
    %3885 = vrot.lane.b32.xlu0 %v253, 100
    %v3886 = vpop.permute.xlu0 %3885
    %3887 = vrot.lane.b32.xlu0 %v253, 92
    %v3888 = vpop.permute.xlu0 %3887
    %v3889 = vsel %vm280, %v3886, 0
    %v3891 = vsel %vm280, %v3888, 0
    %3893 = vmatprep.subr.mxu0 0.0
    %3894 = vmatpush1.xpose.msra.mxu0 %v3891
    %3895 = vmatprep.subr.mxu0 0.0
    %3896 = vmatpush1.xpose.msra.mxu0 0.0
    %3897 = vmatprep.subr.mxu0 0.0
    %3898 = vmatpush1.xpose.msra.mxu0 0.0
    %3899 = vmatprep.subr.mxu0 0.0
    %3900 = vmatpush1.xpose.msra.mxu0 0.0
    %3901 = vmatprep.subr.mxu0 0.0
    %3902 = vmatpush1.xpose.msra.mxu0 0.0
    %3903 = vmatprep.subr.mxu0 0.0
    %3904 = vmatpush1.xpose.msra.mxu0 0.0
    %3905 = vmatprep.subr.mxu0 0.0
    %3906 = vmatpush1.xpose.msra.mxu0 0.0
    %3907 = vmatprep.subr.mxu0 0.0
    %3908 = vmatpush1.xpose.msra.mxu0 0.0
    %3909 = vmatprep.subr.mxu0 0.0
    %3910 = vmatpush1.xpose.msra.mxu0 0.0
    %3911 = vmatprep.subr.mxu0 0.0
    %3912 = vmatpush1.xpose.msra.mxu0 0.0
    %3913 = vmatprep.subr.mxu0 0.0
    %3914 = vmatpush1.xpose.msra.mxu0 0.0
    %3915 = vmatprep.subr.mxu0 0.0
    %3916 = vmatpush1.xpose.msra.mxu0 0.0
    %3917 = vmatprep.subr.mxu0 0.0
    %3918 = vmatpush1.xpose.msra.mxu0 0.0
    %3919 = vmatprep.subr.mxu0 0.0
    %3920 = vmatpush1.xpose.msra.mxu0 0.0
    %3921 = vmatprep.subr.mxu0 0.0
    %3922 = vmatpush1.xpose.msra.mxu0 0.0
    %3923 = vmatprep.subr.mxu0 0.0
    %3924 = vmatpush1.xpose.msra.mxu0 0.0
    %3925 = vmatprep.subr.mxu0 0.0
    %3926 = vmatpush1.xpose.msra.mxu0 0.0
    %3927 = vmatprep.subr.mxu0 0.0
    %3928 = vmatpush1.xpose.msra.mxu0 0.0
    %3929 = vmatprep.subr.mxu0 0.0
    %3930 = vmatpush1.xpose.msra.mxu0 0.0
    %3931 = vmatprep.subr.mxu0 0.0
    %3932 = vmatpush1.xpose.msra.mxu0 0.0
    %3933 = vmatprep.subr.mxu0 0.0
    %3934 = vmatpush1.xpose.msra.mxu0 0.0
    %3935 = vmatprep.subr.mxu0 0.0
    %3936 = vmatpush1.xpose.msra.mxu0 0.0
    %3937 = vmatprep.subr.mxu0 0.0
    %3938 = vmatpush1.xpose.msra.mxu0 0.0
    %3939 = vmatprep.subr.mxu0 0.0
    %3940 = vmatpush1.xpose.msra.mxu0 0.0
    %3941 = vmatprep.subr.mxu0 0.0
    %3942 = vmatpush1.xpose.msra.mxu0 0.0
    %3943 = vmatprep.subr.mxu0 0.0
    %3944 = vmatpush1.xpose.msra.mxu0 0.0
    %3945 = vmatprep.subr.mxu0 0.0
    %3946 = vmatpush1.xpose.msra.mxu0 0.0
    %3947 = vmatprep.subr.mxu0 0.0
    %3948 = vmatpush1.xpose.msra.mxu0 0.0
    %3949 = vmatprep.subr.mxu0 0.0
    %3950 = vmatpush1.xpose.msra.mxu0 0.0
    %3951 = vmatprep.subr.mxu0 0.0
    %3952 = vmatpush1.xpose.msra.mxu0 0.0
    %3953 = vmatprep.subr.mxu0 0.0
    %3954 = vmatpush1.xpose.msra.mxu0 0.0
    %3955 = vmatprep.subr.mxu0 0.0
    %3956 = vmatpush1.xpose.msra.mxu0 0.0
    %3957 = vmatprep.mubr.f32.mxu0 0.0
    %3958 = vmatmul.mubr.f32.gmra.mrb[0].mxu0 %v3889
    %v3959 = vpop.f32.mrb[0].mxu0
    %v3960 = vadd.f32 0.0, %v3959
    %v3961 = vpop.f32.mrb[0].mxu0
    %3962 = vdwg.mxu0
    %3963 = vrot.lane.b32.xlu0 %v258, 100
    %v3964 = vpop.permute.xlu0 %3963
    %3965 = vrot.lane.b32.xlu0 %v258, 92
    %v3966 = vpop.permute.xlu0 %3965
    %v3967 = vsel %vm280, %v3964, 0
    %v3969 = vsel %vm280, %v3966, 0
    %3971 = vmatprep.subr.mxu0 0.0
    %3972 = vmatpush1.xpose.msra.mxu0 %v3969
    %3973 = vmatprep.subr.mxu0 0.0
    %3974 = vmatpush1.xpose.msra.mxu0 0.0
    %3975 = vmatprep.subr.mxu0 0.0
    %3976 = vmatpush1.xpose.msra.mxu0 0.0
    %3977 = vmatprep.subr.mxu0 0.0
    %3978 = vmatpush1.xpose.msra.mxu0 0.0
    %3979 = vmatprep.subr.mxu0 0.0
    %3980 = vmatpush1.xpose.msra.mxu0 0.0
    %3981 = vmatprep.subr.mxu0 0.0
    %3982 = vmatpush1.xpose.msra.mxu0 0.0
    %3983 = vmatprep.subr.mxu0 0.0
    %3984 = vmatpush1.xpose.msra.mxu0 0.0
    %3985 = vmatprep.subr.mxu0 0.0
    %3986 = vmatpush1.xpose.msra.mxu0 0.0
    %3987 = vmatprep.subr.mxu0 0.0
    %3988 = vmatpush1.xpose.msra.mxu0 0.0
    %3989 = vmatprep.subr.mxu0 0.0
    %3990 = vmatpush1.xpose.msra.mxu0 0.0
    %3991 = vmatprep.subr.mxu0 0.0
    %3992 = vmatpush1.xpose.msra.mxu0 0.0
    %3993 = vmatprep.subr.mxu0 0.0
    %3994 = vmatpush1.xpose.msra.mxu0 0.0
    %3995 = vmatprep.subr.mxu0 0.0
    %3996 = vmatpush1.xpose.msra.mxu0 0.0
    %3997 = vmatprep.subr.mxu0 0.0
    %3998 = vmatpush1.xpose.msra.mxu0 0.0
    %3999 = vmatprep.subr.mxu0 0.0
    %4000 = vmatpush1.xpose.msra.mxu0 0.0
    %4001 = vmatprep.subr.mxu0 0.0
    %4002 = vmatpush1.xpose.msra.mxu0 0.0
    %4003 = vmatprep.subr.mxu0 0.0
    %4004 = vmatpush1.xpose.msra.mxu0 0.0
    %4005 = vmatprep.subr.mxu0 0.0
    %4006 = vmatpush1.xpose.msra.mxu0 0.0
    %4007 = vmatprep.subr.mxu0 0.0
    %4008 = vmatpush1.xpose.msra.mxu0 0.0
    %4009 = vmatprep.subr.mxu0 0.0
    %4010 = vmatpush1.xpose.msra.mxu0 0.0
    %4011 = vmatprep.subr.mxu0 0.0
    %4012 = vmatpush1.xpose.msra.mxu0 0.0
    %4013 = vmatprep.subr.mxu0 0.0
    %4014 = vmatpush1.xpose.msra.mxu0 0.0
    %4015 = vmatprep.subr.mxu0 0.0
    %4016 = vmatpush1.xpose.msra.mxu0 0.0
    %4017 = vmatprep.subr.mxu0 0.0
    %4018 = vmatpush1.xpose.msra.mxu0 0.0
    %4019 = vmatprep.subr.mxu0 0.0
    %4020 = vmatpush1.xpose.msra.mxu0 0.0
    %4021 = vmatprep.subr.mxu0 0.0
    %4022 = vmatpush1.xpose.msra.mxu0 0.0
    %4023 = vmatprep.subr.mxu0 0.0
    %4024 = vmatpush1.xpose.msra.mxu0 0.0
    %4025 = vmatprep.subr.mxu0 0.0
    %4026 = vmatpush1.xpose.msra.mxu0 0.0
    %4027 = vmatprep.subr.mxu0 0.0
    %4028 = vmatpush1.xpose.msra.mxu0 0.0
    %4029 = vmatprep.subr.mxu0 0.0
    %4030 = vmatpush1.xpose.msra.mxu0 0.0
    %4031 = vmatprep.subr.mxu0 0.0
    %4032 = vmatpush1.xpose.msra.mxu0 0.0
    %4033 = vmatprep.subr.mxu0 0.0
    %4034 = vmatpush1.xpose.msra.mxu0 0.0
    %4035 = vmatprep.mubr.f32.mxu0 0.0
    %4036 = vmatmul.mubr.f32.gmra.mrb[0].mxu0 %v3967
    %v4037 = vpop.f32.mrb[0].mxu0
    %v4038 = vadd.f32 0.0, %v4037
    %v4039 = vpop.f32.mrb[0].mxu0
    %4040 = vdwg.mxu0
    %4041 = vrot.lane.b32.xlu0 %v263, 100
    %v4042 = vpop.permute.xlu0 %4041
    %4043 = vrot.lane.b32.xlu0 %v263, 92
    %v4044 = vpop.permute.xlu0 %4043
    %v4045 = vsel %vm280, %v4042, 0
    %v4047 = vsel %vm280, %v4044, 0
    %4049 = vmatprep.subr.mxu0 0.0
    %4050 = vmatpush1.xpose.msra.mxu0 %v4047
    %4051 = vmatprep.subr.mxu0 0.0
    %4052 = vmatpush1.xpose.msra.mxu0 0.0
    %4053 = vmatprep.subr.mxu0 0.0
    %4054 = vmatpush1.xpose.msra.mxu0 0.0
    %4055 = vmatprep.subr.mxu0 0.0
    %4056 = vmatpush1.xpose.msra.mxu0 0.0
    %4057 = vmatprep.subr.mxu0 0.0
    %4058 = vmatpush1.xpose.msra.mxu0 0.0
    %4059 = vmatprep.subr.mxu0 0.0
    %4060 = vmatpush1.xpose.msra.mxu0 0.0
    %4061 = vmatprep.subr.mxu0 0.0
    %4062 = vmatpush1.xpose.msra.mxu0 0.0
    %4063 = vmatprep.subr.mxu0 0.0
    %4064 = vmatpush1.xpose.msra.mxu0 0.0
    %4065 = vmatprep.subr.mxu0 0.0
    %4066 = vmatpush1.xpose.msra.mxu0 0.0
    %4067 = vmatprep.subr.mxu0 0.0
    %4068 = vmatpush1.xpose.msra.mxu0 0.0
    %4069 = vmatprep.subr.mxu0 0.0
    %4070 = vmatpush1.xpose.msra.mxu0 0.0
    %4071 = vmatprep.subr.mxu0 0.0
    %4072 = vmatpush1.xpose.msra.mxu0 0.0
    %4073 = vmatprep.subr.mxu0 0.0
    %4074 = vmatpush1.xpose.msra.mxu0 0.0
    %4075 = vmatprep.subr.mxu0 0.0
    %4076 = vmatpush1.xpose.msra.mxu0 0.0
    %4077 = vmatprep.subr.mxu0 0.0
    %4078 = vmatpush1.xpose.msra.mxu0 0.0
    %4079 = vmatprep.subr.mxu0 0.0
    %4080 = vmatpush1.xpose.msra.mxu0 0.0
    %4081 = vmatprep.subr.mxu0 0.0
    %4082 = vmatpush1.xpose.msra.mxu0 0.0
    %4083 = vmatprep.subr.mxu0 0.0
    %4084 = vmatpush1.xpose.msra.mxu0 0.0
    %4085 = vmatprep.subr.mxu0 0.0
    %4086 = vmatpush1.xpose.msra.mxu0 0.0
    %4087 = vmatprep.subr.mxu0 0.0
    %4088 = vmatpush1.xpose.msra.mxu0 0.0
    %4089 = vmatprep.subr.mxu0 0.0
    %4090 = vmatpush1.xpose.msra.mxu0 0.0
    %4091 = vmatprep.subr.mxu0 0.0
    %4092 = vmatpush1.xpose.msra.mxu0 0.0
    %4093 = vmatprep.subr.mxu0 0.0
    %4094 = vmatpush1.xpose.msra.mxu0 0.0
    %4095 = vmatprep.subr.mxu0 0.0
    %4096 = vmatpush1.xpose.msra.mxu0 0.0
    %4097 = vmatprep.subr.mxu0 0.0
    %4098 = vmatpush1.xpose.msra.mxu0 0.0
    %4099 = vmatprep.subr.mxu0 0.0
    %4100 = vmatpush1.xpose.msra.mxu0 0.0
    %4101 = vmatprep.subr.mxu0 0.0
    %4102 = vmatpush1.xpose.msra.mxu0 0.0
    %4103 = vmatprep.subr.mxu0 0.0
    %4104 = vmatpush1.xpose.msra.mxu0 0.0
    %4105 = vmatprep.subr.mxu0 0.0
    %4106 = vmatpush1.xpose.msra.mxu0 0.0
    %4107 = vmatprep.subr.mxu0 0.0
    %4108 = vmatpush1.xpose.msra.mxu0 0.0
    %4109 = vmatprep.subr.mxu0 0.0
    %4110 = vmatpush1.xpose.msra.mxu0 0.0
    %4111 = vmatprep.subr.mxu0 0.0
    %4112 = vmatpush1.xpose.msra.mxu0 0.0
    %4113 = vmatprep.mubr.f32.mxu0 0.0
    %4114 = vmatmul.mubr.f32.gmra.mrb[0].mxu0 %v4045
    %v4115 = vpop.f32.mrb[0].mxu0
    %v4116 = vadd.f32 0.0, %v4115
    %v4117 = vpop.f32.mrb[0].mxu0
    %4118 = vdwg.mxu0
    %4119 = vrot.lane.b32.xlu0 %v268, 100
    %v4120 = vpop.permute.xlu0 %4119
    %4121 = vrot.lane.b32.xlu0 %v268, 92
    %v4122 = vpop.permute.xlu0 %4121
    %v4123 = vsel %vm280, %v4120, 0
    %v4125 = vsel %vm280, %v4122, 0
    %4127 = vmatprep.subr.mxu0 0.0
    %4128 = vmatpush1.xpose.msra.mxu0 %v4125
    %4129 = vmatprep.subr.mxu0 0.0
    %4130 = vmatpush1.xpose.msra.mxu0 0.0
    %4131 = vmatprep.subr.mxu0 0.0
    %4132 = vmatpush1.xpose.msra.mxu0 0.0
    %4133 = vmatprep.subr.mxu0 0.0
    %4134 = vmatpush1.xpose.msra.mxu0 0.0
    %4135 = vmatprep.subr.mxu0 0.0
    %4136 = vmatpush1.xpose.msra.mxu0 0.0
    %4137 = vmatprep.subr.mxu0 0.0
    %4138 = vmatpush1.xpose.msra.mxu0 0.0
    %4139 = vmatprep.subr.mxu0 0.0
    %4140 = vmatpush1.xpose.msra.mxu0 0.0
    %4141 = vmatprep.subr.mxu0 0.0
    %4142 = vmatpush1.xpose.msra.mxu0 0.0
    %4143 = vmatprep.subr.mxu0 0.0
    %4144 = vmatpush1.xpose.msra.mxu0 0.0
    %4145 = vmatprep.subr.mxu0 0.0
    %4146 = vmatpush1.xpose.msra.mxu0 0.0
    %4147 = vmatprep.subr.mxu0 0.0
    %4148 = vmatpush1.xpose.msra.mxu0 0.0
    %4149 = vmatprep.subr.mxu0 0.0
    %4150 = vmatpush1.xpose.msra.mxu0 0.0
    %4151 = vmatprep.subr.mxu0 0.0
    %4152 = vmatpush1.xpose.msra.mxu0 0.0
    %4153 = vmatprep.subr.mxu0 0.0
    %4154 = vmatpush1.xpose.msra.mxu0 0.0
    %4155 = vmatprep.subr.mxu0 0.0
    %4156 = vmatpush1.xpose.msra.mxu0 0.0
    %4157 = vmatprep.subr.mxu0 0.0
    %4158 = vmatpush1.xpose.msra.mxu0 0.0
    %4159 = vmatprep.subr.mxu0 0.0
    %4160 = vmatpush1.xpose.msra.mxu0 0.0
    %4161 = vmatprep.subr.mxu0 0.0
    %4162 = vmatpush1.xpose.msra.mxu0 0.0
    %4163 = vmatprep.subr.mxu0 0.0
    %4164 = vmatpush1.xpose.msra.mxu0 0.0
    %4165 = vmatprep.subr.mxu0 0.0
    %4166 = vmatpush1.xpose.msra.mxu0 0.0
    %4167 = vmatprep.subr.mxu0 0.0
    %4168 = vmatpush1.xpose.msra.mxu0 0.0
    %4169 = vmatprep.subr.mxu0 0.0
    %4170 = vmatpush1.xpose.msra.mxu0 0.0
    %4171 = vmatprep.subr.mxu0 0.0
    %4172 = vmatpush1.xpose.msra.mxu0 0.0
    %4173 = vmatprep.subr.mxu0 0.0
    %4174 = vmatpush1.xpose.msra.mxu0 0.0
    %4175 = vmatprep.subr.mxu0 0.0
    %4176 = vmatpush1.xpose.msra.mxu0 0.0
    %4177 = vmatprep.subr.mxu0 0.0
    %4178 = vmatpush1.xpose.msra.mxu0 0.0
    %4179 = vmatprep.subr.mxu0 0.0
    %4180 = vmatpush1.xpose.msra.mxu0 0.0
    %4181 = vmatprep.subr.mxu0 0.0
    %4182 = vmatpush1.xpose.msra.mxu0 0.0
    %4183 = vmatprep.subr.mxu0 0.0
    %4184 = vmatpush1.xpose.msra.mxu0 0.0
    %4185 = vmatprep.subr.mxu0 0.0
    %4186 = vmatpush1.xpose.msra.mxu0 0.0
    %4187 = vmatprep.subr.mxu0 0.0
    %4188 = vmatpush1.xpose.msra.mxu0 0.0
    %4189 = vmatprep.subr.mxu0 0.0
    %4190 = vmatpush1.xpose.msra.mxu0 0.0
    %4191 = vmatprep.mubr.f32.mxu0 0.0
    %4192 = vmatmul.mubr.f32.gmra.mrb[0].mxu0 %v4123
    %v4193 = vpop.f32.mrb[0].mxu0
    %v4194 = vadd.f32 0.0, %v4193
    %v4195 = vpop.f32.mrb[0].mxu0
    %4196 = vdwg.mxu0
    %v4197 = vmul.f32 %v3024, 0.5
    %v4198 = vmul.f32 %v3102, 0.5
    %v4199 = vmul.f32 %v3180, 0.5
    %v4200 = vmul.f32 %v3258, 0.5
    %v4201 = vmul.f32 %v3336, 0.5
    %v4202 = vmul.f32 %v3414, 0.5
    %v4203 = vmul.f32 %v3492, 0.5
    %v4204 = vmul.f32 %v3570, 0.5
    %v4205 = vmul.f32 %v3648, 0.5
    %v4206 = vmul.f32 %v3726, 0.5
    %v4207 = vmul.f32 %v3804, 0.5
    %v4208 = vmul.f32 %v3882, 0.5
    %v4209 = vmul.f32 %v3960, 0.5
    %v4210 = vmul.f32 %v4038, 0.5
    %v4211 = vmul.f32 %v4116, 0.5
    %v4212 = vmul.f32 %v4194, 0.5
    %v4213 = vsel %vm1556, %v4197, -inf
    %4214 = vmax.xlane.f32.xlu0 %v4213
    %v4215 = vpop.xlane.xlu0 %4214
    %v4216 = vsel %vm1556, %v4198, -inf
    %4217 = vmax.xlane.f32.xlu0 %v4216
    %v4218 = vpop.xlane.xlu0 %4217
    %v4219 = vsel %vm1556, %v4199, -inf
    %4220 = vmax.xlane.f32.xlu0 %v4219
    %v4221 = vpop.xlane.xlu0 %4220
    %v4222 = vsel %vm1556, %v4200, -inf
    %4223 = vmax.xlane.f32.xlu0 %v4222
    %v4224 = vpop.xlane.xlu0 %4223
    %v4225 = vsel %vm1556, %v4201, -inf
    %4226 = vmax.xlane.f32.xlu0 %v4225
    %v4227 = vpop.xlane.xlu0 %4226
    %v4228 = vsel %vm1556, %v4202, -inf
    %4229 = vmax.xlane.f32.xlu0 %v4228
    %v4230 = vpop.xlane.xlu0 %4229
    %v4231 = vsel %vm1556, %v4203, -inf
    %4232 = vmax.xlane.f32.xlu0 %v4231
    %v4233 = vpop.xlane.xlu0 %4232
    %v4234 = vsel %vm1556, %v4204, -inf
    %4235 = vmax.xlane.f32.xlu0 %v4234
    %v4236 = vpop.xlane.xlu0 %4235
    %v4237 = vsel %vm1556, %v4205, -inf
    %4238 = vmax.xlane.f32.xlu0 %v4237
    %v4239 = vpop.xlane.xlu0 %4238
    %v4240 = vsel %vm1556, %v4206, -inf
    %4241 = vmax.xlane.f32.xlu0 %v4240
    %v4242 = vpop.xlane.xlu0 %4241
    %v4243 = vsel %vm1556, %v4207, -inf
    %4244 = vmax.xlane.f32.xlu0 %v4243
    %v4245 = vpop.xlane.xlu0 %4244
    %v4246 = vsel %vm1556, %v4208, -inf
    %4247 = vmax.xlane.f32.xlu0 %v4246
    %v4248 = vpop.xlane.xlu0 %4247
    %v4249 = vsel %vm1556, %v4209, -inf
    %4250 = vmax.xlane.f32.xlu0 %v4249
    %v4251 = vpop.xlane.xlu0 %4250
    %v4252 = vsel %vm1556, %v4210, -inf
    %4253 = vmax.xlane.f32.xlu0 %v4252
    %v4254 = vpop.xlane.xlu0 %4253
    %v4255 = vsel %vm1556, %v4211, -inf
    %4256 = vmax.xlane.f32.xlu0 %v4255
    %v4257 = vpop.xlane.xlu0 %4256
    %v4258 = vsel %vm1556, %v4212, -inf
    %4259 = vmax.xlane.f32.xlu0 %v4258
    %v4260 = vpop.xlane.xlu0 %4259
    %v4261 = vsub.f32 %v4197, %v4215
    %v4262 = vsub.f32 %v4198, %v4218
    %v4263 = vsub.f32 %v4199, %v4221
    %v4264 = vsub.f32 %v4200, %v4224
    %v4265 = vsub.f32 %v4201, %v4227
    %v4266 = vsub.f32 %v4202, %v4230
    %v4267 = vsub.f32 %v4203, %v4233
    %v4268 = vsub.f32 %v4204, %v4236
    %v4269 = vsub.f32 %v4205, %v4239
    %v4270 = vsub.f32 %v4206, %v4242
    %v4271 = vsub.f32 %v4207, %v4245
    %v4272 = vsub.f32 %v4208, %v4248
    %v4273 = vsub.f32 %v4209, %v4251
    %v4274 = vsub.f32 %v4210, %v4254
    %v4275 = vsub.f32 %v4211, %v4257
    %v4276 = vsub.f32 %v4212, %v4260
    %v4277 = vmul.f32 %v4261, 1.442695
    %v4278 = vpow.pop %v4277
    %v4279 = vmul.f32 %v4262, 1.442695
    %v4280 = vpow.pop %v4279
    %v4281 = vmul.f32 %v4263, 1.442695
    %v4282 = vpow.pop %v4281
    %v4283 = vmul.f32 %v4264, 1.442695
    %v4284 = vpow.pop %v4283
    %v4285 = vmul.f32 %v4265, 1.442695
    %v4286 = vpow.pop %v4285
    %v4287 = vmul.f32 %v4266, 1.442695
    %v4288 = vpow.pop %v4287
    %v4289 = vmul.f32 %v4267, 1.442695
    %v4290 = vpow.pop %v4289
    %v4291 = vmul.f32 %v4268, 1.442695
    %v4292 = vpow.pop %v4291
    %v4293 = vmul.f32 %v4269, 1.442695
    %v4294 = vpow.pop %v4293
    %v4295 = vmul.f32 %v4270, 1.442695
    %v4296 = vpow.pop %v4295
    %v4297 = vmul.f32 %v4271, 1.442695
    %v4298 = vpow.pop %v4297
    %v4299 = vmul.f32 %v4272, 1.442695
    %v4300 = vpow.pop %v4299
    %v4301 = vmul.f32 %v4273, 1.442695
    %v4302 = vpow.pop %v4301
    %v4303 = vmul.f32 %v4274, 1.442695
    %v4304 = vpow.pop %v4303
    %v4305 = vmul.f32 %v4275, 1.442695
    %v4306 = vpow.pop %v4305
    %v4307 = vmul.f32 %v4276, 1.442695
    %v4308 = vpow.pop %v4307
    %v4309 = vsel %vm1556, %v4278, 0.0
    %4310 = vadd.xlane.f32.xlu0 %v4309
    %v4311 = vpop.xlane.xlu0 %4310
    %v4312 = vsel %vm1556, %v4280, 0.0
    %4313 = vadd.xlane.f32.xlu0 %v4312
    %v4314 = vpop.xlane.xlu0 %4313
    %v4315 = vsel %vm1556, %v4282, 0.0
    %4316 = vadd.xlane.f32.xlu0 %v4315
    %v4317 = vpop.xlane.xlu0 %4316
    %v4318 = vsel %vm1556, %v4284, 0.0
    %4319 = vadd.xlane.f32.xlu0 %v4318
    %v4320 = vpop.xlane.xlu0 %4319
    %v4321 = vsel %vm1556, %v4286, 0.0
    %4322 = vadd.xlane.f32.xlu0 %v4321
    %v4323 = vpop.xlane.xlu0 %4322
    %v4324 = vsel %vm1556, %v4288, 0.0
    %4325 = vadd.xlane.f32.xlu0 %v4324
    %v4326 = vpop.xlane.xlu0 %4325
    %v4327 = vsel %vm1556, %v4290, 0.0
    %4328 = vadd.xlane.f32.xlu0 %v4327
    %v4329 = vpop.xlane.xlu0 %4328
    %v4330 = vsel %vm1556, %v4292, 0.0
    %4331 = vadd.xlane.f32.xlu0 %v4330
    %v4332 = vpop.xlane.xlu0 %4331
    %v4333 = vsel %vm1556, %v4294, 0.0
    %4334 = vadd.xlane.f32.xlu0 %v4333
    %v4335 = vpop.xlane.xlu0 %4334
    %v4336 = vsel %vm1556, %v4296, 0.0
    %4337 = vadd.xlane.f32.xlu0 %v4336
    %v4338 = vpop.xlane.xlu0 %4337
    %v4339 = vsel %vm1556, %v4298, 0.0
    %4340 = vadd.xlane.f32.xlu0 %v4339
    %v4341 = vpop.xlane.xlu0 %4340
    %v4342 = vsel %vm1556, %v4300, 0.0
    %4343 = vadd.xlane.f32.xlu0 %v4342
    %v4344 = vpop.xlane.xlu0 %4343
    %v4345 = vsel %vm1556, %v4302, 0.0
    %4346 = vadd.xlane.f32.xlu0 %v4345
    %v4347 = vpop.xlane.xlu0 %4346
    %v4348 = vsel %vm1556, %v4304, 0.0
    %4349 = vadd.xlane.f32.xlu0 %v4348
    %v4350 = vpop.xlane.xlu0 %4349
    %v4351 = vsel %vm1556, %v4306, 0.0
    %4352 = vadd.xlane.f32.xlu0 %v4351
    %v4353 = vpop.xlane.xlu0 %4352
    %v4354 = vsel %vm1556, %v4308, 0.0
    %4355 = vadd.xlane.f32.xlu0 %v4354
    %v4356 = vpop.xlane.xlu0 %4355
    %v4357 = vrcp.pop %v4311
    %v4358 = vrcp.pop %v4314
    %v4359 = vrcp.pop %v4317
    %v4360 = vrcp.pop %v4320
    %v4361 = vrcp.pop %v4323
    %v4362 = vrcp.pop %v4326
    %v4363 = vrcp.pop %v4329
    %v4364 = vrcp.pop %v4332
    %v4365 = vrcp.pop %v4335
    %v4366 = vrcp.pop %v4338
    %v4367 = vrcp.pop %v4341
    %v4368 = vrcp.pop %v4344
    %v4369 = vrcp.pop %v4347
    %v4370 = vrcp.pop %v4350
    %v4371 = vrcp.pop %v4353
    %v4372 = vrcp.pop %v4356
    %v4373 = vmul.f32 %v4278, %v4357
    %v4374 = vmul.f32 %v4280, %v4358
    %v4375 = vmul.f32 %v4282, %v4359
    %v4376 = vmul.f32 %v4284, %v4360
    %v4377 = vmul.f32 %v4286, %v4361
    %v4378 = vmul.f32 %v4288, %v4362
    %v4379 = vmul.f32 %v4290, %v4363
    %v4380 = vmul.f32 %v4292, %v4364
    %v4381 = vmul.f32 %v4294, %v4365
    %v4382 = vmul.f32 %v4296, %v4366
    %v4383 = vmul.f32 %v4298, %v4367
    %v4384 = vmul.f32 %v4300, %v4368
    %v4385 = vmul.f32 %v4302, %v4369
    %v4386 = vmul.f32 %v4304, %v4370
    %v4387 = vmul.f32 %v4306, %v4371
    %v4388 = vmul.f32 %v4308, %v4372
    %4389 = vrot.lane.b32.xlu0 %v193, 84
    %v4390 = vpop.permute.xlu0 %4389
    %v4393 = vsel %vm1556, %v4373, 0
    %4395 = vmatprep.subr.mxu0 0.0
    %4396 = vmatpush1.msra.mxu0 %v4390
    %4397 = vmatprep.subr.mxu0 0.0
    %4398 = vmatpush1.msra.mxu0 0.0
    %4399 = vmatprep.subr.mxu0 0.0
    %4400 = vmatpush1.msra.mxu0 0.0
    %4401 = vmatprep.subr.mxu0 0.0
    %4402 = vmatpush1.msra.mxu0 0.0
    %4403 = vmatprep.subr.mxu0 0.0
    %4404 = vmatpush1.msra.mxu0 0.0
    %4405 = vmatprep.subr.mxu0 0.0
    %4406 = vmatpush1.msra.mxu0 0.0
    %4407 = vmatprep.subr.mxu0 0.0
    %4408 = vmatpush1.msra.mxu0 0.0
    %4409 = vmatprep.subr.mxu0 0.0
    %4410 = vmatpush1.msra.mxu0 0.0
    %4411 = vmatprep.subr.mxu0 0.0
    %4412 = vmatpush1.msra.mxu0 0.0
    %4413 = vmatprep.subr.mxu0 0.0
    %4414 = vmatpush1.msra.mxu0 0.0
    %4415 = vmatprep.subr.mxu0 0.0
    %4416 = vmatpush1.msra.mxu0 0.0
    %4417 = vmatprep.subr.mxu0 0.0
    %4418 = vmatpush1.msra.mxu0 0.0
    %4419 = vmatprep.subr.mxu0 0.0
    %4420 = vmatpush1.msra.mxu0 0.0
    %4421 = vmatprep.subr.mxu0 0.0
    %4422 = vmatpush1.msra.mxu0 0.0
    %4423 = vmatprep.subr.mxu0 0.0
    %4424 = vmatpush1.msra.mxu0 0.0
    %4425 = vmatprep.subr.mxu0 0.0
    %4426 = vmatpush1.msra.mxu0 0.0
    %4427 = vmatprep.subr.mxu0 0.0
    %4428 = vmatpush1.msra.mxu0 0.0
    %4429 = vmatprep.subr.mxu0 0.0
    %4430 = vmatpush1.msra.mxu0 0.0
    %4431 = vmatprep.subr.mxu0 0.0
    %4432 = vmatpush1.msra.mxu0 0.0
    %4433 = vmatprep.subr.mxu0 0.0
    %4434 = vmatpush1.msra.mxu0 0.0
    %4435 = vmatprep.subr.mxu0 0.0
    %4436 = vmatpush1.msra.mxu0 0.0
    %4437 = vmatprep.subr.mxu0 0.0
    %4438 = vmatpush1.msra.mxu0 0.0
    %4439 = vmatprep.subr.mxu0 0.0
    %4440 = vmatpush1.msra.mxu0 0.0
    %4441 = vmatprep.subr.mxu0 0.0
    %4442 = vmatpush1.msra.mxu0 0.0
    %4443 = vmatprep.subr.mxu0 0.0
    %4444 = vmatpush1.msra.mxu0 0.0
    %4445 = vmatprep.subr.mxu0 0.0
    %4446 = vmatpush1.msra.mxu0 0.0
    %4447 = vmatprep.subr.mxu0 0.0
    %4448 = vmatpush1.msra.mxu0 0.0
    %4449 = vmatprep.subr.mxu0 0.0
    %4450 = vmatpush1.msra.mxu0 0.0
    %4451 = vmatprep.subr.mxu0 0.0
    %4452 = vmatpush1.msra.mxu0 0.0
    %4453 = vmatprep.subr.mxu0 0.0
    %4454 = vmatpush1.msra.mxu0 0.0
    %4455 = vmatprep.subr.mxu0 0.0
    %4456 = vmatpush1.msra.mxu0 0.0
    %4457 = vmatprep.subr.mxu0 0.0
    %4458 = vmatpush1.msra.mxu0 0.0
    %4459 = vmatprep.mubr.f32.mxu0 0.0
    %4460 = vmatmul.mubr.f32.gmra.mrb[0].mxu0 %v4393
    %v4461 = vpop.f32.mrb[0].mxu0
    %v4462 = vadd.f32 0.0, %v4461
    %v4463 = vpop.f32.mrb[0].mxu0
    %4464 = vdwg.mxu0
    %4465 = vrot.lane.b32.xlu0 %v198, 84
    %v4466 = vpop.permute.xlu0 %4465
    %v4469 = vsel %vm1556, %v4374, 0
    %4471 = vmatprep.subr.mxu0 0.0
    %4472 = vmatpush1.msra.mxu0 %v4466
    %4473 = vmatprep.subr.mxu0 0.0
    %4474 = vmatpush1.msra.mxu0 0.0
    %4475 = vmatprep.subr.mxu0 0.0
    %4476 = vmatpush1.msra.mxu0 0.0
    %4477 = vmatprep.subr.mxu0 0.0
    %4478 = vmatpush1.msra.mxu0 0.0
    %4479 = vmatprep.subr.mxu0 0.0
    %4480 = vmatpush1.msra.mxu0 0.0
    %4481 = vmatprep.subr.mxu0 0.0
    %4482 = vmatpush1.msra.mxu0 0.0
    %4483 = vmatprep.subr.mxu0 0.0
    %4484 = vmatpush1.msra.mxu0 0.0
    %4485 = vmatprep.subr.mxu0 0.0
    %4486 = vmatpush1.msra.mxu0 0.0
    %4487 = vmatprep.subr.mxu0 0.0
    %4488 = vmatpush1.msra.mxu0 0.0
    %4489 = vmatprep.subr.mxu0 0.0
    %4490 = vmatpush1.msra.mxu0 0.0
    %4491 = vmatprep.subr.mxu0 0.0
    %4492 = vmatpush1.msra.mxu0 0.0
    %4493 = vmatprep.subr.mxu0 0.0
    %4494 = vmatpush1.msra.mxu0 0.0
    %4495 = vmatprep.subr.mxu0 0.0
    %4496 = vmatpush1.msra.mxu0 0.0
    %4497 = vmatprep.subr.mxu0 0.0
    %4498 = vmatpush1.msra.mxu0 0.0
    %4499 = vmatprep.subr.mxu0 0.0
    %4500 = vmatpush1.msra.mxu0 0.0
    %4501 = vmatprep.subr.mxu0 0.0
    %4502 = vmatpush1.msra.mxu0 0.0
    %4503 = vmatprep.subr.mxu0 0.0
    %4504 = vmatpush1.msra.mxu0 0.0
    %4505 = vmatprep.subr.mxu0 0.0
    %4506 = vmatpush1.msra.mxu0 0.0
    %4507 = vmatprep.subr.mxu0 0.0
    %4508 = vmatpush1.msra.mxu0 0.0
    %4509 = vmatprep.subr.mxu0 0.0
    %4510 = vmatpush1.msra.mxu0 0.0
    %4511 = vmatprep.subr.mxu0 0.0
    %4512 = vmatpush1.msra.mxu0 0.0
    %4513 = vmatprep.subr.mxu0 0.0
    %4514 = vmatpush1.msra.mxu0 0.0
    %4515 = vmatprep.subr.mxu0 0.0
    %4516 = vmatpush1.msra.mxu0 0.0
    %4517 = vmatprep.subr.mxu0 0.0
    %4518 = vmatpush1.msra.mxu0 0.0
    %4519 = vmatprep.subr.mxu0 0.0
    %4520 = vmatpush1.msra.mxu0 0.0
    %4521 = vmatprep.subr.mxu0 0.0
    %4522 = vmatpush1.msra.mxu0 0.0
    %4523 = vmatprep.subr.mxu0 0.0
    %4524 = vmatpush1.msra.mxu0 0.0
    %4525 = vmatprep.subr.mxu0 0.0
    %4526 = vmatpush1.msra.mxu0 0.0
    %4527 = vmatprep.subr.mxu0 0.0
    %4528 = vmatpush1.msra.mxu0 0.0
    %4529 = vmatprep.subr.mxu0 0.0
    %4530 = vmatpush1.msra.mxu0 0.0
    %4531 = vmatprep.subr.mxu0 0.0
    %4532 = vmatpush1.msra.mxu0 0.0
    %4533 = vmatprep.subr.mxu0 0.0
    %4534 = vmatpush1.msra.mxu0 0.0
    %4535 = vmatprep.mubr.f32.mxu0 0.0
    %4536 = vmatmul.mubr.f32.gmra.mrb[0].mxu0 %v4469
    %v4537 = vpop.f32.mrb[0].mxu0
    %v4538 = vadd.f32 0.0, %v4537
    %v4539 = vpop.f32.mrb[0].mxu0
    %4540 = vdwg.mxu0
    %4541 = vrot.lane.b32.xlu0 %v203, 84
    %v4542 = vpop.permute.xlu0 %4541
    %v4545 = vsel %vm1556, %v4375, 0
    %4547 = vmatprep.subr.mxu0 0.0
    %4548 = vmatpush1.msra.mxu0 %v4542
    %4549 = vmatprep.subr.mxu0 0.0
    %4550 = vmatpush1.msra.mxu0 0.0
    %4551 = vmatprep.subr.mxu0 0.0
    %4552 = vmatpush1.msra.mxu0 0.0
    %4553 = vmatprep.subr.mxu0 0.0
    %4554 = vmatpush1.msra.mxu0 0.0
    %4555 = vmatprep.subr.mxu0 0.0
    %4556 = vmatpush1.msra.mxu0 0.0
    %4557 = vmatprep.subr.mxu0 0.0
    %4558 = vmatpush1.msra.mxu0 0.0
    %4559 = vmatprep.subr.mxu0 0.0
    %4560 = vmatpush1.msra.mxu0 0.0
    %4561 = vmatprep.subr.mxu0 0.0
    %4562 = vmatpush1.msra.mxu0 0.0
    %4563 = vmatprep.subr.mxu0 0.0
    %4564 = vmatpush1.msra.mxu0 0.0
    %4565 = vmatprep.subr.mxu0 0.0
    %4566 = vmatpush1.msra.mxu0 0.0
    %4567 = vmatprep.subr.mxu0 0.0
    %4568 = vmatpush1.msra.mxu0 0.0
    %4569 = vmatprep.subr.mxu0 0.0
    %4570 = vmatpush1.msra.mxu0 0.0
    %4571 = vmatprep.subr.mxu0 0.0
    %4572 = vmatpush1.msra.mxu0 0.0
    %4573 = vmatprep.subr.mxu0 0.0
    %4574 = vmatpush1.msra.mxu0 0.0
    %4575 = vmatprep.subr.mxu0 0.0
    %4576 = vmatpush1.msra.mxu0 0.0
    %4577 = vmatprep.subr.mxu0 0.0
    %4578 = vmatpush1.msra.mxu0 0.0
    %4579 = vmatprep.subr.mxu0 0.0
    %4580 = vmatpush1.msra.mxu0 0.0
    %4581 = vmatprep.subr.mxu0 0.0
    %4582 = vmatpush1.msra.mxu0 0.0
    %4583 = vmatprep.subr.mxu0 0.0
    %4584 = vmatpush1.msra.mxu0 0.0
    %4585 = vmatprep.subr.mxu0 0.0
    %4586 = vmatpush1.msra.mxu0 0.0
    %4587 = vmatprep.subr.mxu0 0.0
    %4588 = vmatpush1.msra.mxu0 0.0
    %4589 = vmatprep.subr.mxu0 0.0
    %4590 = vmatpush1.msra.mxu0 0.0
    %4591 = vmatprep.subr.mxu0 0.0
    %4592 = vmatpush1.msra.mxu0 0.0
    %4593 = vmatprep.subr.mxu0 0.0
    %4594 = vmatpush1.msra.mxu0 0.0
    %4595 = vmatprep.subr.mxu0 0.0
    %4596 = vmatpush1.msra.mxu0 0.0
    %4597 = vmatprep.subr.mxu0 0.0
    %4598 = vmatpush1.msra.mxu0 0.0
    %4599 = vmatprep.subr.mxu0 0.0
    %4600 = vmatpush1.msra.mxu0 0.0
    %4601 = vmatprep.subr.mxu0 0.0
    %4602 = vmatpush1.msra.mxu0 0.0
    %4603 = vmatprep.subr.mxu0 0.0
    %4604 = vmatpush1.msra.mxu0 0.0
    %4605 = vmatprep.subr.mxu0 0.0
    %4606 = vmatpush1.msra.mxu0 0.0
    %4607 = vmatprep.subr.mxu0 0.0
    %4608 = vmatpush1.msra.mxu0 0.0
    %4609 = vmatprep.subr.mxu0 0.0
    %4610 = vmatpush1.msra.mxu0 0.0
    %4611 = vmatprep.mubr.f32.mxu0 0.0
    %4612 = vmatmul.mubr.f32.gmra.mrb[0].mxu0 %v4545
    %v4613 = vpop.f32.mrb[0].mxu0
    %v4614 = vadd.f32 0.0, %v4613
    %v4615 = vpop.f32.mrb[0].mxu0
    %4616 = vdwg.mxu0
    %4617 = vrot.lane.b32.xlu0 %v208, 84
    %v4618 = vpop.permute.xlu0 %4617
    %v4621 = vsel %vm1556, %v4376, 0
    %4623 = vmatprep.subr.mxu0 0.0
    %4624 = vmatpush1.msra.mxu0 %v4618
    %4625 = vmatprep.subr.mxu0 0.0
    %4626 = vmatpush1.msra.mxu0 0.0
    %4627 = vmatprep.subr.mxu0 0.0
    %4628 = vmatpush1.msra.mxu0 0.0
    %4629 = vmatprep.subr.mxu0 0.0
    %4630 = vmatpush1.msra.mxu0 0.0
    %4631 = vmatprep.subr.mxu0 0.0
    %4632 = vmatpush1.msra.mxu0 0.0
    %4633 = vmatprep.subr.mxu0 0.0
    %4634 = vmatpush1.msra.mxu0 0.0
    %4635 = vmatprep.subr.mxu0 0.0
    %4636 = vmatpush1.msra.mxu0 0.0
    %4637 = vmatprep.subr.mxu0 0.0
    %4638 = vmatpush1.msra.mxu0 0.0
    %4639 = vmatprep.subr.mxu0 0.0
    %4640 = vmatpush1.msra.mxu0 0.0
    %4641 = vmatprep.subr.mxu0 0.0
    %4642 = vmatpush1.msra.mxu0 0.0
    %4643 = vmatprep.subr.mxu0 0.0
    %4644 = vmatpush1.msra.mxu0 0.0
    %4645 = vmatprep.subr.mxu0 0.0
    %4646 = vmatpush1.msra.mxu0 0.0
    %4647 = vmatprep.subr.mxu0 0.0
    %4648 = vmatpush1.msra.mxu0 0.0
    %4649 = vmatprep.subr.mxu0 0.0
    %4650 = vmatpush1.msra.mxu0 0.0
    %4651 = vmatprep.subr.mxu0 0.0
    %4652 = vmatpush1.msra.mxu0 0.0
    %4653 = vmatprep.subr.mxu0 0.0
    %4654 = vmatpush1.msra.mxu0 0.0
    %4655 = vmatprep.subr.mxu0 0.0
    %4656 = vmatpush1.msra.mxu0 0.0
    %4657 = vmatprep.subr.mxu0 0.0
    %4658 = vmatpush1.msra.mxu0 0.0
    %4659 = vmatprep.subr.mxu0 0.0
    %4660 = vmatpush1.msra.mxu0 0.0
    %4661 = vmatprep.subr.mxu0 0.0
    %4662 = vmatpush1.msra.mxu0 0.0
    %4663 = vmatprep.subr.mxu0 0.0
    %4664 = vmatpush1.msra.mxu0 0.0
    %4665 = vmatprep.subr.mxu0 0.0
    %4666 = vmatpush1.msra.mxu0 0.0
    %4667 = vmatprep.subr.mxu0 0.0
    %4668 = vmatpush1.msra.mxu0 0.0
    %4669 = vmatprep.subr.mxu0 0.0
    %4670 = vmatpush1.msra.mxu0 0.0
    %4671 = vmatprep.subr.mxu0 0.0
    %4672 = vmatpush1.msra.mxu0 0.0
    %4673 = vmatprep.subr.mxu0 0.0
    %4674 = vmatpush1.msra.mxu0 0.0
    %4675 = vmatprep.subr.mxu0 0.0
    %4676 = vmatpush1.msra.mxu0 0.0
    %4677 = vmatprep.subr.mxu0 0.0
    %4678 = vmatpush1.msra.mxu0 0.0
    %4679 = vmatprep.subr.mxu0 0.0
    %4680 = vmatpush1.msra.mxu0 0.0
    %4681 = vmatprep.subr.mxu0 0.0
    %4682 = vmatpush1.msra.mxu0 0.0
    %4683 = vmatprep.subr.mxu0 0.0
    %4684 = vmatpush1.msra.mxu0 0.0
    %4685 = vmatprep.subr.mxu0 0.0
    %4686 = vmatpush1.msra.mxu0 0.0
    %4687 = vmatprep.mubr.f32.mxu0 0.0
    %4688 = vmatmul.mubr.f32.gmra.mrb[0].mxu0 %v4621
    %v4689 = vpop.f32.mrb[0].mxu0
    %v4690 = vadd.f32 0.0, %v4689
    %v4691 = vpop.f32.mrb[0].mxu0
    %4692 = vdwg.mxu0
    %4693 = vrot.lane.b32.xlu0 %v213, 84
    %v4694 = vpop.permute.xlu0 %4693
    %v4697 = vsel %vm1556, %v4377, 0
    %4699 = vmatprep.subr.mxu0 0.0
    %4700 = vmatpush1.msra.mxu0 %v4694
    %4701 = vmatprep.subr.mxu0 0.0
    %4702 = vmatpush1.msra.mxu0 0.0
    %4703 = vmatprep.subr.mxu0 0.0
    %4704 = vmatpush1.msra.mxu0 0.0
    %4705 = vmatprep.subr.mxu0 0.0
    %4706 = vmatpush1.msra.mxu0 0.0
    %4707 = vmatprep.subr.mxu0 0.0
    %4708 = vmatpush1.msra.mxu0 0.0
    %4709 = vmatprep.subr.mxu0 0.0
    %4710 = vmatpush1.msra.mxu0 0.0
    %4711 = vmatprep.subr.mxu0 0.0
    %4712 = vmatpush1.msra.mxu0 0.0
    %4713 = vmatprep.subr.mxu0 0.0
    %4714 = vmatpush1.msra.mxu0 0.0
    %4715 = vmatprep.subr.mxu0 0.0
    %4716 = vmatpush1.msra.mxu0 0.0
    %4717 = vmatprep.subr.mxu0 0.0
    %4718 = vmatpush1.msra.mxu0 0.0
    %4719 = vmatprep.subr.mxu0 0.0
    %4720 = vmatpush1.msra.mxu0 0.0
    %4721 = vmatprep.subr.mxu0 0.0
    %4722 = vmatpush1.msra.mxu0 0.0
    %4723 = vmatprep.subr.mxu0 0.0
    %4724 = vmatpush1.msra.mxu0 0.0
    %4725 = vmatprep.subr.mxu0 0.0
    %4726 = vmatpush1.msra.mxu0 0.0
    %4727 = vmatprep.subr.mxu0 0.0
    %4728 = vmatpush1.msra.mxu0 0.0
    %4729 = vmatprep.subr.mxu0 0.0
    %4730 = vmatpush1.msra.mxu0 0.0
    %4731 = vmatprep.subr.mxu0 0.0
    %4732 = vmatpush1.msra.mxu0 0.0
    %4733 = vmatprep.subr.mxu0 0.0
    %4734 = vmatpush1.msra.mxu0 0.0
    %4735 = vmatprep.subr.mxu0 0.0
    %4736 = vmatpush1.msra.mxu0 0.0
    %4737 = vmatprep.subr.mxu0 0.0
    %4738 = vmatpush1.msra.mxu0 0.0
    %4739 = vmatprep.subr.mxu0 0.0
    %4740 = vmatpush1.msra.mxu0 0.0
    %4741 = vmatprep.subr.mxu0 0.0
    %4742 = vmatpush1.msra.mxu0 0.0
    %4743 = vmatprep.subr.mxu0 0.0
    %4744 = vmatpush1.msra.mxu0 0.0
    %4745 = vmatprep.subr.mxu0 0.0
    %4746 = vmatpush1.msra.mxu0 0.0
    %4747 = vmatprep.subr.mxu0 0.0
    %4748 = vmatpush1.msra.mxu0 0.0
    %4749 = vmatprep.subr.mxu0 0.0
    %4750 = vmatpush1.msra.mxu0 0.0
    %4751 = vmatprep.subr.mxu0 0.0
    %4752 = vmatpush1.msra.mxu0 0.0
    %4753 = vmatprep.subr.mxu0 0.0
    %4754 = vmatpush1.msra.mxu0 0.0
    %4755 = vmatprep.subr.mxu0 0.0
    %4756 = vmatpush1.msra.mxu0 0.0
    %4757 = vmatprep.subr.mxu0 0.0
    %4758 = vmatpush1.msra.mxu0 0.0
    %4759 = vmatprep.subr.mxu0 0.0
    %4760 = vmatpush1.msra.mxu0 0.0
    %4761 = vmatprep.subr.mxu0 0.0
    %4762 = vmatpush1.msra.mxu0 0.0
    %4763 = vmatprep.mubr.f32.mxu0 0.0
    %4764 = vmatmul.mubr.f32.gmra.mrb[0].mxu0 %v4697
    %v4765 = vpop.f32.mrb[0].mxu0
    %v4766 = vadd.f32 0.0, %v4765
    %v4767 = vpop.f32.mrb[0].mxu0
    %4768 = vdwg.mxu0
    %4769 = vrot.lane.b32.xlu0 %v218, 84
    %v4770 = vpop.permute.xlu0 %4769
    %v4773 = vsel %vm1556, %v4378, 0
    %4775 = vmatprep.subr.mxu0 0.0
    %4776 = vmatpush1.msra.mxu0 %v4770
    %4777 = vmatprep.subr.mxu0 0.0
    %4778 = vmatpush1.msra.mxu0 0.0
    %4779 = vmatprep.subr.mxu0 0.0
    %4780 = vmatpush1.msra.mxu0 0.0
    %4781 = vmatprep.subr.mxu0 0.0
    %4782 = vmatpush1.msra.mxu0 0.0
    %4783 = vmatprep.subr.mxu0 0.0
    %4784 = vmatpush1.msra.mxu0 0.0
    %4785 = vmatprep.subr.mxu0 0.0
    %4786 = vmatpush1.msra.mxu0 0.0
    %4787 = vmatprep.subr.mxu0 0.0
    %4788 = vmatpush1.msra.mxu0 0.0
    %4789 = vmatprep.subr.mxu0 0.0
    %4790 = vmatpush1.msra.mxu0 0.0
    %4791 = vmatprep.subr.mxu0 0.0
    %4792 = vmatpush1.msra.mxu0 0.0
    %4793 = vmatprep.subr.mxu0 0.0
    %4794 = vmatpush1.msra.mxu0 0.0
    %4795 = vmatprep.subr.mxu0 0.0
    %4796 = vmatpush1.msra.mxu0 0.0
    %4797 = vmatprep.subr.mxu0 0.0
    %4798 = vmatpush1.msra.mxu0 0.0
    %4799 = vmatprep.subr.mxu0 0.0
    %4800 = vmatpush1.msra.mxu0 0.0
    %4801 = vmatprep.subr.mxu0 0.0
    %4802 = vmatpush1.msra.mxu0 0.0
    %4803 = vmatprep.subr.mxu0 0.0
    %4804 = vmatpush1.msra.mxu0 0.0
    %4805 = vmatprep.subr.mxu0 0.0
    %4806 = vmatpush1.msra.mxu0 0.0
    %4807 = vmatprep.subr.mxu0 0.0
    %4808 = vmatpush1.msra.mxu0 0.0
    %4809 = vmatprep.subr.mxu0 0.0
    %4810 = vmatpush1.msra.mxu0 0.0
    %4811 = vmatprep.subr.mxu0 0.0
    %4812 = vmatpush1.msra.mxu0 0.0
    %4813 = vmatprep.subr.mxu0 0.0
    %4814 = vmatpush1.msra.mxu0 0.0
    %4815 = vmatprep.subr.mxu0 0.0
    %4816 = vmatpush1.msra.mxu0 0.0
    %4817 = vmatprep.subr.mxu0 0.0
    %4818 = vmatpush1.msra.mxu0 0.0
    %4819 = vmatprep.subr.mxu0 0.0
    %4820 = vmatpush1.msra.mxu0 0.0
    %4821 = vmatprep.subr.mxu0 0.0
    %4822 = vmatpush1.msra.mxu0 0.0
    %4823 = vmatprep.subr.mxu0 0.0
    %4824 = vmatpush1.msra.mxu0 0.0
    %4825 = vmatprep.subr.mxu0 0.0
    %4826 = vmatpush1.msra.mxu0 0.0
    %4827 = vmatprep.subr.mxu0 0.0
    %4828 = vmatpush1.msra.mxu0 0.0
    %4829 = vmatprep.subr.mxu0 0.0
    %4830 = vmatpush1.msra.mxu0 0.0
    %4831 = vmatprep.subr.mxu0 0.0
    %4832 = vmatpush1.msra.mxu0 0.0
    %4833 = vmatprep.subr.mxu0 0.0
    %4834 = vmatpush1.msra.mxu0 0.0
    %4835 = vmatprep.subr.mxu0 0.0
    %4836 = vmatpush1.msra.mxu0 0.0
    %4837 = vmatprep.subr.mxu0 0.0
    %4838 = vmatpush1.msra.mxu0 0.0
    %4839 = vmatprep.mubr.f32.mxu0 0.0
    %4840 = vmatmul.mubr.f32.gmra.mrb[0].mxu0 %v4773
    %v4841 = vpop.f32.mrb[0].mxu0
    %v4842 = vadd.f32 0.0, %v4841
    %v4843 = vpop.f32.mrb[0].mxu0
    %4844 = vdwg.mxu0
    %4845 = vrot.lane.b32.xlu0 %v223, 84
    %v4846 = vpop.permute.xlu0 %4845
    %v4849 = vsel %vm1556, %v4379, 0
    %4851 = vmatprep.subr.mxu0 0.0
    %4852 = vmatpush1.msra.mxu0 %v4846
    %4853 = vmatprep.subr.mxu0 0.0
    %4854 = vmatpush1.msra.mxu0 0.0
    %4855 = vmatprep.subr.mxu0 0.0
    %4856 = vmatpush1.msra.mxu0 0.0
    %4857 = vmatprep.subr.mxu0 0.0
    %4858 = vmatpush1.msra.mxu0 0.0
    %4859 = vmatprep.subr.mxu0 0.0
    %4860 = vmatpush1.msra.mxu0 0.0
    %4861 = vmatprep.subr.mxu0 0.0
    %4862 = vmatpush1.msra.mxu0 0.0
    %4863 = vmatprep.subr.mxu0 0.0
    %4864 = vmatpush1.msra.mxu0 0.0
    %4865 = vmatprep.subr.mxu0 0.0
    %4866 = vmatpush1.msra.mxu0 0.0
    %4867 = vmatprep.subr.mxu0 0.0
    %4868 = vmatpush1.msra.mxu0 0.0
    %4869 = vmatprep.subr.mxu0 0.0
    %4870 = vmatpush1.msra.mxu0 0.0
    %4871 = vmatprep.subr.mxu0 0.0
    %4872 = vmatpush1.msra.mxu0 0.0
    %4873 = vmatprep.subr.mxu0 0.0
    %4874 = vmatpush1.msra.mxu0 0.0
    %4875 = vmatprep.subr.mxu0 0.0
    %4876 = vmatpush1.msra.mxu0 0.0
    %4877 = vmatprep.subr.mxu0 0.0
    %4878 = vmatpush1.msra.mxu0 0.0
    %4879 = vmatprep.subr.mxu0 0.0
    %4880 = vmatpush1.msra.mxu0 0.0
    %4881 = vmatprep.subr.mxu0 0.0
    %4882 = vmatpush1.msra.mxu0 0.0
    %4883 = vmatprep.subr.mxu0 0.0
    %4884 = vmatpush1.msra.mxu0 0.0
    %4885 = vmatprep.subr.mxu0 0.0
    %4886 = vmatpush1.msra.mxu0 0.0
    %4887 = vmatprep.subr.mxu0 0.0
    %4888 = vmatpush1.msra.mxu0 0.0
    %4889 = vmatprep.subr.mxu0 0.0
    %4890 = vmatpush1.msra.mxu0 0.0
    %4891 = vmatprep.subr.mxu0 0.0
    %4892 = vmatpush1.msra.mxu0 0.0
    %4893 = vmatprep.subr.mxu0 0.0
    %4894 = vmatpush1.msra.mxu0 0.0
    %4895 = vmatprep.subr.mxu0 0.0
    %4896 = vmatpush1.msra.mxu0 0.0
    %4897 = vmatprep.subr.mxu0 0.0
    %4898 = vmatpush1.msra.mxu0 0.0
    %4899 = vmatprep.subr.mxu0 0.0
    %4900 = vmatpush1.msra.mxu0 0.0
    %4901 = vmatprep.subr.mxu0 0.0
    %4902 = vmatpush1.msra.mxu0 0.0
    %4903 = vmatprep.subr.mxu0 0.0
    %4904 = vmatpush1.msra.mxu0 0.0
    %4905 = vmatprep.subr.mxu0 0.0
    %4906 = vmatpush1.msra.mxu0 0.0
    %4907 = vmatprep.subr.mxu0 0.0
    %4908 = vmatpush1.msra.mxu0 0.0
    %4909 = vmatprep.subr.mxu0 0.0
    %4910 = vmatpush1.msra.mxu0 0.0
    %4911 = vmatprep.subr.mxu0 0.0
    %4912 = vmatpush1.msra.mxu0 0.0
    %4913 = vmatprep.subr.mxu0 0.0
    %4914 = vmatpush1.msra.mxu0 0.0
    %4915 = vmatprep.mubr.f32.mxu0 0.0
    %4916 = vmatmul.mubr.f32.gmra.mrb[0].mxu0 %v4849
    %v4917 = vpop.f32.mrb[0].mxu0
    %v4918 = vadd.f32 0.0, %v4917
    %v4919 = vpop.f32.mrb[0].mxu0
    %4920 = vdwg.mxu0
    %4921 = vrot.lane.b32.xlu0 %v228, 84
    %v4922 = vpop.permute.xlu0 %4921
    %v4925 = vsel %vm1556, %v4380, 0
    %4927 = vmatprep.subr.mxu0 0.0
    %4928 = vmatpush1.msra.mxu0 %v4922
    %4929 = vmatprep.subr.mxu0 0.0
    %4930 = vmatpush1.msra.mxu0 0.0
    %4931 = vmatprep.subr.mxu0 0.0
    %4932 = vmatpush1.msra.mxu0 0.0
    %4933 = vmatprep.subr.mxu0 0.0
    %4934 = vmatpush1.msra.mxu0 0.0
    %4935 = vmatprep.subr.mxu0 0.0
    %4936 = vmatpush1.msra.mxu0 0.0
    %4937 = vmatprep.subr.mxu0 0.0
    %4938 = vmatpush1.msra.mxu0 0.0
    %4939 = vmatprep.subr.mxu0 0.0
    %4940 = vmatpush1.msra.mxu0 0.0
    %4941 = vmatprep.subr.mxu0 0.0
    %4942 = vmatpush1.msra.mxu0 0.0
    %4943 = vmatprep.subr.mxu0 0.0
    %4944 = vmatpush1.msra.mxu0 0.0
    %4945 = vmatprep.subr.mxu0 0.0
    %4946 = vmatpush1.msra.mxu0 0.0
    %4947 = vmatprep.subr.mxu0 0.0
    %4948 = vmatpush1.msra.mxu0 0.0
    %4949 = vmatprep.subr.mxu0 0.0
    %4950 = vmatpush1.msra.mxu0 0.0
    %4951 = vmatprep.subr.mxu0 0.0
    %4952 = vmatpush1.msra.mxu0 0.0
    %4953 = vmatprep.subr.mxu0 0.0
    %4954 = vmatpush1.msra.mxu0 0.0
    %4955 = vmatprep.subr.mxu0 0.0
    %4956 = vmatpush1.msra.mxu0 0.0
    %4957 = vmatprep.subr.mxu0 0.0
    %4958 = vmatpush1.msra.mxu0 0.0
    %4959 = vmatprep.subr.mxu0 0.0
    %4960 = vmatpush1.msra.mxu0 0.0
    %4961 = vmatprep.subr.mxu0 0.0
    %4962 = vmatpush1.msra.mxu0 0.0
    %4963 = vmatprep.subr.mxu0 0.0
    %4964 = vmatpush1.msra.mxu0 0.0
    %4965 = vmatprep.subr.mxu0 0.0
    %4966 = vmatpush1.msra.mxu0 0.0
    %4967 = vmatprep.subr.mxu0 0.0
    %4968 = vmatpush1.msra.mxu0 0.0
    %4969 = vmatprep.subr.mxu0 0.0
    %4970 = vmatpush1.msra.mxu0 0.0
    %4971 = vmatprep.subr.mxu0 0.0
    %4972 = vmatpush1.msra.mxu0 0.0
    %4973 = vmatprep.subr.mxu0 0.0
    %4974 = vmatpush1.msra.mxu0 0.0
    %4975 = vmatprep.subr.mxu0 0.0
    %4976 = vmatpush1.msra.mxu0 0.0
    %4977 = vmatprep.subr.mxu0 0.0
    %4978 = vmatpush1.msra.mxu0 0.0
    %4979 = vmatprep.subr.mxu0 0.0
    %4980 = vmatpush1.msra.mxu0 0.0
    %4981 = vmatprep.subr.mxu0 0.0
    %4982 = vmatpush1.msra.mxu0 0.0
    %4983 = vmatprep.subr.mxu0 0.0
    %4984 = vmatpush1.msra.mxu0 0.0
    %4985 = vmatprep.subr.mxu0 0.0
    %4986 = vmatpush1.msra.mxu0 0.0
    %4987 = vmatprep.subr.mxu0 0.0
    %4988 = vmatpush1.msra.mxu0 0.0
    %4989 = vmatprep.subr.mxu0 0.0
    %4990 = vmatpush1.msra.mxu0 0.0
    %4991 = vmatprep.mubr.f32.mxu0 0.0
    %4992 = vmatmul.mubr.f32.gmra.mrb[0].mxu0 %v4925
    %v4993 = vpop.f32.mrb[0].mxu0
    %v4994 = vadd.f32 0.0, %v4993
    %v4995 = vpop.f32.mrb[0].mxu0
    %4996 = vdwg.mxu0
    %4997 = vrot.lane.b32.xlu0 %v233, 84
    %v4998 = vpop.permute.xlu0 %4997
    %v5001 = vsel %vm1556, %v4381, 0
    %5003 = vmatprep.subr.mxu0 0.0
    %5004 = vmatpush1.msra.mxu0 %v4998
    %5005 = vmatprep.subr.mxu0 0.0
    %5006 = vmatpush1.msra.mxu0 0.0
    %5007 = vmatprep.subr.mxu0 0.0
    %5008 = vmatpush1.msra.mxu0 0.0
    %5009 = vmatprep.subr.mxu0 0.0
    %5010 = vmatpush1.msra.mxu0 0.0
    %5011 = vmatprep.subr.mxu0 0.0
    %5012 = vmatpush1.msra.mxu0 0.0
    %5013 = vmatprep.subr.mxu0 0.0
    %5014 = vmatpush1.msra.mxu0 0.0
    %5015 = vmatprep.subr.mxu0 0.0
    %5016 = vmatpush1.msra.mxu0 0.0
    %5017 = vmatprep.subr.mxu0 0.0
    %5018 = vmatpush1.msra.mxu0 0.0
    %5019 = vmatprep.subr.mxu0 0.0
    %5020 = vmatpush1.msra.mxu0 0.0
    %5021 = vmatprep.subr.mxu0 0.0
    %5022 = vmatpush1.msra.mxu0 0.0
    %5023 = vmatprep.subr.mxu0 0.0
    %5024 = vmatpush1.msra.mxu0 0.0
    %5025 = vmatprep.subr.mxu0 0.0
    %5026 = vmatpush1.msra.mxu0 0.0
    %5027 = vmatprep.subr.mxu0 0.0
    %5028 = vmatpush1.msra.mxu0 0.0
    %5029 = vmatprep.subr.mxu0 0.0
    %5030 = vmatpush1.msra.mxu0 0.0
    %5031 = vmatprep.subr.mxu0 0.0
    %5032 = vmatpush1.msra.mxu0 0.0
    %5033 = vmatprep.subr.mxu0 0.0
    %5034 = vmatpush1.msra.mxu0 0.0
    %5035 = vmatprep.subr.mxu0 0.0
    %5036 = vmatpush1.msra.mxu0 0.0
    %5037 = vmatprep.subr.mxu0 0.0
    %5038 = vmatpush1.msra.mxu0 0.0
    %5039 = vmatprep.subr.mxu0 0.0
    %5040 = vmatpush1.msra.mxu0 0.0
    %5041 = vmatprep.subr.mxu0 0.0
    %5042 = vmatpush1.msra.mxu0 0.0
    %5043 = vmatprep.subr.mxu0 0.0
    %5044 = vmatpush1.msra.mxu0 0.0
    %5045 = vmatprep.subr.mxu0 0.0
    %5046 = vmatpush1.msra.mxu0 0.0
    %5047 = vmatprep.subr.mxu0 0.0
    %5048 = vmatpush1.msra.mxu0 0.0
    %5049 = vmatprep.subr.mxu0 0.0
    %5050 = vmatpush1.msra.mxu0 0.0
    %5051 = vmatprep.subr.mxu0 0.0
    %5052 = vmatpush1.msra.mxu0 0.0
    %5053 = vmatprep.subr.mxu0 0.0
    %5054 = vmatpush1.msra.mxu0 0.0
    %5055 = vmatprep.subr.mxu0 0.0
    %5056 = vmatpush1.msra.mxu0 0.0
    %5057 = vmatprep.subr.mxu0 0.0
    %5058 = vmatpush1.msra.mxu0 0.0
    %5059 = vmatprep.subr.mxu0 0.0
    %5060 = vmatpush1.msra.mxu0 0.0
    %5061 = vmatprep.subr.mxu0 0.0
    %5062 = vmatpush1.msra.mxu0 0.0
    %5063 = vmatprep.subr.mxu0 0.0
    %5064 = vmatpush1.msra.mxu0 0.0
    %5065 = vmatprep.subr.mxu0 0.0
    %5066 = vmatpush1.msra.mxu0 0.0
    %5067 = vmatprep.mubr.f32.mxu0 0.0
    %5068 = vmatmul.mubr.f32.gmra.mrb[0].mxu0 %v5001
    %v5069 = vpop.f32.mrb[0].mxu0
    %v5070 = vadd.f32 0.0, %v5069
    %v5071 = vpop.f32.mrb[0].mxu0
    %5072 = vdwg.mxu0
    %5073 = vrot.lane.b32.xlu0 %v238, 84
    %v5074 = vpop.permute.xlu0 %5073
    %v5077 = vsel %vm1556, %v4382, 0
    %5079 = vmatprep.subr.mxu0 0.0
    %5080 = vmatpush1.msra.mxu0 %v5074
    %5081 = vmatprep.subr.mxu0 0.0
    %5082 = vmatpush1.msra.mxu0 0.0
    %5083 = vmatprep.subr.mxu0 0.0
    %5084 = vmatpush1.msra.mxu0 0.0
    %5085 = vmatprep.subr.mxu0 0.0
    %5086 = vmatpush1.msra.mxu0 0.0
    %5087 = vmatprep.subr.mxu0 0.0
    %5088 = vmatpush1.msra.mxu0 0.0
    %5089 = vmatprep.subr.mxu0 0.0
    %5090 = vmatpush1.msra.mxu0 0.0
    %5091 = vmatprep.subr.mxu0 0.0
    %5092 = vmatpush1.msra.mxu0 0.0
    %5093 = vmatprep.subr.mxu0 0.0
    %5094 = vmatpush1.msra.mxu0 0.0
    %5095 = vmatprep.subr.mxu0 0.0
    %5096 = vmatpush1.msra.mxu0 0.0
    %5097 = vmatprep.subr.mxu0 0.0
    %5098 = vmatpush1.msra.mxu0 0.0
    %5099 = vmatprep.subr.mxu0 0.0
    %5100 = vmatpush1.msra.mxu0 0.0
    %5101 = vmatprep.subr.mxu0 0.0
    %5102 = vmatpush1.msra.mxu0 0.0
    %5103 = vmatprep.subr.mxu0 0.0
    %5104 = vmatpush1.msra.mxu0 0.0
    %5105 = vmatprep.subr.mxu0 0.0
    %5106 = vmatpush1.msra.mxu0 0.0
    %5107 = vmatprep.subr.mxu0 0.0
    %5108 = vmatpush1.msra.mxu0 0.0
    %5109 = vmatprep.subr.mxu0 0.0
    %5110 = vmatpush1.msra.mxu0 0.0
    %5111 = vmatprep.subr.mxu0 0.0
    %5112 = vmatpush1.msra.mxu0 0.0
    %5113 = vmatprep.subr.mxu0 0.0
    %5114 = vmatpush1.msra.mxu0 0.0
    %5115 = vmatprep.subr.mxu0 0.0
    %5116 = vmatpush1.msra.mxu0 0.0
    %5117 = vmatprep.subr.mxu0 0.0
    %5118 = vmatpush1.msra.mxu0 0.0
    %5119 = vmatprep.subr.mxu0 0.0
    %5120 = vmatpush1.msra.mxu0 0.0
    %5121 = vmatprep.subr.mxu0 0.0
    %5122 = vmatpush1.msra.mxu0 0.0
    %5123 = vmatprep.subr.mxu0 0.0
    %5124 = vmatpush1.msra.mxu0 0.0
    %5125 = vmatprep.subr.mxu0 0.0
    %5126 = vmatpush1.msra.mxu0 0.0
    %5127 = vmatprep.subr.mxu0 0.0
    %5128 = vmatpush1.msra.mxu0 0.0
    %5129 = vmatprep.subr.mxu0 0.0
    %5130 = vmatpush1.msra.mxu0 0.0
    %5131 = vmatprep.subr.mxu0 0.0
    %5132 = vmatpush1.msra.mxu0 0.0
    %5133 = vmatprep.subr.mxu0 0.0
    %5134 = vmatpush1.msra.mxu0 0.0
    %5135 = vmatprep.subr.mxu0 0.0
    %5136 = vmatpush1.msra.mxu0 0.0
    %5137 = vmatprep.subr.mxu0 0.0
    %5138 = vmatpush1.msra.mxu0 0.0
    %5139 = vmatprep.subr.mxu0 0.0
    %5140 = vmatpush1.msra.mxu0 0.0
    %5141 = vmatprep.subr.mxu0 0.0
    %5142 = vmatpush1.msra.mxu0 0.0
    %5143 = vmatprep.mubr.f32.mxu0 0.0
    %5144 = vmatmul.mubr.f32.gmra.mrb[0].mxu0 %v5077
    %v5145 = vpop.f32.mrb[0].mxu0
    %v5146 = vadd.f32 0.0, %v5145
    %v5147 = vpop.f32.mrb[0].mxu0
    %5148 = vdwg.mxu0
    %5149 = vrot.lane.b32.xlu0 %v243, 84
    %v5150 = vpop.permute.xlu0 %5149
    %v5153 = vsel %vm1556, %v4383, 0
    %5155 = vmatprep.subr.mxu0 0.0
    %5156 = vmatpush1.msra.mxu0 %v5150
    %5157 = vmatprep.subr.mxu0 0.0
    %5158 = vmatpush1.msra.mxu0 0.0
    %5159 = vmatprep.subr.mxu0 0.0
    %5160 = vmatpush1.msra.mxu0 0.0
    %5161 = vmatprep.subr.mxu0 0.0
    %5162 = vmatpush1.msra.mxu0 0.0
    %5163 = vmatprep.subr.mxu0 0.0
    %5164 = vmatpush1.msra.mxu0 0.0
    %5165 = vmatprep.subr.mxu0 0.0
    %5166 = vmatpush1.msra.mxu0 0.0
    %5167 = vmatprep.subr.mxu0 0.0
    %5168 = vmatpush1.msra.mxu0 0.0
    %5169 = vmatprep.subr.mxu0 0.0
    %5170 = vmatpush1.msra.mxu0 0.0
    %5171 = vmatprep.subr.mxu0 0.0
    %5172 = vmatpush1.msra.mxu0 0.0
    %5173 = vmatprep.subr.mxu0 0.0
    %5174 = vmatpush1.msra.mxu0 0.0
    %5175 = vmatprep.subr.mxu0 0.0
    %5176 = vmatpush1.msra.mxu0 0.0
    %5177 = vmatprep.subr.mxu0 0.0
    %5178 = vmatpush1.msra.mxu0 0.0
    %5179 = vmatprep.subr.mxu0 0.0
    %5180 = vmatpush1.msra.mxu0 0.0
    %5181 = vmatprep.subr.mxu0 0.0
    %5182 = vmatpush1.msra.mxu0 0.0
    %5183 = vmatprep.subr.mxu0 0.0
    %5184 = vmatpush1.msra.mxu0 0.0
    %5185 = vmatprep.subr.mxu0 0.0
    %5186 = vmatpush1.msra.mxu0 0.0
    %5187 = vmatprep.subr.mxu0 0.0
    %5188 = vmatpush1.msra.mxu0 0.0
    %5189 = vmatprep.subr.mxu0 0.0
    %5190 = vmatpush1.msra.mxu0 0.0
    %5191 = vmatprep.subr.mxu0 0.0
    %5192 = vmatpush1.msra.mxu0 0.0
    %5193 = vmatprep.subr.mxu0 0.0
    %5194 = vmatpush1.msra.mxu0 0.0
    %5195 = vmatprep.subr.mxu0 0.0
    %5196 = vmatpush1.msra.mxu0 0.0
    %5197 = vmatprep.subr.mxu0 0.0
    %5198 = vmatpush1.msra.mxu0 0.0
    %5199 = vmatprep.subr.mxu0 0.0
    %5200 = vmatpush1.msra.mxu0 0.0
    %5201 = vmatprep.subr.mxu0 0.0
    %5202 = vmatpush1.msra.mxu0 0.0
    %5203 = vmatprep.subr.mxu0 0.0
    %5204 = vmatpush1.msra.mxu0 0.0
    %5205 = vmatprep.subr.mxu0 0.0
    %5206 = vmatpush1.msra.mxu0 0.0
    %5207 = vmatprep.subr.mxu0 0.0
    %5208 = vmatpush1.msra.mxu0 0.0
    %5209 = vmatprep.subr.mxu0 0.0
    %5210 = vmatpush1.msra.mxu0 0.0
    %5211 = vmatprep.subr.mxu0 0.0
    %5212 = vmatpush1.msra.mxu0 0.0
    %5213 = vmatprep.subr.mxu0 0.0
    %5214 = vmatpush1.msra.mxu0 0.0
    %5215 = vmatprep.subr.mxu0 0.0
    %5216 = vmatpush1.msra.mxu0 0.0
    %5217 = vmatprep.subr.mxu0 0.0
    %5218 = vmatpush1.msra.mxu0 0.0
    %5219 = vmatprep.mubr.f32.mxu0 0.0
    %5220 = vmatmul.mubr.f32.gmra.mrb[0].mxu0 %v5153
    %v5221 = vpop.f32.mrb[0].mxu0
    %v5222 = vadd.f32 0.0, %v5221
    %v5223 = vpop.f32.mrb[0].mxu0
    %5224 = vdwg.mxu0
    %5225 = vrot.lane.b32.xlu0 %v248, 84
    %v5226 = vpop.permute.xlu0 %5225
    %v5229 = vsel %vm1556, %v4384, 0
    %5231 = vmatprep.subr.mxu0 0.0
    %5232 = vmatpush1.msra.mxu0 %v5226
    %5233 = vmatprep.subr.mxu0 0.0
    %5234 = vmatpush1.msra.mxu0 0.0
    %5235 = vmatprep.subr.mxu0 0.0
    %5236 = vmatpush1.msra.mxu0 0.0
    %5237 = vmatprep.subr.mxu0 0.0
    %5238 = vmatpush1.msra.mxu0 0.0
    %5239 = vmatprep.subr.mxu0 0.0
    %5240 = vmatpush1.msra.mxu0 0.0
    %5241 = vmatprep.subr.mxu0 0.0
    %5242 = vmatpush1.msra.mxu0 0.0
    %5243 = vmatprep.subr.mxu0 0.0
    %5244 = vmatpush1.msra.mxu0 0.0
    %5245 = vmatprep.subr.mxu0 0.0
    %5246 = vmatpush1.msra.mxu0 0.0
    %5247 = vmatprep.subr.mxu0 0.0
    %5248 = vmatpush1.msra.mxu0 0.0
    %5249 = vmatprep.subr.mxu0 0.0
    %5250 = vmatpush1.msra.mxu0 0.0
    %5251 = vmatprep.subr.mxu0 0.0
    %5252 = vmatpush1.msra.mxu0 0.0
    %5253 = vmatprep.subr.mxu0 0.0
    %5254 = vmatpush1.msra.mxu0 0.0
    %5255 = vmatprep.subr.mxu0 0.0
    %5256 = vmatpush1.msra.mxu0 0.0
    %5257 = vmatprep.subr.mxu0 0.0
    %5258 = vmatpush1.msra.mxu0 0.0
    %5259 = vmatprep.subr.mxu0 0.0
    %5260 = vmatpush1.msra.mxu0 0.0
    %5261 = vmatprep.subr.mxu0 0.0
    %5262 = vmatpush1.msra.mxu0 0.0
    %5263 = vmatprep.subr.mxu0 0.0
    %5264 = vmatpush1.msra.mxu0 0.0
    %5265 = vmatprep.subr.mxu0 0.0
    %5266 = vmatpush1.msra.mxu0 0.0
    %5267 = vmatprep.subr.mxu0 0.0
    %5268 = vmatpush1.msra.mxu0 0.0
    %5269 = vmatprep.subr.mxu0 0.0
    %5270 = vmatpush1.msra.mxu0 0.0
    %5271 = vmatprep.subr.mxu0 0.0
    %5272 = vmatpush1.msra.mxu0 0.0
    %5273 = vmatprep.subr.mxu0 0.0
    %5274 = vmatpush1.msra.mxu0 0.0
    %5275 = vmatprep.subr.mxu0 0.0
    %5276 = vmatpush1.msra.mxu0 0.0
    %5277 = vmatprep.subr.mxu0 0.0
    %5278 = vmatpush1.msra.mxu0 0.0
    %5279 = vmatprep.subr.mxu0 0.0
    %5280 = vmatpush1.msra.mxu0 0.0
    %5281 = vmatprep.subr.mxu0 0.0
    %5282 = vmatpush1.msra.mxu0 0.0
    %5283 = vmatprep.subr.mxu0 0.0
    %5284 = vmatpush1.msra.mxu0 0.0
    %5285 = vmatprep.subr.mxu0 0.0
    %5286 = vmatpush1.msra.mxu0 0.0
    %5287 = vmatprep.subr.mxu0 0.0
    %5288 = vmatpush1.msra.mxu0 0.0
    %5289 = vmatprep.subr.mxu0 0.0
    %5290 = vmatpush1.msra.mxu0 0.0
    %5291 = vmatprep.subr.mxu0 0.0
    %5292 = vmatpush1.msra.mxu0 0.0
    %5293 = vmatprep.subr.mxu0 0.0
    %5294 = vmatpush1.msra.mxu0 0.0
    %5295 = vmatprep.mubr.f32.mxu0 0.0
    %5296 = vmatmul.mubr.f32.gmra.mrb[0].mxu0 %v5229
    %v5297 = vpop.f32.mrb[0].mxu0
    %v5298 = vadd.f32 0.0, %v5297
    %v5299 = vpop.f32.mrb[0].mxu0
    %5300 = vdwg.mxu0
    %5301 = vrot.lane.b32.xlu0 %v253, 84
    %v5302 = vpop.permute.xlu0 %5301
    %v5305 = vsel %vm1556, %v4385, 0
    %5307 = vmatprep.subr.mxu0 0.0
    %5308 = vmatpush1.msra.mxu0 %v5302
    %5309 = vmatprep.subr.mxu0 0.0
    %5310 = vmatpush1.msra.mxu0 0.0
    %5311 = vmatprep.subr.mxu0 0.0
    %5312 = vmatpush1.msra.mxu0 0.0
    %5313 = vmatprep.subr.mxu0 0.0
    %5314 = vmatpush1.msra.mxu0 0.0
    %5315 = vmatprep.subr.mxu0 0.0
    %5316 = vmatpush1.msra.mxu0 0.0
    %5317 = vmatprep.subr.mxu0 0.0
    %5318 = vmatpush1.msra.mxu0 0.0
    %5319 = vmatprep.subr.mxu0 0.0
    %5320 = vmatpush1.msra.mxu0 0.0
    %5321 = vmatprep.subr.mxu0 0.0
    %5322 = vmatpush1.msra.mxu0 0.0
    %5323 = vmatprep.subr.mxu0 0.0
    %5324 = vmatpush1.msra.mxu0 0.0
    %5325 = vmatprep.subr.mxu0 0.0
    %5326 = vmatpush1.msra.mxu0 0.0
    %5327 = vmatprep.subr.mxu0 0.0
    %5328 = vmatpush1.msra.mxu0 0.0
    %5329 = vmatprep.subr.mxu0 0.0
    %5330 = vmatpush1.msra.mxu0 0.0
    %5331 = vmatprep.subr.mxu0 0.0
    %5332 = vmatpush1.msra.mxu0 0.0
    %5333 = vmatprep.subr.mxu0 0.0
    %5334 = vmatpush1.msra.mxu0 0.0
    %5335 = vmatprep.subr.mxu0 0.0
    %5336 = vmatpush1.msra.mxu0 0.0
    %5337 = vmatprep.subr.mxu0 0.0
    %5338 = vmatpush1.msra.mxu0 0.0
    %5339 = vmatprep.subr.mxu0 0.0
    %5340 = vmatpush1.msra.mxu0 0.0
    %5341 = vmatprep.subr.mxu0 0.0
    %5342 = vmatpush1.msra.mxu0 0.0
    %5343 = vmatprep.subr.mxu0 0.0
    %5344 = vmatpush1.msra.mxu0 0.0
    %5345 = vmatprep.subr.mxu0 0.0
    %5346 = vmatpush1.msra.mxu0 0.0
    %5347 = vmatprep.subr.mxu0 0.0
    %5348 = vmatpush1.msra.mxu0 0.0
    %5349 = vmatprep.subr.mxu0 0.0
    %5350 = vmatpush1.msra.mxu0 0.0
    %5351 = vmatprep.subr.mxu0 0.0
    %5352 = vmatpush1.msra.mxu0 0.0
    %5353 = vmatprep.subr.mxu0 0.0
    %5354 = vmatpush1.msra.mxu0 0.0
    %5355 = vmatprep.subr.mxu0 0.0
    %5356 = vmatpush1.msra.mxu0 0.0
    %5357 = vmatprep.subr.mxu0 0.0
    %5358 = vmatpush1.msra.mxu0 0.0
    %5359 = vmatprep.subr.mxu0 0.0
    %5360 = vmatpush1.msra.mxu0 0.0
    %5361 = vmatprep.subr.mxu0 0.0
    %5362 = vmatpush1.msra.mxu0 0.0
    %5363 = vmatprep.subr.mxu0 0.0
    %5364 = vmatpush1.msra.mxu0 0.0
    %5365 = vmatprep.subr.mxu0 0.0
    %5366 = vmatpush1.msra.mxu0 0.0
    %5367 = vmatprep.subr.mxu0 0.0
    %5368 = vmatpush1.msra.mxu0 0.0
    %5369 = vmatprep.subr.mxu0 0.0
    %5370 = vmatpush1.msra.mxu0 0.0
    %5371 = vmatprep.mubr.f32.mxu0 0.0
    %5372 = vmatmul.mubr.f32.gmra.mrb[0].mxu0 %v5305
    %v5373 = vpop.f32.mrb[0].mxu0
    %v5374 = vadd.f32 0.0, %v5373
    %v5375 = vpop.f32.mrb[0].mxu0
    %5376 = vdwg.mxu0
    %5377 = vrot.lane.b32.xlu0 %v258, 84
    %v5378 = vpop.permute.xlu0 %5377
    %v5381 = vsel %vm1556, %v4386, 0
    %5383 = vmatprep.subr.mxu0 0.0
    %5384 = vmatpush1.msra.mxu0 %v5378
    %5385 = vmatprep.subr.mxu0 0.0
    %5386 = vmatpush1.msra.mxu0 0.0
    %5387 = vmatprep.subr.mxu0 0.0
    %5388 = vmatpush1.msra.mxu0 0.0
    %5389 = vmatprep.subr.mxu0 0.0
    %5390 = vmatpush1.msra.mxu0 0.0
    %5391 = vmatprep.subr.mxu0 0.0
    %5392 = vmatpush1.msra.mxu0 0.0
    %5393 = vmatprep.subr.mxu0 0.0
    %5394 = vmatpush1.msra.mxu0 0.0
    %5395 = vmatprep.subr.mxu0 0.0
    %5396 = vmatpush1.msra.mxu0 0.0
    %5397 = vmatprep.subr.mxu0 0.0
    %5398 = vmatpush1.msra.mxu0 0.0
    %5399 = vmatprep.subr.mxu0 0.0
    %5400 = vmatpush1.msra.mxu0 0.0
    %5401 = vmatprep.subr.mxu0 0.0
    %5402 = vmatpush1.msra.mxu0 0.0
    %5403 = vmatprep.subr.mxu0 0.0
    %5404 = vmatpush1.msra.mxu0 0.0
    %5405 = vmatprep.subr.mxu0 0.0
    %5406 = vmatpush1.msra.mxu0 0.0
    %5407 = vmatprep.subr.mxu0 0.0
    %5408 = vmatpush1.msra.mxu0 0.0
    %5409 = vmatprep.subr.mxu0 0.0
    %5410 = vmatpush1.msra.mxu0 0.0
    %5411 = vmatprep.subr.mxu0 0.0
    %5412 = vmatpush1.msra.mxu0 0.0
    %5413 = vmatprep.subr.mxu0 0.0
    %5414 = vmatpush1.msra.mxu0 0.0
    %5415 = vmatprep.subr.mxu0 0.0
    %5416 = vmatpush1.msra.mxu0 0.0
    %5417 = vmatprep.subr.mxu0 0.0
    %5418 = vmatpush1.msra.mxu0 0.0
    %5419 = vmatprep.subr.mxu0 0.0
    %5420 = vmatpush1.msra.mxu0 0.0
    %5421 = vmatprep.subr.mxu0 0.0
    %5422 = vmatpush1.msra.mxu0 0.0
    %5423 = vmatprep.subr.mxu0 0.0
    %5424 = vmatpush1.msra.mxu0 0.0
    %5425 = vmatprep.subr.mxu0 0.0
    %5426 = vmatpush1.msra.mxu0 0.0
    %5427 = vmatprep.subr.mxu0 0.0
    %5428 = vmatpush1.msra.mxu0 0.0
    %5429 = vmatprep.subr.mxu0 0.0
    %5430 = vmatpush1.msra.mxu0 0.0
    %5431 = vmatprep.subr.mxu0 0.0
    %5432 = vmatpush1.msra.mxu0 0.0
    %5433 = vmatprep.subr.mxu0 0.0
    %5434 = vmatpush1.msra.mxu0 0.0
    %5435 = vmatprep.subr.mxu0 0.0
    %5436 = vmatpush1.msra.mxu0 0.0
    %5437 = vmatprep.subr.mxu0 0.0
    %5438 = vmatpush1.msra.mxu0 0.0
    %5439 = vmatprep.subr.mxu0 0.0
    %5440 = vmatpush1.msra.mxu0 0.0
    %5441 = vmatprep.subr.mxu0 0.0
    %5442 = vmatpush1.msra.mxu0 0.0
    %5443 = vmatprep.subr.mxu0 0.0
    %5444 = vmatpush1.msra.mxu0 0.0
    %5445 = vmatprep.subr.mxu0 0.0
    %5446 = vmatpush1.msra.mxu0 0.0
    %5447 = vmatprep.mubr.f32.mxu0 0.0
    %5448 = vmatmul.mubr.f32.gmra.mrb[0].mxu0 %v5381
    %v5449 = vpop.f32.mrb[0].mxu0
    %v5450 = vadd.f32 0.0, %v5449
    %v5451 = vpop.f32.mrb[0].mxu0
    %5452 = vdwg.mxu0
    %5453 = vrot.lane.b32.xlu0 %v263, 84
    %v5454 = vpop.permute.xlu0 %5453
    %v5457 = vsel %vm1556, %v4387, 0
    %5459 = vmatprep.subr.mxu0 0.0
    %5460 = vmatpush1.msra.mxu0 %v5454
    %5461 = vmatprep.subr.mxu0 0.0
    %5462 = vmatpush1.msra.mxu0 0.0
    %5463 = vmatprep.subr.mxu0 0.0
    %5464 = vmatpush1.msra.mxu0 0.0
    %5465 = vmatprep.subr.mxu0 0.0
    %5466 = vmatpush1.msra.mxu0 0.0
    %5467 = vmatprep.subr.mxu0 0.0
    %5468 = vmatpush1.msra.mxu0 0.0
    %5469 = vmatprep.subr.mxu0 0.0
    %5470 = vmatpush1.msra.mxu0 0.0
    %5471 = vmatprep.subr.mxu0 0.0
    %5472 = vmatpush1.msra.mxu0 0.0
    %5473 = vmatprep.subr.mxu0 0.0
    %5474 = vmatpush1.msra.mxu0 0.0
    %5475 = vmatprep.subr.mxu0 0.0
    %5476 = vmatpush1.msra.mxu0 0.0
    %5477 = vmatprep.subr.mxu0 0.0
    %5478 = vmatpush1.msra.mxu0 0.0
    %5479 = vmatprep.subr.mxu0 0.0
    %5480 = vmatpush1.msra.mxu0 0.0
    %5481 = vmatprep.subr.mxu0 0.0
    %5482 = vmatpush1.msra.mxu0 0.0
    %5483 = vmatprep.subr.mxu0 0.0
    %5484 = vmatpush1.msra.mxu0 0.0
    %5485 = vmatprep.subr.mxu0 0.0
    %5486 = vmatpush1.msra.mxu0 0.0
    %5487 = vmatprep.subr.mxu0 0.0
    %5488 = vmatpush1.msra.mxu0 0.0
    %5489 = vmatprep.subr.mxu0 0.0
    %5490 = vmatpush1.msra.mxu0 0.0
    %5491 = vmatprep.subr.mxu0 0.0
    %5492 = vmatpush1.msra.mxu0 0.0
    %5493 = vmatprep.subr.mxu0 0.0
    %5494 = vmatpush1.msra.mxu0 0.0
    %5495 = vmatprep.subr.mxu0 0.0
    %5496 = vmatpush1.msra.mxu0 0.0
    %5497 = vmatprep.subr.mxu0 0.0
    %5498 = vmatpush1.msra.mxu0 0.0
    %5499 = vmatprep.subr.mxu0 0.0
    %5500 = vmatpush1.msra.mxu0 0.0
    %5501 = vmatprep.subr.mxu0 0.0
    %5502 = vmatpush1.msra.mxu0 0.0
    %5503 = vmatprep.subr.mxu0 0.0
    %5504 = vmatpush1.msra.mxu0 0.0
    %5505 = vmatprep.subr.mxu0 0.0
    %5506 = vmatpush1.msra.mxu0 0.0
    %5507 = vmatprep.subr.mxu0 0.0
    %5508 = vmatpush1.msra.mxu0 0.0
    %5509 = vmatprep.subr.mxu0 0.0
    %5510 = vmatpush1.msra.mxu0 0.0
    %5511 = vmatprep.subr.mxu0 0.0
    %5512 = vmatpush1.msra.mxu0 0.0
    %5513 = vmatprep.subr.mxu0 0.0
    %5514 = vmatpush1.msra.mxu0 0.0
    %5515 = vmatprep.subr.mxu0 0.0
    %5516 = vmatpush1.msra.mxu0 0.0
    %5517 = vmatprep.subr.mxu0 0.0
    %5518 = vmatpush1.msra.mxu0 0.0
    %5519 = vmatprep.subr.mxu0 0.0
    %5520 = vmatpush1.msra.mxu0 0.0
    %5521 = vmatprep.subr.mxu0 0.0
    %5522 = vmatpush1.msra.mxu0 0.0
    %5523 = vmatprep.mubr.f32.mxu0 0.0
    %5524 = vmatmul.mubr.f32.gmra.mrb[0].mxu0 %v5457
    %v5525 = vpop.f32.mrb[0].mxu0
    %v5526 = vadd.f32 0.0, %v5525
    %v5527 = vpop.f32.mrb[0].mxu0
    %5528 = vdwg.mxu0
    %5529 = vrot.lane.b32.xlu0 %v268, 84
    %v5530 = vpop.permute.xlu0 %5529
    %v5533 = vsel %vm1556, %v4388, 0
    %5535 = vmatprep.subr.mxu0 0.0
    %5536 = vmatpush1.msra.mxu0 %v5530
    %5537 = vmatprep.subr.mxu0 0.0
    %5538 = vmatpush1.msra.mxu0 0.0
    %5539 = vmatprep.subr.mxu0 0.0
    %5540 = vmatpush1.msra.mxu0 0.0
    %5541 = vmatprep.subr.mxu0 0.0
    %5542 = vmatpush1.msra.mxu0 0.0
    %5543 = vmatprep.subr.mxu0 0.0
    %5544 = vmatpush1.msra.mxu0 0.0
    %5545 = vmatprep.subr.mxu0 0.0
    %5546 = vmatpush1.msra.mxu0 0.0
    %5547 = vmatprep.subr.mxu0 0.0
    %5548 = vmatpush1.msra.mxu0 0.0
    %5549 = vmatprep.subr.mxu0 0.0
    %5550 = vmatpush1.msra.mxu0 0.0
    %5551 = vmatprep.subr.mxu0 0.0
    %5552 = vmatpush1.msra.mxu0 0.0
    %5553 = vmatprep.subr.mxu0 0.0
    %5554 = vmatpush1.msra.mxu0 0.0
    %5555 = vmatprep.subr.mxu0 0.0
    %5556 = vmatpush1.msra.mxu0 0.0
    %5557 = vmatprep.subr.mxu0 0.0
    %5558 = vmatpush1.msra.mxu0 0.0
    %5559 = vmatprep.subr.mxu0 0.0
    %5560 = vmatpush1.msra.mxu0 0.0
    %5561 = vmatprep.subr.mxu0 0.0
    %5562 = vmatpush1.msra.mxu0 0.0
    %5563 = vmatprep.subr.mxu0 0.0
    %5564 = vmatpush1.msra.mxu0 0.0
    %5565 = vmatprep.subr.mxu0 0.0
    %5566 = vmatpush1.msra.mxu0 0.0
    %5567 = vmatprep.subr.mxu0 0.0
    %5568 = vmatpush1.msra.mxu0 0.0
    %5569 = vmatprep.subr.mxu0 0.0
    %5570 = vmatpush1.msra.mxu0 0.0
    %5571 = vmatprep.subr.mxu0 0.0
    %5572 = vmatpush1.msra.mxu0 0.0
    %5573 = vmatprep.subr.mxu0 0.0
    %5574 = vmatpush1.msra.mxu0 0.0
    %5575 = vmatprep.subr.mxu0 0.0
    %5576 = vmatpush1.msra.mxu0 0.0
    %5577 = vmatprep.subr.mxu0 0.0
    %5578 = vmatpush1.msra.mxu0 0.0
    %5579 = vmatprep.subr.mxu0 0.0
    %5580 = vmatpush1.msra.mxu0 0.0
    %5581 = vmatprep.subr.mxu0 0.0
    %5582 = vmatpush1.msra.mxu0 0.0
    %5583 = vmatprep.subr.mxu0 0.0
    %5584 = vmatpush1.msra.mxu0 0.0
    %5585 = vmatprep.subr.mxu0 0.0
    %5586 = vmatpush1.msra.mxu0 0.0
    %5587 = vmatprep.subr.mxu0 0.0
    %5588 = vmatpush1.msra.mxu0 0.0
    %5589 = vmatprep.subr.mxu0 0.0
    %5590 = vmatpush1.msra.mxu0 0.0
    %5591 = vmatprep.subr.mxu0 0.0
    %5592 = vmatpush1.msra.mxu0 0.0
    %5593 = vmatprep.subr.mxu0 0.0
    %5594 = vmatpush1.msra.mxu0 0.0
    %5595 = vmatprep.subr.mxu0 0.0
    %5596 = vmatpush1.msra.mxu0 0.0
    %5597 = vmatprep.subr.mxu0 0.0
    %5598 = vmatpush1.msra.mxu0 0.0
    %5599 = vmatprep.mubr.f32.mxu0 0.0
    %5600 = vmatmul.mubr.f32.gmra.mrb[0].mxu0 %v5533
    %v5601 = vpop.f32.mrb[0].mxu0
    %v5602 = vadd.f32 0.0, %v5601
    %v5603 = vpop.f32.mrb[0].mxu0
    %5604 = vdwg.mxu0
    %v5606 = vrot.slane %v272, 4
    %v5608 = vsel %vm280, %v4462, 0
    %v5611 = vsel %vm280, %v4538, 0
    %v5614 = vsel %vm280, %v4614, 0
    %v5617 = vsel %vm280, %v4690, 0
    %v5620 = vsel %vm280, %v4766, 0
    %v5623 = vsel %vm280, %v4842, 0
    %v5626 = vsel %vm280, %v4918, 0
    %v5629 = vsel %vm280, %v4994, 0
    %v5632 = vsel %vm280, %v5070, 0
    %v5635 = vsel %vm280, %v5146, 0
    %v5638 = vsel %vm280, %v5222, 0
    %v5641 = vsel %vm280, %v5298, 0
    %v5644 = vsel %vm280, %v5374, 0
    %v5647 = vsel %vm280, %v5450, 0
    %v5650 = vsel %vm280, %v5526, 0
    %v5653 = vsel %vm280, %v5602, 0
    %vm5655 = vcmask 1043456
    %v5656 = vsel %vm5655, %v5606, 0
    %5658 = vmatprep.subr.mxu0 0.0
    %5659 = vmatpush1.msra.mxu0 %v5656
    %5660 = vmatprep.subr.mxu0 0.0
    %5661 = vmatpush1.msra.mxu0 0.0
    %5662 = vmatprep.subr.mxu0 0.0
    %5663 = vmatpush1.msra.mxu0 0.0
    %5664 = vmatprep.subr.mxu0 0.0
    %5665 = vmatpush1.msra.mxu0 0.0
    %5666 = vmatprep.subr.mxu0 0.0
    %5667 = vmatpush1.msra.mxu0 0.0
    %5668 = vmatprep.subr.mxu0 0.0
    %5669 = vmatpush1.msra.mxu0 0.0
    %5670 = vmatprep.subr.mxu0 0.0
    %5671 = vmatpush1.msra.mxu0 0.0
    %5672 = vmatprep.subr.mxu0 0.0
    %5673 = vmatpush1.msra.mxu0 0.0
    %5674 = vmatprep.subr.mxu0 0.0
    %5675 = vmatpush1.msra.mxu0 0.0
    %5676 = vmatprep.subr.mxu0 0.0
    %5677 = vmatpush1.msra.mxu0 0.0
    %5678 = vmatprep.subr.mxu0 0.0
    %5679 = vmatpush1.msra.mxu0 0.0
    %5680 = vmatprep.subr.mxu0 0.0
    %5681 = vmatpush1.msra.mxu0 0.0
    %5682 = vmatprep.subr.mxu0 0.0
    %5683 = vmatpush1.msra.mxu0 0.0
    %5684 = vmatprep.subr.mxu0 0.0
    %5685 = vmatpush1.msra.mxu0 0.0
    %5686 = vmatprep.subr.mxu0 0.0
    %5687 = vmatpush1.msra.mxu0 0.0
    %5688 = vmatprep.subr.mxu0 0.0
    %5689 = vmatpush1.msra.mxu0 0.0
    %5690 = vmatprep.subr.mxu0 0.0
    %5691 = vmatpush1.msra.mxu0 0.0
    %5692 = vmatprep.subr.mxu0 0.0
    %5693 = vmatpush1.msra.mxu0 0.0
    %5694 = vmatprep.subr.mxu0 0.0
    %5695 = vmatpush1.msra.mxu0 0.0
    %5696 = vmatprep.subr.mxu0 0.0
    %5697 = vmatpush1.msra.mxu0 0.0
    %5698 = vmatprep.subr.mxu0 0.0
    %5699 = vmatpush1.msra.mxu0 0.0
    %5700 = vmatprep.subr.mxu0 0.0
    %5701 = vmatpush1.msra.mxu0 0.0
    %5702 = vmatprep.subr.mxu0 0.0
    %5703 = vmatpush1.msra.mxu0 0.0
    %5704 = vmatprep.subr.mxu0 0.0
    %5705 = vmatpush1.msra.mxu0 0.0
    %5706 = vmatprep.subr.mxu0 0.0
    %5707 = vmatpush1.msra.mxu0 0.0
    %5708 = vmatprep.subr.mxu0 0.0
    %5709 = vmatpush1.msra.mxu0 0.0
    %5710 = vmatprep.subr.mxu0 0.0
    %5711 = vmatpush1.msra.mxu0 0.0
    %5712 = vmatprep.subr.mxu0 0.0
    %5713 = vmatpush1.msra.mxu0 0.0
    %5714 = vmatprep.subr.mxu0 0.0
    %5715 = vmatpush1.msra.mxu0 0.0
    %5716 = vmatprep.subr.mxu0 0.0
    %5717 = vmatpush1.msra.mxu0 0.0
    %5718 = vmatprep.subr.mxu0 0.0
    %5719 = vmatpush1.msra.mxu0 0.0
    %5720 = vmatprep.subr.mxu0 0.0
    %5721 = vmatpush1.msra.mxu0 0.0
    %5722 = vmatprep.mubr.f32.mxu0 0.0
    %5723 = vmatmul.mubr.f32.gmra.mrb[0].mxu0 %v5608
    %v5724 = vpop.f32.mrb[0].mxu0
    %v5725 = vadd.f32 0.0, %v5724
    %v5726 = vpop.f32.mrb[0].mxu0
    %5727 = vmatprep.mubr.f32.mxu0 0.0
    %5728 = vmatmul.mubr.f32.gmra.mrb[0].mxu0 %v5611
    %v5729 = vpop.f32.mrb[0].mxu0
    %v5730 = vadd.f32 0.0, %v5729
    %v5731 = vpop.f32.mrb[0].mxu0
    %5732 = vmatprep.mubr.f32.mxu0 0.0
    %5733 = vmatmul.mubr.f32.gmra.mrb[0].mxu0 %v5614
    %v5734 = vpop.f32.mrb[0].mxu0
    %v5735 = vadd.f32 0.0, %v5734
    %v5736 = vpop.f32.mrb[0].mxu0
    %5737 = vmatprep.mubr.f32.mxu0 0.0
    %5738 = vmatmul.mubr.f32.gmra.mrb[0].mxu0 %v5617
    %v5739 = vpop.f32.mrb[0].mxu0
    %v5740 = vadd.f32 0.0, %v5739
    %v5741 = vpop.f32.mrb[0].mxu0
    %5742 = vmatprep.mubr.f32.mxu0 0.0
    %5743 = vmatmul.mubr.f32.gmra.mrb[0].mxu0 %v5620
    %v5744 = vpop.f32.mrb[0].mxu0
    %v5745 = vadd.f32 0.0, %v5744
    %v5746 = vpop.f32.mrb[0].mxu0
    %5747 = vmatprep.mubr.f32.mxu0 0.0
    %5748 = vmatmul.mubr.f32.gmra.mrb[0].mxu0 %v5623
    %v5749 = vpop.f32.mrb[0].mxu0
    %v5750 = vadd.f32 0.0, %v5749
    %v5751 = vpop.f32.mrb[0].mxu0
    %5752 = vmatprep.mubr.f32.mxu0 0.0
    %5753 = vmatmul.mubr.f32.gmra.mrb[0].mxu0 %v5626
    %v5754 = vpop.f32.mrb[0].mxu0
    %v5755 = vadd.f32 0.0, %v5754
    %v5756 = vpop.f32.mrb[0].mxu0
    %5757 = vmatprep.mubr.f32.mxu0 0.0
    %5758 = vmatmul.mubr.f32.gmra.mrb[0].mxu0 %v5629
    %v5759 = vpop.f32.mrb[0].mxu0
    %v5760 = vadd.f32 0.0, %v5759
    %v5761 = vpop.f32.mrb[0].mxu0
    %5762 = vmatprep.mubr.f32.mxu0 0.0
    %5763 = vmatmul.mubr.f32.gmra.mrb[0].mxu0 %v5632
    %v5764 = vpop.f32.mrb[0].mxu0
    %v5765 = vadd.f32 0.0, %v5764
    %v5766 = vpop.f32.mrb[0].mxu0
    %5767 = vmatprep.mubr.f32.mxu0 0.0
    %5768 = vmatmul.mubr.f32.gmra.mrb[0].mxu0 %v5635
    %v5769 = vpop.f32.mrb[0].mxu0
    %v5770 = vadd.f32 0.0, %v5769
    %v5771 = vpop.f32.mrb[0].mxu0
    %5772 = vmatprep.mubr.f32.mxu0 0.0
    %5773 = vmatmul.mubr.f32.gmra.mrb[0].mxu0 %v5638
    %v5774 = vpop.f32.mrb[0].mxu0
    %v5775 = vadd.f32 0.0, %v5774
    %v5776 = vpop.f32.mrb[0].mxu0
    %5777 = vmatprep.mubr.f32.mxu0 0.0
    %5778 = vmatmul.mubr.f32.gmra.mrb[0].mxu0 %v5641
    %v5779 = vpop.f32.mrb[0].mxu0
    %v5780 = vadd.f32 0.0, %v5779
    %v5781 = vpop.f32.mrb[0].mxu0
    %5782 = vmatprep.mubr.f32.mxu0 0.0
    %5783 = vmatmul.mubr.f32.gmra.mrb[0].mxu0 %v5644
    %v5784 = vpop.f32.mrb[0].mxu0
    %v5785 = vadd.f32 0.0, %v5784
    %v5786 = vpop.f32.mrb[0].mxu0
    %5787 = vmatprep.mubr.f32.mxu0 0.0
    %5788 = vmatmul.mubr.f32.gmra.mrb[0].mxu0 %v5647
    %v5789 = vpop.f32.mrb[0].mxu0
    %v5790 = vadd.f32 0.0, %v5789
    %v5791 = vpop.f32.mrb[0].mxu0
    %5792 = vmatprep.mubr.f32.mxu0 0.0
    %5793 = vmatmul.mubr.f32.gmra.mrb[0].mxu0 %v5650
    %v5794 = vpop.f32.mrb[0].mxu0
    %v5795 = vadd.f32 0.0, %v5794
    %v5796 = vpop.f32.mrb[0].mxu0
    %5797 = vmatprep.mubr.f32.mxu0 0.0
    %5798 = vmatmul.mubr.f32.gmra.mrb[0].mxu0 %v5653
    %v5799 = vpop.f32.mrb[0].mxu0
    %v5800 = vadd.f32 0.0, %v5799
    %v5801 = vpop.f32.mrb[0].mxu0
    %5802 = vdwg.mxu0
    %v5804 = vsel %vm280, %v1806, 0
    %v5807 = vsel %vm280, %v1882, 0
    %v5810 = vsel %vm280, %v1958, 0
    %v5813 = vsel %vm280, %v2034, 0
    %v5816 = vsel %vm280, %v2110, 0
    %v5819 = vsel %vm280, %v2186, 0
    %v5822 = vsel %vm280, %v2262, 0
    %v5825 = vsel %vm280, %v2338, 0
    %v5828 = vsel %vm280, %v2414, 0
    %v5831 = vsel %vm280, %v2490, 0
    %v5834 = vsel %vm280, %v2566, 0
    %v5837 = vsel %vm280, %v2642, 0
    %v5840 = vsel %vm280, %v2718, 0
    %v5843 = vsel %vm280, %v2794, 0
    %v5846 = vsel %vm280, %v2870, 0
    %v5849 = vsel %vm280, %v2946, 0
    %v5851 = vsel %vm5655, %v272, 0
    %5853 = vmatprep.subr.mxu0 0.0
    %5854 = vmatpush1.msra.mxu0 %v5851
    %5855 = vmatprep.subr.mxu0 0.0
    %5856 = vmatpush1.msra.mxu0 0.0
    %5857 = vmatprep.subr.mxu0 0.0
    %5858 = vmatpush1.msra.mxu0 0.0
    %5859 = vmatprep.subr.mxu0 0.0
    %5860 = vmatpush1.msra.mxu0 0.0
    %5861 = vmatprep.subr.mxu0 0.0
    %5862 = vmatpush1.msra.mxu0 0.0
    %5863 = vmatprep.subr.mxu0 0.0
    %5864 = vmatpush1.msra.mxu0 0.0
    %5865 = vmatprep.subr.mxu0 0.0
    %5866 = vmatpush1.msra.mxu0 0.0
    %5867 = vmatprep.subr.mxu0 0.0
    %5868 = vmatpush1.msra.mxu0 0.0
    %5869 = vmatprep.subr.mxu0 0.0
    %5870 = vmatpush1.msra.mxu0 0.0
    %5871 = vmatprep.subr.mxu0 0.0
    %5872 = vmatpush1.msra.mxu0 0.0
    %5873 = vmatprep.subr.mxu0 0.0
    %5874 = vmatpush1.msra.mxu0 0.0
    %5875 = vmatprep.subr.mxu0 0.0
    %5876 = vmatpush1.msra.mxu0 0.0
    %5877 = vmatprep.subr.mxu0 0.0
    %5878 = vmatpush1.msra.mxu0 0.0
    %5879 = vmatprep.subr.mxu0 0.0
    %5880 = vmatpush1.msra.mxu0 0.0
    %5881 = vmatprep.subr.mxu0 0.0
    %5882 = vmatpush1.msra.mxu0 0.0
    %5883 = vmatprep.subr.mxu0 0.0
    %5884 = vmatpush1.msra.mxu0 0.0
    %5885 = vmatprep.subr.mxu0 0.0
    %5886 = vmatpush1.msra.mxu0 0.0
    %5887 = vmatprep.subr.mxu0 0.0
    %5888 = vmatpush1.msra.mxu0 0.0
    %5889 = vmatprep.subr.mxu0 0.0
    %5890 = vmatpush1.msra.mxu0 0.0
    %5891 = vmatprep.subr.mxu0 0.0
    %5892 = vmatpush1.msra.mxu0 0.0
    %5893 = vmatprep.subr.mxu0 0.0
    %5894 = vmatpush1.msra.mxu0 0.0
    %5895 = vmatprep.subr.mxu0 0.0
    %5896 = vmatpush1.msra.mxu0 0.0
    %5897 = vmatprep.subr.mxu0 0.0
    %5898 = vmatpush1.msra.mxu0 0.0
    %5899 = vmatprep.subr.mxu0 0.0
    %5900 = vmatpush1.msra.mxu0 0.0
    %5901 = vmatprep.subr.mxu0 0.0
    %5902 = vmatpush1.msra.mxu0 0.0
    %5903 = vmatprep.subr.mxu0 0.0
    %5904 = vmatpush1.msra.mxu0 0.0
    %5905 = vmatprep.subr.mxu0 0.0
    %5906 = vmatpush1.msra.mxu0 0.0
    %5907 = vmatprep.subr.mxu0 0.0
    %5908 = vmatpush1.msra.mxu0 0.0
    %5909 = vmatprep.subr.mxu0 0.0
    %5910 = vmatpush1.msra.mxu0 0.0
    %5911 = vmatprep.subr.mxu0 0.0
    %5912 = vmatpush1.msra.mxu0 0.0
    %5913 = vmatprep.subr.mxu0 0.0
    %5914 = vmatpush1.msra.mxu0 0.0
    %5915 = vmatprep.subr.mxu0 0.0
    %5916 = vmatpush1.msra.mxu0 0.0
    %5917 = vmatprep.mubr.f32.mxu0 0.0
    %5918 = vmatmul.mubr.f32.gmra.mrb[0].mxu0 %v5804
    %v5919 = vpop.f32.mrb[0].mxu0
    %v5920 = vadd.f32 %v5725, %v5919
    %v5921 = vpop.f32.mrb[0].mxu0
    %5922 = vmatprep.mubr.f32.mxu0 0.0
    %5923 = vmatmul.mubr.f32.gmra.mrb[0].mxu0 %v5807
    %v5924 = vpop.f32.mrb[0].mxu0
    %v5925 = vadd.f32 %v5730, %v5924
    %v5926 = vpop.f32.mrb[0].mxu0
    %5927 = vmatprep.mubr.f32.mxu0 0.0
    %5928 = vmatmul.mubr.f32.gmra.mrb[0].mxu0 %v5810
    %v5929 = vpop.f32.mrb[0].mxu0
    %v5930 = vadd.f32 %v5735, %v5929
    %v5931 = vpop.f32.mrb[0].mxu0
    %5932 = vmatprep.mubr.f32.mxu0 0.0
    %5933 = vmatmul.mubr.f32.gmra.mrb[0].mxu0 %v5813
    %v5934 = vpop.f32.mrb[0].mxu0
    %v5935 = vadd.f32 %v5740, %v5934
    %v5936 = vpop.f32.mrb[0].mxu0
    %5937 = vmatprep.mubr.f32.mxu0 0.0
    %5938 = vmatmul.mubr.f32.gmra.mrb[0].mxu0 %v5816
    %v5939 = vpop.f32.mrb[0].mxu0
    %v5940 = vadd.f32 %v5745, %v5939
    %v5941 = vpop.f32.mrb[0].mxu0
    %5942 = vmatprep.mubr.f32.mxu0 0.0
    %5943 = vmatmul.mubr.f32.gmra.mrb[0].mxu0 %v5819
    %v5944 = vpop.f32.mrb[0].mxu0
    %v5945 = vadd.f32 %v5750, %v5944
    %v5946 = vpop.f32.mrb[0].mxu0
    %5947 = vmatprep.mubr.f32.mxu0 0.0
    %5948 = vmatmul.mubr.f32.gmra.mrb[0].mxu0 %v5822
    %v5949 = vpop.f32.mrb[0].mxu0
    %v5950 = vadd.f32 %v5755, %v5949
    %v5951 = vpop.f32.mrb[0].mxu0
    %5952 = vmatprep.mubr.f32.mxu0 0.0
    %5953 = vmatmul.mubr.f32.gmra.mrb[0].mxu0 %v5825
    %v5954 = vpop.f32.mrb[0].mxu0
    %v5955 = vadd.f32 %v5760, %v5954
    %v5956 = vpop.f32.mrb[0].mxu0
    %5957 = vmatprep.mubr.f32.mxu0 0.0
    %5958 = vmatmul.mubr.f32.gmra.mrb[0].mxu0 %v5828
    %v5959 = vpop.f32.mrb[0].mxu0
    %v5960 = vadd.f32 %v5765, %v5959
    %v5961 = vpop.f32.mrb[0].mxu0
    %5962 = vmatprep.mubr.f32.mxu0 0.0
    %5963 = vmatmul.mubr.f32.gmra.mrb[0].mxu0 %v5831
    %v5964 = vpop.f32.mrb[0].mxu0
    %v5965 = vadd.f32 %v5770, %v5964
    %v5966 = vpop.f32.mrb[0].mxu0
    %5967 = vmatprep.mubr.f32.mxu0 0.0
    %5968 = vmatmul.mubr.f32.gmra.mrb[0].mxu0 %v5834
    %v5969 = vpop.f32.mrb[0].mxu0
    %v5970 = vadd.f32 %v5775, %v5969
    %v5971 = vpop.f32.mrb[0].mxu0
    %5972 = vmatprep.mubr.f32.mxu0 0.0
    %5973 = vmatmul.mubr.f32.gmra.mrb[0].mxu0 %v5837
    %v5974 = vpop.f32.mrb[0].mxu0
    %v5975 = vadd.f32 %v5780, %v5974
    %v5976 = vpop.f32.mrb[0].mxu0
    %5977 = vmatprep.mubr.f32.mxu0 0.0
    %5978 = vmatmul.mubr.f32.gmra.mrb[0].mxu0 %v5840
    %v5979 = vpop.f32.mrb[0].mxu0
    %v5980 = vadd.f32 %v5785, %v5979
    %v5981 = vpop.f32.mrb[0].mxu0
    %5982 = vmatprep.mubr.f32.mxu0 0.0
    %5983 = vmatmul.mubr.f32.gmra.mrb[0].mxu0 %v5843
    %v5984 = vpop.f32.mrb[0].mxu0
    %v5985 = vadd.f32 %v5790, %v5984
    %v5986 = vpop.f32.mrb[0].mxu0
    %5987 = vmatprep.mubr.f32.mxu0 0.0
    %5988 = vmatmul.mubr.f32.gmra.mrb[0].mxu0 %v5846
    %v5989 = vpop.f32.mrb[0].mxu0
    %v5990 = vadd.f32 %v5795, %v5989
    %v5991 = vpop.f32.mrb[0].mxu0
    %5992 = vmatprep.mubr.f32.mxu0 0.0
    %5993 = vmatmul.mubr.f32.gmra.mrb[0].mxu0 %v5849
    %v5994 = vpop.f32.mrb[0].mxu0
    %v5995 = vadd.f32 %v5800, %v5994
    %v5996 = vpop.f32.mrb[0].mxu0
    %5997 = vdwg.mxu0
    %v5999 = vlaneseq
    %v6000 = vshrl.u32 %v5999, 7
    %v6001 = vsub.s32 0, %v6000
    %v6002 = vrot.slane %v274, %v6001
    %v6004 = vadd.f32 %v5920, %v6002
    %v6005 = vadd.f32 %v5925, %v6002
    %v6006 = vadd.f32 %v5930, %v6002
    %v6007 = vadd.f32 %v5935, %v6002
    %v6008 = vadd.f32 %v5940, %v6002
    %v6009 = vadd.f32 %v5945, %v6002
    %v6010 = vadd.f32 %v5950, %v6002
    %v6011 = vadd.f32 %v5955, %v6002
    %v6012 = vadd.f32 %v5960, %v6002
    %v6013 = vadd.f32 %v5965, %v6002
    %v6014 = vadd.f32 %v5970, %v6002
    %v6015 = vadd.f32 %v5975, %v6002
    %v6016 = vadd.f32 %v5980, %v6002
    %v6017 = vadd.f32 %v5985, %v6002
    %v6018 = vadd.f32 %v5990, %v6002
    %v6019 = vadd.f32 %v5995, %v6002
    %v6020 = vcombine.low %v193, %v203
    %v6021 = vcombine.high %v193, %v203
    %v6023 = vunpack.c.l.s4 1983009808
    %v6024 = vunpack.c.0.s8 %v6023
    %v6025 = vlaneseq
    %v6026 = vshrl.u32 %v6025, 7
    %v6027 = vsub.s32 %v6024, %v6026
    %v6028 = vrot.slane %v6020, %v6027
    %v6030 = vunpack.c.l.s4 1983009808
    %v6031 = vunpack.c.0.s8 %v6030
    %v6032 = vlaneseq
    %v6033 = vshrl.u32 %v6032, 7
    %v6034 = vsub.s32 %v6031, %v6033
    %v6035 = vrot.slane %v6021, %v6034
    %v6036 = vcombine.low %v198, %v208
    %v6037 = vcombine.high %v198, %v208
    %v6039 = vunpack.c.l.s4 1983009808
    %v6040 = vunpack.c.0.s8 %v6039
    %v6041 = vlaneseq
    %v6042 = vshrl.u32 %v6041, 7
    %v6043 = vsub.s32 %v6040, %v6042
    %v6044 = vrot.slane %v6036, %v6043
    %v6046 = vunpack.c.l.s4 1983009808
    %v6047 = vunpack.c.0.s8 %v6046
    %v6048 = vlaneseq
    %v6049 = vshrl.u32 %v6048, 7
    %v6050 = vsub.s32 %v6047, %v6049
    %v6051 = vrot.slane %v6037, %v6050
    %v6052 = vcombine.low %v213, %v223
    %v6053 = vcombine.high %v213, %v223
    %v6055 = vunpack.c.l.s4 1983009808
    %v6056 = vunpack.c.0.s8 %v6055
    %v6057 = vlaneseq
    %v6058 = vshrl.u32 %v6057, 7
    %v6059 = vsub.s32 %v6056, %v6058
    %v6060 = vrot.slane %v6052, %v6059
    %v6062 = vunpack.c.l.s4 1983009808
    %v6063 = vunpack.c.0.s8 %v6062
    %v6064 = vlaneseq
    %v6065 = vshrl.u32 %v6064, 7
    %v6066 = vsub.s32 %v6063, %v6065
    %v6067 = vrot.slane %v6053, %v6066
    %v6068 = vcombine.low %v218, %v228
    %v6069 = vcombine.high %v218, %v228
    %v6071 = vunpack.c.l.s4 1983009808
    %v6072 = vunpack.c.0.s8 %v6071
    %v6073 = vlaneseq
    %v6074 = vshrl.u32 %v6073, 7
    %v6075 = vsub.s32 %v6072, %v6074
    %v6076 = vrot.slane %v6068, %v6075
    %v6078 = vunpack.c.l.s4 1983009808
    %v6079 = vunpack.c.0.s8 %v6078
    %v6080 = vlaneseq
    %v6081 = vshrl.u32 %v6080, 7
    %v6082 = vsub.s32 %v6079, %v6081
    %v6083 = vrot.slane %v6069, %v6082
    %v6084 = vcombine.low %v6028, %v6044
    %v6085 = vcombine.high %v6028, %v6044
    %v6087 = vunpack.c.l.s4 1934713408
    %v6088 = vunpack.c.0.s8 %v6087
    %v6089 = vlaneseq
    %v6090 = vshrl.u32 %v6089, 7
    %v6091 = vsub.s32 %v6088, %v6090
    %v6092 = vrot.slane %v6084, %v6091
    %v6094 = vunpack.c.l.s4 1934713408
    %v6095 = vunpack.c.0.s8 %v6094
    %v6096 = vlaneseq
    %v6097 = vshrl.u32 %v6096, 7
    %v6098 = vsub.s32 %v6095, %v6097
    %v6099 = vrot.slane %v6085, %v6098
    %v6100 = vcombine.low %v6035, %v6051
    %v6101 = vcombine.high %v6035, %v6051
    %v6103 = vunpack.c.l.s4 1934713408
    %v6104 = vunpack.c.0.s8 %v6103
    %v6105 = vlaneseq
    %v6106 = vshrl.u32 %v6105, 7
    %v6107 = vsub.s32 %v6104, %v6106
    %v6108 = vrot.slane %v6100, %v6107
    %v6110 = vunpack.c.l.s4 1934713408
    %v6111 = vunpack.c.0.s8 %v6110
    %v6112 = vlaneseq
    %v6113 = vshrl.u32 %v6112, 7
    %v6114 = vsub.s32 %v6111, %v6113
    %v6115 = vrot.slane %v6101, %v6114
    %v6116 = vcombine.low %v6060, %v6076
    %v6117 = vcombine.high %v6060, %v6076
    %v6119 = vunpack.c.l.s4 1934713408
    %v6120 = vunpack.c.0.s8 %v6119
    %v6121 = vlaneseq
    %v6122 = vshrl.u32 %v6121, 7
    %v6123 = vsub.s32 %v6120, %v6122
    %v6124 = vrot.slane %v6116, %v6123
    %v6126 = vunpack.c.l.s4 1934713408
    %v6127 = vunpack.c.0.s8 %v6126
    %v6128 = vlaneseq
    %v6129 = vshrl.u32 %v6128, 7
    %v6130 = vsub.s32 %v6127, %v6129
    %v6131 = vrot.slane %v6117, %v6130
    %v6132 = vcombine.low %v6067, %v6083
    %v6133 = vcombine.high %v6067, %v6083
    %v6135 = vunpack.c.l.s4 1934713408
    %v6136 = vunpack.c.0.s8 %v6135
    %v6137 = vlaneseq
    %v6138 = vshrl.u32 %v6137, 7
    %v6139 = vsub.s32 %v6136, %v6138
    %v6140 = vrot.slane %v6132, %v6139
    %v6142 = vunpack.c.l.s4 1934713408
    %v6143 = vunpack.c.0.s8 %v6142
    %v6144 = vlaneseq
    %v6145 = vshrl.u32 %v6144, 7
    %v6146 = vsub.s32 %v6143, %v6145
    %v6147 = vrot.slane %v6133, %v6146
    %v6148 = vcombine.low %v6092, %v6124
    %v6149 = vcombine.high %v6092, %v6124
    %v6150 = vcombine.low %v6099, %v6131
    %v6151 = vcombine.high %v6099, %v6131
    %v6152 = vcombine.low %v6108, %v6140
    %v6153 = vcombine.high %v6108, %v6140
    %v6154 = vcombine.low %v6115, %v6147
    %v6155 = vcombine.high %v6115, %v6147
    %v6156 = vcombine.low %v233, %v243
    %v6157 = vcombine.high %v233, %v243
    %v6159 = vunpack.c.l.s4 1983009808
    %v6160 = vunpack.c.0.s8 %v6159
    %v6161 = vlaneseq
    %v6162 = vshrl.u32 %v6161, 7
    %v6163 = vsub.s32 %v6160, %v6162
    %v6164 = vrot.slane %v6156, %v6163
    %v6166 = vunpack.c.l.s4 1983009808
    %v6167 = vunpack.c.0.s8 %v6166
    %v6168 = vlaneseq
    %v6169 = vshrl.u32 %v6168, 7
    %v6170 = vsub.s32 %v6167, %v6169
    %v6171 = vrot.slane %v6157, %v6170
    %v6172 = vcombine.low %v238, %v248
    %v6173 = vcombine.high %v238, %v248
    %v6175 = vunpack.c.l.s4 1983009808
    %v6176 = vunpack.c.0.s8 %v6175
    %v6177 = vlaneseq
    %v6178 = vshrl.u32 %v6177, 7
    %v6179 = vsub.s32 %v6176, %v6178
    %v6180 = vrot.slane %v6172, %v6179
    %v6182 = vunpack.c.l.s4 1983009808
    %v6183 = vunpack.c.0.s8 %v6182
    %v6184 = vlaneseq
    %v6185 = vshrl.u32 %v6184, 7
    %v6186 = vsub.s32 %v6183, %v6185
    %v6187 = vrot.slane %v6173, %v6186
    %v6188 = vcombine.low %v253, %v263
    %v6189 = vcombine.high %v253, %v263
    %v6191 = vunpack.c.l.s4 1983009808
    %v6192 = vunpack.c.0.s8 %v6191
    %v6193 = vlaneseq
    %v6194 = vshrl.u32 %v6193, 7
    %v6195 = vsub.s32 %v6192, %v6194
    %v6196 = vrot.slane %v6188, %v6195
    %v6198 = vunpack.c.l.s4 1983009808
    %v6199 = vunpack.c.0.s8 %v6198
    %v6200 = vlaneseq
    %v6201 = vshrl.u32 %v6200, 7
    %v6202 = vsub.s32 %v6199, %v6201
    %v6203 = vrot.slane %v6189, %v6202
    %v6204 = vcombine.low %v258, %v268
    %v6205 = vcombine.high %v258, %v268
    %v6207 = vunpack.c.l.s4 1983009808
    %v6208 = vunpack.c.0.s8 %v6207
    %v6209 = vlaneseq
    %v6210 = vshrl.u32 %v6209, 7
    %v6211 = vsub.s32 %v6208, %v6210
    %v6212 = vrot.slane %v6204, %v6211
    %v6214 = vunpack.c.l.s4 1983009808
    %v6215 = vunpack.c.0.s8 %v6214
    %v6216 = vlaneseq
    %v6217 = vshrl.u32 %v6216, 7
    %v6218 = vsub.s32 %v6215, %v6217
    %v6219 = vrot.slane %v6205, %v6218
    %v6220 = vcombine.low %v6164, %v6180
    %v6221 = vcombine.high %v6164, %v6180
    %v6223 = vunpack.c.l.s4 1934713408
    %v6224 = vunpack.c.0.s8 %v6223
    %v6225 = vlaneseq
    %v6226 = vshrl.u32 %v6225, 7
    %v6227 = vsub.s32 %v6224, %v6226
    %v6228 = vrot.slane %v6220, %v6227
    %v6230 = vunpack.c.l.s4 1934713408
    %v6231 = vunpack.c.0.s8 %v6230
    %v6232 = vlaneseq
    %v6233 = vshrl.u32 %v6232, 7
    %v6234 = vsub.s32 %v6231, %v6233
    %v6235 = vrot.slane %v6221, %v6234
    %v6236 = vcombine.low %v6171, %v6187
    %v6237 = vcombine.high %v6171, %v6187
    %v6239 = vunpack.c.l.s4 1934713408
    %v6240 = vunpack.c.0.s8 %v6239
    %v6241 = vlaneseq
    %v6242 = vshrl.u32 %v6241, 7
    %v6243 = vsub.s32 %v6240, %v6242
    %v6244 = vrot.slane %v6236, %v6243
    %v6246 = vunpack.c.l.s4 1934713408
    %v6247 = vunpack.c.0.s8 %v6246
    %v6248 = vlaneseq
    %v6249 = vshrl.u32 %v6248, 7
    %v6250 = vsub.s32 %v6247, %v6249
    %v6251 = vrot.slane %v6237, %v6250
    %v6252 = vcombine.low %v6196, %v6212
    %v6253 = vcombine.high %v6196, %v6212
    %v6255 = vunpack.c.l.s4 1934713408
    %v6256 = vunpack.c.0.s8 %v6255
    %v6257 = vlaneseq
    %v6258 = vshrl.u32 %v6257, 7
    %v6259 = vsub.s32 %v6256, %v6258
    %v6260 = vrot.slane %v6252, %v6259
    %v6262 = vunpack.c.l.s4 1934713408
    %v6263 = vunpack.c.0.s8 %v6262
    %v6264 = vlaneseq
    %v6265 = vshrl.u32 %v6264, 7
    %v6266 = vsub.s32 %v6263, %v6265
    %v6267 = vrot.slane %v6253, %v6266
    %v6268 = vcombine.low %v6203, %v6219
    %v6269 = vcombine.high %v6203, %v6219
    %v6271 = vunpack.c.l.s4 1934713408
    %v6272 = vunpack.c.0.s8 %v6271
    %v6273 = vlaneseq
    %v6274 = vshrl.u32 %v6273, 7
    %v6275 = vsub.s32 %v6272, %v6274
    %v6276 = vrot.slane %v6268, %v6275
    %v6278 = vunpack.c.l.s4 1934713408
    %v6279 = vunpack.c.0.s8 %v6278
    %v6280 = vlaneseq
    %v6281 = vshrl.u32 %v6280, 7
    %v6282 = vsub.s32 %v6279, %v6281
    %v6283 = vrot.slane %v6269, %v6282
    %v6284 = vcombine.low %v6228, %v6260
    %v6285 = vcombine.high %v6228, %v6260
    %v6286 = vcombine.low %v6235, %v6267
    %v6287 = vcombine.high %v6235, %v6267
    %v6288 = vcombine.low %v6244, %v6276
    %v6289 = vcombine.high %v6244, %v6276
    %v6290 = vcombine.low %v6251, %v6283
    %v6291 = vcombine.high %v6251, %v6283
    %v6292 = vld [vmem:[#allocation7] sm:$0xff]
    %v6293 = vld [vmem:[%s3] sm:$0x1]
    %6295 = vrot.lane.b32.xlu0 %v6148, 120
    %v6296 = vpop.permute.xlu0 %6295
    %v6297 = vsel %vm280, %v6148, 0
    %v6299 = vsel %vm280, %v6296, 0
    %6301 = vmatprep.subr.mxu0 0.0
    %6302 = vmatpush1.xpose.msra.mxu0 %v6299
    %6303 = vmatprep.subr.mxu0 0.0
    %6304 = vmatpush1.xpose.msra.mxu0 0.0
    %6305 = vmatprep.subr.mxu0 0.0
    %6306 = vmatpush1.xpose.msra.mxu0 0.0
    %6307 = vmatprep.subr.mxu0 0.0
    %6308 = vmatpush1.xpose.msra.mxu0 0.0
    %6309 = vmatprep.subr.mxu0 0.0
    %6310 = vmatpush1.xpose.msra.mxu0 0.0
    %6311 = vmatprep.subr.mxu0 0.0
    %6312 = vmatpush1.xpose.msra.mxu0 0.0
    %6313 = vmatprep.subr.mxu0 0.0
    %6314 = vmatpush1.xpose.msra.mxu0 0.0
    %6315 = vmatprep.subr.mxu0 0.0
    %6316 = vmatpush1.xpose.msra.mxu0 0.0
    %6317 = vmatprep.subr.mxu0 0.0
    %6318 = vmatpush1.xpose.msra.mxu0 0.0
    %6319 = vmatprep.subr.mxu0 0.0
    %6320 = vmatpush1.xpose.msra.mxu0 0.0
    %6321 = vmatprep.subr.mxu0 0.0
    %6322 = vmatpush1.xpose.msra.mxu0 0.0
    %6323 = vmatprep.subr.mxu0 0.0
    %6324 = vmatpush1.xpose.msra.mxu0 0.0
    %6325 = vmatprep.subr.mxu0 0.0
    %6326 = vmatpush1.xpose.msra.mxu0 0.0
    %6327 = vmatprep.subr.mxu0 0.0
    %6328 = vmatpush1.xpose.msra.mxu0 0.0
    %6329 = vmatprep.subr.mxu0 0.0
    %6330 = vmatpush1.xpose.msra.mxu0 0.0
    %6331 = vmatprep.subr.mxu0 0.0
    %6332 = vmatpush1.xpose.msra.mxu0 0.0
    %6333 = vmatprep.subr.mxu0 0.0
    %6334 = vmatpush1.xpose.msra.mxu0 0.0
    %6335 = vmatprep.subr.mxu0 0.0
    %6336 = vmatpush1.xpose.msra.mxu0 0.0
    %6337 = vmatprep.subr.mxu0 0.0
    %6338 = vmatpush1.xpose.msra.mxu0 0.0
    %6339 = vmatprep.subr.mxu0 0.0
    %6340 = vmatpush1.xpose.msra.mxu0 0.0
    %6341 = vmatprep.subr.mxu0 0.0
    %6342 = vmatpush1.xpose.msra.mxu0 0.0
    %6343 = vmatprep.subr.mxu0 0.0
    %6344 = vmatpush1.xpose.msra.mxu0 0.0
    %6345 = vmatprep.subr.mxu0 0.0
    %6346 = vmatpush1.xpose.msra.mxu0 0.0
    %6347 = vmatprep.subr.mxu0 0.0
    %6348 = vmatpush1.xpose.msra.mxu0 0.0
    %6349 = vmatprep.subr.mxu0 0.0
    %6350 = vmatpush1.xpose.msra.mxu0 0.0
    %6351 = vmatprep.subr.mxu0 0.0
    %6352 = vmatpush1.xpose.msra.mxu0 0.0
    %6353 = vmatprep.subr.mxu0 0.0
    %6354 = vmatpush1.xpose.msra.mxu0 0.0
    %6355 = vmatprep.subr.mxu0 0.0
    %6356 = vmatpush1.xpose.msra.mxu0 0.0
    %6357 = vmatprep.subr.mxu0 0.0
    %6358 = vmatpush1.xpose.msra.mxu0 0.0
    %6359 = vmatprep.subr.mxu0 0.0
    %6360 = vmatpush1.xpose.msra.mxu0 0.0
    %6361 = vmatprep.subr.mxu0 0.0
    %6362 = vmatpush1.xpose.msra.mxu0 0.0
    %6363 = vmatprep.subr.mxu0 0.0
    %6364 = vmatpush1.xpose.msra.mxu0 0.0
    %6365 = vmatprep.mubr.f32.mxu0 0.0
    %6366 = vmatmul.mubr.f32.gmra.mrb[0].mxu0 %v6297
    %v6367 = vpop.f32.mrb[0].mxu0
    %v6368 = vadd.f32 0.0, %v6367
    %v6369 = vpop.f32.mrb[0].mxu0
    %6370 = vdwg.mxu0
    %6372 = vrot.lane.b32.xlu0 %v6149, 120
    %v6373 = vpop.permute.xlu0 %6372
    %v6374 = vsel %vm280, %v6149, 0
    %v6376 = vsel %vm280, %v6373, 0
    %6378 = vmatprep.subr.mxu0 0.0
    %6379 = vmatpush1.xpose.msra.mxu0 %v6376
    %6380 = vmatprep.subr.mxu0 0.0
    %6381 = vmatpush1.xpose.msra.mxu0 0.0
    %6382 = vmatprep.subr.mxu0 0.0
    %6383 = vmatpush1.xpose.msra.mxu0 0.0
    %6384 = vmatprep.subr.mxu0 0.0
    %6385 = vmatpush1.xpose.msra.mxu0 0.0
    %6386 = vmatprep.subr.mxu0 0.0
    %6387 = vmatpush1.xpose.msra.mxu0 0.0
    %6388 = vmatprep.subr.mxu0 0.0
    %6389 = vmatpush1.xpose.msra.mxu0 0.0
    %6390 = vmatprep.subr.mxu0 0.0
    %6391 = vmatpush1.xpose.msra.mxu0 0.0
    %6392 = vmatprep.subr.mxu0 0.0
    %6393 = vmatpush1.xpose.msra.mxu0 0.0
    %6394 = vmatprep.subr.mxu0 0.0
    %6395 = vmatpush1.xpose.msra.mxu0 0.0
    %6396 = vmatprep.subr.mxu0 0.0
    %6397 = vmatpush1.xpose.msra.mxu0 0.0
    %6398 = vmatprep.subr.mxu0 0.0
    %6399 = vmatpush1.xpose.msra.mxu0 0.0
    %6400 = vmatprep.subr.mxu0 0.0
    %6401 = vmatpush1.xpose.msra.mxu0 0.0
    %6402 = vmatprep.subr.mxu0 0.0
    %6403 = vmatpush1.xpose.msra.mxu0 0.0
    %6404 = vmatprep.subr.mxu0 0.0
    %6405 = vmatpush1.xpose.msra.mxu0 0.0
    %6406 = vmatprep.subr.mxu0 0.0
    %6407 = vmatpush1.xpose.msra.mxu0 0.0
    %6408 = vmatprep.subr.mxu0 0.0
    %6409 = vmatpush1.xpose.msra.mxu0 0.0
    %6410 = vmatprep.subr.mxu0 0.0
    %6411 = vmatpush1.xpose.msra.mxu0 0.0
    %6412 = vmatprep.subr.mxu0 0.0
    %6413 = vmatpush1.xpose.msra.mxu0 0.0
    %6414 = vmatprep.subr.mxu0 0.0
    %6415 = vmatpush1.xpose.msra.mxu0 0.0
    %6416 = vmatprep.subr.mxu0 0.0
    %6417 = vmatpush1.xpose.msra.mxu0 0.0
    %6418 = vmatprep.subr.mxu0 0.0
    %6419 = vmatpush1.xpose.msra.mxu0 0.0
    %6420 = vmatprep.subr.mxu0 0.0
    %6421 = vmatpush1.xpose.msra.mxu0 0.0
    %6422 = vmatprep.subr.mxu0 0.0
    %6423 = vmatpush1.xpose.msra.mxu0 0.0
    %6424 = vmatprep.subr.mxu0 0.0
    %6425 = vmatpush1.xpose.msra.mxu0 0.0
    %6426 = vmatprep.subr.mxu0 0.0
    %6427 = vmatpush1.xpose.msra.mxu0 0.0
    %6428 = vmatprep.subr.mxu0 0.0
    %6429 = vmatpush1.xpose.msra.mxu0 0.0
    %6430 = vmatprep.subr.mxu0 0.0
    %6431 = vmatpush1.xpose.msra.mxu0 0.0
    %6432 = vmatprep.subr.mxu0 0.0
    %6433 = vmatpush1.xpose.msra.mxu0 0.0
    %6434 = vmatprep.subr.mxu0 0.0
    %6435 = vmatpush1.xpose.msra.mxu0 0.0
    %6436 = vmatprep.subr.mxu0 0.0
    %6437 = vmatpush1.xpose.msra.mxu0 0.0
    %6438 = vmatprep.subr.mxu0 0.0
    %6439 = vmatpush1.xpose.msra.mxu0 0.0
    %6440 = vmatprep.subr.mxu0 0.0
    %6441 = vmatpush1.xpose.msra.mxu0 0.0
    %6442 = vmatprep.mubr.f32.mxu0 0.0
    %6443 = vmatmul.mubr.f32.gmra.mrb[0].mxu0 %v6374
    %v6444 = vpop.f32.mrb[0].mxu0
    %v6445 = vadd.f32 0.0, %v6444
    %v6446 = vpop.f32.mrb[0].mxu0
    %6447 = vdwg.mxu0
    %6449 = vrot.lane.b32.xlu0 %v6150, 120
    %v6450 = vpop.permute.xlu0 %6449
    %v6451 = vsel %vm280, %v6150, 0
    %v6453 = vsel %vm280, %v6450, 0
    %6455 = vmatprep.subr.mxu0 0.0
    %6456 = vmatpush1.xpose.msra.mxu0 %v6453
    %6457 = vmatprep.subr.mxu0 0.0
    %6458 = vmatpush1.xpose.msra.mxu0 0.0
    %6459 = vmatprep.subr.mxu0 0.0
    %6460 = vmatpush1.xpose.msra.mxu0 0.0
    %6461 = vmatprep.subr.mxu0 0.0
    %6462 = vmatpush1.xpose.msra.mxu0 0.0
    %6463 = vmatprep.subr.mxu0 0.0
    %6464 = vmatpush1.xpose.msra.mxu0 0.0
    %6465 = vmatprep.subr.mxu0 0.0
    %6466 = vmatpush1.xpose.msra.mxu0 0.0
    %6467 = vmatprep.subr.mxu0 0.0
    %6468 = vmatpush1.xpose.msra.mxu0 0.0
    %6469 = vmatprep.subr.mxu0 0.0
    %6470 = vmatpush1.xpose.msra.mxu0 0.0
    %6471 = vmatprep.subr.mxu0 0.0
    %6472 = vmatpush1.xpose.msra.mxu0 0.0
    %6473 = vmatprep.subr.mxu0 0.0
    %6474 = vmatpush1.xpose.msra.mxu0 0.0
    %6475 = vmatprep.subr.mxu0 0.0
    %6476 = vmatpush1.xpose.msra.mxu0 0.0
    %6477 = vmatprep.subr.mxu0 0.0
    %6478 = vmatpush1.xpose.msra.mxu0 0.0
    %6479 = vmatprep.subr.mxu0 0.0
    %6480 = vmatpush1.xpose.msra.mxu0 0.0
    %6481 = vmatprep.subr.mxu0 0.0
    %6482 = vmatpush1.xpose.msra.mxu0 0.0
    %6483 = vmatprep.subr.mxu0 0.0
    %6484 = vmatpush1.xpose.msra.mxu0 0.0
    %6485 = vmatprep.subr.mxu0 0.0
    %6486 = vmatpush1.xpose.msra.mxu0 0.0
    %6487 = vmatprep.subr.mxu0 0.0
    %6488 = vmatpush1.xpose.msra.mxu0 0.0
    %6489 = vmatprep.subr.mxu0 0.0
    %6490 = vmatpush1.xpose.msra.mxu0 0.0
    %6491 = vmatprep.subr.mxu0 0.0
    %6492 = vmatpush1.xpose.msra.mxu0 0.0
    %6493 = vmatprep.subr.mxu0 0.0
    %6494 = vmatpush1.xpose.msra.mxu0 0.0
    %6495 = vmatprep.subr.mxu0 0.0
    %6496 = vmatpush1.xpose.msra.mxu0 0.0
    %6497 = vmatprep.subr.mxu0 0.0
    %6498 = vmatpush1.xpose.msra.mxu0 0.0
    %6499 = vmatprep.subr.mxu0 0.0
    %6500 = vmatpush1.xpose.msra.mxu0 0.0
    %6501 = vmatprep.subr.mxu0 0.0
    %6502 = vmatpush1.xpose.msra.mxu0 0.0
    %6503 = vmatprep.subr.mxu0 0.0
    %6504 = vmatpush1.xpose.msra.mxu0 0.0
    %6505 = vmatprep.subr.mxu0 0.0
    %6506 = vmatpush1.xpose.msra.mxu0 0.0
    %6507 = vmatprep.subr.mxu0 0.0
    %6508 = vmatpush1.xpose.msra.mxu0 0.0
    %6509 = vmatprep.subr.mxu0 0.0
    %6510 = vmatpush1.xpose.msra.mxu0 0.0
    %6511 = vmatprep.subr.mxu0 0.0
    %6512 = vmatpush1.xpose.msra.mxu0 0.0
    %6513 = vmatprep.subr.mxu0 0.0
    %6514 = vmatpush1.xpose.msra.mxu0 0.0
    %6515 = vmatprep.subr.mxu0 0.0
    %6516 = vmatpush1.xpose.msra.mxu0 0.0
    %6517 = vmatprep.subr.mxu0 0.0
    %6518 = vmatpush1.xpose.msra.mxu0 0.0
    %6519 = vmatprep.mubr.f32.mxu0 0.0
    %6520 = vmatmul.mubr.f32.gmra.mrb[0].mxu0 %v6451
    %v6521 = vpop.f32.mrb[0].mxu0
    %v6522 = vadd.f32 0.0, %v6521
    %v6523 = vpop.f32.mrb[0].mxu0
    %6524 = vdwg.mxu0
    %6526 = vrot.lane.b32.xlu0 %v6151, 120
    %v6527 = vpop.permute.xlu0 %6526
    %v6528 = vsel %vm280, %v6151, 0
    %v6530 = vsel %vm280, %v6527, 0
    %6532 = vmatprep.subr.mxu0 0.0
    %6533 = vmatpush1.xpose.msra.mxu0 %v6530
    %6534 = vmatprep.subr.mxu0 0.0
    %6535 = vmatpush1.xpose.msra.mxu0 0.0
    %6536 = vmatprep.subr.mxu0 0.0
    %6537 = vmatpush1.xpose.msra.mxu0 0.0
    %6538 = vmatprep.subr.mxu0 0.0
    %6539 = vmatpush1.xpose.msra.mxu0 0.0
    %6540 = vmatprep.subr.mxu0 0.0
    %6541 = vmatpush1.xpose.msra.mxu0 0.0
    %6542 = vmatprep.subr.mxu0 0.0
    %6543 = vmatpush1.xpose.msra.mxu0 0.0
    %6544 = vmatprep.subr.mxu0 0.0
    %6545 = vmatpush1.xpose.msra.mxu0 0.0
    %6546 = vmatprep.subr.mxu0 0.0
    %6547 = vmatpush1.xpose.msra.mxu0 0.0
    %6548 = vmatprep.subr.mxu0 0.0
    %6549 = vmatpush1.xpose.msra.mxu0 0.0
    %6550 = vmatprep.subr.mxu0 0.0
    %6551 = vmatpush1.xpose.msra.mxu0 0.0
    %6552 = vmatprep.subr.mxu0 0.0
    %6553 = vmatpush1.xpose.msra.mxu0 0.0
    %6554 = vmatprep.subr.mxu0 0.0
    %6555 = vmatpush1.xpose.msra.mxu0 0.0
    %6556 = vmatprep.subr.mxu0 0.0
    %6557 = vmatpush1.xpose.msra.mxu0 0.0
    %6558 = vmatprep.subr.mxu0 0.0
    %6559 = vmatpush1.xpose.msra.mxu0 0.0
    %6560 = vmatprep.subr.mxu0 0.0
    %6561 = vmatpush1.xpose.msra.mxu0 0.0
    %6562 = vmatprep.subr.mxu0 0.0
    %6563 = vmatpush1.xpose.msra.mxu0 0.0
    %6564 = vmatprep.subr.mxu0 0.0
    %6565 = vmatpush1.xpose.msra.mxu0 0.0
    %6566 = vmatprep.subr.mxu0 0.0
    %6567 = vmatpush1.xpose.msra.mxu0 0.0
    %6568 = vmatprep.subr.mxu0 0.0
    %6569 = vmatpush1.xpose.msra.mxu0 0.0
    %6570 = vmatprep.subr.mxu0 0.0
    %6571 = vmatpush1.xpose.msra.mxu0 0.0
    %6572 = vmatprep.subr.mxu0 0.0
    %6573 = vmatpush1.xpose.msra.mxu0 0.0
    %6574 = vmatprep.subr.mxu0 0.0
    %6575 = vmatpush1.xpose.msra.mxu0 0.0
    %6576 = vmatprep.subr.mxu0 0.0
    %6577 = vmatpush1.xpose.msra.mxu0 0.0
    %6578 = vmatprep.subr.mxu0 0.0
    %6579 = vmatpush1.xpose.msra.mxu0 0.0
    %6580 = vmatprep.subr.mxu0 0.0
    %6581 = vmatpush1.xpose.msra.mxu0 0.0
    %6582 = vmatprep.subr.mxu0 0.0
    %6583 = vmatpush1.xpose.msra.mxu0 0.0
    %6584 = vmatprep.subr.mxu0 0.0
    %6585 = vmatpush1.xpose.msra.mxu0 0.0
    %6586 = vmatprep.subr.mxu0 0.0
    %6587 = vmatpush1.xpose.msra.mxu0 0.0
    %6588 = vmatprep.subr.mxu0 0.0
    %6589 = vmatpush1.xpose.msra.mxu0 0.0
    %6590 = vmatprep.subr.mxu0 0.0
    %6591 = vmatpush1.xpose.msra.mxu0 0.0
    %6592 = vmatprep.subr.mxu0 0.0
    %6593 = vmatpush1.xpose.msra.mxu0 0.0
    %6594 = vmatprep.subr.mxu0 0.0
    %6595 = vmatpush1.xpose.msra.mxu0 0.0
    %6596 = vmatprep.mubr.f32.mxu0 0.0
    %6597 = vmatmul.mubr.f32.gmra.mrb[0].mxu0 %v6528
    %v6598 = vpop.f32.mrb[0].mxu0
    %v6599 = vadd.f32 0.0, %v6598
    %v6600 = vpop.f32.mrb[0].mxu0
    %6601 = vdwg.mxu0
    %6603 = vrot.lane.b32.xlu0 %v6152, 120
    %v6604 = vpop.permute.xlu0 %6603
    %v6605 = vsel %vm280, %v6152, 0
    %v6607 = vsel %vm280, %v6604, 0
    %6609 = vmatprep.subr.mxu0 0.0
    %6610 = vmatpush1.xpose.msra.mxu0 %v6607
    %6611 = vmatprep.subr.mxu0 0.0
    %6612 = vmatpush1.xpose.msra.mxu0 0.0
    %6613 = vmatprep.subr.mxu0 0.0
    %6614 = vmatpush1.xpose.msra.mxu0 0.0
    %6615 = vmatprep.subr.mxu0 0.0
    %6616 = vmatpush1.xpose.msra.mxu0 0.0
    %6617 = vmatprep.subr.mxu0 0.0
    %6618 = vmatpush1.xpose.msra.mxu0 0.0
    %6619 = vmatprep.subr.mxu0 0.0
    %6620 = vmatpush1.xpose.msra.mxu0 0.0
    %6621 = vmatprep.subr.mxu0 0.0
    %6622 = vmatpush1.xpose.msra.mxu0 0.0
    %6623 = vmatprep.subr.mxu0 0.0
    %6624 = vmatpush1.xpose.msra.mxu0 0.0
    %6625 = vmatprep.subr.mxu0 0.0
    %6626 = vmatpush1.xpose.msra.mxu0 0.0
    %6627 = vmatprep.subr.mxu0 0.0
    %6628 = vmatpush1.xpose.msra.mxu0 0.0
    %6629 = vmatprep.subr.mxu0 0.0
    %6630 = vmatpush1.xpose.msra.mxu0 0.0
    %6631 = vmatprep.subr.mxu0 0.0
    %6632 = vmatpush1.xpose.msra.mxu0 0.0
    %6633 = vmatprep.subr.mxu0 0.0
    %6634 = vmatpush1.xpose.msra.mxu0 0.0
    %6635 = vmatprep.subr.mxu0 0.0
    %6636 = vmatpush1.xpose.msra.mxu0 0.0
    %6637 = vmatprep.subr.mxu0 0.0
    %6638 = vmatpush1.xpose.msra.mxu0 0.0
    %6639 = vmatprep.subr.mxu0 0.0
    %6640 = vmatpush1.xpose.msra.mxu0 0.0
    %6641 = vmatprep.subr.mxu0 0.0
    %6642 = vmatpush1.xpose.msra.mxu0 0.0
    %6643 = vmatprep.subr.mxu0 0.0
    %6644 = vmatpush1.xpose.msra.mxu0 0.0
    %6645 = vmatprep.subr.mxu0 0.0
    %6646 = vmatpush1.xpose.msra.mxu0 0.0
    %6647 = vmatprep.subr.mxu0 0.0
    %6648 = vmatpush1.xpose.msra.mxu0 0.0
    %6649 = vmatprep.subr.mxu0 0.0
    %6650 = vmatpush1.xpose.msra.mxu0 0.0
    %6651 = vmatprep.subr.mxu0 0.0
    %6652 = vmatpush1.xpose.msra.mxu0 0.0
    %6653 = vmatprep.subr.mxu0 0.0
    %6654 = vmatpush1.xpose.msra.mxu0 0.0
    %6655 = vmatprep.subr.mxu0 0.0
    %6656 = vmatpush1.xpose.msra.mxu0 0.0
    %6657 = vmatprep.subr.mxu0 0.0
    %6658 = vmatpush1.xpose.msra.mxu0 0.0
    %6659 = vmatprep.subr.mxu0 0.0
    %6660 = vmatpush1.xpose.msra.mxu0 0.0
    %6661 = vmatprep.subr.mxu0 0.0
    %6662 = vmatpush1.xpose.msra.mxu0 0.0
    %6663 = vmatprep.subr.mxu0 0.0
    %6664 = vmatpush1.xpose.msra.mxu0 0.0
    %6665 = vmatprep.subr.mxu0 0.0
    %6666 = vmatpush1.xpose.msra.mxu0 0.0
    %6667 = vmatprep.subr.mxu0 0.0
    %6668 = vmatpush1.xpose.msra.mxu0 0.0
    %6669 = vmatprep.subr.mxu0 0.0
    %6670 = vmatpush1.xpose.msra.mxu0 0.0
    %6671 = vmatprep.subr.mxu0 0.0
    %6672 = vmatpush1.xpose.msra.mxu0 0.0
    %6673 = vmatprep.mubr.f32.mxu0 0.0
    %6674 = vmatmul.mubr.f32.gmra.mrb[0].mxu0 %v6605
    %v6675 = vpop.f32.mrb[0].mxu0
    %v6676 = vadd.f32 0.0, %v6675
    %v6677 = vpop.f32.mrb[0].mxu0
    %6678 = vdwg.mxu0
    %6680 = vrot.lane.b32.xlu0 %v6153, 120
    %v6681 = vpop.permute.xlu0 %6680
    %v6682 = vsel %vm280, %v6153, 0
    %v6684 = vsel %vm280, %v6681, 0
    %6686 = vmatprep.subr.mxu0 0.0
    %6687 = vmatpush1.xpose.msra.mxu0 %v6684
    %6688 = vmatprep.subr.mxu0 0.0
    %6689 = vmatpush1.xpose.msra.mxu0 0.0
    %6690 = vmatprep.subr.mxu0 0.0
    %6691 = vmatpush1.xpose.msra.mxu0 0.0
    %6692 = vmatprep.subr.mxu0 0.0
    %6693 = vmatpush1.xpose.msra.mxu0 0.0
    %6694 = vmatprep.subr.mxu0 0.0
    %6695 = vmatpush1.xpose.msra.mxu0 0.0
    %6696 = vmatprep.subr.mxu0 0.0
    %6697 = vmatpush1.xpose.msra.mxu0 0.0
    %6698 = vmatprep.subr.mxu0 0.0
    %6699 = vmatpush1.xpose.msra.mxu0 0.0
    %6700 = vmatprep.subr.mxu0 0.0
    %6701 = vmatpush1.xpose.msra.mxu0 0.0
    %6702 = vmatprep.subr.mxu0 0.0
    %6703 = vmatpush1.xpose.msra.mxu0 0.0
    %6704 = vmatprep.subr.mxu0 0.0
    %6705 = vmatpush1.xpose.msra.mxu0 0.0
    %6706 = vmatprep.subr.mxu0 0.0
    %6707 = vmatpush1.xpose.msra.mxu0 0.0
    %6708 = vmatprep.subr.mxu0 0.0
    %6709 = vmatpush1.xpose.msra.mxu0 0.0
    %6710 = vmatprep.subr.mxu0 0.0
    %6711 = vmatpush1.xpose.msra.mxu0 0.0
    %6712 = vmatprep.subr.mxu0 0.0
    %6713 = vmatpush1.xpose.msra.mxu0 0.0
    %6714 = vmatprep.subr.mxu0 0.0
    %6715 = vmatpush1.xpose.msra.mxu0 0.0
    %6716 = vmatprep.subr.mxu0 0.0
    %6717 = vmatpush1.xpose.msra.mxu0 0.0
    %6718 = vmatprep.subr.mxu0 0.0
    %6719 = vmatpush1.xpose.msra.mxu0 0.0
    %6720 = vmatprep.subr.mxu0 0.0
    %6721 = vmatpush1.xpose.msra.mxu0 0.0
    %6722 = vmatprep.subr.mxu0 0.0
    %6723 = vmatpush1.xpose.msra.mxu0 0.0
    %6724 = vmatprep.subr.mxu0 0.0
    %6725 = vmatpush1.xpose.msra.mxu0 0.0
    %6726 = vmatprep.subr.mxu0 0.0
    %6727 = vmatpush1.xpose.msra.mxu0 0.0
    %6728 = vmatprep.subr.mxu0 0.0
    %6729 = vmatpush1.xpose.msra.mxu0 0.0
    %6730 = vmatprep.subr.mxu0 0.0
    %6731 = vmatpush1.xpose.msra.mxu0 0.0
    %6732 = vmatprep.subr.mxu0 0.0
    %6733 = vmatpush1.xpose.msra.mxu0 0.0
    %6734 = vmatprep.subr.mxu0 0.0
    %6735 = vmatpush1.xpose.msra.mxu0 0.0
    %6736 = vmatprep.subr.mxu0 0.0
    %6737 = vmatpush1.xpose.msra.mxu0 0.0
    %6738 = vmatprep.subr.mxu0 0.0
    %6739 = vmatpush1.xpose.msra.mxu0 0.0
    %6740 = vmatprep.subr.mxu0 0.0
    %6741 = vmatpush1.xpose.msra.mxu0 0.0
    %6742 = vmatprep.subr.mxu0 0.0
    %6743 = vmatpush1.xpose.msra.mxu0 0.0
    %6744 = vmatprep.subr.mxu0 0.0
    %6745 = vmatpush1.xpose.msra.mxu0 0.0
    %6746 = vmatprep.subr.mxu0 0.0
    %6747 = vmatpush1.xpose.msra.mxu0 0.0
    %6748 = vmatprep.subr.mxu0 0.0
    %6749 = vmatpush1.xpose.msra.mxu0 0.0
    %6750 = vmatprep.mubr.f32.mxu0 0.0
    %6751 = vmatmul.mubr.f32.gmra.mrb[0].mxu0 %v6682
    %v6752 = vpop.f32.mrb[0].mxu0
    %v6753 = vadd.f32 0.0, %v6752
    %v6754 = vpop.f32.mrb[0].mxu0
    %6755 = vdwg.mxu0
    %6757 = vrot.lane.b32.xlu0 %v6154, 120
    %v6758 = vpop.permute.xlu0 %6757
    %v6759 = vsel %vm280, %v6154, 0
    %v6761 = vsel %vm280, %v6758, 0
    %6763 = vmatprep.subr.mxu0 0.0
    %6764 = vmatpush1.xpose.msra.mxu0 %v6761
    %6765 = vmatprep.subr.mxu0 0.0
    %6766 = vmatpush1.xpose.msra.mxu0 0.0
    %6767 = vmatprep.subr.mxu0 0.0
    %6768 = vmatpush1.xpose.msra.mxu0 0.0
    %6769 = vmatprep.subr.mxu0 0.0
    %6770 = vmatpush1.xpose.msra.mxu0 0.0
    %6771 = vmatprep.subr.mxu0 0.0
    %6772 = vmatpush1.xpose.msra.mxu0 0.0
    %6773 = vmatprep.subr.mxu0 0.0
    %6774 = vmatpush1.xpose.msra.mxu0 0.0
    %6775 = vmatprep.subr.mxu0 0.0
    %6776 = vmatpush1.xpose.msra.mxu0 0.0
    %6777 = vmatprep.subr.mxu0 0.0
    %6778 = vmatpush1.xpose.msra.mxu0 0.0
    %6779 = vmatprep.subr.mxu0 0.0
    %6780 = vmatpush1.xpose.msra.mxu0 0.0
    %6781 = vmatprep.subr.mxu0 0.0
    %6782 = vmatpush1.xpose.msra.mxu0 0.0
    %6783 = vmatprep.subr.mxu0 0.0
    %6784 = vmatpush1.xpose.msra.mxu0 0.0
    %6785 = vmatprep.subr.mxu0 0.0
    %6786 = vmatpush1.xpose.msra.mxu0 0.0
    %6787 = vmatprep.subr.mxu0 0.0
    %6788 = vmatpush1.xpose.msra.mxu0 0.0
    %6789 = vmatprep.subr.mxu0 0.0
    %6790 = vmatpush1.xpose.msra.mxu0 0.0
    %6791 = vmatprep.subr.mxu0 0.0
    %6792 = vmatpush1.xpose.msra.mxu0 0.0
    %6793 = vmatprep.subr.mxu0 0.0
    %6794 = vmatpush1.xpose.msra.mxu0 0.0
    %6795 = vmatprep.subr.mxu0 0.0
    %6796 = vmatpush1.xpose.msra.mxu0 0.0
    %6797 = vmatprep.subr.mxu0 0.0
    %6798 = vmatpush1.xpose.msra.mxu0 0.0
    %6799 = vmatprep.subr.mxu0 0.0
    %6800 = vmatpush1.xpose.msra.mxu0 0.0
    %6801 = vmatprep.subr.mxu0 0.0
    %6802 = vmatpush1.xpose.msra.mxu0 0.0
    %6803 = vmatprep.subr.mxu0 0.0
    %6804 = vmatpush1.xpose.msra.mxu0 0.0
    %6805 = vmatprep.subr.mxu0 0.0
    %6806 = vmatpush1.xpose.msra.mxu0 0.0
    %6807 = vmatprep.subr.mxu0 0.0
    %6808 = vmatpush1.xpose.msra.mxu0 0.0
    %6809 = vmatprep.subr.mxu0 0.0
    %6810 = vmatpush1.xpose.msra.mxu0 0.0
    %6811 = vmatprep.subr.mxu0 0.0
    %6812 = vmatpush1.xpose.msra.mxu0 0.0
    %6813 = vmatprep.subr.mxu0 0.0
    %6814 = vmatpush1.xpose.msra.mxu0 0.0
    %6815 = vmatprep.subr.mxu0 0.0
    %6816 = vmatpush1.xpose.msra.mxu0 0.0
    %6817 = vmatprep.subr.mxu0 0.0
    %6818 = vmatpush1.xpose.msra.mxu0 0.0
    %6819 = vmatprep.subr.mxu0 0.0
    %6820 = vmatpush1.xpose.msra.mxu0 0.0
    %6821 = vmatprep.subr.mxu0 0.0
    %6822 = vmatpush1.xpose.msra.mxu0 0.0
    %6823 = vmatprep.subr.mxu0 0.0
    %6824 = vmatpush1.xpose.msra.mxu0 0.0
    %6825 = vmatprep.subr.mxu0 0.0
    %6826 = vmatpush1.xpose.msra.mxu0 0.0
    %6827 = vmatprep.mubr.f32.mxu0 0.0
    %6828 = vmatmul.mubr.f32.gmra.mrb[0].mxu0 %v6759
    %v6829 = vpop.f32.mrb[0].mxu0
    %v6830 = vadd.f32 0.0, %v6829
    %v6831 = vpop.f32.mrb[0].mxu0
    %6832 = vdwg.mxu0
    %6834 = vrot.lane.b32.xlu0 %v6155, 120
    %v6835 = vpop.permute.xlu0 %6834
    %v6836 = vsel %vm280, %v6155, 0
    %v6838 = vsel %vm280, %v6835, 0
    %6840 = vmatprep.subr.mxu0 0.0
    %6841 = vmatpush1.xpose.msra.mxu0 %v6838
    %6842 = vmatprep.subr.mxu0 0.0
    %6843 = vmatpush1.xpose.msra.mxu0 0.0
    %6844 = vmatprep.subr.mxu0 0.0
    %6845 = vmatpush1.xpose.msra.mxu0 0.0
    %6846 = vmatprep.subr.mxu0 0.0
    %6847 = vmatpush1.xpose.msra.mxu0 0.0
    %6848 = vmatprep.subr.mxu0 0.0
    %6849 = vmatpush1.xpose.msra.mxu0 0.0
    %6850 = vmatprep.subr.mxu0 0.0
    %6851 = vmatpush1.xpose.msra.mxu0 0.0
    %6852 = vmatprep.subr.mxu0 0.0
    %6853 = vmatpush1.xpose.msra.mxu0 0.0
    %6854 = vmatprep.subr.mxu0 0.0
    %6855 = vmatpush1.xpose.msra.mxu0 0.0
    %6856 = vmatprep.subr.mxu0 0.0
    %6857 = vmatpush1.xpose.msra.mxu0 0.0
    %6858 = vmatprep.subr.mxu0 0.0
    %6859 = vmatpush1.xpose.msra.mxu0 0.0
    %6860 = vmatprep.subr.mxu0 0.0
    %6861 = vmatpush1.xpose.msra.mxu0 0.0
    %6862 = vmatprep.subr.mxu0 0.0
    %6863 = vmatpush1.xpose.msra.mxu0 0.0
    %6864 = vmatprep.subr.mxu0 0.0
    %6865 = vmatpush1.xpose.msra.mxu0 0.0
    %6866 = vmatprep.subr.mxu0 0.0
    %6867 = vmatpush1.xpose.msra.mxu0 0.0
    %6868 = vmatprep.subr.mxu0 0.0
    %6869 = vmatpush1.xpose.msra.mxu0 0.0
    %6870 = vmatprep.subr.mxu0 0.0
    %6871 = vmatpush1.xpose.msra.mxu0 0.0
    %6872 = vmatprep.subr.mxu0 0.0
    %6873 = vmatpush1.xpose.msra.mxu0 0.0
    %6874 = vmatprep.subr.mxu0 0.0
    %6875 = vmatpush1.xpose.msra.mxu0 0.0
    %6876 = vmatprep.subr.mxu0 0.0
    %6877 = vmatpush1.xpose.msra.mxu0 0.0
    %6878 = vmatprep.subr.mxu0 0.0
    %6879 = vmatpush1.xpose.msra.mxu0 0.0
    %6880 = vmatprep.subr.mxu0 0.0
    %6881 = vmatpush1.xpose.msra.mxu0 0.0
    %6882 = vmatprep.subr.mxu0 0.0
    %6883 = vmatpush1.xpose.msra.mxu0 0.0
    %6884 = vmatprep.subr.mxu0 0.0
    %6885 = vmatpush1.xpose.msra.mxu0 0.0
    %6886 = vmatprep.subr.mxu0 0.0
    %6887 = vmatpush1.xpose.msra.mxu0 0.0
    %6888 = vmatprep.subr.mxu0 0.0
    %6889 = vmatpush1.xpose.msra.mxu0 0.0
    %6890 = vmatprep.subr.mxu0 0.0
    %6891 = vmatpush1.xpose.msra.mxu0 0.0
    %6892 = vmatprep.subr.mxu0 0.0
    %6893 = vmatpush1.xpose.msra.mxu0 0.0
    %6894 = vmatprep.subr.mxu0 0.0
    %6895 = vmatpush1.xpose.msra.mxu0 0.0
    %6896 = vmatprep.subr.mxu0 0.0
    %6897 = vmatpush1.xpose.msra.mxu0 0.0
    %6898 = vmatprep.subr.mxu0 0.0
    %6899 = vmatpush1.xpose.msra.mxu0 0.0
    %6900 = vmatprep.subr.mxu0 0.0
    %6901 = vmatpush1.xpose.msra.mxu0 0.0
    %6902 = vmatprep.subr.mxu0 0.0
    %6903 = vmatpush1.xpose.msra.mxu0 0.0
    %6904 = vmatprep.mubr.f32.mxu0 0.0
    %6905 = vmatmul.mubr.f32.gmra.mrb[0].mxu0 %v6836
    %v6906 = vpop.f32.mrb[0].mxu0
    %v6907 = vadd.f32 0.0, %v6906
    %v6908 = vpop.f32.mrb[0].mxu0
    %6909 = vdwg.mxu0
    %6911 = vrot.lane.b32.xlu0 %v6284, 120
    %v6912 = vpop.permute.xlu0 %6911
    %v6913 = vsel %vm280, %v6284, 0
    %v6915 = vsel %vm280, %v6912, 0
    %6917 = vmatprep.subr.mxu0 0.0
    %6918 = vmatpush1.xpose.msra.mxu0 %v6915
    %6919 = vmatprep.subr.mxu0 0.0
    %6920 = vmatpush1.xpose.msra.mxu0 0.0
    %6921 = vmatprep.subr.mxu0 0.0
    %6922 = vmatpush1.xpose.msra.mxu0 0.0
    %6923 = vmatprep.subr.mxu0 0.0
    %6924 = vmatpush1.xpose.msra.mxu0 0.0
    %6925 = vmatprep.subr.mxu0 0.0
    %6926 = vmatpush1.xpose.msra.mxu0 0.0
    %6927 = vmatprep.subr.mxu0 0.0
    %6928 = vmatpush1.xpose.msra.mxu0 0.0
    %6929 = vmatprep.subr.mxu0 0.0
    %6930 = vmatpush1.xpose.msra.mxu0 0.0
    %6931 = vmatprep.subr.mxu0 0.0
    %6932 = vmatpush1.xpose.msra.mxu0 0.0
    %6933 = vmatprep.subr.mxu0 0.0
    %6934 = vmatpush1.xpose.msra.mxu0 0.0
    %6935 = vmatprep.subr.mxu0 0.0
    %6936 = vmatpush1.xpose.msra.mxu0 0.0
    %6937 = vmatprep.subr.mxu0 0.0
    %6938 = vmatpush1.xpose.msra.mxu0 0.0
    %6939 = vmatprep.subr.mxu0 0.0
    %6940 = vmatpush1.xpose.msra.mxu0 0.0
    %6941 = vmatprep.subr.mxu0 0.0
    %6942 = vmatpush1.xpose.msra.mxu0 0.0
    %6943 = vmatprep.subr.mxu0 0.0
    %6944 = vmatpush1.xpose.msra.mxu0 0.0
    %6945 = vmatprep.subr.mxu0 0.0
    %6946 = vmatpush1.xpose.msra.mxu0 0.0
    %6947 = vmatprep.subr.mxu0 0.0
    %6948 = vmatpush1.xpose.msra.mxu0 0.0
    %6949 = vmatprep.subr.mxu0 0.0
    %6950 = vmatpush1.xpose.msra.mxu0 0.0
    %6951 = vmatprep.subr.mxu0 0.0
    %6952 = vmatpush1.xpose.msra.mxu0 0.0
    %6953 = vmatprep.subr.mxu0 0.0
    %6954 = vmatpush1.xpose.msra.mxu0 0.0
    %6955 = vmatprep.subr.mxu0 0.0
    %6956 = vmatpush1.xpose.msra.mxu0 0.0
    %6957 = vmatprep.subr.mxu0 0.0
    %6958 = vmatpush1.xpose.msra.mxu0 0.0
    %6959 = vmatprep.subr.mxu0 0.0
    %6960 = vmatpush1.xpose.msra.mxu0 0.0
    %6961 = vmatprep.subr.mxu0 0.0
    %6962 = vmatpush1.xpose.msra.mxu0 0.0
    %6963 = vmatprep.subr.mxu0 0.0
    %6964 = vmatpush1.xpose.msra.mxu0 0.0
    %6965 = vmatprep.subr.mxu0 0.0
    %6966 = vmatpush1.xpose.msra.mxu0 0.0
    %6967 = vmatprep.subr.mxu0 0.0
    %6968 = vmatpush1.xpose.msra.mxu0 0.0
    %6969 = vmatprep.subr.mxu0 0.0
    %6970 = vmatpush1.xpose.msra.mxu0 0.0
    %6971 = vmatprep.subr.mxu0 0.0
    %6972 = vmatpush1.xpose.msra.mxu0 0.0
    %6973 = vmatprep.subr.mxu0 0.0
    %6974 = vmatpush1.xpose.msra.mxu0 0.0
    %6975 = vmatprep.subr.mxu0 0.0
    %6976 = vmatpush1.xpose.msra.mxu0 0.0
    %6977 = vmatprep.subr.mxu0 0.0
    %6978 = vmatpush1.xpose.msra.mxu0 0.0
    %6979 = vmatprep.subr.mxu0 0.0
    %6980 = vmatpush1.xpose.msra.mxu0 0.0
    %6981 = vmatprep.mubr.f32.mxu0 0.0
    %6982 = vmatmul.mubr.f32.gmra.mrb[0].mxu0 %v6913
    %v6983 = vpop.f32.mrb[0].mxu0
    %v6984 = vadd.f32 0.0, %v6983
    %v6985 = vpop.f32.mrb[0].mxu0
    %6986 = vdwg.mxu0
    %6988 = vrot.lane.b32.xlu0 %v6285, 120
    %v6989 = vpop.permute.xlu0 %6988
    %v6990 = vsel %vm280, %v6285, 0
    %v6992 = vsel %vm280, %v6989, 0
    %6994 = vmatprep.subr.mxu0 0.0
    %6995 = vmatpush1.xpose.msra.mxu0 %v6992
    %6996 = vmatprep.subr.mxu0 0.0
    %6997 = vmatpush1.xpose.msra.mxu0 0.0
    %6998 = vmatprep.subr.mxu0 0.0
    %6999 = vmatpush1.xpose.msra.mxu0 0.0
    %7000 = vmatprep.subr.mxu0 0.0
    %7001 = vmatpush1.xpose.msra.mxu0 0.0
    %7002 = vmatprep.subr.mxu0 0.0
    %7003 = vmatpush1.xpose.msra.mxu0 0.0
    %7004 = vmatprep.subr.mxu0 0.0
    %7005 = vmatpush1.xpose.msra.mxu0 0.0
    %7006 = vmatprep.subr.mxu0 0.0
    %7007 = vmatpush1.xpose.msra.mxu0 0.0
    %7008 = vmatprep.subr.mxu0 0.0
    %7009 = vmatpush1.xpose.msra.mxu0 0.0
    %7010 = vmatprep.subr.mxu0 0.0
    %7011 = vmatpush1.xpose.msra.mxu0 0.0
    %7012 = vmatprep.subr.mxu0 0.0
    %7013 = vmatpush1.xpose.msra.mxu0 0.0
    %7014 = vmatprep.subr.mxu0 0.0
    %7015 = vmatpush1.xpose.msra.mxu0 0.0
    %7016 = vmatprep.subr.mxu0 0.0
    %7017 = vmatpush1.xpose.msra.mxu0 0.0
    %7018 = vmatprep.subr.mxu0 0.0
    %7019 = vmatpush1.xpose.msra.mxu0 0.0
    %7020 = vmatprep.subr.mxu0 0.0
    %7021 = vmatpush1.xpose.msra.mxu0 0.0
    %7022 = vmatprep.subr.mxu0 0.0
    %7023 = vmatpush1.xpose.msra.mxu0 0.0
    %7024 = vmatprep.subr.mxu0 0.0
    %7025 = vmatpush1.xpose.msra.mxu0 0.0
    %7026 = vmatprep.subr.mxu0 0.0
    %7027 = vmatpush1.xpose.msra.mxu0 0.0
    %7028 = vmatprep.subr.mxu0 0.0
    %7029 = vmatpush1.xpose.msra.mxu0 0.0
    %7030 = vmatprep.subr.mxu0 0.0
    %7031 = vmatpush1.xpose.msra.mxu0 0.0
    %7032 = vmatprep.subr.mxu0 0.0
    %7033 = vmatpush1.xpose.msra.mxu0 0.0
    %7034 = vmatprep.subr.mxu0 0.0
    %7035 = vmatpush1.xpose.msra.mxu0 0.0
    %7036 = vmatprep.subr.mxu0 0.0
    %7037 = vmatpush1.xpose.msra.mxu0 0.0
    %7038 = vmatprep.subr.mxu0 0.0
    %7039 = vmatpush1.xpose.msra.mxu0 0.0
    %7040 = vmatprep.subr.mxu0 0.0
    %7041 = vmatpush1.xpose.msra.mxu0 0.0
    %7042 = vmatprep.subr.mxu0 0.0
    %7043 = vmatpush1.xpose.msra.mxu0 0.0
    %7044 = vmatprep.subr.mxu0 0.0
    %7045 = vmatpush1.xpose.msra.mxu0 0.0
    %7046 = vmatprep.subr.mxu0 0.0
    %7047 = vmatpush1.xpose.msra.mxu0 0.0
    %7048 = vmatprep.subr.mxu0 0.0
    %7049 = vmatpush1.xpose.msra.mxu0 0.0
    %7050 = vmatprep.subr.mxu0 0.0
    %7051 = vmatpush1.xpose.msra.mxu0 0.0
    %7052 = vmatprep.subr.mxu0 0.0
    %7053 = vmatpush1.xpose.msra.mxu0 0.0
    %7054 = vmatprep.subr.mxu0 0.0
    %7055 = vmatpush1.xpose.msra.mxu0 0.0
    %7056 = vmatprep.subr.mxu0 0.0
    %7057 = vmatpush1.xpose.msra.mxu0 0.0
    %7058 = vmatprep.mubr.f32.mxu0 0.0
    %7059 = vmatmul.mubr.f32.gmra.mrb[0].mxu0 %v6990
    %v7060 = vpop.f32.mrb[0].mxu0
    %v7061 = vadd.f32 0.0, %v7060
    %v7062 = vpop.f32.mrb[0].mxu0
    %7063 = vdwg.mxu0
    %7065 = vrot.lane.b32.xlu0 %v6286, 120
    %v7066 = vpop.permute.xlu0 %7065
    %v7067 = vsel %vm280, %v6286, 0
    %v7069 = vsel %vm280, %v7066, 0
    %7071 = vmatprep.subr.mxu0 0.0
    %7072 = vmatpush1.xpose.msra.mxu0 %v7069
    %7073 = vmatprep.subr.mxu0 0.0
    %7074 = vmatpush1.xpose.msra.mxu0 0.0
    %7075 = vmatprep.subr.mxu0 0.0
    %7076 = vmatpush1.xpose.msra.mxu0 0.0
    %7077 = vmatprep.subr.mxu0 0.0
    %7078 = vmatpush1.xpose.msra.mxu0 0.0
    %7079 = vmatprep.subr.mxu0 0.0
    %7080 = vmatpush1.xpose.msra.mxu0 0.0
    %7081 = vmatprep.subr.mxu0 0.0
    %7082 = vmatpush1.xpose.msra.mxu0 0.0
    %7083 = vmatprep.subr.mxu0 0.0
    %7084 = vmatpush1.xpose.msra.mxu0 0.0
    %7085 = vmatprep.subr.mxu0 0.0
    %7086 = vmatpush1.xpose.msra.mxu0 0.0
    %7087 = vmatprep.subr.mxu0 0.0
    %7088 = vmatpush1.xpose.msra.mxu0 0.0
    %7089 = vmatprep.subr.mxu0 0.0
    %7090 = vmatpush1.xpose.msra.mxu0 0.0
    %7091 = vmatprep.subr.mxu0 0.0
    %7092 = vmatpush1.xpose.msra.mxu0 0.0
    %7093 = vmatprep.subr.mxu0 0.0
    %7094 = vmatpush1.xpose.msra.mxu0 0.0
    %7095 = vmatprep.subr.mxu0 0.0
    %7096 = vmatpush1.xpose.msra.mxu0 0.0
    %7097 = vmatprep.subr.mxu0 0.0
    %7098 = vmatpush1.xpose.msra.mxu0 0.0
    %7099 = vmatprep.subr.mxu0 0.0
    %7100 = vmatpush1.xpose.msra.mxu0 0.0
    %7101 = vmatprep.subr.mxu0 0.0
    %7102 = vmatpush1.xpose.msra.mxu0 0.0
    %7103 = vmatprep.subr.mxu0 0.0
    %7104 = vmatpush1.xpose.msra.mxu0 0.0
    %7105 = vmatprep.subr.mxu0 0.0
    %7106 = vmatpush1.xpose.msra.mxu0 0.0
    %7107 = vmatprep.subr.mxu0 0.0
    %7108 = vmatpush1.xpose.msra.mxu0 0.0
    %7109 = vmatprep.subr.mxu0 0.0
    %7110 = vmatpush1.xpose.msra.mxu0 0.0
    %7111 = vmatprep.subr.mxu0 0.0
    %7112 = vmatpush1.xpose.msra.mxu0 0.0
    %7113 = vmatprep.subr.mxu0 0.0
    %7114 = vmatpush1.xpose.msra.mxu0 0.0
    %7115 = vmatprep.subr.mxu0 0.0
    %7116 = vmatpush1.xpose.msra.mxu0 0.0
    %7117 = vmatprep.subr.mxu0 0.0
    %7118 = vmatpush1.xpose.msra.mxu0 0.0
    %7119 = vmatprep.subr.mxu0 0.0
    %7120 = vmatpush1.xpose.msra.mxu0 0.0
    %7121 = vmatprep.subr.mxu0 0.0
    %7122 = vmatpush1.xpose.msra.mxu0 0.0
    %7123 = vmatprep.subr.mxu0 0.0
    %7124 = vmatpush1.xpose.msra.mxu0 0.0
    %7125 = vmatprep.subr.mxu0 0.0
    %7126 = vmatpush1.xpose.msra.mxu0 0.0
    %7127 = vmatprep.subr.mxu0 0.0
    %7128 = vmatpush1.xpose.msra.mxu0 0.0
    %7129 = vmatprep.subr.mxu0 0.0
    %7130 = vmatpush1.xpose.msra.mxu0 0.0
    %7131 = vmatprep.subr.mxu0 0.0
    %7132 = vmatpush1.xpose.msra.mxu0 0.0
    %7133 = vmatprep.subr.mxu0 0.0
    %7134 = vmatpush1.xpose.msra.mxu0 0.0
    %7135 = vmatprep.mubr.f32.mxu0 0.0
    %7136 = vmatmul.mubr.f32.gmra.mrb[0].mxu0 %v7067
    %v7137 = vpop.f32.mrb[0].mxu0
    %v7138 = vadd.f32 0.0, %v7137
    %v7139 = vpop.f32.mrb[0].mxu0
    %7140 = vdwg.mxu0
    %7142 = vrot.lane.b32.xlu0 %v6287, 120
    %v7143 = vpop.permute.xlu0 %7142
    %v7144 = vsel %vm280, %v6287, 0
    %v7146 = vsel %vm280, %v7143, 0
    %7148 = vmatprep.subr.mxu0 0.0
    %7149 = vmatpush1.xpose.msra.mxu0 %v7146
    %7150 = vmatprep.subr.mxu0 0.0
    %7151 = vmatpush1.xpose.msra.mxu0 0.0
    %7152 = vmatprep.subr.mxu0 0.0
    %7153 = vmatpush1.xpose.msra.mxu0 0.0
    %7154 = vmatprep.subr.mxu0 0.0
    %7155 = vmatpush1.xpose.msra.mxu0 0.0
    %7156 = vmatprep.subr.mxu0 0.0
    %7157 = vmatpush1.xpose.msra.mxu0 0.0
    %7158 = vmatprep.subr.mxu0 0.0
    %7159 = vmatpush1.xpose.msra.mxu0 0.0
    %7160 = vmatprep.subr.mxu0 0.0
    %7161 = vmatpush1.xpose.msra.mxu0 0.0
    %7162 = vmatprep.subr.mxu0 0.0
    %7163 = vmatpush1.xpose.msra.mxu0 0.0
    %7164 = vmatprep.subr.mxu0 0.0
    %7165 = vmatpush1.xpose.msra.mxu0 0.0
    %7166 = vmatprep.subr.mxu0 0.0
    %7167 = vmatpush1.xpose.msra.mxu0 0.0
    %7168 = vmatprep.subr.mxu0 0.0
    %7169 = vmatpush1.xpose.msra.mxu0 0.0
    %7170 = vmatprep.subr.mxu0 0.0
    %7171 = vmatpush1.xpose.msra.mxu0 0.0
    %7172 = vmatprep.subr.mxu0 0.0
    %7173 = vmatpush1.xpose.msra.mxu0 0.0
    %7174 = vmatprep.subr.mxu0 0.0
    %7175 = vmatpush1.xpose.msra.mxu0 0.0
    %7176 = vmatprep.subr.mxu0 0.0
    %7177 = vmatpush1.xpose.msra.mxu0 0.0
    %7178 = vmatprep.subr.mxu0 0.0
    %7179 = vmatpush1.xpose.msra.mxu0 0.0
    %7180 = vmatprep.subr.mxu0 0.0
    %7181 = vmatpush1.xpose.msra.mxu0 0.0
    %7182 = vmatprep.subr.mxu0 0.0
    %7183 = vmatpush1.xpose.msra.mxu0 0.0
    %7184 = vmatprep.subr.mxu0 0.0
    %7185 = vmatpush1.xpose.msra.mxu0 0.0
    %7186 = vmatprep.subr.mxu0 0.0
    %7187 = vmatpush1.xpose.msra.mxu0 0.0
    %7188 = vmatprep.subr.mxu0 0.0
    %7189 = vmatpush1.xpose.msra.mxu0 0.0
    %7190 = vmatprep.subr.mxu0 0.0
    %7191 = vmatpush1.xpose.msra.mxu0 0.0
    %7192 = vmatprep.subr.mxu0 0.0
    %7193 = vmatpush1.xpose.msra.mxu0 0.0
    %7194 = vmatprep.subr.mxu0 0.0
    %7195 = vmatpush1.xpose.msra.mxu0 0.0
    %7196 = vmatprep.subr.mxu0 0.0
    %7197 = vmatpush1.xpose.msra.mxu0 0.0
    %7198 = vmatprep.subr.mxu0 0.0
    %7199 = vmatpush1.xpose.msra.mxu0 0.0
    %7200 = vmatprep.subr.mxu0 0.0
    %7201 = vmatpush1.xpose.msra.mxu0 0.0
    %7202 = vmatprep.subr.mxu0 0.0
    %7203 = vmatpush1.xpose.msra.mxu0 0.0
    %7204 = vmatprep.subr.mxu0 0.0
    %7205 = vmatpush1.xpose.msra.mxu0 0.0
    %7206 = vmatprep.subr.mxu0 0.0
    %7207 = vmatpush1.xpose.msra.mxu0 0.0
    %7208 = vmatprep.subr.mxu0 0.0
    %7209 = vmatpush1.xpose.msra.mxu0 0.0
    %7210 = vmatprep.subr.mxu0 0.0
    %7211 = vmatpush1.xpose.msra.mxu0 0.0
    %7212 = vmatprep.mubr.f32.mxu0 0.0
    %7213 = vmatmul.mubr.f32.gmra.mrb[0].mxu0 %v7144
    %v7214 = vpop.f32.mrb[0].mxu0
    %v7215 = vadd.f32 0.0, %v7214
    %v7216 = vpop.f32.mrb[0].mxu0
    %7217 = vdwg.mxu0
    %7219 = vrot.lane.b32.xlu0 %v6288, 120
    %v7220 = vpop.permute.xlu0 %7219
    %v7221 = vsel %vm280, %v6288, 0
    %v7223 = vsel %vm280, %v7220, 0
    %7225 = vmatprep.subr.mxu0 0.0
    %7226 = vmatpush1.xpose.msra.mxu0 %v7223
    %7227 = vmatprep.subr.mxu0 0.0
    %7228 = vmatpush1.xpose.msra.mxu0 0.0
    %7229 = vmatprep.subr.mxu0 0.0
    %7230 = vmatpush1.xpose.msra.mxu0 0.0
    %7231 = vmatprep.subr.mxu0 0.0
    %7232 = vmatpush1.xpose.msra.mxu0 0.0
    %7233 = vmatprep.subr.mxu0 0.0
    %7234 = vmatpush1.xpose.msra.mxu0 0.0
    %7235 = vmatprep.subr.mxu0 0.0
    %7236 = vmatpush1.xpose.msra.mxu0 0.0
    %7237 = vmatprep.subr.mxu0 0.0
    %7238 = vmatpush1.xpose.msra.mxu0 0.0
    %7239 = vmatprep.subr.mxu0 0.0
    %7240 = vmatpush1.xpose.msra.mxu0 0.0
    %7241 = vmatprep.subr.mxu0 0.0
    %7242 = vmatpush1.xpose.msra.mxu0 0.0
    %7243 = vmatprep.subr.mxu0 0.0
    %7244 = vmatpush1.xpose.msra.mxu0 0.0
    %7245 = vmatprep.subr.mxu0 0.0
    %7246 = vmatpush1.xpose.msra.mxu0 0.0
    %7247 = vmatprep.subr.mxu0 0.0
    %7248 = vmatpush1.xpose.msra.mxu0 0.0
    %7249 = vmatprep.subr.mxu0 0.0
    %7250 = vmatpush1.xpose.msra.mxu0 0.0
    %7251 = vmatprep.subr.mxu0 0.0
    %7252 = vmatpush1.xpose.msra.mxu0 0.0
    %7253 = vmatprep.subr.mxu0 0.0
    %7254 = vmatpush1.xpose.msra.mxu0 0.0
    %7255 = vmatprep.subr.mxu0 0.0
    %7256 = vmatpush1.xpose.msra.mxu0 0.0
    %7257 = vmatprep.subr.mxu0 0.0
    %7258 = vmatpush1.xpose.msra.mxu0 0.0
    %7259 = vmatprep.subr.mxu0 0.0
    %7260 = vmatpush1.xpose.msra.mxu0 0.0
    %7261 = vmatprep.subr.mxu0 0.0
    %7262 = vmatpush1.xpose.msra.mxu0 0.0
    %7263 = vmatprep.subr.mxu0 0.0
    %7264 = vmatpush1.xpose.msra.mxu0 0.0
    %7265 = vmatprep.subr.mxu0 0.0
    %7266 = vmatpush1.xpose.msra.mxu0 0.0
    %7267 = vmatprep.subr.mxu0 0.0
    %7268 = vmatpush1.xpose.msra.mxu0 0.0
    %7269 = vmatprep.subr.mxu0 0.0
    %7270 = vmatpush1.xpose.msra.mxu0 0.0
    %7271 = vmatprep.subr.mxu0 0.0
    %7272 = vmatpush1.xpose.msra.mxu0 0.0
    %7273 = vmatprep.subr.mxu0 0.0
    %7274 = vmatpush1.xpose.msra.mxu0 0.0
    %7275 = vmatprep.subr.mxu0 0.0
    %7276 = vmatpush1.xpose.msra.mxu0 0.0
    %7277 = vmatprep.subr.mxu0 0.0
    %7278 = vmatpush1.xpose.msra.mxu0 0.0
    %7279 = vmatprep.subr.mxu0 0.0
    %7280 = vmatpush1.xpose.msra.mxu0 0.0
    %7281 = vmatprep.subr.mxu0 0.0
    %7282 = vmatpush1.xpose.msra.mxu0 0.0
    %7283 = vmatprep.subr.mxu0 0.0
    %7284 = vmatpush1.xpose.msra.mxu0 0.0
    %7285 = vmatprep.subr.mxu0 0.0
    %7286 = vmatpush1.xpose.msra.mxu0 0.0
    %7287 = vmatprep.subr.mxu0 0.0
    %7288 = vmatpush1.xpose.msra.mxu0 0.0
    %7289 = vmatprep.mubr.f32.mxu0 0.0
    %7290 = vmatmul.mubr.f32.gmra.mrb[0].mxu0 %v7221
    %v7291 = vpop.f32.mrb[0].mxu0
    %v7292 = vadd.f32 0.0, %v7291
    %v7293 = vpop.f32.mrb[0].mxu0
    %7294 = vdwg.mxu0
    %7296 = vrot.lane.b32.xlu0 %v6289, 120
    %v7297 = vpop.permute.xlu0 %7296
    %v7298 = vsel %vm280, %v6289, 0
    %v7300 = vsel %vm280, %v7297, 0
    %7302 = vmatprep.subr.mxu0 0.0
    %7303 = vmatpush1.xpose.msra.mxu0 %v7300
    %7304 = vmatprep.subr.mxu0 0.0
    %7305 = vmatpush1.xpose.msra.mxu0 0.0
    %7306 = vmatprep.subr.mxu0 0.0
    %7307 = vmatpush1.xpose.msra.mxu0 0.0
    %7308 = vmatprep.subr.mxu0 0.0
    %7309 = vmatpush1.xpose.msra.mxu0 0.0
    %7310 = vmatprep.subr.mxu0 0.0
    %7311 = vmatpush1.xpose.msra.mxu0 0.0
    %7312 = vmatprep.subr.mxu0 0.0
    %7313 = vmatpush1.xpose.msra.mxu0 0.0
    %7314 = vmatprep.subr.mxu0 0.0
    %7315 = vmatpush1.xpose.msra.mxu0 0.0
    %7316 = vmatprep.subr.mxu0 0.0
    %7317 = vmatpush1.xpose.msra.mxu0 0.0
    %7318 = vmatprep.subr.mxu0 0.0
    %7319 = vmatpush1.xpose.msra.mxu0 0.0
    %7320 = vmatprep.subr.mxu0 0.0
    %7321 = vmatpush1.xpose.msra.mxu0 0.0
    %7322 = vmatprep.subr.mxu0 0.0
    %7323 = vmatpush1.xpose.msra.mxu0 0.0
    %7324 = vmatprep.subr.mxu0 0.0
    %7325 = vmatpush1.xpose.msra.mxu0 0.0
    %7326 = vmatprep.subr.mxu0 0.0
    %7327 = vmatpush1.xpose.msra.mxu0 0.0
    %7328 = vmatprep.subr.mxu0 0.0
    %7329 = vmatpush1.xpose.msra.mxu0 0.0
    %7330 = vmatprep.subr.mxu0 0.0
    %7331 = vmatpush1.xpose.msra.mxu0 0.0
    %7332 = vmatprep.subr.mxu0 0.0
    %7333 = vmatpush1.xpose.msra.mxu0 0.0
    %7334 = vmatprep.subr.mxu0 0.0
    %7335 = vmatpush1.xpose.msra.mxu0 0.0
    %7336 = vmatprep.subr.mxu0 0.0
    %7337 = vmatpush1.xpose.msra.mxu0 0.0
    %7338 = vmatprep.subr.mxu0 0.0
    %7339 = vmatpush1.xpose.msra.mxu0 0.0
    %7340 = vmatprep.subr.mxu0 0.0
    %7341 = vmatpush1.xpose.msra.mxu0 0.0
    %7342 = vmatprep.subr.mxu0 0.0
    %7343 = vmatpush1.xpose.msra.mxu0 0.0
    %7344 = vmatprep.subr.mxu0 0.0
    %7345 = vmatpush1.xpose.msra.mxu0 0.0
    %7346 = vmatprep.subr.mxu0 0.0
    %7347 = vmatpush1.xpose.msra.mxu0 0.0
    %7348 = vmatprep.subr.mxu0 0.0
    %7349 = vmatpush1.xpose.msra.mxu0 0.0
    %7350 = vmatprep.subr.mxu0 0.0
    %7351 = vmatpush1.xpose.msra.mxu0 0.0
    %7352 = vmatprep.subr.mxu0 0.0
    %7353 = vmatpush1.xpose.msra.mxu0 0.0
    %7354 = vmatprep.subr.mxu0 0.0
    %7355 = vmatpush1.xpose.msra.mxu0 0.0
    %7356 = vmatprep.subr.mxu0 0.0
    %7357 = vmatpush1.xpose.msra.mxu0 0.0
    %7358 = vmatprep.subr.mxu0 0.0
    %7359 = vmatpush1.xpose.msra.mxu0 0.0
    %7360 = vmatprep.subr.mxu0 0.0
    %7361 = vmatpush1.xpose.msra.mxu0 0.0
    %7362 = vmatprep.subr.mxu0 0.0
    %7363 = vmatpush1.xpose.msra.mxu0 0.0
    %7364 = vmatprep.subr.mxu0 0.0
    %7365 = vmatpush1.xpose.msra.mxu0 0.0
    %7366 = vmatprep.mubr.f32.mxu0 0.0
    %7367 = vmatmul.mubr.f32.gmra.mrb[0].mxu0 %v7298
    %v7368 = vpop.f32.mrb[0].mxu0
    %v7369 = vadd.f32 0.0, %v7368
    %v7370 = vpop.f32.mrb[0].mxu0
    %7371 = vdwg.mxu0
    %7373 = vrot.lane.b32.xlu0 %v6290, 120
    %v7374 = vpop.permute.xlu0 %7373
    %v7375 = vsel %vm280, %v6290, 0
    %v7377 = vsel %vm280, %v7374, 0
    %7379 = vmatprep.subr.mxu0 0.0
    %7380 = vmatpush1.xpose.msra.mxu0 %v7377
    %7381 = vmatprep.subr.mxu0 0.0
    %7382 = vmatpush1.xpose.msra.mxu0 0.0
    %7383 = vmatprep.subr.mxu0 0.0
    %7384 = vmatpush1.xpose.msra.mxu0 0.0
    %7385 = vmatprep.subr.mxu0 0.0
    %7386 = vmatpush1.xpose.msra.mxu0 0.0
    %7387 = vmatprep.subr.mxu0 0.0
    %7388 = vmatpush1.xpose.msra.mxu0 0.0
    %7389 = vmatprep.subr.mxu0 0.0
    %7390 = vmatpush1.xpose.msra.mxu0 0.0
    %7391 = vmatprep.subr.mxu0 0.0
    %7392 = vmatpush1.xpose.msra.mxu0 0.0
    %7393 = vmatprep.subr.mxu0 0.0
    %7394 = vmatpush1.xpose.msra.mxu0 0.0
    %7395 = vmatprep.subr.mxu0 0.0
    %7396 = vmatpush1.xpose.msra.mxu0 0.0
    %7397 = vmatprep.subr.mxu0 0.0
    %7398 = vmatpush1.xpose.msra.mxu0 0.0
    %7399 = vmatprep.subr.mxu0 0.0
    %7400 = vmatpush1.xpose.msra.mxu0 0.0
    %7401 = vmatprep.subr.mxu0 0.0
    %7402 = vmatpush1.xpose.msra.mxu0 0.0
    %7403 = vmatprep.subr.mxu0 0.0
    %7404 = vmatpush1.xpose.msra.mxu0 0.0
    %7405 = vmatprep.subr.mxu0 0.0
    %7406 = vmatpush1.xpose.msra.mxu0 0.0
    %7407 = vmatprep.subr.mxu0 0.0
    %7408 = vmatpush1.xpose.msra.mxu0 0.0
    %7409 = vmatprep.subr.mxu0 0.0
    %7410 = vmatpush1.xpose.msra.mxu0 0.0
    %7411 = vmatprep.subr.mxu0 0.0
    %7412 = vmatpush1.xpose.msra.mxu0 0.0
    %7413 = vmatprep.subr.mxu0 0.0
    %7414 = vmatpush1.xpose.msra.mxu0 0.0
    %7415 = vmatprep.subr.mxu0 0.0
    %7416 = vmatpush1.xpose.msra.mxu0 0.0
    %7417 = vmatprep.subr.mxu0 0.0
    %7418 = vmatpush1.xpose.msra.mxu0 0.0
    %7419 = vmatprep.subr.mxu0 0.0
    %7420 = vmatpush1.xpose.msra.mxu0 0.0
    %7421 = vmatprep.subr.mxu0 0.0
    %7422 = vmatpush1.xpose.msra.mxu0 0.0
    %7423 = vmatprep.subr.mxu0 0.0
    %7424 = vmatpush1.xpose.msra.mxu0 0.0
    %7425 = vmatprep.subr.mxu0 0.0
    %7426 = vmatpush1.xpose.msra.mxu0 0.0
    %7427 = vmatprep.subr.mxu0 0.0
    %7428 = vmatpush1.xpose.msra.mxu0 0.0
    %7429 = vmatprep.subr.mxu0 0.0
    %7430 = vmatpush1.xpose.msra.mxu0 0.0
    %7431 = vmatprep.subr.mxu0 0.0
    %7432 = vmatpush1.xpose.msra.mxu0 0.0
    %7433 = vmatprep.subr.mxu0 0.0
    %7434 = vmatpush1.xpose.msra.mxu0 0.0
    %7435 = vmatprep.subr.mxu0 0.0
    %7436 = vmatpush1.xpose.msra.mxu0 0.0
    %7437 = vmatprep.subr.mxu0 0.0
    %7438 = vmatpush1.xpose.msra.mxu0 0.0
    %7439 = vmatprep.subr.mxu0 0.0
    %7440 = vmatpush1.xpose.msra.mxu0 0.0
    %7441 = vmatprep.subr.mxu0 0.0
    %7442 = vmatpush1.xpose.msra.mxu0 0.0
    %7443 = vmatprep.mubr.f32.mxu0 0.0
    %7444 = vmatmul.mubr.f32.gmra.mrb[0].mxu0 %v7375
    %v7445 = vpop.f32.mrb[0].mxu0
    %v7446 = vadd.f32 0.0, %v7445
    %v7447 = vpop.f32.mrb[0].mxu0
    %7448 = vdwg.mxu0
    %7450 = vrot.lane.b32.xlu0 %v6291, 120
    %v7451 = vpop.permute.xlu0 %7450
    %v7452 = vsel %vm280, %v6291, 0
    %v7454 = vsel %vm280, %v7451, 0
    %7456 = vmatprep.subr.mxu0 0.0
    %7457 = vmatpush1.xpose.msra.mxu0 %v7454
    %7458 = vmatprep.subr.mxu0 0.0
    %7459 = vmatpush1.xpose.msra.mxu0 0.0
    %7460 = vmatprep.subr.mxu0 0.0
    %7461 = vmatpush1.xpose.msra.mxu0 0.0
    %7462 = vmatprep.subr.mxu0 0.0
    %7463 = vmatpush1.xpose.msra.mxu0 0.0
    %7464 = vmatprep.subr.mxu0 0.0
    %7465 = vmatpush1.xpose.msra.mxu0 0.0
    %7466 = vmatprep.subr.mxu0 0.0
    %7467 = vmatpush1.xpose.msra.mxu0 0.0
    %7468 = vmatprep.subr.mxu0 0.0
    %7469 = vmatpush1.xpose.msra.mxu0 0.0
    %7470 = vmatprep.subr.mxu0 0.0
    %7471 = vmatpush1.xpose.msra.mxu0 0.0
    %7472 = vmatprep.subr.mxu0 0.0
    %7473 = vmatpush1.xpose.msra.mxu0 0.0
    %7474 = vmatprep.subr.mxu0 0.0
    %7475 = vmatpush1.xpose.msra.mxu0 0.0
    %7476 = vmatprep.subr.mxu0 0.0
    %7477 = vmatpush1.xpose.msra.mxu0 0.0
    %7478 = vmatprep.subr.mxu0 0.0
    %7479 = vmatpush1.xpose.msra.mxu0 0.0
    %7480 = vmatprep.subr.mxu0 0.0
    %7481 = vmatpush1.xpose.msra.mxu0 0.0
    %7482 = vmatprep.subr.mxu0 0.0
    %7483 = vmatpush1.xpose.msra.mxu0 0.0
    %7484 = vmatprep.subr.mxu0 0.0
    %7485 = vmatpush1.xpose.msra.mxu0 0.0
    %7486 = vmatprep.subr.mxu0 0.0
    %7487 = vmatpush1.xpose.msra.mxu0 0.0
    %7488 = vmatprep.subr.mxu0 0.0
    %7489 = vmatpush1.xpose.msra.mxu0 0.0
    %7490 = vmatprep.subr.mxu0 0.0
    %7491 = vmatpush1.xpose.msra.mxu0 0.0
    %7492 = vmatprep.subr.mxu0 0.0
    %7493 = vmatpush1.xpose.msra.mxu0 0.0
    %7494 = vmatprep.subr.mxu0 0.0
    %7495 = vmatpush1.xpose.msra.mxu0 0.0
    %7496 = vmatprep.subr.mxu0 0.0
    %7497 = vmatpush1.xpose.msra.mxu0 0.0
    %7498 = vmatprep.subr.mxu0 0.0
    %7499 = vmatpush1.xpose.msra.mxu0 0.0
    %7500 = vmatprep.subr.mxu0 0.0
    %7501 = vmatpush1.xpose.msra.mxu0 0.0
    %7502 = vmatprep.subr.mxu0 0.0
    %7503 = vmatpush1.xpose.msra.mxu0 0.0
    %7504 = vmatprep.subr.mxu0 0.0
    %7505 = vmatpush1.xpose.msra.mxu0 0.0
    %7506 = vmatprep.subr.mxu0 0.0
    %7507 = vmatpush1.xpose.msra.mxu0 0.0
    %7508 = vmatprep.subr.mxu0 0.0
    %7509 = vmatpush1.xpose.msra.mxu0 0.0
    %7510 = vmatprep.subr.mxu0 0.0
    %7511 = vmatpush1.xpose.msra.mxu0 0.0
    %7512 = vmatprep.subr.mxu0 0.0
    %7513 = vmatpush1.xpose.msra.mxu0 0.0
    %7514 = vmatprep.subr.mxu0 0.0
    %7515 = vmatpush1.xpose.msra.mxu0 0.0
    %7516 = vmatprep.subr.mxu0 0.0
    %7517 = vmatpush1.xpose.msra.mxu0 0.0
    %7518 = vmatprep.subr.mxu0 0.0
    %7519 = vmatpush1.xpose.msra.mxu0 0.0
    %7520 = vmatprep.mubr.f32.mxu0 0.0
    %7521 = vmatmul.mubr.f32.gmra.mrb[0].mxu0 %v7452
    %v7522 = vpop.f32.mrb[0].mxu0
    %v7523 = vadd.f32 0.0, %v7522
    %v7524 = vpop.f32.mrb[0].mxu0
    %7525 = vdwg.mxu0
    %v7526 = vmul.f32 %v6368, 0.5
    %v7527 = vmul.f32 %v6445, 0.5
    %v7528 = vmul.f32 %v6522, 0.5
    %v7529 = vmul.f32 %v6599, 0.5
    %v7530 = vmul.f32 %v6676, 0.5
    %v7531 = vmul.f32 %v6753, 0.5
    %v7532 = vmul.f32 %v6830, 0.5
    %v7533 = vmul.f32 %v6907, 0.5
    %v7534 = vmul.f32 %v6984, 0.5
    %v7535 = vmul.f32 %v7061, 0.5
    %v7536 = vmul.f32 %v7138, 0.5
    %v7537 = vmul.f32 %v7215, 0.5
    %v7538 = vmul.f32 %v7292, 0.5
    %v7539 = vmul.f32 %v7369, 0.5
    %v7540 = vmul.f32 %v7446, 0.5
    %v7541 = vmul.f32 %v7523, 0.5
    %v7542 = vsel %vm1556, %v7526, -inf
    %7543 = vmax.xlane.f32.xlu0 %v7542
    %v7544 = vpop.xlane.xlu0 %7543
    %v7545 = vsel %vm1556, %v7527, -inf
    %7546 = vmax.xlane.f32.xlu0 %v7545
    %v7547 = vpop.xlane.xlu0 %7546
    %v7548 = vsel %vm1556, %v7528, -inf
    %7549 = vmax.xlane.f32.xlu0 %v7548
    %v7550 = vpop.xlane.xlu0 %7549
    %v7551 = vsel %vm1556, %v7529, -inf
    %7552 = vmax.xlane.f32.xlu0 %v7551
    %v7553 = vpop.xlane.xlu0 %7552
    %v7554 = vsel %vm1556, %v7530, -inf
    %7555 = vmax.xlane.f32.xlu0 %v7554
    %v7556 = vpop.xlane.xlu0 %7555
    %v7557 = vsel %vm1556, %v7531, -inf
    %7558 = vmax.xlane.f32.xlu0 %v7557
    %v7559 = vpop.xlane.xlu0 %7558
    %v7560 = vsel %vm1556, %v7532, -inf
    %7561 = vmax.xlane.f32.xlu0 %v7560
    %v7562 = vpop.xlane.xlu0 %7561
    %v7563 = vsel %vm1556, %v7533, -inf
    %7564 = vmax.xlane.f32.xlu0 %v7563
    %v7565 = vpop.xlane.xlu0 %7564
    %v7566 = vsel %vm1556, %v7534, -inf
    %7567 = vmax.xlane.f32.xlu0 %v7566
    %v7568 = vpop.xlane.xlu0 %7567
    %v7569 = vsel %vm1556, %v7535, -inf
    %7570 = vmax.xlane.f32.xlu0 %v7569
    %v7571 = vpop.xlane.xlu0 %7570
    %v7572 = vsel %vm1556, %v7536, -inf
    %7573 = vmax.xlane.f32.xlu0 %v7572
    %v7574 = vpop.xlane.xlu0 %7573
    %v7575 = vsel %vm1556, %v7537, -inf
    %7576 = vmax.xlane.f32.xlu0 %v7575
    %v7577 = vpop.xlane.xlu0 %7576
    %v7578 = vsel %vm1556, %v7538, -inf
    %7579 = vmax.xlane.f32.xlu0 %v7578
    %v7580 = vpop.xlane.xlu0 %7579
    %v7581 = vsel %vm1556, %v7539, -inf
    %7582 = vmax.xlane.f32.xlu0 %v7581
    %v7583 = vpop.xlane.xlu0 %7582
    %v7584 = vsel %vm1556, %v7540, -inf
    %7585 = vmax.xlane.f32.xlu0 %v7584
    %v7586 = vpop.xlane.xlu0 %7585
    %v7587 = vsel %vm1556, %v7541, -inf
    %7588 = vmax.xlane.f32.xlu0 %v7587
    %v7589 = vpop.xlane.xlu0 %7588
    %v7590 = vsub.f32 %v7526, %v7544
    %v7591 = vsub.f32 %v7527, %v7547
    %v7592 = vsub.f32 %v7528, %v7550
    %v7593 = vsub.f32 %v7529, %v7553
    %v7594 = vsub.f32 %v7530, %v7556
    %v7595 = vsub.f32 %v7531, %v7559
    %v7596 = vsub.f32 %v7532, %v7562
    %v7597 = vsub.f32 %v7533, %v7565
    %v7598 = vsub.f32 %v7534, %v7568
    %v7599 = vsub.f32 %v7535, %v7571
    %v7600 = vsub.f32 %v7536, %v7574
    %v7601 = vsub.f32 %v7537, %v7577
    %v7602 = vsub.f32 %v7538, %v7580
    %v7603 = vsub.f32 %v7539, %v7583
    %v7604 = vsub.f32 %v7540, %v7586
    %v7605 = vsub.f32 %v7541, %v7589
    %v7606 = vmul.f32 %v7590, 1.442695
    %v7607 = vpow.pop %v7606
    %v7608 = vmul.f32 %v7591, 1.442695
    %v7609 = vpow.pop %v7608
    %v7610 = vmul.f32 %v7592, 1.442695
    %v7611 = vpow.pop %v7610
    %v7612 = vmul.f32 %v7593, 1.442695
    %v7613 = vpow.pop %v7612
    %v7614 = vmul.f32 %v7594, 1.442695
    %v7615 = vpow.pop %v7614
    %v7616 = vmul.f32 %v7595, 1.442695
    %v7617 = vpow.pop %v7616
    %v7618 = vmul.f32 %v7596, 1.442695
    %v7619 = vpow.pop %v7618
    %v7620 = vmul.f32 %v7597, 1.442695
    %v7621 = vpow.pop %v7620
    %v7622 = vmul.f32 %v7598, 1.442695
    %v7623 = vpow.pop %v7622
    %v7624 = vmul.f32 %v7599, 1.442695
    %v7625 = vpow.pop %v7624
    %v7626 = vmul.f32 %v7600, 1.442695
    %v7627 = vpow.pop %v7626
    %v7628 = vmul.f32 %v7601, 1.442695
    %v7629 = vpow.pop %v7628
    %v7630 = vmul.f32 %v7602, 1.442695
    %v7631 = vpow.pop %v7630
    %v7632 = vmul.f32 %v7603, 1.442695
    %v7633 = vpow.pop %v7632
    %v7634 = vmul.f32 %v7604, 1.442695
    %v7635 = vpow.pop %v7634
    %v7636 = vmul.f32 %v7605, 1.442695
    %v7637 = vpow.pop %v7636
    %v7638 = vsel %vm1556, %v7607, 0.0
    %7639 = vadd.xlane.f32.xlu0 %v7638
    %v7640 = vpop.xlane.xlu0 %7639
    %v7641 = vsel %vm1556, %v7609, 0.0
    %7642 = vadd.xlane.f32.xlu0 %v7641
    %v7643 = vpop.xlane.xlu0 %7642
    %v7644 = vsel %vm1556, %v7611, 0.0
    %7645 = vadd.xlane.f32.xlu0 %v7644
    %v7646 = vpop.xlane.xlu0 %7645
    %v7647 = vsel %vm1556, %v7613, 0.0
    %7648 = vadd.xlane.f32.xlu0 %v7647
    %v7649 = vpop.xlane.xlu0 %7648
    %v7650 = vsel %vm1556, %v7615, 0.0
    %7651 = vadd.xlane.f32.xlu0 %v7650
    %v7652 = vpop.xlane.xlu0 %7651
    %v7653 = vsel %vm1556, %v7617, 0.0
    %7654 = vadd.xlane.f32.xlu0 %v7653
    %v7655 = vpop.xlane.xlu0 %7654
    %v7656 = vsel %vm1556, %v7619, 0.0
    %7657 = vadd.xlane.f32.xlu0 %v7656
    %v7658 = vpop.xlane.xlu0 %7657
    %v7659 = vsel %vm1556, %v7621, 0.0
    %7660 = vadd.xlane.f32.xlu0 %v7659
    %v7661 = vpop.xlane.xlu0 %7660
    %v7662 = vsel %vm1556, %v7623, 0.0
    %7663 = vadd.xlane.f32.xlu0 %v7662
    %v7664 = vpop.xlane.xlu0 %7663
    %v7665 = vsel %vm1556, %v7625, 0.0
    %7666 = vadd.xlane.f32.xlu0 %v7665
    %v7667 = vpop.xlane.xlu0 %7666
    %v7668 = vsel %vm1556, %v7627, 0.0
    %7669 = vadd.xlane.f32.xlu0 %v7668
    %v7670 = vpop.xlane.xlu0 %7669
    %v7671 = vsel %vm1556, %v7629, 0.0
    %7672 = vadd.xlane.f32.xlu0 %v7671
    %v7673 = vpop.xlane.xlu0 %7672
    %v7674 = vsel %vm1556, %v7631, 0.0
    %7675 = vadd.xlane.f32.xlu0 %v7674
    %v7676 = vpop.xlane.xlu0 %7675
    %v7677 = vsel %vm1556, %v7633, 0.0
    %7678 = vadd.xlane.f32.xlu0 %v7677
    %v7679 = vpop.xlane.xlu0 %7678
    %v7680 = vsel %vm1556, %v7635, 0.0
    %7681 = vadd.xlane.f32.xlu0 %v7680
    %v7682 = vpop.xlane.xlu0 %7681
    %v7683 = vsel %vm1556, %v7637, 0.0
    %7684 = vadd.xlane.f32.xlu0 %v7683
    %v7685 = vpop.xlane.xlu0 %7684
    %v7686 = vrcp.pop %v7640
    %v7687 = vrcp.pop %v7643
    %v7688 = vrcp.pop %v7646
    %v7689 = vrcp.pop %v7649
    %v7690 = vrcp.pop %v7652
    %v7691 = vrcp.pop %v7655
    %v7692 = vrcp.pop %v7658
    %v7693 = vrcp.pop %v7661
    %v7694 = vrcp.pop %v7664
    %v7695 = vrcp.pop %v7667
    %v7696 = vrcp.pop %v7670
    %v7697 = vrcp.pop %v7673
    %v7698 = vrcp.pop %v7676
    %v7699 = vrcp.pop %v7679
    %v7700 = vrcp.pop %v7682
    %v7701 = vrcp.pop %v7685
    %v7702 = vmul.f32 %v7607, %v7686
    %v7703 = vmul.f32 %v7609, %v7687
    %v7704 = vmul.f32 %v7611, %v7688
    %v7705 = vmul.f32 %v7613, %v7689
    %v7706 = vmul.f32 %v7615, %v7690
    %v7707 = vmul.f32 %v7617, %v7691
    %v7708 = vmul.f32 %v7619, %v7692
    %v7709 = vmul.f32 %v7621, %v7693
    %v7710 = vmul.f32 %v7623, %v7694
    %v7711 = vmul.f32 %v7625, %v7695
    %v7712 = vmul.f32 %v7627, %v7696
    %v7713 = vmul.f32 %v7629, %v7697
    %v7714 = vmul.f32 %v7631, %v7698
    %v7715 = vmul.f32 %v7633, %v7699
    %v7716 = vmul.f32 %v7635, %v7700
    %v7717 = vmul.f32 %v7637, %v7701
    %7718 = vrot.lane.b32.xlu0 %v6148, 112
    %v7719 = vpop.permute.xlu0 %7718
    %v7722 = vsel %vm1556, %v7702, 0
    %7724 = vmatprep.subr.mxu0 0.0
    %7725 = vmatpush1.msra.mxu0 %v7719
    %7726 = vmatprep.subr.mxu0 0.0
    %7727 = vmatpush1.msra.mxu0 0.0
    %7728 = vmatprep.subr.mxu0 0.0
    %7729 = vmatpush1.msra.mxu0 0.0
    %7730 = vmatprep.subr.mxu0 0.0
    %7731 = vmatpush1.msra.mxu0 0.0
    %7732 = vmatprep.subr.mxu0 0.0
    %7733 = vmatpush1.msra.mxu0 0.0
    %7734 = vmatprep.subr.mxu0 0.0
    %7735 = vmatpush1.msra.mxu0 0.0
    %7736 = vmatprep.subr.mxu0 0.0
    %7737 = vmatpush1.msra.mxu0 0.0
    %7738 = vmatprep.subr.mxu0 0.0
    %7739 = vmatpush1.msra.mxu0 0.0
    %7740 = vmatprep.subr.mxu0 0.0
    %7741 = vmatpush1.msra.mxu0 0.0
    %7742 = vmatprep.subr.mxu0 0.0
    %7743 = vmatpush1.msra.mxu0 0.0
    %7744 = vmatprep.subr.mxu0 0.0
    %7745 = vmatpush1.msra.mxu0 0.0
    %7746 = vmatprep.subr.mxu0 0.0
    %7747 = vmatpush1.msra.mxu0 0.0
    %7748 = vmatprep.subr.mxu0 0.0
    %7749 = vmatpush1.msra.mxu0 0.0
    %7750 = vmatprep.subr.mxu0 0.0
    %7751 = vmatpush1.msra.mxu0 0.0
    %7752 = vmatprep.subr.mxu0 0.0
    %7753 = vmatpush1.msra.mxu0 0.0
    %7754 = vmatprep.subr.mxu0 0.0
    %7755 = vmatpush1.msra.mxu0 0.0
    %7756 = vmatprep.subr.mxu0 0.0
    %7757 = vmatpush1.msra.mxu0 0.0
    %7758 = vmatprep.subr.mxu0 0.0
    %7759 = vmatpush1.msra.mxu0 0.0
    %7760 = vmatprep.subr.mxu0 0.0
    %7761 = vmatpush1.msra.mxu0 0.0
    %7762 = vmatprep.subr.mxu0 0.0
    %7763 = vmatpush1.msra.mxu0 0.0
    %7764 = vmatprep.subr.mxu0 0.0
    %7765 = vmatpush1.msra.mxu0 0.0
    %7766 = vmatprep.subr.mxu0 0.0
    %7767 = vmatpush1.msra.mxu0 0.0
    %7768 = vmatprep.subr.mxu0 0.0
    %7769 = vmatpush1.msra.mxu0 0.0
    %7770 = vmatprep.subr.mxu0 0.0
    %7771 = vmatpush1.msra.mxu0 0.0
    %7772 = vmatprep.subr.mxu0 0.0
    %7773 = vmatpush1.msra.mxu0 0.0
    %7774 = vmatprep.subr.mxu0 0.0
    %7775 = vmatpush1.msra.mxu0 0.0
    %7776 = vmatprep.subr.mxu0 0.0
    %7777 = vmatpush1.msra.mxu0 0.0
    %7778 = vmatprep.subr.mxu0 0.0
    %7779 = vmatpush1.msra.mxu0 0.0
    %7780 = vmatprep.subr.mxu0 0.0
    %7781 = vmatpush1.msra.mxu0 0.0
    %7782 = vmatprep.subr.mxu0 0.0
    %7783 = vmatpush1.msra.mxu0 0.0
    %7784 = vmatprep.subr.mxu0 0.0
    %7785 = vmatpush1.msra.mxu0 0.0
    %7786 = vmatprep.subr.mxu0 0.0
    %7787 = vmatpush1.msra.mxu0 0.0
    %7788 = vmatprep.mubr.f32.mxu0 0.0
    %7789 = vmatmul.mubr.f32.gmra.mrb[0].mxu0 %v7722
    %v7790 = vpop.f32.mrb[0].mxu0
    %v7791 = vadd.f32 0.0, %v7790
    %v7792 = vpop.f32.mrb[0].mxu0
    %7793 = vdwg.mxu0
    %7794 = vrot.lane.b32.xlu0 %v6149, 112
    %v7795 = vpop.permute.xlu0 %7794
    %v7798 = vsel %vm1556, %v7703, 0
    %7800 = vmatprep.subr.mxu0 0.0
    %7801 = vmatpush1.msra.mxu0 %v7795
    %7802 = vmatprep.subr.mxu0 0.0
    %7803 = vmatpush1.msra.mxu0 0.0
    %7804 = vmatprep.subr.mxu0 0.0
    %7805 = vmatpush1.msra.mxu0 0.0
    %7806 = vmatprep.subr.mxu0 0.0
    %7807 = vmatpush1.msra.mxu0 0.0
    %7808 = vmatprep.subr.mxu0 0.0
    %7809 = vmatpush1.msra.mxu0 0.0
    %7810 = vmatprep.subr.mxu0 0.0
    %7811 = vmatpush1.msra.mxu0 0.0
    %7812 = vmatprep.subr.mxu0 0.0
    %7813 = vmatpush1.msra.mxu0 0.0
    %7814 = vmatprep.subr.mxu0 0.0
    %7815 = vmatpush1.msra.mxu0 0.0
    %7816 = vmatprep.subr.mxu0 0.0
    %7817 = vmatpush1.msra.mxu0 0.0
    %7818 = vmatprep.subr.mxu0 0.0
    %7819 = vmatpush1.msra.mxu0 0.0
    %7820 = vmatprep.subr.mxu0 0.0
    %7821 = vmatpush1.msra.mxu0 0.0
    %7822 = vmatprep.subr.mxu0 0.0
    %7823 = vmatpush1.msra.mxu0 0.0
    %7824 = vmatprep.subr.mxu0 0.0
    %7825 = vmatpush1.msra.mxu0 0.0
    %7826 = vmatprep.subr.mxu0 0.0
    %7827 = vmatpush1.msra.mxu0 0.0
    %7828 = vmatprep.subr.mxu0 0.0
    %7829 = vmatpush1.msra.mxu0 0.0
    %7830 = vmatprep.subr.mxu0 0.0
    %7831 = vmatpush1.msra.mxu0 0.0
    %7832 = vmatprep.subr.mxu0 0.0
    %7833 = vmatpush1.msra.mxu0 0.0
    %7834 = vmatprep.subr.mxu0 0.0
    %7835 = vmatpush1.msra.mxu0 0.0
    %7836 = vmatprep.subr.mxu0 0.0
    %7837 = vmatpush1.msra.mxu0 0.0
    %7838 = vmatprep.subr.mxu0 0.0
    %7839 = vmatpush1.msra.mxu0 0.0
    %7840 = vmatprep.subr.mxu0 0.0
    %7841 = vmatpush1.msra.mxu0 0.0
    %7842 = vmatprep.subr.mxu0 0.0
    %7843 = vmatpush1.msra.mxu0 0.0
    %7844 = vmatprep.subr.mxu0 0.0
    %7845 = vmatpush1.msra.mxu0 0.0
    %7846 = vmatprep.subr.mxu0 0.0
    %7847 = vmatpush1.msra.mxu0 0.0
    %7848 = vmatprep.subr.mxu0 0.0
    %7849 = vmatpush1.msra.mxu0 0.0
    %7850 = vmatprep.subr.mxu0 0.0
    %7851 = vmatpush1.msra.mxu0 0.0
    %7852 = vmatprep.subr.mxu0 0.0
    %7853 = vmatpush1.msra.mxu0 0.0
    %7854 = vmatprep.subr.mxu0 0.0
    %7855 = vmatpush1.msra.mxu0 0.0
    %7856 = vmatprep.subr.mxu0 0.0
    %7857 = vmatpush1.msra.mxu0 0.0
    %7858 = vmatprep.subr.mxu0 0.0
    %7859 = vmatpush1.msra.mxu0 0.0
    %7860 = vmatprep.subr.mxu0 0.0
    %7861 = vmatpush1.msra.mxu0 0.0
    %7862 = vmatprep.subr.mxu0 0.0
    %7863 = vmatpush1.msra.mxu0 0.0
    %7864 = vmatprep.mubr.f32.mxu0 0.0
    %7865 = vmatmul.mubr.f32.gmra.mrb[0].mxu0 %v7798
    %v7866 = vpop.f32.mrb[0].mxu0
    %v7867 = vadd.f32 0.0, %v7866
    %v7868 = vpop.f32.mrb[0].mxu0
    %7869 = vdwg.mxu0
    %7870 = vrot.lane.b32.xlu0 %v6150, 112
    %v7871 = vpop.permute.xlu0 %7870
    %v7874 = vsel %vm1556, %v7704, 0
    %7876 = vmatprep.subr.mxu0 0.0
    %7877 = vmatpush1.msra.mxu0 %v7871
    %7878 = vmatprep.subr.mxu0 0.0
    %7879 = vmatpush1.msra.mxu0 0.0
    %7880 = vmatprep.subr.mxu0 0.0
    %7881 = vmatpush1.msra.mxu0 0.0
    %7882 = vmatprep.subr.mxu0 0.0
    %7883 = vmatpush1.msra.mxu0 0.0
    %7884 = vmatprep.subr.mxu0 0.0
    %7885 = vmatpush1.msra.mxu0 0.0
    %7886 = vmatprep.subr.mxu0 0.0
    %7887 = vmatpush1.msra.mxu0 0.0
    %7888 = vmatprep.subr.mxu0 0.0
    %7889 = vmatpush1.msra.mxu0 0.0
    %7890 = vmatprep.subr.mxu0 0.0
    %7891 = vmatpush1.msra.mxu0 0.0
    %7892 = vmatprep.subr.mxu0 0.0
    %7893 = vmatpush1.msra.mxu0 0.0
    %7894 = vmatprep.subr.mxu0 0.0
    %7895 = vmatpush1.msra.mxu0 0.0
    %7896 = vmatprep.subr.mxu0 0.0
    %7897 = vmatpush1.msra.mxu0 0.0
    %7898 = vmatprep.subr.mxu0 0.0
    %7899 = vmatpush1.msra.mxu0 0.0
    %7900 = vmatprep.subr.mxu0 0.0
    %7901 = vmatpush1.msra.mxu0 0.0
    %7902 = vmatprep.subr.mxu0 0.0
    %7903 = vmatpush1.msra.mxu0 0.0
    %7904 = vmatprep.subr.mxu0 0.0
    %7905 = vmatpush1.msra.mxu0 0.0
    %7906 = vmatprep.subr.mxu0 0.0
    %7907 = vmatpush1.msra.mxu0 0.0
    %7908 = vmatprep.subr.mxu0 0.0
    %7909 = vmatpush1.msra.mxu0 0.0
    %7910 = vmatprep.subr.mxu0 0.0
    %7911 = vmatpush1.msra.mxu0 0.0
    %7912 = vmatprep.subr.mxu0 0.0
    %7913 = vmatpush1.msra.mxu0 0.0
    %7914 = vmatprep.subr.mxu0 0.0
    %7915 = vmatpush1.msra.mxu0 0.0
    %7916 = vmatprep.subr.mxu0 0.0
    %7917 = vmatpush1.msra.mxu0 0.0
    %7918 = vmatprep.subr.mxu0 0.0
    %7919 = vmatpush1.msra.mxu0 0.0
    %7920 = vmatprep.subr.mxu0 0.0
    %7921 = vmatpush1.msra.mxu0 0.0
    %7922 = vmatprep.subr.mxu0 0.0
    %7923 = vmatpush1.msra.mxu0 0.0
    %7924 = vmatprep.subr.mxu0 0.0
    %7925 = vmatpush1.msra.mxu0 0.0
    %7926 = vmatprep.subr.mxu0 0.0
    %7927 = vmatpush1.msra.mxu0 0.0
    %7928 = vmatprep.subr.mxu0 0.0
    %7929 = vmatpush1.msra.mxu0 0.0
    %7930 = vmatprep.subr.mxu0 0.0
    %7931 = vmatpush1.msra.mxu0 0.0
    %7932 = vmatprep.subr.mxu0 0.0
    %7933 = vmatpush1.msra.mxu0 0.0
    %7934 = vmatprep.subr.mxu0 0.0
    %7935 = vmatpush1.msra.mxu0 0.0
    %7936 = vmatprep.subr.mxu0 0.0
    %7937 = vmatpush1.msra.mxu0 0.0
    %7938 = vmatprep.subr.mxu0 0.0
    %7939 = vmatpush1.msra.mxu0 0.0
    %7940 = vmatprep.mubr.f32.mxu0 0.0
    %7941 = vmatmul.mubr.f32.gmra.mrb[0].mxu0 %v7874
    %v7942 = vpop.f32.mrb[0].mxu0
    %v7943 = vadd.f32 0.0, %v7942
    %v7944 = vpop.f32.mrb[0].mxu0
    %7945 = vdwg.mxu0
    %7946 = vrot.lane.b32.xlu0 %v6151, 112
    %v7947 = vpop.permute.xlu0 %7946
    %v7950 = vsel %vm1556, %v7705, 0
    %7952 = vmatprep.subr.mxu0 0.0
    %7953 = vmatpush1.msra.mxu0 %v7947
    %7954 = vmatprep.subr.mxu0 0.0
    %7955 = vmatpush1.msra.mxu0 0.0
    %7956 = vmatprep.subr.mxu0 0.0
    %7957 = vmatpush1.msra.mxu0 0.0
    %7958 = vmatprep.subr.mxu0 0.0
    %7959 = vmatpush1.msra.mxu0 0.0
    %7960 = vmatprep.subr.mxu0 0.0
    %7961 = vmatpush1.msra.mxu0 0.0
    %7962 = vmatprep.subr.mxu0 0.0
    %7963 = vmatpush1.msra.mxu0 0.0
    %7964 = vmatprep.subr.mxu0 0.0
    %7965 = vmatpush1.msra.mxu0 0.0
    %7966 = vmatprep.subr.mxu0 0.0
    %7967 = vmatpush1.msra.mxu0 0.0
    %7968 = vmatprep.subr.mxu0 0.0
    %7969 = vmatpush1.msra.mxu0 0.0
    %7970 = vmatprep.subr.mxu0 0.0
    %7971 = vmatpush1.msra.mxu0 0.0
    %7972 = vmatprep.subr.mxu0 0.0
    %7973 = vmatpush1.msra.mxu0 0.0
    %7974 = vmatprep.subr.mxu0 0.0
    %7975 = vmatpush1.msra.mxu0 0.0
    %7976 = vmatprep.subr.mxu0 0.0
    %7977 = vmatpush1.msra.mxu0 0.0
    %7978 = vmatprep.subr.mxu0 0.0
    %7979 = vmatpush1.msra.mxu0 0.0
    %7980 = vmatprep.subr.mxu0 0.0
    %7981 = vmatpush1.msra.mxu0 0.0
    %7982 = vmatprep.subr.mxu0 0.0
    %7983 = vmatpush1.msra.mxu0 0.0
    %7984 = vmatprep.subr.mxu0 0.0
    %7985 = vmatpush1.msra.mxu0 0.0
    %7986 = vmatprep.subr.mxu0 0.0
    %7987 = vmatpush1.msra.mxu0 0.0
    %7988 = vmatprep.subr.mxu0 0.0
    %7989 = vmatpush1.msra.mxu0 0.0
    %7990 = vmatprep.subr.mxu0 0.0
    %7991 = vmatpush1.msra.mxu0 0.0
    %7992 = vmatprep.subr.mxu0 0.0
    %7993 = vmatpush1.msra.mxu0 0.0
    %7994 = vmatprep.subr.mxu0 0.0
    %7995 = vmatpush1.msra.mxu0 0.0
    %7996 = vmatprep.subr.mxu0 0.0
    %7997 = vmatpush1.msra.mxu0 0.0
    %7998 = vmatprep.subr.mxu0 0.0
    %7999 = vmatpush1.msra.mxu0 0.0
    %8000 = vmatprep.subr.mxu0 0.0
    %8001 = vmatpush1.msra.mxu0 0.0
    %8002 = vmatprep.subr.mxu0 0.0
    %8003 = vmatpush1.msra.mxu0 0.0
    %8004 = vmatprep.subr.mxu0 0.0
    %8005 = vmatpush1.msra.mxu0 0.0
    %8006 = vmatprep.subr.mxu0 0.0
    %8007 = vmatpush1.msra.mxu0 0.0
    %8008 = vmatprep.subr.mxu0 0.0
    %8009 = vmatpush1.msra.mxu0 0.0
    %8010 = vmatprep.subr.mxu0 0.0
    %8011 = vmatpush1.msra.mxu0 0.0
    %8012 = vmatprep.subr.mxu0 0.0
    %8013 = vmatpush1.msra.mxu0 0.0
    %8014 = vmatprep.subr.mxu0 0.0
    %8015 = vmatpush1.msra.mxu0 0.0
    %8016 = vmatprep.mubr.f32.mxu0 0.0
    %8017 = vmatmul.mubr.f32.gmra.mrb[0].mxu0 %v7950
    %v8018 = vpop.f32.mrb[0].mxu0
    %v8019 = vadd.f32 0.0, %v8018
    %v8020 = vpop.f32.mrb[0].mxu0
    %8021 = vdwg.mxu0
    %8022 = vrot.lane.b32.xlu0 %v6152, 112
    %v8023 = vpop.permute.xlu0 %8022
    %v8026 = vsel %vm1556, %v7706, 0
    %8028 = vmatprep.subr.mxu0 0.0
    %8029 = vmatpush1.msra.mxu0 %v8023
    %8030 = vmatprep.subr.mxu0 0.0
    %8031 = vmatpush1.msra.mxu0 0.0
    %8032 = vmatprep.subr.mxu0 0.0
    %8033 = vmatpush1.msra.mxu0 0.0
    %8034 = vmatprep.subr.mxu0 0.0
    %8035 = vmatpush1.msra.mxu0 0.0
    %8036 = vmatprep.subr.mxu0 0.0
    %8037 = vmatpush1.msra.mxu0 0.0
    %8038 = vmatprep.subr.mxu0 0.0
    %8039 = vmatpush1.msra.mxu0 0.0
    %8040 = vmatprep.subr.mxu0 0.0
    %8041 = vmatpush1.msra.mxu0 0.0
    %8042 = vmatprep.subr.mxu0 0.0
    %8043 = vmatpush1.msra.mxu0 0.0
    %8044 = vmatprep.subr.mxu0 0.0
    %8045 = vmatpush1.msra.mxu0 0.0
    %8046 = vmatprep.subr.mxu0 0.0
    %8047 = vmatpush1.msra.mxu0 0.0
    %8048 = vmatprep.subr.mxu0 0.0
    %8049 = vmatpush1.msra.mxu0 0.0
    %8050 = vmatprep.subr.mxu0 0.0
    %8051 = vmatpush1.msra.mxu0 0.0
    %8052 = vmatprep.subr.mxu0 0.0
    %8053 = vmatpush1.msra.mxu0 0.0
    %8054 = vmatprep.subr.mxu0 0.0
    %8055 = vmatpush1.msra.mxu0 0.0
    %8056 = vmatprep.subr.mxu0 0.0
    %8057 = vmatpush1.msra.mxu0 0.0
    %8058 = vmatprep.subr.mxu0 0.0
    %8059 = vmatpush1.msra.mxu0 0.0
    %8060 = vmatprep.subr.mxu0 0.0
    %8061 = vmatpush1.msra.mxu0 0.0
    %8062 = vmatprep.subr.mxu0 0.0
    %8063 = vmatpush1.msra.mxu0 0.0
    %8064 = vmatprep.subr.mxu0 0.0
    %8065 = vmatpush1.msra.mxu0 0.0
    %8066 = vmatprep.subr.mxu0 0.0
    %8067 = vmatpush1.msra.mxu0 0.0
    %8068 = vmatprep.subr.mxu0 0.0
    %8069 = vmatpush1.msra.mxu0 0.0
    %8070 = vmatprep.subr.mxu0 0.0
    %8071 = vmatpush1.msra.mxu0 0.0
    %8072 = vmatprep.subr.mxu0 0.0
    %8073 = vmatpush1.msra.mxu0 0.0
    %8074 = vmatprep.subr.mxu0 0.0
    %8075 = vmatpush1.msra.mxu0 0.0
    %8076 = vmatprep.subr.mxu0 0.0
    %8077 = vmatpush1.msra.mxu0 0.0
    %8078 = vmatprep.subr.mxu0 0.0
    %8079 = vmatpush1.msra.mxu0 0.0
    %8080 = vmatprep.subr.mxu0 0.0
    %8081 = vmatpush1.msra.mxu0 0.0
    %8082 = vmatprep.subr.mxu0 0.0
    %8083 = vmatpush1.msra.mxu0 0.0
    %8084 = vmatprep.subr.mxu0 0.0
    %8085 = vmatpush1.msra.mxu0 0.0
    %8086 = vmatprep.subr.mxu0 0.0
    %8087 = vmatpush1.msra.mxu0 0.0
    %8088 = vmatprep.subr.mxu0 0.0
    %8089 = vmatpush1.msra.mxu0 0.0
    %8090 = vmatprep.subr.mxu0 0.0
    %8091 = vmatpush1.msra.mxu0 0.0
    %8092 = vmatprep.mubr.f32.mxu0 0.0
    %8093 = vmatmul.mubr.f32.gmra.mrb[0].mxu0 %v8026
    %v8094 = vpop.f32.mrb[0].mxu0
    %v8095 = vadd.f32 0.0, %v8094
    %v8096 = vpop.f32.mrb[0].mxu0
    %8097 = vdwg.mxu0
    %8098 = vrot.lane.b32.xlu0 %v6153, 112
    %v8099 = vpop.permute.xlu0 %8098
    %v8102 = vsel %vm1556, %v7707, 0
    %8104 = vmatprep.subr.mxu0 0.0
    %8105 = vmatpush1.msra.mxu0 %v8099
    %8106 = vmatprep.subr.mxu0 0.0
    %8107 = vmatpush1.msra.mxu0 0.0
    %8108 = vmatprep.subr.mxu0 0.0
    %8109 = vmatpush1.msra.mxu0 0.0
    %8110 = vmatprep.subr.mxu0 0.0
    %8111 = vmatpush1.msra.mxu0 0.0
    %8112 = vmatprep.subr.mxu0 0.0
    %8113 = vmatpush1.msra.mxu0 0.0
    %8114 = vmatprep.subr.mxu0 0.0
    %8115 = vmatpush1.msra.mxu0 0.0
    %8116 = vmatprep.subr.mxu0 0.0
    %8117 = vmatpush1.msra.mxu0 0.0
    %8118 = vmatprep.subr.mxu0 0.0
    %8119 = vmatpush1.msra.mxu0 0.0
    %8120 = vmatprep.subr.mxu0 0.0
    %8121 = vmatpush1.msra.mxu0 0.0
    %8122 = vmatprep.subr.mxu0 0.0
    %8123 = vmatpush1.msra.mxu0 0.0
    %8124 = vmatprep.subr.mxu0 0.0
    %8125 = vmatpush1.msra.mxu0 0.0
    %8126 = vmatprep.subr.mxu0 0.0
    %8127 = vmatpush1.msra.mxu0 0.0
    %8128 = vmatprep.subr.mxu0 0.0
    %8129 = vmatpush1.msra.mxu0 0.0
    %8130 = vmatprep.subr.mxu0 0.0
    %8131 = vmatpush1.msra.mxu0 0.0
    %8132 = vmatprep.subr.mxu0 0.0
    %8133 = vmatpush1.msra.mxu0 0.0
    %8134 = vmatprep.subr.mxu0 0.0
    %8135 = vmatpush1.msra.mxu0 0.0
    %8136 = vmatprep.subr.mxu0 0.0
    %8137 = vmatpush1.msra.mxu0 0.0
    %8138 = vmatprep.subr.mxu0 0.0
    %8139 = vmatpush1.msra.mxu0 0.0
    %8140 = vmatprep.subr.mxu0 0.0
    %8141 = vmatpush1.msra.mxu0 0.0
    %8142 = vmatprep.subr.mxu0 0.0
    %8143 = vmatpush1.msra.mxu0 0.0
    %8144 = vmatprep.subr.mxu0 0.0
    %8145 = vmatpush1.msra.mxu0 0.0
    %8146 = vmatprep.subr.mxu0 0.0
    %8147 = vmatpush1.msra.mxu0 0.0
    %8148 = vmatprep.subr.mxu0 0.0
    %8149 = vmatpush1.msra.mxu0 0.0
    %8150 = vmatprep.subr.mxu0 0.0
    %8151 = vmatpush1.msra.mxu0 0.0
    %8152 = vmatprep.subr.mxu0 0.0
    %8153 = vmatpush1.msra.mxu0 0.0
    %8154 = vmatprep.subr.mxu0 0.0
    %8155 = vmatpush1.msra.mxu0 0.0
    %8156 = vmatprep.subr.mxu0 0.0
    %8157 = vmatpush1.msra.mxu0 0.0
    %8158 = vmatprep.subr.mxu0 0.0
    %8159 = vmatpush1.msra.mxu0 0.0
    %8160 = vmatprep.subr.mxu0 0.0
    %8161 = vmatpush1.msra.mxu0 0.0
    %8162 = vmatprep.subr.mxu0 0.0
    %8163 = vmatpush1.msra.mxu0 0.0
    %8164 = vmatprep.subr.mxu0 0.0
    %8165 = vmatpush1.msra.mxu0 0.0
    %8166 = vmatprep.subr.mxu0 0.0
    %8167 = vmatpush1.msra.mxu0 0.0
    %8168 = vmatprep.mubr.f32.mxu0 0.0
    %8169 = vmatmul.mubr.f32.gmra.mrb[0].mxu0 %v8102
    %v8170 = vpop.f32.mrb[0].mxu0
    %v8171 = vadd.f32 0.0, %v8170
    %v8172 = vpop.f32.mrb[0].mxu0
    %8173 = vdwg.mxu0
    %8174 = vrot.lane.b32.xlu0 %v6154, 112
    %v8175 = vpop.permute.xlu0 %8174
    %v8178 = vsel %vm1556, %v7708, 0
    %8180 = vmatprep.subr.mxu0 0.0
    %8181 = vmatpush1.msra.mxu0 %v8175
    %8182 = vmatprep.subr.mxu0 0.0
    %8183 = vmatpush1.msra.mxu0 0.0
    %8184 = vmatprep.subr.mxu0 0.0
    %8185 = vmatpush1.msra.mxu0 0.0
    %8186 = vmatprep.subr.mxu0 0.0
    %8187 = vmatpush1.msra.mxu0 0.0
    %8188 = vmatprep.subr.mxu0 0.0
    %8189 = vmatpush1.msra.mxu0 0.0
    %8190 = vmatprep.subr.mxu0 0.0
    %8191 = vmatpush1.msra.mxu0 0.0
    %8192 = vmatprep.subr.mxu0 0.0
    %8193 = vmatpush1.msra.mxu0 0.0
    %8194 = vmatprep.subr.mxu0 0.0
    %8195 = vmatpush1.msra.mxu0 0.0
    %8196 = vmatprep.subr.mxu0 0.0
    %8197 = vmatpush1.msra.mxu0 0.0
    %8198 = vmatprep.subr.mxu0 0.0
    %8199 = vmatpush1.msra.mxu0 0.0
    %8200 = vmatprep.subr.mxu0 0.0
    %8201 = vmatpush1.msra.mxu0 0.0
    %8202 = vmatprep.subr.mxu0 0.0
    %8203 = vmatpush1.msra.mxu0 0.0
    %8204 = vmatprep.subr.mxu0 0.0
    %8205 = vmatpush1.msra.mxu0 0.0
    %8206 = vmatprep.subr.mxu0 0.0
    %8207 = vmatpush1.msra.mxu0 0.0
    %8208 = vmatprep.subr.mxu0 0.0
    %8209 = vmatpush1.msra.mxu0 0.0
    %8210 = vmatprep.subr.mxu0 0.0
    %8211 = vmatpush1.msra.mxu0 0.0
    %8212 = vmatprep.subr.mxu0 0.0
    %8213 = vmatpush1.msra.mxu0 0.0
    %8214 = vmatprep.subr.mxu0 0.0
    %8215 = vmatpush1.msra.mxu0 0.0
    %8216 = vmatprep.subr.mxu0 0.0
    %8217 = vmatpush1.msra.mxu0 0.0
    %8218 = vmatprep.subr.mxu0 0.0
    %8219 = vmatpush1.msra.mxu0 0.0
    %8220 = vmatprep.subr.mxu0 0.0
    %8221 = vmatpush1.msra.mxu0 0.0
    %8222 = vmatprep.subr.mxu0 0.0
    %8223 = vmatpush1.msra.mxu0 0.0
    %8224 = vmatprep.subr.mxu0 0.0
    %8225 = vmatpush1.msra.mxu0 0.0
    %8226 = vmatprep.subr.mxu0 0.0
    %8227 = vmatpush1.msra.mxu0 0.0
    %8228 = vmatprep.subr.mxu0 0.0
    %8229 = vmatpush1.msra.mxu0 0.0
    %8230 = vmatprep.subr.mxu0 0.0
    %8231 = vmatpush1.msra.mxu0 0.0
    %8232 = vmatprep.subr.mxu0 0.0
    %8233 = vmatpush1.msra.mxu0 0.0
    %8234 = vmatprep.subr.mxu0 0.0
    %8235 = vmatpush1.msra.mxu0 0.0
    %8236 = vmatprep.subr.mxu0 0.0
    %8237 = vmatpush1.msra.mxu0 0.0
    %8238 = vmatprep.subr.mxu0 0.0
    %8239 = vmatpush1.msra.mxu0 0.0
    %8240 = vmatprep.subr.mxu0 0.0
    %8241 = vmatpush1.msra.mxu0 0.0
    %8242 = vmatprep.subr.mxu0 0.0
    %8243 = vmatpush1.msra.mxu0 0.0
    %8244 = vmatprep.mubr.f32.mxu0 0.0
    %8245 = vmatmul.mubr.f32.gmra.mrb[0].mxu0 %v8178
    %v8246 = vpop.f32.mrb[0].mxu0
    %v8247 = vadd.f32 0.0, %v8246
    %v8248 = vpop.f32.mrb[0].mxu0
    %8249 = vdwg.mxu0
    %8250 = vrot.lane.b32.xlu0 %v6155, 112
    %v8251 = vpop.permute.xlu0 %8250
    %v8254 = vsel %vm1556, %v7709, 0
    %8256 = vmatprep.subr.mxu0 0.0
    %8257 = vmatpush1.msra.mxu0 %v8251
    %8258 = vmatprep.subr.mxu0 0.0
    %8259 = vmatpush1.msra.mxu0 0.0
    %8260 = vmatprep.subr.mxu0 0.0
    %8261 = vmatpush1.msra.mxu0 0.0
    %8262 = vmatprep.subr.mxu0 0.0
    %8263 = vmatpush1.msra.mxu0 0.0
    %8264 = vmatprep.subr.mxu0 0.0
    %8265 = vmatpush1.msra.mxu0 0.0
    %8266 = vmatprep.subr.mxu0 0.0
    %8267 = vmatpush1.msra.mxu0 0.0
    %8268 = vmatprep.subr.mxu0 0.0
    %8269 = vmatpush1.msra.mxu0 0.0
    %8270 = vmatprep.subr.mxu0 0.0
    %8271 = vmatpush1.msra.mxu0 0.0
    %8272 = vmatprep.subr.mxu0 0.0
    %8273 = vmatpush1.msra.mxu0 0.0
    %8274 = vmatprep.subr.mxu0 0.0
    %8275 = vmatpush1.msra.mxu0 0.0
    %8276 = vmatprep.subr.mxu0 0.0
    %8277 = vmatpush1.msra.mxu0 0.0
    %8278 = vmatprep.subr.mxu0 0.0
    %8279 = vmatpush1.msra.mxu0 0.0
    %8280 = vmatprep.subr.mxu0 0.0
    %8281 = vmatpush1.msra.mxu0 0.0
    %8282 = vmatprep.subr.mxu0 0.0
    %8283 = vmatpush1.msra.mxu0 0.0
    %8284 = vmatprep.subr.mxu0 0.0
    %8285 = vmatpush1.msra.mxu0 0.0
    %8286 = vmatprep.subr.mxu0 0.0
    %8287 = vmatpush1.msra.mxu0 0.0
    %8288 = vmatprep.subr.mxu0 0.0
    %8289 = vmatpush1.msra.mxu0 0.0
    %8290 = vmatprep.subr.mxu0 0.0
    %8291 = vmatpush1.msra.mxu0 0.0
    %8292 = vmatprep.subr.mxu0 0.0
    %8293 = vmatpush1.msra.mxu0 0.0
    %8294 = vmatprep.subr.mxu0 0.0
    %8295 = vmatpush1.msra.mxu0 0.0
    %8296 = vmatprep.subr.mxu0 0.0
    %8297 = vmatpush1.msra.mxu0 0.0
    %8298 = vmatprep.subr.mxu0 0.0
    %8299 = vmatpush1.msra.mxu0 0.0
    %8300 = vmatprep.subr.mxu0 0.0
    %8301 = vmatpush1.msra.mxu0 0.0
    %8302 = vmatprep.subr.mxu0 0.0
    %8303 = vmatpush1.msra.mxu0 0.0
    %8304 = vmatprep.subr.mxu0 0.0
    %8305 = vmatpush1.msra.mxu0 0.0
    %8306 = vmatprep.subr.mxu0 0.0
    %8307 = vmatpush1.msra.mxu0 0.0
    %8308 = vmatprep.subr.mxu0 0.0
    %8309 = vmatpush1.msra.mxu0 0.0
    %8310 = vmatprep.subr.mxu0 0.0
    %8311 = vmatpush1.msra.mxu0 0.0
    %8312 = vmatprep.subr.mxu0 0.0
    %8313 = vmatpush1.msra.mxu0 0.0
    %8314 = vmatprep.subr.mxu0 0.0
    %8315 = vmatpush1.msra.mxu0 0.0
    %8316 = vmatprep.subr.mxu0 0.0
    %8317 = vmatpush1.msra.mxu0 0.0
    %8318 = vmatprep.subr.mxu0 0.0
    %8319 = vmatpush1.msra.mxu0 0.0
    %8320 = vmatprep.mubr.f32.mxu0 0.0
    %8321 = vmatmul.mubr.f32.gmra.mrb[0].mxu0 %v8254
    %v8322 = vpop.f32.mrb[0].mxu0
    %v8323 = vadd.f32 0.0, %v8322
    %v8324 = vpop.f32.mrb[0].mxu0
    %8325 = vdwg.mxu0
    %8326 = vrot.lane.b32.xlu0 %v6284, 112
    %v8327 = vpop.permute.xlu0 %8326
    %v8330 = vsel %vm1556, %v7710, 0
    %8332 = vmatprep.subr.mxu0 0.0
    %8333 = vmatpush1.msra.mxu0 %v8327
    %8334 = vmatprep.subr.mxu0 0.0
    %8335 = vmatpush1.msra.mxu0 0.0
    %8336 = vmatprep.subr.mxu0 0.0
    %8337 = vmatpush1.msra.mxu0 0.0
    %8338 = vmatprep.subr.mxu0 0.0
    %8339 = vmatpush1.msra.mxu0 0.0
    %8340 = vmatprep.subr.mxu0 0.0
    %8341 = vmatpush1.msra.mxu0 0.0
    %8342 = vmatprep.subr.mxu0 0.0
    %8343 = vmatpush1.msra.mxu0 0.0
    %8344 = vmatprep.subr.mxu0 0.0
    %8345 = vmatpush1.msra.mxu0 0.0
    %8346 = vmatprep.subr.mxu0 0.0
    %8347 = vmatpush1.msra.mxu0 0.0
    %8348 = vmatprep.subr.mxu0 0.0
    %8349 = vmatpush1.msra.mxu0 0.0
    %8350 = vmatprep.subr.mxu0 0.0
    %8351 = vmatpush1.msra.mxu0 0.0
    %8352 = vmatprep.subr.mxu0 0.0
    %8353 = vmatpush1.msra.mxu0 0.0
    %8354 = vmatprep.subr.mxu0 0.0
    %8355 = vmatpush1.msra.mxu0 0.0
    %8356 = vmatprep.subr.mxu0 0.0
    %8357 = vmatpush1.msra.mxu0 0.0
    %8358 = vmatprep.subr.mxu0 0.0
    %8359 = vmatpush1.msra.mxu0 0.0
    %8360 = vmatprep.subr.mxu0 0.0
    %8361 = vmatpush1.msra.mxu0 0.0
    %8362 = vmatprep.subr.mxu0 0.0
    %8363 = vmatpush1.msra.mxu0 0.0
    %8364 = vmatprep.subr.mxu0 0.0
    %8365 = vmatpush1.msra.mxu0 0.0
    %8366 = vmatprep.subr.mxu0 0.0
    %8367 = vmatpush1.msra.mxu0 0.0
    %8368 = vmatprep.subr.mxu0 0.0
    %8369 = vmatpush1.msra.mxu0 0.0
    %8370 = vmatprep.subr.mxu0 0.0
    %8371 = vmatpush1.msra.mxu0 0.0
    %8372 = vmatprep.subr.mxu0 0.0
    %8373 = vmatpush1.msra.mxu0 0.0
    %8374 = vmatprep.subr.mxu0 0.0
    %8375 = vmatpush1.msra.mxu0 0.0
    %8376 = vmatprep.subr.mxu0 0.0
    %8377 = vmatpush1.msra.mxu0 0.0
    %8378 = vmatprep.subr.mxu0 0.0
    %8379 = vmatpush1.msra.mxu0 0.0
    %8380 = vmatprep.subr.mxu0 0.0
    %8381 = vmatpush1.msra.mxu0 0.0
    %8382 = vmatprep.subr.mxu0 0.0
    %8383 = vmatpush1.msra.mxu0 0.0
    %8384 = vmatprep.subr.mxu0 0.0
    %8385 = vmatpush1.msra.mxu0 0.0
    %8386 = vmatprep.subr.mxu0 0.0
    %8387 = vmatpush1.msra.mxu0 0.0
    %8388 = vmatprep.subr.mxu0 0.0
    %8389 = vmatpush1.msra.mxu0 0.0
    %8390 = vmatprep.subr.mxu0 0.0
    %8391 = vmatpush1.msra.mxu0 0.0
    %8392 = vmatprep.subr.mxu0 0.0
    %8393 = vmatpush1.msra.mxu0 0.0
    %8394 = vmatprep.subr.mxu0 0.0
    %8395 = vmatpush1.msra.mxu0 0.0
    %8396 = vmatprep.mubr.f32.mxu0 0.0
    %8397 = vmatmul.mubr.f32.gmra.mrb[0].mxu0 %v8330
    %v8398 = vpop.f32.mrb[0].mxu0
    %v8399 = vadd.f32 0.0, %v8398
    %v8400 = vpop.f32.mrb[0].mxu0
    %8401 = vdwg.mxu0
    %8402 = vrot.lane.b32.xlu0 %v6285, 112
    %v8403 = vpop.permute.xlu0 %8402
    %v8406 = vsel %vm1556, %v7711, 0
    %8408 = vmatprep.subr.mxu0 0.0
    %8409 = vmatpush1.msra.mxu0 %v8403
    %8410 = vmatprep.subr.mxu0 0.0
    %8411 = vmatpush1.msra.mxu0 0.0
    %8412 = vmatprep.subr.mxu0 0.0
    %8413 = vmatpush1.msra.mxu0 0.0
    %8414 = vmatprep.subr.mxu0 0.0
    %8415 = vmatpush1.msra.mxu0 0.0
    %8416 = vmatprep.subr.mxu0 0.0
    %8417 = vmatpush1.msra.mxu0 0.0
    %8418 = vmatprep.subr.mxu0 0.0
    %8419 = vmatpush1.msra.mxu0 0.0
    %8420 = vmatprep.subr.mxu0 0.0
    %8421 = vmatpush1.msra.mxu0 0.0
    %8422 = vmatprep.subr.mxu0 0.0
    %8423 = vmatpush1.msra.mxu0 0.0
    %8424 = vmatprep.subr.mxu0 0.0
    %8425 = vmatpush1.msra.mxu0 0.0
    %8426 = vmatprep.subr.mxu0 0.0
    %8427 = vmatpush1.msra.mxu0 0.0
    %8428 = vmatprep.subr.mxu0 0.0
    %8429 = vmatpush1.msra.mxu0 0.0
    %8430 = vmatprep.subr.mxu0 0.0
    %8431 = vmatpush1.msra.mxu0 0.0
    %8432 = vmatprep.subr.mxu0 0.0
    %8433 = vmatpush1.msra.mxu0 0.0
    %8434 = vmatprep.subr.mxu0 0.0
    %8435 = vmatpush1.msra.mxu0 0.0
    %8436 = vmatprep.subr.mxu0 0.0
    %8437 = vmatpush1.msra.mxu0 0.0
    %8438 = vmatprep.subr.mxu0 0.0
    %8439 = vmatpush1.msra.mxu0 0.0
    %8440 = vmatprep.subr.mxu0 0.0
    %8441 = vmatpush1.msra.mxu0 0.0
    %8442 = vmatprep.subr.mxu0 0.0
    %8443 = vmatpush1.msra.mxu0 0.0
    %8444 = vmatprep.subr.mxu0 0.0
    %8445 = vmatpush1.msra.mxu0 0.0
    %8446 = vmatprep.subr.mxu0 0.0
    %8447 = vmatpush1.msra.mxu0 0.0
    %8448 = vmatprep.subr.mxu0 0.0
    %8449 = vmatpush1.msra.mxu0 0.0
    %8450 = vmatprep.subr.mxu0 0.0
    %8451 = vmatpush1.msra.mxu0 0.0
    %8452 = vmatprep.subr.mxu0 0.0
    %8453 = vmatpush1.msra.mxu0 0.0
    %8454 = vmatprep.subr.mxu0 0.0
    %8455 = vmatpush1.msra.mxu0 0.0
    %8456 = vmatprep.subr.mxu0 0.0
    %8457 = vmatpush1.msra.mxu0 0.0
    %8458 = vmatprep.subr.mxu0 0.0
    %8459 = vmatpush1.msra.mxu0 0.0
    %8460 = vmatprep.subr.mxu0 0.0
    %8461 = vmatpush1.msra.mxu0 0.0
    %8462 = vmatprep.subr.mxu0 0.0
    %8463 = vmatpush1.msra.mxu0 0.0
    %8464 = vmatprep.subr.mxu0 0.0
    %8465 = vmatpush1.msra.mxu0 0.0
    %8466 = vmatprep.subr.mxu0 0.0
    %8467 = vmatpush1.msra.mxu0 0.0
    %8468 = vmatprep.subr.mxu0 0.0
    %8469 = vmatpush1.msra.mxu0 0.0
    %8470 = vmatprep.subr.mxu0 0.0
    %8471 = vmatpush1.msra.mxu0 0.0
    %8472 = vmatprep.mubr.f32.mxu0 0.0
    %8473 = vmatmul.mubr.f32.gmra.mrb[0].mxu0 %v8406
    %v8474 = vpop.f32.mrb[0].mxu0
    %v8475 = vadd.f32 0.0, %v8474
    %v8476 = vpop.f32.mrb[0].mxu0
    %8477 = vdwg.mxu0
    %8478 = vrot.lane.b32.xlu0 %v6286, 112
    %v8479 = vpop.permute.xlu0 %8478
    %v8482 = vsel %vm1556, %v7712, 0
    %8484 = vmatprep.subr.mxu0 0.0
    %8485 = vmatpush1.msra.mxu0 %v8479
    %8486 = vmatprep.subr.mxu0 0.0
    %8487 = vmatpush1.msra.mxu0 0.0
    %8488 = vmatprep.subr.mxu0 0.0
    %8489 = vmatpush1.msra.mxu0 0.0
    %8490 = vmatprep.subr.mxu0 0.0
    %8491 = vmatpush1.msra.mxu0 0.0
    %8492 = vmatprep.subr.mxu0 0.0
    %8493 = vmatpush1.msra.mxu0 0.0
    %8494 = vmatprep.subr.mxu0 0.0
    %8495 = vmatpush1.msra.mxu0 0.0
    %8496 = vmatprep.subr.mxu0 0.0
    %8497 = vmatpush1.msra.mxu0 0.0
    %8498 = vmatprep.subr.mxu0 0.0
    %8499 = vmatpush1.msra.mxu0 0.0
    %8500 = vmatprep.subr.mxu0 0.0
    %8501 = vmatpush1.msra.mxu0 0.0
    %8502 = vmatprep.subr.mxu0 0.0
    %8503 = vmatpush1.msra.mxu0 0.0
    %8504 = vmatprep.subr.mxu0 0.0
    %8505 = vmatpush1.msra.mxu0 0.0
    %8506 = vmatprep.subr.mxu0 0.0
    %8507 = vmatpush1.msra.mxu0 0.0
    %8508 = vmatprep.subr.mxu0 0.0
    %8509 = vmatpush1.msra.mxu0 0.0
    %8510 = vmatprep.subr.mxu0 0.0
    %8511 = vmatpush1.msra.mxu0 0.0
    %8512 = vmatprep.subr.mxu0 0.0
    %8513 = vmatpush1.msra.mxu0 0.0
    %8514 = vmatprep.subr.mxu0 0.0
    %8515 = vmatpush1.msra.mxu0 0.0
    %8516 = vmatprep.subr.mxu0 0.0
    %8517 = vmatpush1.msra.mxu0 0.0
    %8518 = vmatprep.subr.mxu0 0.0
    %8519 = vmatpush1.msra.mxu0 0.0
    %8520 = vmatprep.subr.mxu0 0.0
    %8521 = vmatpush1.msra.mxu0 0.0
    %8522 = vmatprep.subr.mxu0 0.0
    %8523 = vmatpush1.msra.mxu0 0.0
    %8524 = vmatprep.subr.mxu0 0.0
    %8525 = vmatpush1.msra.mxu0 0.0
    %8526 = vmatprep.subr.mxu0 0.0
    %8527 = vmatpush1.msra.mxu0 0.0
    %8528 = vmatprep.subr.mxu0 0.0
    %8529 = vmatpush1.msra.mxu0 0.0
    %8530 = vmatprep.subr.mxu0 0.0
    %8531 = vmatpush1.msra.mxu0 0.0
    %8532 = vmatprep.subr.mxu0 0.0
    %8533 = vmatpush1.msra.mxu0 0.0
    %8534 = vmatprep.subr.mxu0 0.0
    %8535 = vmatpush1.msra.mxu0 0.0
    %8536 = vmatprep.subr.mxu0 0.0
    %8537 = vmatpush1.msra.mxu0 0.0
    %8538 = vmatprep.subr.mxu0 0.0
    %8539 = vmatpush1.msra.mxu0 0.0
    %8540 = vmatprep.subr.mxu0 0.0
    %8541 = vmatpush1.msra.mxu0 0.0
    %8542 = vmatprep.subr.mxu0 0.0
    %8543 = vmatpush1.msra.mxu0 0.0
    %8544 = vmatprep.subr.mxu0 0.0
    %8545 = vmatpush1.msra.mxu0 0.0
    %8546 = vmatprep.subr.mxu0 0.0
    %8547 = vmatpush1.msra.mxu0 0.0
    %8548 = vmatprep.mubr.f32.mxu0 0.0
    %8549 = vmatmul.mubr.f32.gmra.mrb[0].mxu0 %v8482
    %v8550 = vpop.f32.mrb[0].mxu0
    %v8551 = vadd.f32 0.0, %v8550
    %v8552 = vpop.f32.mrb[0].mxu0
    %8553 = vdwg.mxu0
    %8554 = vrot.lane.b32.xlu0 %v6287, 112
    %v8555 = vpop.permute.xlu0 %8554
    %v8558 = vsel %vm1556, %v7713, 0
    %8560 = vmatprep.subr.mxu0 0.0
    %8561 = vmatpush1.msra.mxu0 %v8555
    %8562 = vmatprep.subr.mxu0 0.0
    %8563 = vmatpush1.msra.mxu0 0.0
    %8564 = vmatprep.subr.mxu0 0.0
    %8565 = vmatpush1.msra.mxu0 0.0
    %8566 = vmatprep.subr.mxu0 0.0
    %8567 = vmatpush1.msra.mxu0 0.0
    %8568 = vmatprep.subr.mxu0 0.0
    %8569 = vmatpush1.msra.mxu0 0.0
    %8570 = vmatprep.subr.mxu0 0.0
    %8571 = vmatpush1.msra.mxu0 0.0
    %8572 = vmatprep.subr.mxu0 0.0
    %8573 = vmatpush1.msra.mxu0 0.0
    %8574 = vmatprep.subr.mxu0 0.0
    %8575 = vmatpush1.msra.mxu0 0.0
    %8576 = vmatprep.subr.mxu0 0.0
    %8577 = vmatpush1.msra.mxu0 0.0
    %8578 = vmatprep.subr.mxu0 0.0
    %8579 = vmatpush1.msra.mxu0 0.0
    %8580 = vmatprep.subr.mxu0 0.0
    %8581 = vmatpush1.msra.mxu0 0.0
    %8582 = vmatprep.subr.mxu0 0.0
    %8583 = vmatpush1.msra.mxu0 0.0
    %8584 = vmatprep.subr.mxu0 0.0
    %8585 = vmatpush1.msra.mxu0 0.0
    %8586 = vmatprep.subr.mxu0 0.0
    %8587 = vmatpush1.msra.mxu0 0.0
    %8588 = vmatprep.subr.mxu0 0.0
    %8589 = vmatpush1.msra.mxu0 0.0
    %8590 = vmatprep.subr.mxu0 0.0
    %8591 = vmatpush1.msra.mxu0 0.0
    %8592 = vmatprep.subr.mxu0 0.0
    %8593 = vmatpush1.msra.mxu0 0.0
    %8594 = vmatprep.subr.mxu0 0.0
    %8595 = vmatpush1.msra.mxu0 0.0
    %8596 = vmatprep.subr.mxu0 0.0
    %8597 = vmatpush1.msra.mxu0 0.0
    %8598 = vmatprep.subr.mxu0 0.0
    %8599 = vmatpush1.msra.mxu0 0.0
    %8600 = vmatprep.subr.mxu0 0.0
    %8601 = vmatpush1.msra.mxu0 0.0
    %8602 = vmatprep.subr.mxu0 0.0
    %8603 = vmatpush1.msra.mxu0 0.0
    %8604 = vmatprep.subr.mxu0 0.0
    %8605 = vmatpush1.msra.mxu0 0.0
    %8606 = vmatprep.subr.mxu0 0.0
    %8607 = vmatpush1.msra.mxu0 0.0
    %8608 = vmatprep.subr.mxu0 0.0
    %8609 = vmatpush1.msra.mxu0 0.0
    %8610 = vmatprep.subr.mxu0 0.0
    %8611 = vmatpush1.msra.mxu0 0.0
    %8612 = vmatprep.subr.mxu0 0.0
    %8613 = vmatpush1.msra.mxu0 0.0
    %8614 = vmatprep.subr.mxu0 0.0
    %8615 = vmatpush1.msra.mxu0 0.0
    %8616 = vmatprep.subr.mxu0 0.0
    %8617 = vmatpush1.msra.mxu0 0.0
    %8618 = vmatprep.subr.mxu0 0.0
    %8619 = vmatpush1.msra.mxu0 0.0
    %8620 = vmatprep.subr.mxu0 0.0
    %8621 = vmatpush1.msra.mxu0 0.0
    %8622 = vmatprep.subr.mxu0 0.0
    %8623 = vmatpush1.msra.mxu0 0.0
    %8624 = vmatprep.mubr.f32.mxu0 0.0
    %8625 = vmatmul.mubr.f32.gmra.mrb[0].mxu0 %v8558
    %v8626 = vpop.f32.mrb[0].mxu0
    %v8627 = vadd.f32 0.0, %v8626
    %v8628 = vpop.f32.mrb[0].mxu0
    %8629 = vdwg.mxu0
    %8630 = vrot.lane.b32.xlu0 %v6288, 112
    %v8631 = vpop.permute.xlu0 %8630
    %v8634 = vsel %vm1556, %v7714, 0
    %8636 = vmatprep.subr.mxu0 0.0
    %8637 = vmatpush1.msra.mxu0 %v8631
    %8638 = vmatprep.subr.mxu0 0.0
    %8639 = vmatpush1.msra.mxu0 0.0
    %8640 = vmatprep.subr.mxu0 0.0
    %8641 = vmatpush1.msra.mxu0 0.0
    %8642 = vmatprep.subr.mxu0 0.0
    %8643 = vmatpush1.msra.mxu0 0.0
    %8644 = vmatprep.subr.mxu0 0.0
    %8645 = vmatpush1.msra.mxu0 0.0
    %8646 = vmatprep.subr.mxu0 0.0
    %8647 = vmatpush1.msra.mxu0 0.0
    %8648 = vmatprep.subr.mxu0 0.0
    %8649 = vmatpush1.msra.mxu0 0.0
    %8650 = vmatprep.subr.mxu0 0.0
    %8651 = vmatpush1.msra.mxu0 0.0
    %8652 = vmatprep.subr.mxu0 0.0
    %8653 = vmatpush1.msra.mxu0 0.0
    %8654 = vmatprep.subr.mxu0 0.0
    %8655 = vmatpush1.msra.mxu0 0.0
    %8656 = vmatprep.subr.mxu0 0.0
    %8657 = vmatpush1.msra.mxu0 0.0
    %8658 = vmatprep.subr.mxu0 0.0
    %8659 = vmatpush1.msra.mxu0 0.0
    %8660 = vmatprep.subr.mxu0 0.0
    %8661 = vmatpush1.msra.mxu0 0.0
    %8662 = vmatprep.subr.mxu0 0.0
    %8663 = vmatpush1.msra.mxu0 0.0
    %8664 = vmatprep.subr.mxu0 0.0
    %8665 = vmatpush1.msra.mxu0 0.0
    %8666 = vmatprep.subr.mxu0 0.0
    %8667 = vmatpush1.msra.mxu0 0.0
    %8668 = vmatprep.subr.mxu0 0.0
    %8669 = vmatpush1.msra.mxu0 0.0
    %8670 = vmatprep.subr.mxu0 0.0
    %8671 = vmatpush1.msra.mxu0 0.0
    %8672 = vmatprep.subr.mxu0 0.0
    %8673 = vmatpush1.msra.mxu0 0.0
    %8674 = vmatprep.subr.mxu0 0.0
    %8675 = vmatpush1.msra.mxu0 0.0
    %8676 = vmatprep.subr.mxu0 0.0
    %8677 = vmatpush1.msra.mxu0 0.0
    %8678 = vmatprep.subr.mxu0 0.0
    %8679 = vmatpush1.msra.mxu0 0.0
    %8680 = vmatprep.subr.mxu0 0.0
    %8681 = vmatpush1.msra.mxu0 0.0
    %8682 = vmatprep.subr.mxu0 0.0
    %8683 = vmatpush1.msra.mxu0 0.0
    %8684 = vmatprep.subr.mxu0 0.0
    %8685 = vmatpush1.msra.mxu0 0.0
    %8686 = vmatprep.subr.mxu0 0.0
    %8687 = vmatpush1.msra.mxu0 0.0
    %8688 = vmatprep.subr.mxu0 0.0
    %8689 = vmatpush1.msra.mxu0 0.0
    %8690 = vmatprep.subr.mxu0 0.0
    %8691 = vmatpush1.msra.mxu0 0.0
    %8692 = vmatprep.subr.mxu0 0.0
    %8693 = vmatpush1.msra.mxu0 0.0
    %8694 = vmatprep.subr.mxu0 0.0
    %8695 = vmatpush1.msra.mxu0 0.0
    %8696 = vmatprep.subr.mxu0 0.0
    %8697 = vmatpush1.msra.mxu0 0.0
    %8698 = vmatprep.subr.mxu0 0.0
    %8699 = vmatpush1.msra.mxu0 0.0
    %8700 = vmatprep.mubr.f32.mxu0 0.0
    %8701 = vmatmul.mubr.f32.gmra.mrb[0].mxu0 %v8634
    %v8702 = vpop.f32.mrb[0].mxu0
    %v8703 = vadd.f32 0.0, %v8702
    %v8704 = vpop.f32.mrb[0].mxu0
    %8705 = vdwg.mxu0
    %8706 = vrot.lane.b32.xlu0 %v6289, 112
    %v8707 = vpop.permute.xlu0 %8706
    %v8710 = vsel %vm1556, %v7715, 0
    %8712 = vmatprep.subr.mxu0 0.0
    %8713 = vmatpush1.msra.mxu0 %v8707
    %8714 = vmatprep.subr.mxu0 0.0
    %8715 = vmatpush1.msra.mxu0 0.0
    %8716 = vmatprep.subr.mxu0 0.0
    %8717 = vmatpush1.msra.mxu0 0.0
    %8718 = vmatprep.subr.mxu0 0.0
    %8719 = vmatpush1.msra.mxu0 0.0
    %8720 = vmatprep.subr.mxu0 0.0
    %8721 = vmatpush1.msra.mxu0 0.0
    %8722 = vmatprep.subr.mxu0 0.0
    %8723 = vmatpush1.msra.mxu0 0.0
    %8724 = vmatprep.subr.mxu0 0.0
    %8725 = vmatpush1.msra.mxu0 0.0
    %8726 = vmatprep.subr.mxu0 0.0
    %8727 = vmatpush1.msra.mxu0 0.0
    %8728 = vmatprep.subr.mxu0 0.0
    %8729 = vmatpush1.msra.mxu0 0.0
    %8730 = vmatprep.subr.mxu0 0.0
    %8731 = vmatpush1.msra.mxu0 0.0
    %8732 = vmatprep.subr.mxu0 0.0
    %8733 = vmatpush1.msra.mxu0 0.0
    %8734 = vmatprep.subr.mxu0 0.0
    %8735 = vmatpush1.msra.mxu0 0.0
    %8736 = vmatprep.subr.mxu0 0.0
    %8737 = vmatpush1.msra.mxu0 0.0
    %8738 = vmatprep.subr.mxu0 0.0
    %8739 = vmatpush1.msra.mxu0 0.0
    %8740 = vmatprep.subr.mxu0 0.0
    %8741 = vmatpush1.msra.mxu0 0.0
    %8742 = vmatprep.subr.mxu0 0.0
    %8743 = vmatpush1.msra.mxu0 0.0
    %8744 = vmatprep.subr.mxu0 0.0
    %8745 = vmatpush1.msra.mxu0 0.0
    %8746 = vmatprep.subr.mxu0 0.0
    %8747 = vmatpush1.msra.mxu0 0.0
    %8748 = vmatprep.subr.mxu0 0.0
    %8749 = vmatpush1.msra.mxu0 0.0
    %8750 = vmatprep.subr.mxu0 0.0
    %8751 = vmatpush1.msra.mxu0 0.0
    %8752 = vmatprep.subr.mxu0 0.0
    %8753 = vmatpush1.msra.mxu0 0.0
    %8754 = vmatprep.subr.mxu0 0.0
    %8755 = vmatpush1.msra.mxu0 0.0
    %8756 = vmatprep.subr.mxu0 0.0
    %8757 = vmatpush1.msra.mxu0 0.0
    %8758 = vmatprep.subr.mxu0 0.0
    %8759 = vmatpush1.msra.mxu0 0.0
    %8760 = vmatprep.subr.mxu0 0.0
    %8761 = vmatpush1.msra.mxu0 0.0
    %8762 = vmatprep.subr.mxu0 0.0
    %8763 = vmatpush1.msra.mxu0 0.0
    %8764 = vmatprep.subr.mxu0 0.0
    %8765 = vmatpush1.msra.mxu0 0.0
    %8766 = vmatprep.subr.mxu0 0.0
    %8767 = vmatpush1.msra.mxu0 0.0
    %8768 = vmatprep.subr.mxu0 0.0
    %8769 = vmatpush1.msra.mxu0 0.0
    %8770 = vmatprep.subr.mxu0 0.0
    %8771 = vmatpush1.msra.mxu0 0.0
    %8772 = vmatprep.subr.mxu0 0.0
    %8773 = vmatpush1.msra.mxu0 0.0
    %8774 = vmatprep.subr.mxu0 0.0
    %8775 = vmatpush1.msra.mxu0 0.0
    %8776 = vmatprep.mubr.f32.mxu0 0.0
    %8777 = vmatmul.mubr.f32.gmra.mrb[0].mxu0 %v8710
    %v8778 = vpop.f32.mrb[0].mxu0
    %v8779 = vadd.f32 0.0, %v8778
    %v8780 = vpop.f32.mrb[0].mxu0
    %8781 = vdwg.mxu0
    %8782 = vrot.lane.b32.xlu0 %v6290, 112
    %v8783 = vpop.permute.xlu0 %8782
    %v8786 = vsel %vm1556, %v7716, 0
    %8788 = vmatprep.subr.mxu0 0.0
    %8789 = vmatpush1.msra.mxu0 %v8783
    %8790 = vmatprep.subr.mxu0 0.0
    %8791 = vmatpush1.msra.mxu0 0.0
    %8792 = vmatprep.subr.mxu0 0.0
    %8793 = vmatpush1.msra.mxu0 0.0
    %8794 = vmatprep.subr.mxu0 0.0
    %8795 = vmatpush1.msra.mxu0 0.0
    %8796 = vmatprep.subr.mxu0 0.0
    %8797 = vmatpush1.msra.mxu0 0.0
    %8798 = vmatprep.subr.mxu0 0.0
    %8799 = vmatpush1.msra.mxu0 0.0
    %8800 = vmatprep.subr.mxu0 0.0
    %8801 = vmatpush1.msra.mxu0 0.0
    %8802 = vmatprep.subr.mxu0 0.0
    %8803 = vmatpush1.msra.mxu0 0.0
    %8804 = vmatprep.subr.mxu0 0.0
    %8805 = vmatpush1.msra.mxu0 0.0
    %8806 = vmatprep.subr.mxu0 0.0
    %8807 = vmatpush1.msra.mxu0 0.0
    %8808 = vmatprep.subr.mxu0 0.0
    %8809 = vmatpush1.msra.mxu0 0.0
    %8810 = vmatprep.subr.mxu0 0.0
    %8811 = vmatpush1.msra.mxu0 0.0
    %8812 = vmatprep.subr.mxu0 0.0
    %8813 = vmatpush1.msra.mxu0 0.0
    %8814 = vmatprep.subr.mxu0 0.0
    %8815 = vmatpush1.msra.mxu0 0.0
    %8816 = vmatprep.subr.mxu0 0.0
    %8817 = vmatpush1.msra.mxu0 0.0
    %8818 = vmatprep.subr.mxu0 0.0
    %8819 = vmatpush1.msra.mxu0 0.0
    %8820 = vmatprep.subr.mxu0 0.0
    %8821 = vmatpush1.msra.mxu0 0.0
    %8822 = vmatprep.subr.mxu0 0.0
    %8823 = vmatpush1.msra.mxu0 0.0
    %8824 = vmatprep.subr.mxu0 0.0
    %8825 = vmatpush1.msra.mxu0 0.0
    %8826 = vmatprep.subr.mxu0 0.0
    %8827 = vmatpush1.msra.mxu0 0.0
    %8828 = vmatprep.subr.mxu0 0.0
    %8829 = vmatpush1.msra.mxu0 0.0
    %8830 = vmatprep.subr.mxu0 0.0
    %8831 = vmatpush1.msra.mxu0 0.0
    %8832 = vmatprep.subr.mxu0 0.0
    %8833 = vmatpush1.msra.mxu0 0.0
    %8834 = vmatprep.subr.mxu0 0.0
    %8835 = vmatpush1.msra.mxu0 0.0
    %8836 = vmatprep.subr.mxu0 0.0
    %8837 = vmatpush1.msra.mxu0 0.0
    %8838 = vmatprep.subr.mxu0 0.0
    %8839 = vmatpush1.msra.mxu0 0.0
    %8840 = vmatprep.subr.mxu0 0.0
    %8841 = vmatpush1.msra.mxu0 0.0
    %8842 = vmatprep.subr.mxu0 0.0
    %8843 = vmatpush1.msra.mxu0 0.0
    %8844 = vmatprep.subr.mxu0 0.0
    %8845 = vmatpush1.msra.mxu0 0.0
    %8846 = vmatprep.subr.mxu0 0.0
    %8847 = vmatpush1.msra.mxu0 0.0
    %8848 = vmatprep.subr.mxu0 0.0
    %8849 = vmatpush1.msra.mxu0 0.0
    %8850 = vmatprep.subr.mxu0 0.0
    %8851 = vmatpush1.msra.mxu0 0.0
    %8852 = vmatprep.mubr.f32.mxu0 0.0
    %8853 = vmatmul.mubr.f32.gmra.mrb[0].mxu0 %v8786
    %v8854 = vpop.f32.mrb[0].mxu0
    %v8855 = vadd.f32 0.0, %v8854
    %v8856 = vpop.f32.mrb[0].mxu0
    %8857 = vdwg.mxu0
    %8858 = vrot.lane.b32.xlu0 %v6291, 112
    %v8859 = vpop.permute.xlu0 %8858
    %v8862 = vsel %vm1556, %v7717, 0
    %8864 = vmatprep.subr.mxu0 0.0
    %8865 = vmatpush1.msra.mxu0 %v8859
    %8866 = vmatprep.subr.mxu0 0.0
    %8867 = vmatpush1.msra.mxu0 0.0
    %8868 = vmatprep.subr.mxu0 0.0
    %8869 = vmatpush1.msra.mxu0 0.0
    %8870 = vmatprep.subr.mxu0 0.0
    %8871 = vmatpush1.msra.mxu0 0.0
    %8872 = vmatprep.subr.mxu0 0.0
    %8873 = vmatpush1.msra.mxu0 0.0
    %8874 = vmatprep.subr.mxu0 0.0
    %8875 = vmatpush1.msra.mxu0 0.0
    %8876 = vmatprep.subr.mxu0 0.0
    %8877 = vmatpush1.msra.mxu0 0.0
    %8878 = vmatprep.subr.mxu0 0.0
    %8879 = vmatpush1.msra.mxu0 0.0
    %8880 = vmatprep.subr.mxu0 0.0
    %8881 = vmatpush1.msra.mxu0 0.0
    %8882 = vmatprep.subr.mxu0 0.0
    %8883 = vmatpush1.msra.mxu0 0.0
    %8884 = vmatprep.subr.mxu0 0.0
    %8885 = vmatpush1.msra.mxu0 0.0
    %8886 = vmatprep.subr.mxu0 0.0
    %8887 = vmatpush1.msra.mxu0 0.0
    %8888 = vmatprep.subr.mxu0 0.0
    %8889 = vmatpush1.msra.mxu0 0.0
    %8890 = vmatprep.subr.mxu0 0.0
    %8891 = vmatpush1.msra.mxu0 0.0
    %8892 = vmatprep.subr.mxu0 0.0
    %8893 = vmatpush1.msra.mxu0 0.0
    %8894 = vmatprep.subr.mxu0 0.0
    %8895 = vmatpush1.msra.mxu0 0.0
    %8896 = vmatprep.subr.mxu0 0.0
    %8897 = vmatpush1.msra.mxu0 0.0
    %8898 = vmatprep.subr.mxu0 0.0
    %8899 = vmatpush1.msra.mxu0 0.0
    %8900 = vmatprep.subr.mxu0 0.0
    %8901 = vmatpush1.msra.mxu0 0.0
    %8902 = vmatprep.subr.mxu0 0.0
    %8903 = vmatpush1.msra.mxu0 0.0
    %8904 = vmatprep.subr.mxu0 0.0
    %8905 = vmatpush1.msra.mxu0 0.0
    %8906 = vmatprep.subr.mxu0 0.0
    %8907 = vmatpush1.msra.mxu0 0.0
    %8908 = vmatprep.subr.mxu0 0.0
    %8909 = vmatpush1.msra.mxu0 0.0
    %8910 = vmatprep.subr.mxu0 0.0
    %8911 = vmatpush1.msra.mxu0 0.0
    %8912 = vmatprep.subr.mxu0 0.0
    %8913 = vmatpush1.msra.mxu0 0.0
    %8914 = vmatprep.subr.mxu0 0.0
    %8915 = vmatpush1.msra.mxu0 0.0
    %8916 = vmatprep.subr.mxu0 0.0
    %8917 = vmatpush1.msra.mxu0 0.0
    %8918 = vmatprep.subr.mxu0 0.0
    %8919 = vmatpush1.msra.mxu0 0.0
    %8920 = vmatprep.subr.mxu0 0.0
    %8921 = vmatpush1.msra.mxu0 0.0
    %8922 = vmatprep.subr.mxu0 0.0
    %8923 = vmatpush1.msra.mxu0 0.0
    %8924 = vmatprep.subr.mxu0 0.0
    %8925 = vmatpush1.msra.mxu0 0.0
    %8926 = vmatprep.subr.mxu0 0.0
    %8927 = vmatpush1.msra.mxu0 0.0
    %8928 = vmatprep.mubr.f32.mxu0 0.0
    %8929 = vmatmul.mubr.f32.gmra.mrb[0].mxu0 %v8862
    %v8930 = vpop.f32.mrb[0].mxu0
    %v8931 = vadd.f32 0.0, %v8930
    %v8932 = vpop.f32.mrb[0].mxu0
    %8933 = vdwg.mxu0
    %8934 = vrot.lane.b32.xlu0 %v6148, 124
    %v8935 = vpop.permute.xlu0 %8934
    %8936 = vrot.lane.b32.xlu0 %v6148, 116
    %v8937 = vpop.permute.xlu0 %8936
    %v8938 = vsel %vm280, %v8935, 0
    %v8940 = vsel %vm280, %v8937, 0
    %8942 = vmatprep.subr.mxu0 0.0
    %8943 = vmatpush1.xpose.msra.mxu0 %v8940
    %8944 = vmatprep.subr.mxu0 0.0
    %8945 = vmatpush1.xpose.msra.mxu0 0.0
    %8946 = vmatprep.subr.mxu0 0.0
    %8947 = vmatpush1.xpose.msra.mxu0 0.0
    %8948 = vmatprep.subr.mxu0 0.0
    %8949 = vmatpush1.xpose.msra.mxu0 0.0
    %8950 = vmatprep.subr.mxu0 0.0
    %8951 = vmatpush1.xpose.msra.mxu0 0.0
    %8952 = vmatprep.subr.mxu0 0.0
    %8953 = vmatpush1.xpose.msra.mxu0 0.0
    %8954 = vmatprep.subr.mxu0 0.0
    %8955 = vmatpush1.xpose.msra.mxu0 0.0
    %8956 = vmatprep.subr.mxu0 0.0
    %8957 = vmatpush1.xpose.msra.mxu0 0.0
    %8958 = vmatprep.subr.mxu0 0.0
    %8959 = vmatpush1.xpose.msra.mxu0 0.0
    %8960 = vmatprep.subr.mxu0 0.0
    %8961 = vmatpush1.xpose.msra.mxu0 0.0
    %8962 = vmatprep.subr.mxu0 0.0
    %8963 = vmatpush1.xpose.msra.mxu0 0.0
    %8964 = vmatprep.subr.mxu0 0.0
    %8965 = vmatpush1.xpose.msra.mxu0 0.0
    %8966 = vmatprep.subr.mxu0 0.0
    %8967 = vmatpush1.xpose.msra.mxu0 0.0
    %8968 = vmatprep.subr.mxu0 0.0
    %8969 = vmatpush1.xpose.msra.mxu0 0.0
    %8970 = vmatprep.subr.mxu0 0.0
    %8971 = vmatpush1.xpose.msra.mxu0 0.0
    %8972 = vmatprep.subr.mxu0 0.0
    %8973 = vmatpush1.xpose.msra.mxu0 0.0
    %8974 = vmatprep.subr.mxu0 0.0
    %8975 = vmatpush1.xpose.msra.mxu0 0.0
    %8976 = vmatprep.subr.mxu0 0.0
    %8977 = vmatpush1.xpose.msra.mxu0 0.0
    %8978 = vmatprep.subr.mxu0 0.0
    %8979 = vmatpush1.xpose.msra.mxu0 0.0
    %8980 = vmatprep.subr.mxu0 0.0
    %8981 = vmatpush1.xpose.msra.mxu0 0.0
    %8982 = vmatprep.subr.mxu0 0.0
    %8983 = vmatpush1.xpose.msra.mxu0 0.0
    %8984 = vmatprep.subr.mxu0 0.0
    %8985 = vmatpush1.xpose.msra.mxu0 0.0
    %8986 = vmatprep.subr.mxu0 0.0
    %8987 = vmatpush1.xpose.msra.mxu0 0.0
    %8988 = vmatprep.subr.mxu0 0.0
    %8989 = vmatpush1.xpose.msra.mxu0 0.0
    %8990 = vmatprep.subr.mxu0 0.0
    %8991 = vmatpush1.xpose.msra.mxu0 0.0
    %8992 = vmatprep.subr.mxu0 0.0
    %8993 = vmatpush1.xpose.msra.mxu0 0.0
    %8994 = vmatprep.subr.mxu0 0.0
    %8995 = vmatpush1.xpose.msra.mxu0 0.0
    %8996 = vmatprep.subr.mxu0 0.0
    %8997 = vmatpush1.xpose.msra.mxu0 0.0
    %8998 = vmatprep.subr.mxu0 0.0
    %8999 = vmatpush1.xpose.msra.mxu0 0.0
    %9000 = vmatprep.subr.mxu0 0.0
    %9001 = vmatpush1.xpose.msra.mxu0 0.0
    %9002 = vmatprep.subr.mxu0 0.0
    %9003 = vmatpush1.xpose.msra.mxu0 0.0
    %9004 = vmatprep.subr.mxu0 0.0
    %9005 = vmatpush1.xpose.msra.mxu0 0.0
    %9006 = vmatprep.mubr.f32.mxu0 0.0
    %9007 = vmatmul.mubr.f32.gmra.mrb[0].mxu0 %v8938
    %v9008 = vpop.f32.mrb[0].mxu0
    %v9009 = vadd.f32 0.0, %v9008
    %v9010 = vpop.f32.mrb[0].mxu0
    %9011 = vdwg.mxu0
    %9012 = vrot.lane.b32.xlu0 %v6149, 124
    %v9013 = vpop.permute.xlu0 %9012
    %9014 = vrot.lane.b32.xlu0 %v6149, 116
    %v9015 = vpop.permute.xlu0 %9014
    %v9016 = vsel %vm280, %v9013, 0
    %v9018 = vsel %vm280, %v9015, 0
    %9020 = vmatprep.subr.mxu0 0.0
    %9021 = vmatpush1.xpose.msra.mxu0 %v9018
    %9022 = vmatprep.subr.mxu0 0.0
    %9023 = vmatpush1.xpose.msra.mxu0 0.0
    %9024 = vmatprep.subr.mxu0 0.0
    %9025 = vmatpush1.xpose.msra.mxu0 0.0
    %9026 = vmatprep.subr.mxu0 0.0
    %9027 = vmatpush1.xpose.msra.mxu0 0.0
    %9028 = vmatprep.subr.mxu0 0.0
    %9029 = vmatpush1.xpose.msra.mxu0 0.0
    %9030 = vmatprep.subr.mxu0 0.0
    %9031 = vmatpush1.xpose.msra.mxu0 0.0
    %9032 = vmatprep.subr.mxu0 0.0
    %9033 = vmatpush1.xpose.msra.mxu0 0.0
    %9034 = vmatprep.subr.mxu0 0.0
    %9035 = vmatpush1.xpose.msra.mxu0 0.0
    %9036 = vmatprep.subr.mxu0 0.0
    %9037 = vmatpush1.xpose.msra.mxu0 0.0
    %9038 = vmatprep.subr.mxu0 0.0
    %9039 = vmatpush1.xpose.msra.mxu0 0.0
    %9040 = vmatprep.subr.mxu0 0.0
    %9041 = vmatpush1.xpose.msra.mxu0 0.0
    %9042 = vmatprep.subr.mxu0 0.0
    %9043 = vmatpush1.xpose.msra.mxu0 0.0
    %9044 = vmatprep.subr.mxu0 0.0
    %9045 = vmatpush1.xpose.msra.mxu0 0.0
    %9046 = vmatprep.subr.mxu0 0.0
    %9047 = vmatpush1.xpose.msra.mxu0 0.0
    %9048 = vmatprep.subr.mxu0 0.0
    %9049 = vmatpush1.xpose.msra.mxu0 0.0
    %9050 = vmatprep.subr.mxu0 0.0
    %9051 = vmatpush1.xpose.msra.mxu0 0.0
    %9052 = vmatprep.subr.mxu0 0.0
    %9053 = vmatpush1.xpose.msra.mxu0 0.0
    %9054 = vmatprep.subr.mxu0 0.0
    %9055 = vmatpush1.xpose.msra.mxu0 0.0
    %9056 = vmatprep.subr.mxu0 0.0
    %9057 = vmatpush1.xpose.msra.mxu0 0.0
    %9058 = vmatprep.subr.mxu0 0.0
    %9059 = vmatpush1.xpose.msra.mxu0 0.0
    %9060 = vmatprep.subr.mxu0 0.0
    %9061 = vmatpush1.xpose.msra.mxu0 0.0
    %9062 = vmatprep.subr.mxu0 0.0
    %9063 = vmatpush1.xpose.msra.mxu0 0.0
    %9064 = vmatprep.subr.mxu0 0.0
    %9065 = vmatpush1.xpose.msra.mxu0 0.0
    %9066 = vmatprep.subr.mxu0 0.0
    %9067 = vmatpush1.xpose.msra.mxu0 0.0
    %9068 = vmatprep.subr.mxu0 0.0
    %9069 = vmatpush1.xpose.msra.mxu0 0.0
    %9070 = vmatprep.subr.mxu0 0.0
    %9071 = vmatpush1.xpose.msra.mxu0 0.0
    %9072 = vmatprep.subr.mxu0 0.0
    %9073 = vmatpush1.xpose.msra.mxu0 0.0
    %9074 = vmatprep.subr.mxu0 0.0
    %9075 = vmatpush1.xpose.msra.mxu0 0.0
    %9076 = vmatprep.subr.mxu0 0.0
    %9077 = vmatpush1.xpose.msra.mxu0 0.0
    %9078 = vmatprep.subr.mxu0 0.0
    %9079 = vmatpush1.xpose.msra.mxu0 0.0
    %9080 = vmatprep.subr.mxu0 0.0
    %9081 = vmatpush1.xpose.msra.mxu0 0.0
    %9082 = vmatprep.subr.mxu0 0.0
    %9083 = vmatpush1.xpose.msra.mxu0 0.0
    %9084 = vmatprep.mubr.f32.mxu0 0.0
    %9085 = vmatmul.mubr.f32.gmra.mrb[0].mxu0 %v9016
    %v9086 = vpop.f32.mrb[0].mxu0
    %v9087 = vadd.f32 0.0, %v9086
    %v9088 = vpop.f32.mrb[0].mxu0
    %9089 = vdwg.mxu0
    %9090 = vrot.lane.b32.xlu0 %v6150, 124
    %v9091 = vpop.permute.xlu0 %9090
    %9092 = vrot.lane.b32.xlu0 %v6150, 116
    %v9093 = vpop.permute.xlu0 %9092
    %v9094 = vsel %vm280, %v9091, 0
    %v9096 = vsel %vm280, %v9093, 0
    %9098 = vmatprep.subr.mxu0 0.0
    %9099 = vmatpush1.xpose.msra.mxu0 %v9096
    %9100 = vmatprep.subr.mxu0 0.0
    %9101 = vmatpush1.xpose.msra.mxu0 0.0
    %9102 = vmatprep.subr.mxu0 0.0
    %9103 = vmatpush1.xpose.msra.mxu0 0.0
    %9104 = vmatprep.subr.mxu0 0.0
    %9105 = vmatpush1.xpose.msra.mxu0 0.0
    %9106 = vmatprep.subr.mxu0 0.0
    %9107 = vmatpush1.xpose.msra.mxu0 0.0
    %9108 = vmatprep.subr.mxu0 0.0
    %9109 = vmatpush1.xpose.msra.mxu0 0.0
    %9110 = vmatprep.subr.mxu0 0.0
    %9111 = vmatpush1.xpose.msra.mxu0 0.0
    %9112 = vmatprep.subr.mxu0 0.0
    %9113 = vmatpush1.xpose.msra.mxu0 0.0
    %9114 = vmatprep.subr.mxu0 0.0
    %9115 = vmatpush1.xpose.msra.mxu0 0.0
    %9116 = vmatprep.subr.mxu0 0.0
    %9117 = vmatpush1.xpose.msra.mxu0 0.0
    %9118 = vmatprep.subr.mxu0 0.0
    %9119 = vmatpush1.xpose.msra.mxu0 0.0
    %9120 = vmatprep.subr.mxu0 0.0
    %9121 = vmatpush1.xpose.msra.mxu0 0.0
    %9122 = vmatprep.subr.mxu0 0.0
    %9123 = vmatpush1.xpose.msra.mxu0 0.0
    %9124 = vmatprep.subr.mxu0 0.0
    %9125 = vmatpush1.xpose.msra.mxu0 0.0
    %9126 = vmatprep.subr.mxu0 0.0
    %9127 = vmatpush1.xpose.msra.mxu0 0.0
    %9128 = vmatprep.subr.mxu0 0.0
    %9129 = vmatpush1.xpose.msra.mxu0 0.0
    %9130 = vmatprep.subr.mxu0 0.0
    %9131 = vmatpush1.xpose.msra.mxu0 0.0
    %9132 = vmatprep.subr.mxu0 0.0
    %9133 = vmatpush1.xpose.msra.mxu0 0.0
    %9134 = vmatprep.subr.mxu0 0.0
    %9135 = vmatpush1.xpose.msra.mxu0 0.0
    %9136 = vmatprep.subr.mxu0 0.0
    %9137 = vmatpush1.xpose.msra.mxu0 0.0
    %9138 = vmatprep.subr.mxu0 0.0
    %9139 = vmatpush1.xpose.msra.mxu0 0.0
    %9140 = vmatprep.subr.mxu0 0.0
    %9141 = vmatpush1.xpose.msra.mxu0 0.0
    %9142 = vmatprep.subr.mxu0 0.0
    %9143 = vmatpush1.xpose.msra.mxu0 0.0
    %9144 = vmatprep.subr.mxu0 0.0
    %9145 = vmatpush1.xpose.msra.mxu0 0.0
    %9146 = vmatprep.subr.mxu0 0.0
    %9147 = vmatpush1.xpose.msra.mxu0 0.0
    %9148 = vmatprep.subr.mxu0 0.0
    %9149 = vmatpush1.xpose.msra.mxu0 0.0
    %9150 = vmatprep.subr.mxu0 0.0
    %9151 = vmatpush1.xpose.msra.mxu0 0.0
    %9152 = vmatprep.subr.mxu0 0.0
    %9153 = vmatpush1.xpose.msra.mxu0 0.0
    %9154 = vmatprep.subr.mxu0 0.0
    %9155 = vmatpush1.xpose.msra.mxu0 0.0
    %9156 = vmatprep.subr.mxu0 0.0
    %9157 = vmatpush1.xpose.msra.mxu0 0.0
    %9158 = vmatprep.subr.mxu0 0.0
    %9159 = vmatpush1.xpose.msra.mxu0 0.0
    %9160 = vmatprep.subr.mxu0 0.0
    %9161 = vmatpush1.xpose.msra.mxu0 0.0
    %9162 = vmatprep.mubr.f32.mxu0 0.0
    %9163 = vmatmul.mubr.f32.gmra.mrb[0].mxu0 %v9094
    %v9164 = vpop.f32.mrb[0].mxu0
    %v9165 = vadd.f32 0.0, %v9164
    %v9166 = vpop.f32.mrb[0].mxu0
    %9167 = vdwg.mxu0
    %9168 = vrot.lane.b32.xlu0 %v6151, 124
    %v9169 = vpop.permute.xlu0 %9168
    %9170 = vrot.lane.b32.xlu0 %v6151, 116
    %v9171 = vpop.permute.xlu0 %9170
    %v9172 = vsel %vm280, %v9169, 0
    %v9174 = vsel %vm280, %v9171, 0
    %9176 = vmatprep.subr.mxu0 0.0
    %9177 = vmatpush1.xpose.msra.mxu0 %v9174
    %9178 = vmatprep.subr.mxu0 0.0
    %9179 = vmatpush1.xpose.msra.mxu0 0.0
    %9180 = vmatprep.subr.mxu0 0.0
    %9181 = vmatpush1.xpose.msra.mxu0 0.0
    %9182 = vmatprep.subr.mxu0 0.0
    %9183 = vmatpush1.xpose.msra.mxu0 0.0
    %9184 = vmatprep.subr.mxu0 0.0
    %9185 = vmatpush1.xpose.msra.mxu0 0.0
    %9186 = vmatprep.subr.mxu0 0.0
    %9187 = vmatpush1.xpose.msra.mxu0 0.0
    %9188 = vmatprep.subr.mxu0 0.0
    %9189 = vmatpush1.xpose.msra.mxu0 0.0
    %9190 = vmatprep.subr.mxu0 0.0
    %9191 = vmatpush1.xpose.msra.mxu0 0.0
    %9192 = vmatprep.subr.mxu0 0.0
    %9193 = vmatpush1.xpose.msra.mxu0 0.0
    %9194 = vmatprep.subr.mxu0 0.0
    %9195 = vmatpush1.xpose.msra.mxu0 0.0
    %9196 = vmatprep.subr.mxu0 0.0
    %9197 = vmatpush1.xpose.msra.mxu0 0.0
    %9198 = vmatprep.subr.mxu0 0.0
    %9199 = vmatpush1.xpose.msra.mxu0 0.0
    %9200 = vmatprep.subr.mxu0 0.0
    %9201 = vmatpush1.xpose.msra.mxu0 0.0
    %9202 = vmatprep.subr.mxu0 0.0
    %9203 = vmatpush1.xpose.msra.mxu0 0.0
    %9204 = vmatprep.subr.mxu0 0.0
    %9205 = vmatpush1.xpose.msra.mxu0 0.0
    %9206 = vmatprep.subr.mxu0 0.0
    %9207 = vmatpush1.xpose.msra.mxu0 0.0
    %9208 = vmatprep.subr.mxu0 0.0
    %9209 = vmatpush1.xpose.msra.mxu0 0.0
    %9210 = vmatprep.subr.mxu0 0.0
    %9211 = vmatpush1.xpose.msra.mxu0 0.0
    %9212 = vmatprep.subr.mxu0 0.0
    %9213 = vmatpush1.xpose.msra.mxu0 0.0
    %9214 = vmatprep.subr.mxu0 0.0
    %9215 = vmatpush1.xpose.msra.mxu0 0.0
    %9216 = vmatprep.subr.mxu0 0.0
    %9217 = vmatpush1.xpose.msra.mxu0 0.0
    %9218 = vmatprep.subr.mxu0 0.0
    %9219 = vmatpush1.xpose.msra.mxu0 0.0
    %9220 = vmatprep.subr.mxu0 0.0
    %9221 = vmatpush1.xpose.msra.mxu0 0.0
    %9222 = vmatprep.subr.mxu0 0.0
    %9223 = vmatpush1.xpose.msra.mxu0 0.0
    %9224 = vmatprep.subr.mxu0 0.0
    %9225 = vmatpush1.xpose.msra.mxu0 0.0
    %9226 = vmatprep.subr.mxu0 0.0
    %9227 = vmatpush1.xpose.msra.mxu0 0.0
    %9228 = vmatprep.subr.mxu0 0.0
    %9229 = vmatpush1.xpose.msra.mxu0 0.0
    %9230 = vmatprep.subr.mxu0 0.0
    %9231 = vmatpush1.xpose.msra.mxu0 0.0
    %9232 = vmatprep.subr.mxu0 0.0
    %9233 = vmatpush1.xpose.msra.mxu0 0.0
    %9234 = vmatprep.subr.mxu0 0.0
    %9235 = vmatpush1.xpose.msra.mxu0 0.0
    %9236 = vmatprep.subr.mxu0 0.0
    %9237 = vmatpush1.xpose.msra.mxu0 0.0
    %9238 = vmatprep.subr.mxu0 0.0
    %9239 = vmatpush1.xpose.msra.mxu0 0.0
    %9240 = vmatprep.mubr.f32.mxu0 0.0
    %9241 = vmatmul.mubr.f32.gmra.mrb[0].mxu0 %v9172
    %v9242 = vpop.f32.mrb[0].mxu0
    %v9243 = vadd.f32 0.0, %v9242
    %v9244 = vpop.f32.mrb[0].mxu0
    %9245 = vdwg.mxu0
    %9246 = vrot.lane.b32.xlu0 %v6152, 124
    %v9247 = vpop.permute.xlu0 %9246
    %9248 = vrot.lane.b32.xlu0 %v6152, 116
    %v9249 = vpop.permute.xlu0 %9248
    %v9250 = vsel %vm280, %v9247, 0
    %v9252 = vsel %vm280, %v9249, 0
    %9254 = vmatprep.subr.mxu0 0.0
    %9255 = vmatpush1.xpose.msra.mxu0 %v9252
    %9256 = vmatprep.subr.mxu0 0.0
    %9257 = vmatpush1.xpose.msra.mxu0 0.0
    %9258 = vmatprep.subr.mxu0 0.0
    %9259 = vmatpush1.xpose.msra.mxu0 0.0
    %9260 = vmatprep.subr.mxu0 0.0
    %9261 = vmatpush1.xpose.msra.mxu0 0.0
    %9262 = vmatprep.subr.mxu0 0.0
    %9263 = vmatpush1.xpose.msra.mxu0 0.0
    %9264 = vmatprep.subr.mxu0 0.0
    %9265 = vmatpush1.xpose.msra.mxu0 0.0
    %9266 = vmatprep.subr.mxu0 0.0
    %9267 = vmatpush1.xpose.msra.mxu0 0.0
    %9268 = vmatprep.subr.mxu0 0.0
    %9269 = vmatpush1.xpose.msra.mxu0 0.0
    %9270 = vmatprep.subr.mxu0 0.0
    %9271 = vmatpush1.xpose.msra.mxu0 0.0
    %9272 = vmatprep.subr.mxu0 0.0
    %9273 = vmatpush1.xpose.msra.mxu0 0.0
    %9274 = vmatprep.subr.mxu0 0.0
    %9275 = vmatpush1.xpose.msra.mxu0 0.0
    %9276 = vmatprep.subr.mxu0 0.0
    %9277 = vmatpush1.xpose.msra.mxu0 0.0
    %9278 = vmatprep.subr.mxu0 0.0
    %9279 = vmatpush1.xpose.msra.mxu0 0.0
    %9280 = vmatprep.subr.mxu0 0.0
    %9281 = vmatpush1.xpose.msra.mxu0 0.0
    %9282 = vmatprep.subr.mxu0 0.0
    %9283 = vmatpush1.xpose.msra.mxu0 0.0
    %9284 = vmatprep.subr.mxu0 0.0
    %9285 = vmatpush1.xpose.msra.mxu0 0.0
    %9286 = vmatprep.subr.mxu0 0.0
    %9287 = vmatpush1.xpose.msra.mxu0 0.0
    %9288 = vmatprep.subr.mxu0 0.0
    %9289 = vmatpush1.xpose.msra.mxu0 0.0
    %9290 = vmatprep.subr.mxu0 0.0
    %9291 = vmatpush1.xpose.msra.mxu0 0.0
    %9292 = vmatprep.subr.mxu0 0.0
    %9293 = vmatpush1.xpose.msra.mxu0 0.0
    %9294 = vmatprep.subr.mxu0 0.0
    %9295 = vmatpush1.xpose.msra.mxu0 0.0
    %9296 = vmatprep.subr.mxu0 0.0
    %9297 = vmatpush1.xpose.msra.mxu0 0.0
    %9298 = vmatprep.subr.mxu0 0.0
    %9299 = vmatpush1.xpose.msra.mxu0 0.0
    %9300 = vmatprep.subr.mxu0 0.0
    %9301 = vmatpush1.xpose.msra.mxu0 0.0
    %9302 = vmatprep.subr.mxu0 0.0
    %9303 = vmatpush1.xpose.msra.mxu0 0.0
    %9304 = vmatprep.subr.mxu0 0.0
    %9305 = vmatpush1.xpose.msra.mxu0 0.0
    %9306 = vmatprep.subr.mxu0 0.0
    %9307 = vmatpush1.xpose.msra.mxu0 0.0
    %9308 = vmatprep.subr.mxu0 0.0
    %9309 = vmatpush1.xpose.msra.mxu0 0.0
    %9310 = vmatprep.subr.mxu0 0.0
    %9311 = vmatpush1.xpose.msra.mxu0 0.0
    %9312 = vmatprep.subr.mxu0 0.0
    %9313 = vmatpush1.xpose.msra.mxu0 0.0
    %9314 = vmatprep.subr.mxu0 0.0
    %9315 = vmatpush1.xpose.msra.mxu0 0.0
    %9316 = vmatprep.subr.mxu0 0.0
    %9317 = vmatpush1.xpose.msra.mxu0 0.0
    %9318 = vmatprep.mubr.f32.mxu0 0.0
    %9319 = vmatmul.mubr.f32.gmra.mrb[0].mxu0 %v9250
    %v9320 = vpop.f32.mrb[0].mxu0
    %v9321 = vadd.f32 0.0, %v9320
    %v9322 = vpop.f32.mrb[0].mxu0
    %9323 = vdwg.mxu0
    %9324 = vrot.lane.b32.xlu0 %v6153, 124
    %v9325 = vpop.permute.xlu0 %9324
    %9326 = vrot.lane.b32.xlu0 %v6153, 116
    %v9327 = vpop.permute.xlu0 %9326
    %v9328 = vsel %vm280, %v9325, 0
    %v9330 = vsel %vm280, %v9327, 0
    %9332 = vmatprep.subr.mxu0 0.0
    %9333 = vmatpush1.xpose.msra.mxu0 %v9330
    %9334 = vmatprep.subr.mxu0 0.0
    %9335 = vmatpush1.xpose.msra.mxu0 0.0
    %9336 = vmatprep.subr.mxu0 0.0
    %9337 = vmatpush1.xpose.msra.mxu0 0.0
    %9338 = vmatprep.subr.mxu0 0.0
    %9339 = vmatpush1.xpose.msra.mxu0 0.0
    %9340 = vmatprep.subr.mxu0 0.0
    %9341 = vmatpush1.xpose.msra.mxu0 0.0
    %9342 = vmatprep.subr.mxu0 0.0
    %9343 = vmatpush1.xpose.msra.mxu0 0.0
    %9344 = vmatprep.subr.mxu0 0.0
    %9345 = vmatpush1.xpose.msra.mxu0 0.0
    %9346 = vmatprep.subr.mxu0 0.0
    %9347 = vmatpush1.xpose.msra.mxu0 0.0
    %9348 = vmatprep.subr.mxu0 0.0
    %9349 = vmatpush1.xpose.msra.mxu0 0.0
    %9350 = vmatprep.subr.mxu0 0.0
    %9351 = vmatpush1.xpose.msra.mxu0 0.0
    %9352 = vmatprep.subr.mxu0 0.0
    %9353 = vmatpush1.xpose.msra.mxu0 0.0
    %9354 = vmatprep.subr.mxu0 0.0
    %9355 = vmatpush1.xpose.msra.mxu0 0.0
    %9356 = vmatprep.subr.mxu0 0.0
    %9357 = vmatpush1.xpose.msra.mxu0 0.0
    %9358 = vmatprep.subr.mxu0 0.0
    %9359 = vmatpush1.xpose.msra.mxu0 0.0
    %9360 = vmatprep.subr.mxu0 0.0
    %9361 = vmatpush1.xpose.msra.mxu0 0.0
    %9362 = vmatprep.subr.mxu0 0.0
    %9363 = vmatpush1.xpose.msra.mxu0 0.0
    %9364 = vmatprep.subr.mxu0 0.0
    %9365 = vmatpush1.xpose.msra.mxu0 0.0
    %9366 = vmatprep.subr.mxu0 0.0
    %9367 = vmatpush1.xpose.msra.mxu0 0.0
    %9368 = vmatprep.subr.mxu0 0.0
    %9369 = vmatpush1.xpose.msra.mxu0 0.0
    %9370 = vmatprep.subr.mxu0 0.0
    %9371 = vmatpush1.xpose.msra.mxu0 0.0
    %9372 = vmatprep.subr.mxu0 0.0
    %9373 = vmatpush1.xpose.msra.mxu0 0.0
    %9374 = vmatprep.subr.mxu0 0.0
    %9375 = vmatpush1.xpose.msra.mxu0 0.0
    %9376 = vmatprep.subr.mxu0 0.0
    %9377 = vmatpush1.xpose.msra.mxu0 0.0
    %9378 = vmatprep.subr.mxu0 0.0
    %9379 = vmatpush1.xpose.msra.mxu0 0.0
    %9380 = vmatprep.subr.mxu0 0.0
    %9381 = vmatpush1.xpose.msra.mxu0 0.0
    %9382 = vmatprep.subr.mxu0 0.0
    %9383 = vmatpush1.xpose.msra.mxu0 0.0
    %9384 = vmatprep.subr.mxu0 0.0
    %9385 = vmatpush1.xpose.msra.mxu0 0.0
    %9386 = vmatprep.subr.mxu0 0.0
    %9387 = vmatpush1.xpose.msra.mxu0 0.0
    %9388 = vmatprep.subr.mxu0 0.0
    %9389 = vmatpush1.xpose.msra.mxu0 0.0
    %9390 = vmatprep.subr.mxu0 0.0
    %9391 = vmatpush1.xpose.msra.mxu0 0.0
    %9392 = vmatprep.subr.mxu0 0.0
    %9393 = vmatpush1.xpose.msra.mxu0 0.0
    %9394 = vmatprep.subr.mxu0 0.0
    %9395 = vmatpush1.xpose.msra.mxu0 0.0
    %9396 = vmatprep.mubr.f32.mxu0 0.0
    %9397 = vmatmul.mubr.f32.gmra.mrb[0].mxu0 %v9328
    %v9398 = vpop.f32.mrb[0].mxu0
    %v9399 = vadd.f32 0.0, %v9398
    %v9400 = vpop.f32.mrb[0].mxu0
    %9401 = vdwg.mxu0
    %9402 = vrot.lane.b32.xlu0 %v6154, 124
    %v9403 = vpop.permute.xlu0 %9402
    %9404 = vrot.lane.b32.xlu0 %v6154, 116
    %v9405 = vpop.permute.xlu0 %9404
    %v9406 = vsel %vm280, %v9403, 0
    %v9408 = vsel %vm280, %v9405, 0
    %9410 = vmatprep.subr.mxu0 0.0
    %9411 = vmatpush1.xpose.msra.mxu0 %v9408
    %9412 = vmatprep.subr.mxu0 0.0
    %9413 = vmatpush1.xpose.msra.mxu0 0.0
    %9414 = vmatprep.subr.mxu0 0.0
    %9415 = vmatpush1.xpose.msra.mxu0 0.0
    %9416 = vmatprep.subr.mxu0 0.0
    %9417 = vmatpush1.xpose.msra.mxu0 0.0
    %9418 = vmatprep.subr.mxu0 0.0
    %9419 = vmatpush1.xpose.msra.mxu0 0.0
    %9420 = vmatprep.subr.mxu0 0.0
    %9421 = vmatpush1.xpose.msra.mxu0 0.0
    %9422 = vmatprep.subr.mxu0 0.0
    %9423 = vmatpush1.xpose.msra.mxu0 0.0
    %9424 = vmatprep.subr.mxu0 0.0
    %9425 = vmatpush1.xpose.msra.mxu0 0.0
    %9426 = vmatprep.subr.mxu0 0.0
    %9427 = vmatpush1.xpose.msra.mxu0 0.0
    %9428 = vmatprep.subr.mxu0 0.0
    %9429 = vmatpush1.xpose.msra.mxu0 0.0
    %9430 = vmatprep.subr.mxu0 0.0
    %9431 = vmatpush1.xpose.msra.mxu0 0.0
    %9432 = vmatprep.subr.mxu0 0.0
    %9433 = vmatpush1.xpose.msra.mxu0 0.0
    %9434 = vmatprep.subr.mxu0 0.0
    %9435 = vmatpush1.xpose.msra.mxu0 0.0
    %9436 = vmatprep.subr.mxu0 0.0
    %9437 = vmatpush1.xpose.msra.mxu0 0.0
    %9438 = vmatprep.subr.mxu0 0.0
    %9439 = vmatpush1.xpose.msra.mxu0 0.0
    %9440 = vmatprep.subr.mxu0 0.0
    %9441 = vmatpush1.xpose.msra.mxu0 0.0
    %9442 = vmatprep.subr.mxu0 0.0
    %9443 = vmatpush1.xpose.msra.mxu0 0.0
    %9444 = vmatprep.subr.mxu0 0.0
    %9445 = vmatpush1.xpose.msra.mxu0 0.0
    %9446 = vmatprep.subr.mxu0 0.0
    %9447 = vmatpush1.xpose.msra.mxu0 0.0
    %9448 = vmatprep.subr.mxu0 0.0
    %9449 = vmatpush1.xpose.msra.mxu0 0.0
    %9450 = vmatprep.subr.mxu0 0.0
    %9451 = vmatpush1.xpose.msra.mxu0 0.0
    %9452 = vmatprep.subr.mxu0 0.0
    %9453 = vmatpush1.xpose.msra.mxu0 0.0
    %9454 = vmatprep.subr.mxu0 0.0
    %9455 = vmatpush1.xpose.msra.mxu0 0.0
    %9456 = vmatprep.subr.mxu0 0.0
    %9457 = vmatpush1.xpose.msra.mxu0 0.0
    %9458 = vmatprep.subr.mxu0 0.0
    %9459 = vmatpush1.xpose.msra.mxu0 0.0
    %9460 = vmatprep.subr.mxu0 0.0
    %9461 = vmatpush1.xpose.msra.mxu0 0.0
    %9462 = vmatprep.subr.mxu0 0.0
    %9463 = vmatpush1.xpose.msra.mxu0 0.0
    %9464 = vmatprep.subr.mxu0 0.0
    %9465 = vmatpush1.xpose.msra.mxu0 0.0
    %9466 = vmatprep.subr.mxu0 0.0
    %9467 = vmatpush1.xpose.msra.mxu0 0.0
    %9468 = vmatprep.subr.mxu0 0.0
    %9469 = vmatpush1.xpose.msra.mxu0 0.0
    %9470 = vmatprep.subr.mxu0 0.0
    %9471 = vmatpush1.xpose.msra.mxu0 0.0
    %9472 = vmatprep.subr.mxu0 0.0
    %9473 = vmatpush1.xpose.msra.mxu0 0.0
    %9474 = vmatprep.mubr.f32.mxu0 0.0
    %9475 = vmatmul.mubr.f32.gmra.mrb[0].mxu0 %v9406
    %v9476 = vpop.f32.mrb[0].mxu0
    %v9477 = vadd.f32 0.0, %v9476
    %v9478 = vpop.f32.mrb[0].mxu0
    %9479 = vdwg.mxu0
    %9480 = vrot.lane.b32.xlu0 %v6155, 124
    %v9481 = vpop.permute.xlu0 %9480
    %9482 = vrot.lane.b32.xlu0 %v6155, 116
    %v9483 = vpop.permute.xlu0 %9482
    %v9484 = vsel %vm280, %v9481, 0
    %v9486 = vsel %vm280, %v9483, 0
    %9488 = vmatprep.subr.mxu0 0.0
    %9489 = vmatpush1.xpose.msra.mxu0 %v9486
    %9490 = vmatprep.subr.mxu0 0.0
    %9491 = vmatpush1.xpose.msra.mxu0 0.0
    %9492 = vmatprep.subr.mxu0 0.0
    %9493 = vmatpush1.xpose.msra.mxu0 0.0
    %9494 = vmatprep.subr.mxu0 0.0
    %9495 = vmatpush1.xpose.msra.mxu0 0.0
    %9496 = vmatprep.subr.mxu0 0.0
    %9497 = vmatpush1.xpose.msra.mxu0 0.0
    %9498 = vmatprep.subr.mxu0 0.0
    %9499 = vmatpush1.xpose.msra.mxu0 0.0
    %9500 = vmatprep.subr.mxu0 0.0
    %9501 = vmatpush1.xpose.msra.mxu0 0.0
    %9502 = vmatprep.subr.mxu0 0.0
    %9503 = vmatpush1.xpose.msra.mxu0 0.0
    %9504 = vmatprep.subr.mxu0 0.0
    %9505 = vmatpush1.xpose.msra.mxu0 0.0
    %9506 = vmatprep.subr.mxu0 0.0
    %9507 = vmatpush1.xpose.msra.mxu0 0.0
    %9508 = vmatprep.subr.mxu0 0.0
    %9509 = vmatpush1.xpose.msra.mxu0 0.0
    %9510 = vmatprep.subr.mxu0 0.0
    %9511 = vmatpush1.xpose.msra.mxu0 0.0
    %9512 = vmatprep.subr.mxu0 0.0
    %9513 = vmatpush1.xpose.msra.mxu0 0.0
    %9514 = vmatprep.subr.mxu0 0.0
    %9515 = vmatpush1.xpose.msra.mxu0 0.0
    %9516 = vmatprep.subr.mxu0 0.0
    %9517 = vmatpush1.xpose.msra.mxu0 0.0
    %9518 = vmatprep.subr.mxu0 0.0
    %9519 = vmatpush1.xpose.msra.mxu0 0.0
    %9520 = vmatprep.subr.mxu0 0.0
    %9521 = vmatpush1.xpose.msra.mxu0 0.0
    %9522 = vmatprep.subr.mxu0 0.0
    %9523 = vmatpush1.xpose.msra.mxu0 0.0
    %9524 = vmatprep.subr.mxu0 0.0
    %9525 = vmatpush1.xpose.msra.mxu0 0.0
    %9526 = vmatprep.subr.mxu0 0.0
    %9527 = vmatpush1.xpose.msra.mxu0 0.0
    %9528 = vmatprep.subr.mxu0 0.0
    %9529 = vmatpush1.xpose.msra.mxu0 0.0
    %9530 = vmatprep.subr.mxu0 0.0
    %9531 = vmatpush1.xpose.msra.mxu0 0.0
    %9532 = vmatprep.subr.mxu0 0.0
    %9533 = vmatpush1.xpose.msra.mxu0 0.0
    %9534 = vmatprep.subr.mxu0 0.0
    %9535 = vmatpush1.xpose.msra.mxu0 0.0
    %9536 = vmatprep.subr.mxu0 0.0
    %9537 = vmatpush1.xpose.msra.mxu0 0.0
    %9538 = vmatprep.subr.mxu0 0.0
    %9539 = vmatpush1.xpose.msra.mxu0 0.0
    %9540 = vmatprep.subr.mxu0 0.0
    %9541 = vmatpush1.xpose.msra.mxu0 0.0
    %9542 = vmatprep.subr.mxu0 0.0
    %9543 = vmatpush1.xpose.msra.mxu0 0.0
    %9544 = vmatprep.subr.mxu0 0.0
    %9545 = vmatpush1.xpose.msra.mxu0 0.0
    %9546 = vmatprep.subr.mxu0 0.0
    %9547 = vmatpush1.xpose.msra.mxu0 0.0
    %9548 = vmatprep.subr.mxu0 0.0
    %9549 = vmatpush1.xpose.msra.mxu0 0.0
    %9550 = vmatprep.subr.mxu0 0.0
    %9551 = vmatpush1.xpose.msra.mxu0 0.0
    %9552 = vmatprep.mubr.f32.mxu0 0.0
    %9553 = vmatmul.mubr.f32.gmra.mrb[0].mxu0 %v9484
    %v9554 = vpop.f32.mrb[0].mxu0
    %v9555 = vadd.f32 0.0, %v9554
    %v9556 = vpop.f32.mrb[0].mxu0
    %9557 = vdwg.mxu0
    %9558 = vrot.lane.b32.xlu0 %v6284, 124
    %v9559 = vpop.permute.xlu0 %9558
    %9560 = vrot.lane.b32.xlu0 %v6284, 116
    %v9561 = vpop.permute.xlu0 %9560
    %v9562 = vsel %vm280, %v9559, 0
    %v9564 = vsel %vm280, %v9561, 0
    %9566 = vmatprep.subr.mxu0 0.0
    %9567 = vmatpush1.xpose.msra.mxu0 %v9564
    %9568 = vmatprep.subr.mxu0 0.0
    %9569 = vmatpush1.xpose.msra.mxu0 0.0
    %9570 = vmatprep.subr.mxu0 0.0
    %9571 = vmatpush1.xpose.msra.mxu0 0.0
    %9572 = vmatprep.subr.mxu0 0.0
    %9573 = vmatpush1.xpose.msra.mxu0 0.0
    %9574 = vmatprep.subr.mxu0 0.0
    %9575 = vmatpush1.xpose.msra.mxu0 0.0
    %9576 = vmatprep.subr.mxu0 0.0
    %9577 = vmatpush1.xpose.msra.mxu0 0.0
    %9578 = vmatprep.subr.mxu0 0.0
    %9579 = vmatpush1.xpose.msra.mxu0 0.0
    %9580 = vmatprep.subr.mxu0 0.0
    %9581 = vmatpush1.xpose.msra.mxu0 0.0
    %9582 = vmatprep.subr.mxu0 0.0
    %9583 = vmatpush1.xpose.msra.mxu0 0.0
    %9584 = vmatprep.subr.mxu0 0.0
    %9585 = vmatpush1.xpose.msra.mxu0 0.0
    %9586 = vmatprep.subr.mxu0 0.0
    %9587 = vmatpush1.xpose.msra.mxu0 0.0
    %9588 = vmatprep.subr.mxu0 0.0
    %9589 = vmatpush1.xpose.msra.mxu0 0.0
    %9590 = vmatprep.subr.mxu0 0.0
    %9591 = vmatpush1.xpose.msra.mxu0 0.0
    %9592 = vmatprep.subr.mxu0 0.0
    %9593 = vmatpush1.xpose.msra.mxu0 0.0
    %9594 = vmatprep.subr.mxu0 0.0
    %9595 = vmatpush1.xpose.msra.mxu0 0.0
    %9596 = vmatprep.subr.mxu0 0.0
    %9597 = vmatpush1.xpose.msra.mxu0 0.0
    %9598 = vmatprep.subr.mxu0 0.0
    %9599 = vmatpush1.xpose.msra.mxu0 0.0
    %9600 = vmatprep.subr.mxu0 0.0
    %9601 = vmatpush1.xpose.msra.mxu0 0.0
    %9602 = vmatprep.subr.mxu0 0.0
    %9603 = vmatpush1.xpose.msra.mxu0 0.0
    %9604 = vmatprep.subr.mxu0 0.0
    %9605 = vmatpush1.xpose.msra.mxu0 0.0
    %9606 = vmatprep.subr.mxu0 0.0
    %9607 = vmatpush1.xpose.msra.mxu0 0.0
    %9608 = vmatprep.subr.mxu0 0.0
    %9609 = vmatpush1.xpose.msra.mxu0 0.0
    %9610 = vmatprep.subr.mxu0 0.0
    %9611 = vmatpush1.xpose.msra.mxu0 0.0
    %9612 = vmatprep.subr.mxu0 0.0
    %9613 = vmatpush1.xpose.msra.mxu0 0.0
    %9614 = vmatprep.subr.mxu0 0.0
    %9615 = vmatpush1.xpose.msra.mxu0 0.0
    %9616 = vmatprep.subr.mxu0 0.0
    %9617 = vmatpush1.xpose.msra.mxu0 0.0
    %9618 = vmatprep.subr.mxu0 0.0
    %9619 = vmatpush1.xpose.msra.mxu0 0.0
    %9620 = vmatprep.subr.mxu0 0.0
    %9621 = vmatpush1.xpose.msra.mxu0 0.0
    %9622 = vmatprep.subr.mxu0 0.0
    %9623 = vmatpush1.xpose.msra.mxu0 0.0
    %9624 = vmatprep.subr.mxu0 0.0
    %9625 = vmatpush1.xpose.msra.mxu0 0.0
    %9626 = vmatprep.subr.mxu0 0.0
    %9627 = vmatpush1.xpose.msra.mxu0 0.0
    %9628 = vmatprep.subr.mxu0 0.0
    %9629 = vmatpush1.xpose.msra.mxu0 0.0
    %9630 = vmatprep.mubr.f32.mxu0 0.0
    %9631 = vmatmul.mubr.f32.gmra.mrb[0].mxu0 %v9562
    %v9632 = vpop.f32.mrb[0].mxu0
    %v9633 = vadd.f32 0.0, %v9632
    %v9634 = vpop.f32.mrb[0].mxu0
    %9635 = vdwg.mxu0
    %9636 = vrot.lane.b32.xlu0 %v6285, 124
    %v9637 = vpop.permute.xlu0 %9636
    %9638 = vrot.lane.b32.xlu0 %v6285, 116
    %v9639 = vpop.permute.xlu0 %9638
    %v9640 = vsel %vm280, %v9637, 0
    %v9642 = vsel %vm280, %v9639, 0
    %9644 = vmatprep.subr.mxu0 0.0
    %9645 = vmatpush1.xpose.msra.mxu0 %v9642
    %9646 = vmatprep.subr.mxu0 0.0
    %9647 = vmatpush1.xpose.msra.mxu0 0.0
    %9648 = vmatprep.subr.mxu0 0.0
    %9649 = vmatpush1.xpose.msra.mxu0 0.0
    %9650 = vmatprep.subr.mxu0 0.0
    %9651 = vmatpush1.xpose.msra.mxu0 0.0
    %9652 = vmatprep.subr.mxu0 0.0
    %9653 = vmatpush1.xpose.msra.mxu0 0.0
    %9654 = vmatprep.subr.mxu0 0.0
    %9655 = vmatpush1.xpose.msra.mxu0 0.0
    %9656 = vmatprep.subr.mxu0 0.0
    %9657 = vmatpush1.xpose.msra.mxu0 0.0
    %9658 = vmatprep.subr.mxu0 0.0
    %9659 = vmatpush1.xpose.msra.mxu0 0.0
    %9660 = vmatprep.subr.mxu0 0.0
    %9661 = vmatpush1.xpose.msra.mxu0 0.0
    %9662 = vmatprep.subr.mxu0 0.0
    %9663 = vmatpush1.xpose.msra.mxu0 0.0
    %9664 = vmatprep.subr.mxu0 0.0
    %9665 = vmatpush1.xpose.msra.mxu0 0.0
    %9666 = vmatprep.subr.mxu0 0.0
    %9667 = vmatpush1.xpose.msra.mxu0 0.0
    %9668 = vmatprep.subr.mxu0 0.0
    %9669 = vmatpush1.xpose.msra.mxu0 0.0
    %9670 = vmatprep.subr.mxu0 0.0
    %9671 = vmatpush1.xpose.msra.mxu0 0.0
    %9672 = vmatprep.subr.mxu0 0.0
    %9673 = vmatpush1.xpose.msra.mxu0 0.0
    %9674 = vmatprep.subr.mxu0 0.0
    %9675 = vmatpush1.xpose.msra.mxu0 0.0
    %9676 = vmatprep.subr.mxu0 0.0
    %9677 = vmatpush1.xpose.msra.mxu0 0.0
    %9678 = vmatprep.subr.mxu0 0.0
    %9679 = vmatpush1.xpose.msra.mxu0 0.0
    %9680 = vmatprep.subr.mxu0 0.0
    %9681 = vmatpush1.xpose.msra.mxu0 0.0
    %9682 = vmatprep.subr.mxu0 0.0
    %9683 = vmatpush1.xpose.msra.mxu0 0.0
    %9684 = vmatprep.subr.mxu0 0.0
    %9685 = vmatpush1.xpose.msra.mxu0 0.0
    %9686 = vmatprep.subr.mxu0 0.0
    %9687 = vmatpush1.xpose.msra.mxu0 0.0
    %9688 = vmatprep.subr.mxu0 0.0
    %9689 = vmatpush1.xpose.msra.mxu0 0.0
    %9690 = vmatprep.subr.mxu0 0.0
    %9691 = vmatpush1.xpose.msra.mxu0 0.0
    %9692 = vmatprep.subr.mxu0 0.0
    %9693 = vmatpush1.xpose.msra.mxu0 0.0
    %9694 = vmatprep.subr.mxu0 0.0
    %9695 = vmatpush1.xpose.msra.mxu0 0.0
    %9696 = vmatprep.subr.mxu0 0.0
    %9697 = vmatpush1.xpose.msra.mxu0 0.0
    %9698 = vmatprep.subr.mxu0 0.0
    %9699 = vmatpush1.xpose.msra.mxu0 0.0
    %9700 = vmatprep.subr.mxu0 0.0
    %9701 = vmatpush1.xpose.msra.mxu0 0.0
    %9702 = vmatprep.subr.mxu0 0.0
    %9703 = vmatpush1.xpose.msra.mxu0 0.0
    %9704 = vmatprep.subr.mxu0 0.0
    %9705 = vmatpush1.xpose.msra.mxu0 0.0
    %9706 = vmatprep.subr.mxu0 0.0
    %9707 = vmatpush1.xpose.msra.mxu0 0.0
    %9708 = vmatprep.mubr.f32.mxu0 0.0
    %9709 = vmatmul.mubr.f32.gmra.mrb[0].mxu0 %v9640
    %v9710 = vpop.f32.mrb[0].mxu0
    %v9711 = vadd.f32 0.0, %v9710
    %v9712 = vpop.f32.mrb[0].mxu0
    %9713 = vdwg.mxu0
    %9714 = vrot.lane.b32.xlu0 %v6286, 124
    %v9715 = vpop.permute.xlu0 %9714
    %9716 = vrot.lane.b32.xlu0 %v6286, 116
    %v9717 = vpop.permute.xlu0 %9716
    %v9718 = vsel %vm280, %v9715, 0
    %v9720 = vsel %vm280, %v9717, 0
    %9722 = vmatprep.subr.mxu0 0.0
    %9723 = vmatpush1.xpose.msra.mxu0 %v9720
    %9724 = vmatprep.subr.mxu0 0.0
    %9725 = vmatpush1.xpose.msra.mxu0 0.0
    %9726 = vmatprep.subr.mxu0 0.0
    %9727 = vmatpush1.xpose.msra.mxu0 0.0
    %9728 = vmatprep.subr.mxu0 0.0
    %9729 = vmatpush1.xpose.msra.mxu0 0.0
    %9730 = vmatprep.subr.mxu0 0.0
    %9731 = vmatpush1.xpose.msra.mxu0 0.0
    %9732 = vmatprep.subr.mxu0 0.0
    %9733 = vmatpush1.xpose.msra.mxu0 0.0
    %9734 = vmatprep.subr.mxu0 0.0
    %9735 = vmatpush1.xpose.msra.mxu0 0.0
    %9736 = vmatprep.subr.mxu0 0.0
    %9737 = vmatpush1.xpose.msra.mxu0 0.0
    %9738 = vmatprep.subr.mxu0 0.0
    %9739 = vmatpush1.xpose.msra.mxu0 0.0
    %9740 = vmatprep.subr.mxu0 0.0
    %9741 = vmatpush1.xpose.msra.mxu0 0.0
    %9742 = vmatprep.subr.mxu0 0.0
    %9743 = vmatpush1.xpose.msra.mxu0 0.0
    %9744 = vmatprep.subr.mxu0 0.0
    %9745 = vmatpush1.xpose.msra.mxu0 0.0
    %9746 = vmatprep.subr.mxu0 0.0
    %9747 = vmatpush1.xpose.msra.mxu0 0.0
    %9748 = vmatprep.subr.mxu0 0.0
    %9749 = vmatpush1.xpose.msra.mxu0 0.0
    %9750 = vmatprep.subr.mxu0 0.0
    %9751 = vmatpush1.xpose.msra.mxu0 0.0
    %9752 = vmatprep.subr.mxu0 0.0
    %9753 = vmatpush1.xpose.msra.mxu0 0.0
    %9754 = vmatprep.subr.mxu0 0.0
    %9755 = vmatpush1.xpose.msra.mxu0 0.0
    %9756 = vmatprep.subr.mxu0 0.0
    %9757 = vmatpush1.xpose.msra.mxu0 0.0
    %9758 = vmatprep.subr.mxu0 0.0
    %9759 = vmatpush1.xpose.msra.mxu0 0.0
    %9760 = vmatprep.subr.mxu0 0.0
    %9761 = vmatpush1.xpose.msra.mxu0 0.0
    %9762 = vmatprep.subr.mxu0 0.0
    %9763 = vmatpush1.xpose.msra.mxu0 0.0
    %9764 = vmatprep.subr.mxu0 0.0
    %9765 = vmatpush1.xpose.msra.mxu0 0.0
    %9766 = vmatprep.subr.mxu0 0.0
    %9767 = vmatpush1.xpose.msra.mxu0 0.0
    %9768 = vmatprep.subr.mxu0 0.0
    %9769 = vmatpush1.xpose.msra.mxu0 0.0
    %9770 = vmatprep.subr.mxu0 0.0
    %9771 = vmatpush1.xpose.msra.mxu0 0.0
    %9772 = vmatprep.subr.mxu0 0.0
    %9773 = vmatpush1.xpose.msra.mxu0 0.0
    %9774 = vmatprep.subr.mxu0 0.0
    %9775 = vmatpush1.xpose.msra.mxu0 0.0
    %9776 = vmatprep.subr.mxu0 0.0
    %9777 = vmatpush1.xpose.msra.mxu0 0.0
    %9778 = vmatprep.subr.mxu0 0.0
    %9779 = vmatpush1.xpose.msra.mxu0 0.0
    %9780 = vmatprep.subr.mxu0 0.0
    %9781 = vmatpush1.xpose.msra.mxu0 0.0
    %9782 = vmatprep.subr.mxu0 0.0
    %9783 = vmatpush1.xpose.msra.mxu0 0.0
    %9784 = vmatprep.subr.mxu0 0.0
    %9785 = vmatpush1.xpose.msra.mxu0 0.0
    %9786 = vmatprep.mubr.f32.mxu0 0.0
    %9787 = vmatmul.mubr.f32.gmra.mrb[0].mxu0 %v9718
    %v9788 = vpop.f32.mrb[0].mxu0
    %v9789 = vadd.f32 0.0, %v9788
    %v9790 = vpop.f32.mrb[0].mxu0
    %9791 = vdwg.mxu0
    %9792 = vrot.lane.b32.xlu0 %v6287, 124
    %v9793 = vpop.permute.xlu0 %9792
    %9794 = vrot.lane.b32.xlu0 %v6287, 116
    %v9795 = vpop.permute.xlu0 %9794
    %v9796 = vsel %vm280, %v9793, 0
    %v9798 = vsel %vm280, %v9795, 0
    %9800 = vmatprep.subr.mxu0 0.0
    %9801 = vmatpush1.xpose.msra.mxu0 %v9798
    %9802 = vmatprep.subr.mxu0 0.0
    %9803 = vmatpush1.xpose.msra.mxu0 0.0
    %9804 = vmatprep.subr.mxu0 0.0
    %9805 = vmatpush1.xpose.msra.mxu0 0.0
    %9806 = vmatprep.subr.mxu0 0.0
    %9807 = vmatpush1.xpose.msra.mxu0 0.0
    %9808 = vmatprep.subr.mxu0 0.0
    %9809 = vmatpush1.xpose.msra.mxu0 0.0
    %9810 = vmatprep.subr.mxu0 0.0
    %9811 = vmatpush1.xpose.msra.mxu0 0.0
    %9812 = vmatprep.subr.mxu0 0.0
    %9813 = vmatpush1.xpose.msra.mxu0 0.0
    %9814 = vmatprep.subr.mxu0 0.0
    %9815 = vmatpush1.xpose.msra.mxu0 0.0
    %9816 = vmatprep.subr.mxu0 0.0
    %9817 = vmatpush1.xpose.msra.mxu0 0.0
    %9818 = vmatprep.subr.mxu0 0.0
    %9819 = vmatpush1.xpose.msra.mxu0 0.0
    %9820 = vmatprep.subr.mxu0 0.0
    %9821 = vmatpush1.xpose.msra.mxu0 0.0
    %9822 = vmatprep.subr.mxu0 0.0
    %9823 = vmatpush1.xpose.msra.mxu0 0.0
    %9824 = vmatprep.subr.mxu0 0.0
    %9825 = vmatpush1.xpose.msra.mxu0 0.0
    %9826 = vmatprep.subr.mxu0 0.0
    %9827 = vmatpush1.xpose.msra.mxu0 0.0
    %9828 = vmatprep.subr.mxu0 0.0
    %9829 = vmatpush1.xpose.msra.mxu0 0.0
    %9830 = vmatprep.subr.mxu0 0.0
    %9831 = vmatpush1.xpose.msra.mxu0 0.0
    %9832 = vmatprep.subr.mxu0 0.0
    %9833 = vmatpush1.xpose.msra.mxu0 0.0
    %9834 = vmatprep.subr.mxu0 0.0
    %9835 = vmatpush1.xpose.msra.mxu0 0.0
    %9836 = vmatprep.subr.mxu0 0.0
    %9837 = vmatpush1.xpose.msra.mxu0 0.0
    %9838 = vmatprep.subr.mxu0 0.0
    %9839 = vmatpush1.xpose.msra.mxu0 0.0
    %9840 = vmatprep.subr.mxu0 0.0
    %9841 = vmatpush1.xpose.msra.mxu0 0.0
    %9842 = vmatprep.subr.mxu0 0.0
    %9843 = vmatpush1.xpose.msra.mxu0 0.0
    %9844 = vmatprep.subr.mxu0 0.0
    %9845 = vmatpush1.xpose.msra.mxu0 0.0
    %9846 = vmatprep.subr.mxu0 0.0
    %9847 = vmatpush1.xpose.msra.mxu0 0.0
    %9848 = vmatprep.subr.mxu0 0.0
    %9849 = vmatpush1.xpose.msra.mxu0 0.0
    %9850 = vmatprep.subr.mxu0 0.0
    %9851 = vmatpush1.xpose.msra.mxu0 0.0
    %9852 = vmatprep.subr.mxu0 0.0
    %9853 = vmatpush1.xpose.msra.mxu0 0.0
    %9854 = vmatprep.subr.mxu0 0.0
    %9855 = vmatpush1.xpose.msra.mxu0 0.0
    %9856 = vmatprep.subr.mxu0 0.0
    %9857 = vmatpush1.xpose.msra.mxu0 0.0
    %9858 = vmatprep.subr.mxu0 0.0
    %9859 = vmatpush1.xpose.msra.mxu0 0.0
    %9860 = vmatprep.subr.mxu0 0.0
    %9861 = vmatpush1.xpose.msra.mxu0 0.0
    %9862 = vmatprep.subr.mxu0 0.0
    %9863 = vmatpush1.xpose.msra.mxu0 0.0
    %9864 = vmatprep.mubr.f32.mxu0 0.0
    %9865 = vmatmul.mubr.f32.gmra.mrb[0].mxu0 %v9796
    %v9866 = vpop.f32.mrb[0].mxu0
    %v9867 = vadd.f32 0.0, %v9866
    %v9868 = vpop.f32.mrb[0].mxu0
    %9869 = vdwg.mxu0
    %9870 = vrot.lane.b32.xlu0 %v6288, 124
    %v9871 = vpop.permute.xlu0 %9870
    %9872 = vrot.lane.b32.xlu0 %v6288, 116
    %v9873 = vpop.permute.xlu0 %9872
    %v9874 = vsel %vm280, %v9871, 0
    %v9876 = vsel %vm280, %v9873, 0
    %9878 = vmatprep.subr.mxu0 0.0
    %9879 = vmatpush1.xpose.msra.mxu0 %v9876
    %9880 = vmatprep.subr.mxu0 0.0
    %9881 = vmatpush1.xpose.msra.mxu0 0.0
    %9882 = vmatprep.subr.mxu0 0.0
    %9883 = vmatpush1.xpose.msra.mxu0 0.0
    %9884 = vmatprep.subr.mxu0 0.0
    %9885 = vmatpush1.xpose.msra.mxu0 0.0
    %9886 = vmatprep.subr.mxu0 0.0
    %9887 = vmatpush1.xpose.msra.mxu0 0.0
    %9888 = vmatprep.subr.mxu0 0.0
    %9889 = vmatpush1.xpose.msra.mxu0 0.0
    %9890 = vmatprep.subr.mxu0 0.0
    %9891 = vmatpush1.xpose.msra.mxu0 0.0
    %9892 = vmatprep.subr.mxu0 0.0
    %9893 = vmatpush1.xpose.msra.mxu0 0.0
    %9894 = vmatprep.subr.mxu0 0.0
    %9895 = vmatpush1.xpose.msra.mxu0 0.0
    %9896 = vmatprep.subr.mxu0 0.0
    %9897 = vmatpush1.xpose.msra.mxu0 0.0
    %9898 = vmatprep.subr.mxu0 0.0
    %9899 = vmatpush1.xpose.msra.mxu0 0.0
    %9900 = vmatprep.subr.mxu0 0.0
    %9901 = vmatpush1.xpose.msra.mxu0 0.0
    %9902 = vmatprep.subr.mxu0 0.0
    %9903 = vmatpush1.xpose.msra.mxu0 0.0
    %9904 = vmatprep.subr.mxu0 0.0
    %9905 = vmatpush1.xpose.msra.mxu0 0.0
    %9906 = vmatprep.subr.mxu0 0.0
    %9907 = vmatpush1.xpose.msra.mxu0 0.0
    %9908 = vmatprep.subr.mxu0 0.0
    %9909 = vmatpush1.xpose.msra.mxu0 0.0
    %9910 = vmatprep.subr.mxu0 0.0
    %9911 = vmatpush1.xpose.msra.mxu0 0.0
    %9912 = vmatprep.subr.mxu0 0.0
    %9913 = vmatpush1.xpose.msra.mxu0 0.0
    %9914 = vmatprep.subr.mxu0 0.0
    %9915 = vmatpush1.xpose.msra.mxu0 0.0
    %9916 = vmatprep.subr.mxu0 0.0
    %9917 = vmatpush1.xpose.msra.mxu0 0.0
    %9918 = vmatprep.subr.mxu0 0.0
    %9919 = vmatpush1.xpose.msra.mxu0 0.0
    %9920 = vmatprep.subr.mxu0 0.0
    %9921 = vmatpush1.xpose.msra.mxu0 0.0
    %9922 = vmatprep.subr.mxu0 0.0
    %9923 = vmatpush1.xpose.msra.mxu0 0.0
    %9924 = vmatprep.subr.mxu0 0.0
    %9925 = vmatpush1.xpose.msra.mxu0 0.0
    %9926 = vmatprep.subr.mxu0 0.0
    %9927 = vmatpush1.xpose.msra.mxu0 0.0
    %9928 = vmatprep.subr.mxu0 0.0
    %9929 = vmatpush1.xpose.msra.mxu0 0.0
    %9930 = vmatprep.subr.mxu0 0.0
    %9931 = vmatpush1.xpose.msra.mxu0 0.0
    %9932 = vmatprep.subr.mxu0 0.0
    %9933 = vmatpush1.xpose.msra.mxu0 0.0
    %9934 = vmatprep.subr.mxu0 0.0
    %9935 = vmatpush1.xpose.msra.mxu0 0.0
    %9936 = vmatprep.subr.mxu0 0.0
    %9937 = vmatpush1.xpose.msra.mxu0 0.0
    %9938 = vmatprep.subr.mxu0 0.0
    %9939 = vmatpush1.xpose.msra.mxu0 0.0
    %9940 = vmatprep.subr.mxu0 0.0
    %9941 = vmatpush1.xpose.msra.mxu0 0.0
    %9942 = vmatprep.mubr.f32.mxu0 0.0
    %9943 = vmatmul.mubr.f32.gmra.mrb[0].mxu0 %v9874
    %v9944 = vpop.f32.mrb[0].mxu0
    %v9945 = vadd.f32 0.0, %v9944
    %v9946 = vpop.f32.mrb[0].mxu0
    %9947 = vdwg.mxu0
    %9948 = vrot.lane.b32.xlu0 %v6289, 124
    %v9949 = vpop.permute.xlu0 %9948
    %9950 = vrot.lane.b32.xlu0 %v6289, 116
    %v9951 = vpop.permute.xlu0 %9950
    %v9952 = vsel %vm280, %v9949, 0
    %v9954 = vsel %vm280, %v9951, 0
    %9956 = vmatprep.subr.mxu0 0.0
    %9957 = vmatpush1.xpose.msra.mxu0 %v9954
    %9958 = vmatprep.subr.mxu0 0.0
    %9959 = vmatpush1.xpose.msra.mxu0 0.0
    %9960 = vmatprep.subr.mxu0 0.0
    %9961 = vmatpush1.xpose.msra.mxu0 0.0
    %9962 = vmatprep.subr.mxu0 0.0
    %9963 = vmatpush1.xpose.msra.mxu0 0.0
    %9964 = vmatprep.subr.mxu0 0.0
    %9965 = vmatpush1.xpose.msra.mxu0 0.0
    %9966 = vmatprep.subr.mxu0 0.0
    %9967 = vmatpush1.xpose.msra.mxu0 0.0
    %9968 = vmatprep.subr.mxu0 0.0
    %9969 = vmatpush1.xpose.msra.mxu0 0.0
    %9970 = vmatprep.subr.mxu0 0.0
    %9971 = vmatpush1.xpose.msra.mxu0 0.0
    %9972 = vmatprep.subr.mxu0 0.0
    %9973 = vmatpush1.xpose.msra.mxu0 0.0
    %9974 = vmatprep.subr.mxu0 0.0
    %9975 = vmatpush1.xpose.msra.mxu0 0.0
    %9976 = vmatprep.subr.mxu0 0.0
    %9977 = vmatpush1.xpose.msra.mxu0 0.0
    %9978 = vmatprep.subr.mxu0 0.0
    %9979 = vmatpush1.xpose.msra.mxu0 0.0
    %9980 = vmatprep.subr.mxu0 0.0
    %9981 = vmatpush1.xpose.msra.mxu0 0.0
    %9982 = vmatprep.subr.mxu0 0.0
    %9983 = vmatpush1.xpose.msra.mxu0 0.0
    %9984 = vmatprep.subr.mxu0 0.0
    %9985 = vmatpush1.xpose.msra.mxu0 0.0
    %9986 = vmatprep.subr.mxu0 0.0
    %9987 = vmatpush1.xpose.msra.mxu0 0.0
    %9988 = vmatprep.subr.mxu0 0.0
    %9989 = vmatpush1.xpose.msra.mxu0 0.0
    %9990 = vmatprep.subr.mxu0 0.0
    %9991 = vmatpush1.xpose.msra.mxu0 0.0
    %9992 = vmatprep.subr.mxu0 0.0
    %9993 = vmatpush1.xpose.msra.mxu0 0.0
    %9994 = vmatprep.subr.mxu0 0.0
    %9995 = vmatpush1.xpose.msra.mxu0 0.0
    %9996 = vmatprep.subr.mxu0 0.0
    %9997 = vmatpush1.xpose.msra.mxu0 0.0
    %9998 = vmatprep.subr.mxu0 0.0
    %9999 = vmatpush1.xpose.msra.mxu0 0.0
    %10000 = vmatprep.subr.mxu0 0.0
    %10001 = vmatpush1.xpose.msra.mxu0 0.0
    %10002 = vmatprep.subr.mxu0 0.0
    %10003 = vmatpush1.xpose.msra.mxu0 0.0
    %10004 = vmatprep.subr.mxu0 0.0
    %10005 = vmatpush1.xpose.msra.mxu0 0.0
    %10006 = vmatprep.subr.mxu0 0.0
    %10007 = vmatpush1.xpose.msra.mxu0 0.0
    %10008 = vmatprep.subr.mxu0 0.0
    %10009 = vmatpush1.xpose.msra.mxu0 0.0
    %10010 = vmatprep.subr.mxu0 0.0
    %10011 = vmatpush1.xpose.msra.mxu0 0.0
    %10012 = vmatprep.subr.mxu0 0.0
    %10013 = vmatpush1.xpose.msra.mxu0 0.0
    %10014 = vmatprep.subr.mxu0 0.0
    %10015 = vmatpush1.xpose.msra.mxu0 0.0
    %10016 = vmatprep.subr.mxu0 0.0
    %10017 = vmatpush1.xpose.msra.mxu0 0.0
    %10018 = vmatprep.subr.mxu0 0.0
    %10019 = vmatpush1.xpose.msra.mxu0 0.0
    %10020 = vmatprep.mubr.f32.mxu0 0.0
    %10021 = vmatmul.mubr.f32.gmra.mrb[0].mxu0 %v9952
    %v10022 = vpop.f32.mrb[0].mxu0
    %v10023 = vadd.f32 0.0, %v10022
    %v10024 = vpop.f32.mrb[0].mxu0
    %10025 = vdwg.mxu0
    %10026 = vrot.lane.b32.xlu0 %v6290, 124
    %v10027 = vpop.permute.xlu0 %10026
    %10028 = vrot.lane.b32.xlu0 %v6290, 116
    %v10029 = vpop.permute.xlu0 %10028
    %v10030 = vsel %vm280, %v10027, 0
    %v10032 = vsel %vm280, %v10029, 0
    %10034 = vmatprep.subr.mxu0 0.0
    %10035 = vmatpush1.xpose.msra.mxu0 %v10032
    %10036 = vmatprep.subr.mxu0 0.0
    %10037 = vmatpush1.xpose.msra.mxu0 0.0
    %10038 = vmatprep.subr.mxu0 0.0
    %10039 = vmatpush1.xpose.msra.mxu0 0.0
    %10040 = vmatprep.subr.mxu0 0.0
    %10041 = vmatpush1.xpose.msra.mxu0 0.0
    %10042 = vmatprep.subr.mxu0 0.0
    %10043 = vmatpush1.xpose.msra.mxu0 0.0
    %10044 = vmatprep.subr.mxu0 0.0
    %10045 = vmatpush1.xpose.msra.mxu0 0.0
    %10046 = vmatprep.subr.mxu0 0.0
    %10047 = vmatpush1.xpose.msra.mxu0 0.0
    %10048 = vmatprep.subr.mxu0 0.0
    %10049 = vmatpush1.xpose.msra.mxu0 0.0
    %10050 = vmatprep.subr.mxu0 0.0
    %10051 = vmatpush1.xpose.msra.mxu0 0.0
    %10052 = vmatprep.subr.mxu0 0.0
    %10053 = vmatpush1.xpose.msra.mxu0 0.0
    %10054 = vmatprep.subr.mxu0 0.0
    %10055 = vmatpush1.xpose.msra.mxu0 0.0
    %10056 = vmatprep.subr.mxu0 0.0
    %10057 = vmatpush1.xpose.msra.mxu0 0.0
    %10058 = vmatprep.subr.mxu0 0.0
    %10059 = vmatpush1.xpose.msra.mxu0 0.0
    %10060 = vmatprep.subr.mxu0 0.0
    %10061 = vmatpush1.xpose.msra.mxu0 0.0
    %10062 = vmatprep.subr.mxu0 0.0
    %10063 = vmatpush1.xpose.msra.mxu0 0.0
    %10064 = vmatprep.subr.mxu0 0.0
    %10065 = vmatpush1.xpose.msra.mxu0 0.0
    %10066 = vmatprep.subr.mxu0 0.0
    %10067 = vmatpush1.xpose.msra.mxu0 0.0
    %10068 = vmatprep.subr.mxu0 0.0
    %10069 = vmatpush1.xpose.msra.mxu0 0.0
    %10070 = vmatprep.subr.mxu0 0.0
    %10071 = vmatpush1.xpose.msra.mxu0 0.0
    %10072 = vmatprep.subr.mxu0 0.0
    %10073 = vmatpush1.xpose.msra.mxu0 0.0
    %10074 = vmatprep.subr.mxu0 0.0
    %10075 = vmatpush1.xpose.msra.mxu0 0.0
    %10076 = vmatprep.subr.mxu0 0.0
    %10077 = vmatpush1.xpose.msra.mxu0 0.0
    %10078 = vmatprep.subr.mxu0 0.0
    %10079 = vmatpush1.xpose.msra.mxu0 0.0
    %10080 = vmatprep.subr.mxu0 0.0
    %10081 = vmatpush1.xpose.msra.mxu0 0.0
    %10082 = vmatprep.subr.mxu0 0.0
    %10083 = vmatpush1.xpose.msra.mxu0 0.0
    %10084 = vmatprep.subr.mxu0 0.0
    %10085 = vmatpush1.xpose.msra.mxu0 0.0
    %10086 = vmatprep.subr.mxu0 0.0
    %10087 = vmatpush1.xpose.msra.mxu0 0.0
    %10088 = vmatprep.subr.mxu0 0.0
    %10089 = vmatpush1.xpose.msra.mxu0 0.0
    %10090 = vmatprep.subr.mxu0 0.0
    %10091 = vmatpush1.xpose.msra.mxu0 0.0
    %10092 = vmatprep.subr.mxu0 0.0
    %10093 = vmatpush1.xpose.msra.mxu0 0.0
    %10094 = vmatprep.subr.mxu0 0.0
    %10095 = vmatpush1.xpose.msra.mxu0 0.0
    %10096 = vmatprep.subr.mxu0 0.0
    %10097 = vmatpush1.xpose.msra.mxu0 0.0
    %10098 = vmatprep.mubr.f32.mxu0 0.0
    %10099 = vmatmul.mubr.f32.gmra.mrb[0].mxu0 %v10030
    %v10100 = vpop.f32.mrb[0].mxu0
    %v10101 = vadd.f32 0.0, %v10100
    %v10102 = vpop.f32.mrb[0].mxu0
    %10103 = vdwg.mxu0
    %10104 = vrot.lane.b32.xlu0 %v6291, 124
    %v10105 = vpop.permute.xlu0 %10104
    %10106 = vrot.lane.b32.xlu0 %v6291, 116
    %v10107 = vpop.permute.xlu0 %10106
    %v10108 = vsel %vm280, %v10105, 0
    %v10110 = vsel %vm280, %v10107, 0
    %10112 = vmatprep.subr.mxu0 0.0
    %10113 = vmatpush1.xpose.msra.mxu0 %v10110
    %10114 = vmatprep.subr.mxu0 0.0
    %10115 = vmatpush1.xpose.msra.mxu0 0.0
    %10116 = vmatprep.subr.mxu0 0.0
    %10117 = vmatpush1.xpose.msra.mxu0 0.0
    %10118 = vmatprep.subr.mxu0 0.0
    %10119 = vmatpush1.xpose.msra.mxu0 0.0
    %10120 = vmatprep.subr.mxu0 0.0
    %10121 = vmatpush1.xpose.msra.mxu0 0.0
    %10122 = vmatprep.subr.mxu0 0.0
    %10123 = vmatpush1.xpose.msra.mxu0 0.0
    %10124 = vmatprep.subr.mxu0 0.0
    %10125 = vmatpush1.xpose.msra.mxu0 0.0
    %10126 = vmatprep.subr.mxu0 0.0
    %10127 = vmatpush1.xpose.msra.mxu0 0.0
    %10128 = vmatprep.subr.mxu0 0.0
    %10129 = vmatpush1.xpose.msra.mxu0 0.0
    %10130 = vmatprep.subr.mxu0 0.0
    %10131 = vmatpush1.xpose.msra.mxu0 0.0
    %10132 = vmatprep.subr.mxu0 0.0
    %10133 = vmatpush1.xpose.msra.mxu0 0.0
    %10134 = vmatprep.subr.mxu0 0.0
    %10135 = vmatpush1.xpose.msra.mxu0 0.0
    %10136 = vmatprep.subr.mxu0 0.0
    %10137 = vmatpush1.xpose.msra.mxu0 0.0
    %10138 = vmatprep.subr.mxu0 0.0
    %10139 = vmatpush1.xpose.msra.mxu0 0.0
    %10140 = vmatprep.subr.mxu0 0.0
    %10141 = vmatpush1.xpose.msra.mxu0 0.0
    %10142 = vmatprep.subr.mxu0 0.0
    %10143 = vmatpush1.xpose.msra.mxu0 0.0
    %10144 = vmatprep.subr.mxu0 0.0
    %10145 = vmatpush1.xpose.msra.mxu0 0.0
    %10146 = vmatprep.subr.mxu0 0.0
    %10147 = vmatpush1.xpose.msra.mxu0 0.0
    %10148 = vmatprep.subr.mxu0 0.0
    %10149 = vmatpush1.xpose.msra.mxu0 0.0
    %10150 = vmatprep.subr.mxu0 0.0
    %10151 = vmatpush1.xpose.msra.mxu0 0.0
    %10152 = vmatprep.subr.mxu0 0.0
    %10153 = vmatpush1.xpose.msra.mxu0 0.0
    %10154 = vmatprep.subr.mxu0 0.0
    %10155 = vmatpush1.xpose.msra.mxu0 0.0
    %10156 = vmatprep.subr.mxu0 0.0
    %10157 = vmatpush1.xpose.msra.mxu0 0.0
    %10158 = vmatprep.subr.mxu0 0.0
    %10159 = vmatpush1.xpose.msra.mxu0 0.0
    %10160 = vmatprep.subr.mxu0 0.0
    %10161 = vmatpush1.xpose.msra.mxu0 0.0
    %10162 = vmatprep.subr.mxu0 0.0
    %10163 = vmatpush1.xpose.msra.mxu0 0.0
    %10164 = vmatprep.subr.mxu0 0.0
    %10165 = vmatpush1.xpose.msra.mxu0 0.0
    %10166 = vmatprep.subr.mxu0 0.0
    %10167 = vmatpush1.xpose.msra.mxu0 0.0
    %10168 = vmatprep.subr.mxu0 0.0
    %10169 = vmatpush1.xpose.msra.mxu0 0.0
    %10170 = vmatprep.subr.mxu0 0.0
    %10171 = vmatpush1.xpose.msra.mxu0 0.0
    %10172 = vmatprep.subr.mxu0 0.0
    %10173 = vmatpush1.xpose.msra.mxu0 0.0
    %10174 = vmatprep.subr.mxu0 0.0
    %10175 = vmatpush1.xpose.msra.mxu0 0.0
    %10176 = vmatprep.mubr.f32.mxu0 0.0
    %10177 = vmatmul.mubr.f32.gmra.mrb[0].mxu0 %v10108
    %v10178 = vpop.f32.mrb[0].mxu0
    %v10179 = vadd.f32 0.0, %v10178
    %v10180 = vpop.f32.mrb[0].mxu0
    %10181 = vdwg.mxu0
    %v10182 = vmul.f32 %v9009, 0.5
    %v10183 = vmul.f32 %v9087, 0.5
    %v10184 = vmul.f32 %v9165, 0.5
    %v10185 = vmul.f32 %v9243, 0.5
    %v10186 = vmul.f32 %v9321, 0.5
    %v10187 = vmul.f32 %v9399, 0.5
    %v10188 = vmul.f32 %v9477, 0.5
    %v10189 = vmul.f32 %v9555, 0.5
    %v10190 = vmul.f32 %v9633, 0.5
    %v10191 = vmul.f32 %v9711, 0.5
    %v10192 = vmul.f32 %v9789, 0.5
    %v10193 = vmul.f32 %v9867, 0.5
    %v10194 = vmul.f32 %v9945, 0.5
    %v10195 = vmul.f32 %v10023, 0.5
    %v10196 = vmul.f32 %v10101, 0.5
    %v10197 = vmul.f32 %v10179, 0.5
    %v10198 = vsel %vm1556, %v10182, -inf
    %10199 = vmax.xlane.f32.xlu0 %v10198
    %v10200 = vpop.xlane.xlu0 %10199
    %v10201 = vsel %vm1556, %v10183, -inf
    %10202 = vmax.xlane.f32.xlu0 %v10201
    %v10203 = vpop.xlane.xlu0 %10202
    %v10204 = vsel %vm1556, %v10184, -inf
    %10205 = vmax.xlane.f32.xlu0 %v10204
    %v10206 = vpop.xlane.xlu0 %10205
    %v10207 = vsel %vm1556, %v10185, -inf
    %10208 = vmax.xlane.f32.xlu0 %v10207
    %v10209 = vpop.xlane.xlu0 %10208
    %v10210 = vsel %vm1556, %v10186, -inf
    %10211 = vmax.xlane.f32.xlu0 %v10210
    %v10212 = vpop.xlane.xlu0 %10211
    %v10213 = vsel %vm1556, %v10187, -inf
    %10214 = vmax.xlane.f32.xlu0 %v10213
    %v10215 = vpop.xlane.xlu0 %10214
    %v10216 = vsel %vm1556, %v10188, -inf
    %10217 = vmax.xlane.f32.xlu0 %v10216
    %v10218 = vpop.xlane.xlu0 %10217
    %v10219 = vsel %vm1556, %v10189, -inf
    %10220 = vmax.xlane.f32.xlu0 %v10219
    %v10221 = vpop.xlane.xlu0 %10220
    %v10222 = vsel %vm1556, %v10190, -inf
    %10223 = vmax.xlane.f32.xlu0 %v10222
    %v10224 = vpop.xlane.xlu0 %10223
    %v10225 = vsel %vm1556, %v10191, -inf
    %10226 = vmax.xlane.f32.xlu0 %v10225
    %v10227 = vpop.xlane.xlu0 %10226
    %v10228 = vsel %vm1556, %v10192, -inf
    %10229 = vmax.xlane.f32.xlu0 %v10228
    %v10230 = vpop.xlane.xlu0 %10229
    %v10231 = vsel %vm1556, %v10193, -inf
    %10232 = vmax.xlane.f32.xlu0 %v10231
    %v10233 = vpop.xlane.xlu0 %10232
    %v10234 = vsel %vm1556, %v10194, -inf
    %10235 = vmax.xlane.f32.xlu0 %v10234
    %v10236 = vpop.xlane.xlu0 %10235
    %v10237 = vsel %vm1556, %v10195, -inf
    %10238 = vmax.xlane.f32.xlu0 %v10237
    %v10239 = vpop.xlane.xlu0 %10238
    %v10240 = vsel %vm1556, %v10196, -inf
    %10241 = vmax.xlane.f32.xlu0 %v10240
    %v10242 = vpop.xlane.xlu0 %10241
    %v10243 = vsel %vm1556, %v10197, -inf
    %10244 = vmax.xlane.f32.xlu0 %v10243
    %v10245 = vpop.xlane.xlu0 %10244
    %v10246 = vsub.f32 %v10182, %v10200
    %v10247 = vsub.f32 %v10183, %v10203
    %v10248 = vsub.f32 %v10184, %v10206
    %v10249 = vsub.f32 %v10185, %v10209
    %v10250 = vsub.f32 %v10186, %v10212
    %v10251 = vsub.f32 %v10187, %v10215
    %v10252 = vsub.f32 %v10188, %v10218
    %v10253 = vsub.f32 %v10189, %v10221
    %v10254 = vsub.f32 %v10190, %v10224
    %v10255 = vsub.f32 %v10191, %v10227
    %v10256 = vsub.f32 %v10192, %v10230
    %v10257 = vsub.f32 %v10193, %v10233
    %v10258 = vsub.f32 %v10194, %v10236
    %v10259 = vsub.f32 %v10195, %v10239
    %v10260 = vsub.f32 %v10196, %v10242
    %v10261 = vsub.f32 %v10197, %v10245
    %v10262 = vmul.f32 %v10246, 1.442695
    %v10263 = vpow.pop %v10262
    %v10264 = vmul.f32 %v10247, 1.442695
    %v10265 = vpow.pop %v10264
    %v10266 = vmul.f32 %v10248, 1.442695
    %v10267 = vpow.pop %v10266
    %v10268 = vmul.f32 %v10249, 1.442695
    %v10269 = vpow.pop %v10268
    %v10270 = vmul.f32 %v10250, 1.442695
    %v10271 = vpow.pop %v10270
    %v10272 = vmul.f32 %v10251, 1.442695
    %v10273 = vpow.pop %v10272
    %v10274 = vmul.f32 %v10252, 1.442695
    %v10275 = vpow.pop %v10274
    %v10276 = vmul.f32 %v10253, 1.442695
    %v10277 = vpow.pop %v10276
    %v10278 = vmul.f32 %v10254, 1.442695
    %v10279 = vpow.pop %v10278
    %v10280 = vmul.f32 %v10255, 1.442695
    %v10281 = vpow.pop %v10280
    %v10282 = vmul.f32 %v10256, 1.442695
    %v10283 = vpow.pop %v10282
    %v10284 = vmul.f32 %v10257, 1.442695
    %v10285 = vpow.pop %v10284
    %v10286 = vmul.f32 %v10258, 1.442695
    %v10287 = vpow.pop %v10286
    %v10288 = vmul.f32 %v10259, 1.442695
    %v10289 = vpow.pop %v10288
    %v10290 = vmul.f32 %v10260, 1.442695
    %v10291 = vpow.pop %v10290
    %v10292 = vmul.f32 %v10261, 1.442695
    %v10293 = vpow.pop %v10292
    %v10294 = vsel %vm1556, %v10263, 0.0
    %10295 = vadd.xlane.f32.xlu0 %v10294
    %v10296 = vpop.xlane.xlu0 %10295
    %v10297 = vsel %vm1556, %v10265, 0.0
    %10298 = vadd.xlane.f32.xlu0 %v10297
    %v10299 = vpop.xlane.xlu0 %10298
    %v10300 = vsel %vm1556, %v10267, 0.0
    %10301 = vadd.xlane.f32.xlu0 %v10300
    %v10302 = vpop.xlane.xlu0 %10301
    %v10303 = vsel %vm1556, %v10269, 0.0
    %10304 = vadd.xlane.f32.xlu0 %v10303
    %v10305 = vpop.xlane.xlu0 %10304
    %v10306 = vsel %vm1556, %v10271, 0.0
    %10307 = vadd.xlane.f32.xlu0 %v10306
    %v10308 = vpop.xlane.xlu0 %10307
    %v10309 = vsel %vm1556, %v10273, 0.0
    %10310 = vadd.xlane.f32.xlu0 %v10309
    %v10311 = vpop.xlane.xlu0 %10310
    %v10312 = vsel %vm1556, %v10275, 0.0
    %10313 = vadd.xlane.f32.xlu0 %v10312
    %v10314 = vpop.xlane.xlu0 %10313
    %v10315 = vsel %vm1556, %v10277, 0.0
    %10316 = vadd.xlane.f32.xlu0 %v10315
    %v10317 = vpop.xlane.xlu0 %10316
    %v10318 = vsel %vm1556, %v10279, 0.0
    %10319 = vadd.xlane.f32.xlu0 %v10318
    %v10320 = vpop.xlane.xlu0 %10319
    %v10321 = vsel %vm1556, %v10281, 0.0
    %10322 = vadd.xlane.f32.xlu0 %v10321
    %v10323 = vpop.xlane.xlu0 %10322
    %v10324 = vsel %vm1556, %v10283, 0.0
    %10325 = vadd.xlane.f32.xlu0 %v10324
    %v10326 = vpop.xlane.xlu0 %10325
    %v10327 = vsel %vm1556, %v10285, 0.0
    %10328 = vadd.xlane.f32.xlu0 %v10327
    %v10329 = vpop.xlane.xlu0 %10328
    %v10330 = vsel %vm1556, %v10287, 0.0
    %10331 = vadd.xlane.f32.xlu0 %v10330
    %v10332 = vpop.xlane.xlu0 %10331
    %v10333 = vsel %vm1556, %v10289, 0.0
    %10334 = vadd.xlane.f32.xlu0 %v10333
    %v10335 = vpop.xlane.xlu0 %10334
    %v10336 = vsel %vm1556, %v10291, 0.0
    %10337 = vadd.xlane.f32.xlu0 %v10336
    %v10338 = vpop.xlane.xlu0 %10337
    %v10339 = vsel %vm1556, %v10293, 0.0
    %10340 = vadd.xlane.f32.xlu0 %v10339
    %v10341 = vpop.xlane.xlu0 %10340
    %v10342 = vrcp.pop %v10296
    %v10343 = vrcp.pop %v10299
    %v10344 = vrcp.pop %v10302
    %v10345 = vrcp.pop %v10305
    %v10346 = vrcp.pop %v10308
    %v10347 = vrcp.pop %v10311
    %v10348 = vrcp.pop %v10314
    %v10349 = vrcp.pop %v10317
    %v10350 = vrcp.pop %v10320
    %v10351 = vrcp.pop %v10323
    %v10352 = vrcp.pop %v10326
    %v10353 = vrcp.pop %v10329
    %v10354 = vrcp.pop %v10332
    %v10355 = vrcp.pop %v10335
    %v10356 = vrcp.pop %v10338
    %v10357 = vrcp.pop %v10341
    %v10358 = vmul.f32 %v10263, %v10342
    %v10359 = vmul.f32 %v10265, %v10343
    %v10360 = vmul.f32 %v10267, %v10344
    %v10361 = vmul.f32 %v10269, %v10345
    %v10362 = vmul.f32 %v10271, %v10346
    %v10363 = vmul.f32 %v10273, %v10347
    %v10364 = vmul.f32 %v10275, %v10348
    %v10365 = vmul.f32 %v10277, %v10349
    %v10366 = vmul.f32 %v10279, %v10350
    %v10367 = vmul.f32 %v10281, %v10351
    %v10368 = vmul.f32 %v10283, %v10352
    %v10369 = vmul.f32 %v10285, %v10353
    %v10370 = vmul.f32 %v10287, %v10354
    %v10371 = vmul.f32 %v10289, %v10355
    %v10372 = vmul.f32 %v10291, %v10356
    %v10373 = vmul.f32 %v10293, %v10357
    %10374 = vrot.lane.b32.xlu0 %v6148, 108
    %v10375 = vpop.permute.xlu0 %10374
    %v10378 = vsel %vm1556, %v10358, 0
    %10380 = vmatprep.subr.mxu0 0.0
    %10381 = vmatpush1.msra.mxu0 %v10375
    %10382 = vmatprep.subr.mxu0 0.0
    %10383 = vmatpush1.msra.mxu0 0.0
    %10384 = vmatprep.subr.mxu0 0.0
    %10385 = vmatpush1.msra.mxu0 0.0
    %10386 = vmatprep.subr.mxu0 0.0
    %10387 = vmatpush1.msra.mxu0 0.0
    %10388 = vmatprep.subr.mxu0 0.0
    %10389 = vmatpush1.msra.mxu0 0.0
    %10390 = vmatprep.subr.mxu0 0.0
    %10391 = vmatpush1.msra.mxu0 0.0
    %10392 = vmatprep.subr.mxu0 0.0
    %10393 = vmatpush1.msra.mxu0 0.0
    %10394 = vmatprep.subr.mxu0 0.0
    %10395 = vmatpush1.msra.mxu0 0.0
    %10396 = vmatprep.subr.mxu0 0.0
    %10397 = vmatpush1.msra.mxu0 0.0
    %10398 = vmatprep.subr.mxu0 0.0
    %10399 = vmatpush1.msra.mxu0 0.0
    %10400 = vmatprep.subr.mxu0 0.0
    %10401 = vmatpush1.msra.mxu0 0.0
    %10402 = vmatprep.subr.mxu0 0.0
    %10403 = vmatpush1.msra.mxu0 0.0
    %10404 = vmatprep.subr.mxu0 0.0
    %10405 = vmatpush1.msra.mxu0 0.0
    %10406 = vmatprep.subr.mxu0 0.0
    %10407 = vmatpush1.msra.mxu0 0.0
    %10408 = vmatprep.subr.mxu0 0.0
    %10409 = vmatpush1.msra.mxu0 0.0
    %10410 = vmatprep.subr.mxu0 0.0
    %10411 = vmatpush1.msra.mxu0 0.0
    %10412 = vmatprep.subr.mxu0 0.0
    %10413 = vmatpush1.msra.mxu0 0.0
    %10414 = vmatprep.subr.mxu0 0.0
    %10415 = vmatpush1.msra.mxu0 0.0
    %10416 = vmatprep.subr.mxu0 0.0
    %10417 = vmatpush1.msra.mxu0 0.0
    %10418 = vmatprep.subr.mxu0 0.0
    %10419 = vmatpush1.msra.mxu0 0.0
    %10420 = vmatprep.subr.mxu0 0.0
    %10421 = vmatpush1.msra.mxu0 0.0
    %10422 = vmatprep.subr.mxu0 0.0
    %10423 = vmatpush1.msra.mxu0 0.0
    %10424 = vmatprep.subr.mxu0 0.0
    %10425 = vmatpush1.msra.mxu0 0.0
    %10426 = vmatprep.subr.mxu0 0.0
    %10427 = vmatpush1.msra.mxu0 0.0
    %10428 = vmatprep.subr.mxu0 0.0
    %10429 = vmatpush1.msra.mxu0 0.0
    %10430 = vmatprep.subr.mxu0 0.0
    %10431 = vmatpush1.msra.mxu0 0.0
    %10432 = vmatprep.subr.mxu0 0.0
    %10433 = vmatpush1.msra.mxu0 0.0
    %10434 = vmatprep.subr.mxu0 0.0
    %10435 = vmatpush1.msra.mxu0 0.0
    %10436 = vmatprep.subr.mxu0 0.0
    %10437 = vmatpush1.msra.mxu0 0.0
    %10438 = vmatprep.subr.mxu0 0.0
    %10439 = vmatpush1.msra.mxu0 0.0
    %10440 = vmatprep.subr.mxu0 0.0
    %10441 = vmatpush1.msra.mxu0 0.0
    %10442 = vmatprep.subr.mxu0 0.0
    %10443 = vmatpush1.msra.mxu0 0.0
    %10444 = vmatprep.mubr.f32.mxu0 0.0
    %10445 = vmatmul.mubr.f32.gmra.mrb[0].mxu0 %v10378
    %v10446 = vpop.f32.mrb[0].mxu0
    %v10447 = vadd.f32 0.0, %v10446
    %v10448 = vpop.f32.mrb[0].mxu0
    %10449 = vdwg.mxu0
    %10450 = vrot.lane.b32.xlu0 %v6149, 108
    %v10451 = vpop.permute.xlu0 %10450
    %v10454 = vsel %vm1556, %v10359, 0
    %10456 = vmatprep.subr.mxu0 0.0
    %10457 = vmatpush1.msra.mxu0 %v10451
    %10458 = vmatprep.subr.mxu0 0.0
    %10459 = vmatpush1.msra.mxu0 0.0
    %10460 = vmatprep.subr.mxu0 0.0
    %10461 = vmatpush1.msra.mxu0 0.0
    %10462 = vmatprep.subr.mxu0 0.0
    %10463 = vmatpush1.msra.mxu0 0.0
    %10464 = vmatprep.subr.mxu0 0.0
    %10465 = vmatpush1.msra.mxu0 0.0
    %10466 = vmatprep.subr.mxu0 0.0
    %10467 = vmatpush1.msra.mxu0 0.0
    %10468 = vmatprep.subr.mxu0 0.0
    %10469 = vmatpush1.msra.mxu0 0.0
    %10470 = vmatprep.subr.mxu0 0.0
    %10471 = vmatpush1.msra.mxu0 0.0
    %10472 = vmatprep.subr.mxu0 0.0
    %10473 = vmatpush1.msra.mxu0 0.0
    %10474 = vmatprep.subr.mxu0 0.0
    %10475 = vmatpush1.msra.mxu0 0.0
    %10476 = vmatprep.subr.mxu0 0.0
    %10477 = vmatpush1.msra.mxu0 0.0
    %10478 = vmatprep.subr.mxu0 0.0
    %10479 = vmatpush1.msra.mxu0 0.0
    %10480 = vmatprep.subr.mxu0 0.0
    %10481 = vmatpush1.msra.mxu0 0.0
    %10482 = vmatprep.subr.mxu0 0.0
    %10483 = vmatpush1.msra.mxu0 0.0
    %10484 = vmatprep.subr.mxu0 0.0
    %10485 = vmatpush1.msra.mxu0 0.0
    %10486 = vmatprep.subr.mxu0 0.0
    %10487 = vmatpush1.msra.mxu0 0.0
    %10488 = vmatprep.subr.mxu0 0.0
    %10489 = vmatpush1.msra.mxu0 0.0
    %10490 = vmatprep.subr.mxu0 0.0
    %10491 = vmatpush1.msra.mxu0 0.0
    %10492 = vmatprep.subr.mxu0 0.0
    %10493 = vmatpush1.msra.mxu0 0.0
    %10494 = vmatprep.subr.mxu0 0.0
    %10495 = vmatpush1.msra.mxu0 0.0
    %10496 = vmatprep.subr.mxu0 0.0
    %10497 = vmatpush1.msra.mxu0 0.0
    %10498 = vmatprep.subr.mxu0 0.0
    %10499 = vmatpush1.msra.mxu0 0.0
    %10500 = vmatprep.subr.mxu0 0.0
    %10501 = vmatpush1.msra.mxu0 0.0
    %10502 = vmatprep.subr.mxu0 0.0
    %10503 = vmatpush1.msra.mxu0 0.0
    %10504 = vmatprep.subr.mxu0 0.0
    %10505 = vmatpush1.msra.mxu0 0.0
    %10506 = vmatprep.subr.mxu0 0.0
    %10507 = vmatpush1.msra.mxu0 0.0
    %10508 = vmatprep.subr.mxu0 0.0
    %10509 = vmatpush1.msra.mxu0 0.0
    %10510 = vmatprep.subr.mxu0 0.0
    %10511 = vmatpush1.msra.mxu0 0.0
    %10512 = vmatprep.subr.mxu0 0.0
    %10513 = vmatpush1.msra.mxu0 0.0
    %10514 = vmatprep.subr.mxu0 0.0
    %10515 = vmatpush1.msra.mxu0 0.0
    %10516 = vmatprep.subr.mxu0 0.0
    %10517 = vmatpush1.msra.mxu0 0.0
    %10518 = vmatprep.subr.mxu0 0.0
    %10519 = vmatpush1.msra.mxu0 0.0
    %10520 = vmatprep.mubr.f32.mxu0 0.0
    %10521 = vmatmul.mubr.f32.gmra.mrb[0].mxu0 %v10454
    %v10522 = vpop.f32.mrb[0].mxu0
    %v10523 = vadd.f32 0.0, %v10522
    %v10524 = vpop.f32.mrb[0].mxu0
    %10525 = vdwg.mxu0
    %10526 = vrot.lane.b32.xlu0 %v6150, 108
    %v10527 = vpop.permute.xlu0 %10526
    %v10530 = vsel %vm1556, %v10360, 0
    %10532 = vmatprep.subr.mxu0 0.0
    %10533 = vmatpush1.msra.mxu0 %v10527
    %10534 = vmatprep.subr.mxu0 0.0
    %10535 = vmatpush1.msra.mxu0 0.0
    %10536 = vmatprep.subr.mxu0 0.0
    %10537 = vmatpush1.msra.mxu0 0.0
    %10538 = vmatprep.subr.mxu0 0.0
    %10539 = vmatpush1.msra.mxu0 0.0
    %10540 = vmatprep.subr.mxu0 0.0
    %10541 = vmatpush1.msra.mxu0 0.0
    %10542 = vmatprep.subr.mxu0 0.0
    %10543 = vmatpush1.msra.mxu0 0.0
    %10544 = vmatprep.subr.mxu0 0.0
    %10545 = vmatpush1.msra.mxu0 0.0
    %10546 = vmatprep.subr.mxu0 0.0
    %10547 = vmatpush1.msra.mxu0 0.0
    %10548 = vmatprep.subr.mxu0 0.0
    %10549 = vmatpush1.msra.mxu0 0.0
    %10550 = vmatprep.subr.mxu0 0.0
    %10551 = vmatpush1.msra.mxu0 0.0
    %10552 = vmatprep.subr.mxu0 0.0
    %10553 = vmatpush1.msra.mxu0 0.0
    %10554 = vmatprep.subr.mxu0 0.0
    %10555 = vmatpush1.msra.mxu0 0.0
    %10556 = vmatprep.subr.mxu0 0.0
    %10557 = vmatpush1.msra.mxu0 0.0
    %10558 = vmatprep.subr.mxu0 0.0
    %10559 = vmatpush1.msra.mxu0 0.0
    %10560 = vmatprep.subr.mxu0 0.0
    %10561 = vmatpush1.msra.mxu0 0.0
    %10562 = vmatprep.subr.mxu0 0.0
    %10563 = vmatpush1.msra.mxu0 0.0
    %10564 = vmatprep.subr.mxu0 0.0
    %10565 = vmatpush1.msra.mxu0 0.0
    %10566 = vmatprep.subr.mxu0 0.0
    %10567 = vmatpush1.msra.mxu0 0.0
    %10568 = vmatprep.subr.mxu0 0.0
    %10569 = vmatpush1.msra.mxu0 0.0
    %10570 = vmatprep.subr.mxu0 0.0
    %10571 = vmatpush1.msra.mxu0 0.0
    %10572 = vmatprep.subr.mxu0 0.0
    %10573 = vmatpush1.msra.mxu0 0.0
    %10574 = vmatprep.subr.mxu0 0.0
    %10575 = vmatpush1.msra.mxu0 0.0
    %10576 = vmatprep.subr.mxu0 0.0
    %10577 = vmatpush1.msra.mxu0 0.0
    %10578 = vmatprep.subr.mxu0 0.0
    %10579 = vmatpush1.msra.mxu0 0.0
    %10580 = vmatprep.subr.mxu0 0.0
    %10581 = vmatpush1.msra.mxu0 0.0
    %10582 = vmatprep.subr.mxu0 0.0
    %10583 = vmatpush1.msra.mxu0 0.0
    %10584 = vmatprep.subr.mxu0 0.0
    %10585 = vmatpush1.msra.mxu0 0.0
    %10586 = vmatprep.subr.mxu0 0.0
    %10587 = vmatpush1.msra.mxu0 0.0
    %10588 = vmatprep.subr.mxu0 0.0
    %10589 = vmatpush1.msra.mxu0 0.0
    %10590 = vmatprep.subr.mxu0 0.0
    %10591 = vmatpush1.msra.mxu0 0.0
    %10592 = vmatprep.subr.mxu0 0.0
    %10593 = vmatpush1.msra.mxu0 0.0
    %10594 = vmatprep.subr.mxu0 0.0
    %10595 = vmatpush1.msra.mxu0 0.0
    %10596 = vmatprep.mubr.f32.mxu0 0.0
    %10597 = vmatmul.mubr.f32.gmra.mrb[0].mxu0 %v10530
    %v10598 = vpop.f32.mrb[0].mxu0
    %v10599 = vadd.f32 0.0, %v10598
    %v10600 = vpop.f32.mrb[0].mxu0
    %10601 = vdwg.mxu0
    %10602 = vrot.lane.b32.xlu0 %v6151, 108
    %v10603 = vpop.permute.xlu0 %10602
    %v10606 = vsel %vm1556, %v10361, 0
    %10608 = vmatprep.subr.mxu0 0.0
    %10609 = vmatpush1.msra.mxu0 %v10603
    %10610 = vmatprep.subr.mxu0 0.0
    %10611 = vmatpush1.msra.mxu0 0.0
    %10612 = vmatprep.subr.mxu0 0.0
    %10613 = vmatpush1.msra.mxu0 0.0
    %10614 = vmatprep.subr.mxu0 0.0
    %10615 = vmatpush1.msra.mxu0 0.0
    %10616 = vmatprep.subr.mxu0 0.0
    %10617 = vmatpush1.msra.mxu0 0.0
    %10618 = vmatprep.subr.mxu0 0.0
    %10619 = vmatpush1.msra.mxu0 0.0
    %10620 = vmatprep.subr.mxu0 0.0
    %10621 = vmatpush1.msra.mxu0 0.0
    %10622 = vmatprep.subr.mxu0 0.0
    %10623 = vmatpush1.msra.mxu0 0.0
    %10624 = vmatprep.subr.mxu0 0.0
    %10625 = vmatpush1.msra.mxu0 0.0
    %10626 = vmatprep.subr.mxu0 0.0
    %10627 = vmatpush1.msra.mxu0 0.0
    %10628 = vmatprep.subr.mxu0 0.0
    %10629 = vmatpush1.msra.mxu0 0.0
    %10630 = vmatprep.subr.mxu0 0.0
    %10631 = vmatpush1.msra.mxu0 0.0
    %10632 = vmatprep.subr.mxu0 0.0
    %10633 = vmatpush1.msra.mxu0 0.0
    %10634 = vmatprep.subr.mxu0 0.0
    %10635 = vmatpush1.msra.mxu0 0.0
    %10636 = vmatprep.subr.mxu0 0.0
    %10637 = vmatpush1.msra.mxu0 0.0
    %10638 = vmatprep.subr.mxu0 0.0
    %10639 = vmatpush1.msra.mxu0 0.0
    %10640 = vmatprep.subr.mxu0 0.0
    %10641 = vmatpush1.msra.mxu0 0.0
    %10642 = vmatprep.subr.mxu0 0.0
    %10643 = vmatpush1.msra.mxu0 0.0
    %10644 = vmatprep.subr.mxu0 0.0
    %10645 = vmatpush1.msra.mxu0 0.0
    %10646 = vmatprep.subr.mxu0 0.0
    %10647 = vmatpush1.msra.mxu0 0.0
    %10648 = vmatprep.subr.mxu0 0.0
    %10649 = vmatpush1.msra.mxu0 0.0
    %10650 = vmatprep.subr.mxu0 0.0
    %10651 = vmatpush1.msra.mxu0 0.0
    %10652 = vmatprep.subr.mxu0 0.0
    %10653 = vmatpush1.msra.mxu0 0.0
    %10654 = vmatprep.subr.mxu0 0.0
    %10655 = vmatpush1.msra.mxu0 0.0
    %10656 = vmatprep.subr.mxu0 0.0
    %10657 = vmatpush1.msra.mxu0 0.0
    %10658 = vmatprep.subr.mxu0 0.0
    %10659 = vmatpush1.msra.mxu0 0.0
    %10660 = vmatprep.subr.mxu0 0.0
    %10661 = vmatpush1.msra.mxu0 0.0
    %10662 = vmatprep.subr.mxu0 0.0
    %10663 = vmatpush1.msra.mxu0 0.0
    %10664 = vmatprep.subr.mxu0 0.0
    %10665 = vmatpush1.msra.mxu0 0.0
    %10666 = vmatprep.subr.mxu0 0.0
    %10667 = vmatpush1.msra.mxu0 0.0
    %10668 = vmatprep.subr.mxu0 0.0
    %10669 = vmatpush1.msra.mxu0 0.0
    %10670 = vmatprep.subr.mxu0 0.0
    %10671 = vmatpush1.msra.mxu0 0.0
    %10672 = vmatprep.mubr.f32.mxu0 0.0
    %10673 = vmatmul.mubr.f32.gmra.mrb[0].mxu0 %v10606
    %v10674 = vpop.f32.mrb[0].mxu0
    %v10675 = vadd.f32 0.0, %v10674
    %v10676 = vpop.f32.mrb[0].mxu0
    %10677 = vdwg.mxu0
    %10678 = vrot.lane.b32.xlu0 %v6152, 108
    %v10679 = vpop.permute.xlu0 %10678
    %v10682 = vsel %vm1556, %v10362, 0
    %10684 = vmatprep.subr.mxu0 0.0
    %10685 = vmatpush1.msra.mxu0 %v10679
    %10686 = vmatprep.subr.mxu0 0.0
    %10687 = vmatpush1.msra.mxu0 0.0
    %10688 = vmatprep.subr.mxu0 0.0
    %10689 = vmatpush1.msra.mxu0 0.0
    %10690 = vmatprep.subr.mxu0 0.0
    %10691 = vmatpush1.msra.mxu0 0.0
    %10692 = vmatprep.subr.mxu0 0.0
    %10693 = vmatpush1.msra.mxu0 0.0
    %10694 = vmatprep.subr.mxu0 0.0
    %10695 = vmatpush1.msra.mxu0 0.0
    %10696 = vmatprep.subr.mxu0 0.0
    %10697 = vmatpush1.msra.mxu0 0.0
    %10698 = vmatprep.subr.mxu0 0.0
    %10699 = vmatpush1.msra.mxu0 0.0
    %10700 = vmatprep.subr.mxu0 0.0
    %10701 = vmatpush1.msra.mxu0 0.0
    %10702 = vmatprep.subr.mxu0 0.0
    %10703 = vmatpush1.msra.mxu0 0.0
    %10704 = vmatprep.subr.mxu0 0.0
    %10705 = vmatpush1.msra.mxu0 0.0
    %10706 = vmatprep.subr.mxu0 0.0
    %10707 = vmatpush1.msra.mxu0 0.0
    %10708 = vmatprep.subr.mxu0 0.0
    %10709 = vmatpush1.msra.mxu0 0.0
    %10710 = vmatprep.subr.mxu0 0.0
    %10711 = vmatpush1.msra.mxu0 0.0
    %10712 = vmatprep.subr.mxu0 0.0
    %10713 = vmatpush1.msra.mxu0 0.0
    %10714 = vmatprep.subr.mxu0 0.0
    %10715 = vmatpush1.msra.mxu0 0.0
    %10716 = vmatprep.subr.mxu0 0.0
    %10717 = vmatpush1.msra.mxu0 0.0
    %10718 = vmatprep.subr.mxu0 0.0
    %10719 = vmatpush1.msra.mxu0 0.0
    %10720 = vmatprep.subr.mxu0 0.0
    %10721 = vmatpush1.msra.mxu0 0.0
    %10722 = vmatprep.subr.mxu0 0.0
    %10723 = vmatpush1.msra.mxu0 0.0
    %10724 = vmatprep.subr.mxu0 0.0
    %10725 = vmatpush1.msra.mxu0 0.0
    %10726 = vmatprep.subr.mxu0 0.0
    %10727 = vmatpush1.msra.mxu0 0.0
    %10728 = vmatprep.subr.mxu0 0.0
    %10729 = vmatpush1.msra.mxu0 0.0
    %10730 = vmatprep.subr.mxu0 0.0
    %10731 = vmatpush1.msra.mxu0 0.0
    %10732 = vmatprep.subr.mxu0 0.0
    %10733 = vmatpush1.msra.mxu0 0.0
    %10734 = vmatprep.subr.mxu0 0.0
    %10735 = vmatpush1.msra.mxu0 0.0
    %10736 = vmatprep.subr.mxu0 0.0
    %10737 = vmatpush1.msra.mxu0 0.0
    %10738 = vmatprep.subr.mxu0 0.0
    %10739 = vmatpush1.msra.mxu0 0.0
    %10740 = vmatprep.subr.mxu0 0.0
    %10741 = vmatpush1.msra.mxu0 0.0
    %10742 = vmatprep.subr.mxu0 0.0
    %10743 = vmatpush1.msra.mxu0 0.0
    %10744 = vmatprep.subr.mxu0 0.0
    %10745 = vmatpush1.msra.mxu0 0.0
    %10746 = vmatprep.subr.mxu0 0.0
    %10747 = vmatpush1.msra.mxu0 0.0
    %10748 = vmatprep.mubr.f32.mxu0 0.0
    %10749 = vmatmul.mubr.f32.gmra.mrb[0].mxu0 %v10682
    %v10750 = vpop.f32.mrb[0].mxu0
    %v10751 = vadd.f32 0.0, %v10750
    %v10752 = vpop.f32.mrb[0].mxu0
    %10753 = vdwg.mxu0
    %10754 = vrot.lane.b32.xlu0 %v6153, 108
    %v10755 = vpop.permute.xlu0 %10754
    %v10758 = vsel %vm1556, %v10363, 0
    %10760 = vmatprep.subr.mxu0 0.0
    %10761 = vmatpush1.msra.mxu0 %v10755
    %10762 = vmatprep.subr.mxu0 0.0
    %10763 = vmatpush1.msra.mxu0 0.0
    %10764 = vmatprep.subr.mxu0 0.0
    %10765 = vmatpush1.msra.mxu0 0.0
    %10766 = vmatprep.subr.mxu0 0.0
    %10767 = vmatpush1.msra.mxu0 0.0
    %10768 = vmatprep.subr.mxu0 0.0
    %10769 = vmatpush1.msra.mxu0 0.0
    %10770 = vmatprep.subr.mxu0 0.0
    %10771 = vmatpush1.msra.mxu0 0.0
    %10772 = vmatprep.subr.mxu0 0.0
    %10773 = vmatpush1.msra.mxu0 0.0
    %10774 = vmatprep.subr.mxu0 0.0
    %10775 = vmatpush1.msra.mxu0 0.0
    %10776 = vmatprep.subr.mxu0 0.0
    %10777 = vmatpush1.msra.mxu0 0.0
    %10778 = vmatprep.subr.mxu0 0.0
    %10779 = vmatpush1.msra.mxu0 0.0
    %10780 = vmatprep.subr.mxu0 0.0
    %10781 = vmatpush1.msra.mxu0 0.0
    %10782 = vmatprep.subr.mxu0 0.0
    %10783 = vmatpush1.msra.mxu0 0.0
    %10784 = vmatprep.subr.mxu0 0.0
    %10785 = vmatpush1.msra.mxu0 0.0
    %10786 = vmatprep.subr.mxu0 0.0
    %10787 = vmatpush1.msra.mxu0 0.0
    %10788 = vmatprep.subr.mxu0 0.0
    %10789 = vmatpush1.msra.mxu0 0.0
    %10790 = vmatprep.subr.mxu0 0.0
    %10791 = vmatpush1.msra.mxu0 0.0
    %10792 = vmatprep.subr.mxu0 0.0
    %10793 = vmatpush1.msra.mxu0 0.0
    %10794 = vmatprep.subr.mxu0 0.0
    %10795 = vmatpush1.msra.mxu0 0.0
    %10796 = vmatprep.subr.mxu0 0.0
    %10797 = vmatpush1.msra.mxu0 0.0
    %10798 = vmatprep.subr.mxu0 0.0
    %10799 = vmatpush1.msra.mxu0 0.0
    %10800 = vmatprep.subr.mxu0 0.0
    %10801 = vmatpush1.msra.mxu0 0.0
    %10802 = vmatprep.subr.mxu0 0.0
    %10803 = vmatpush1.msra.mxu0 0.0
    %10804 = vmatprep.subr.mxu0 0.0
    %10805 = vmatpush1.msra.mxu0 0.0
    %10806 = vmatprep.subr.mxu0 0.0
    %10807 = vmatpush1.msra.mxu0 0.0
    %10808 = vmatprep.subr.mxu0 0.0
    %10809 = vmatpush1.msra.mxu0 0.0
    %10810 = vmatprep.subr.mxu0 0.0
    %10811 = vmatpush1.msra.mxu0 0.0
    %10812 = vmatprep.subr.mxu0 0.0
    %10813 = vmatpush1.msra.mxu0 0.0
    %10814 = vmatprep.subr.mxu0 0.0
    %10815 = vmatpush1.msra.mxu0 0.0
    %10816 = vmatprep.subr.mxu0 0.0
    %10817 = vmatpush1.msra.mxu0 0.0
    %10818 = vmatprep.subr.mxu0 0.0
    %10819 = vmatpush1.msra.mxu0 0.0
    %10820 = vmatprep.subr.mxu0 0.0
    %10821 = vmatpush1.msra.mxu0 0.0
    %10822 = vmatprep.subr.mxu0 0.0
    %10823 = vmatpush1.msra.mxu0 0.0
    %10824 = vmatprep.mubr.f32.mxu0 0.0
    %10825 = vmatmul.mubr.f32.gmra.mrb[0].mxu0 %v10758
    %v10826 = vpop.f32.mrb[0].mxu0
    %v10827 = vadd.f32 0.0, %v10826
    %v10828 = vpop.f32.mrb[0].mxu0
    %10829 = vdwg.mxu0
    %10830 = vrot.lane.b32.xlu0 %v6154, 108
    %v10831 = vpop.permute.xlu0 %10830
    %v10834 = vsel %vm1556, %v10364, 0
    %10836 = vmatprep.subr.mxu0 0.0
    %10837 = vmatpush1.msra.mxu0 %v10831
    %10838 = vmatprep.subr.mxu0 0.0
    %10839 = vmatpush1.msra.mxu0 0.0
    %10840 = vmatprep.subr.mxu0 0.0
    %10841 = vmatpush1.msra.mxu0 0.0
    %10842 = vmatprep.subr.mxu0 0.0
    %10843 = vmatpush1.msra.mxu0 0.0
    %10844 = vmatprep.subr.mxu0 0.0
    %10845 = vmatpush1.msra.mxu0 0.0
    %10846 = vmatprep.subr.mxu0 0.0
    %10847 = vmatpush1.msra.mxu0 0.0
    %10848 = vmatprep.subr.mxu0 0.0
    %10849 = vmatpush1.msra.mxu0 0.0
    %10850 = vmatprep.subr.mxu0 0.0
    %10851 = vmatpush1.msra.mxu0 0.0
    %10852 = vmatprep.subr.mxu0 0.0
    %10853 = vmatpush1.msra.mxu0 0.0
    %10854 = vmatprep.subr.mxu0 0.0
    %10855 = vmatpush1.msra.mxu0 0.0
    %10856 = vmatprep.subr.mxu0 0.0
    %10857 = vmatpush1.msra.mxu0 0.0
    %10858 = vmatprep.subr.mxu0 0.0
    %10859 = vmatpush1.msra.mxu0 0.0
    %10860 = vmatprep.subr.mxu0 0.0
    %10861 = vmatpush1.msra.mxu0 0.0
    %10862 = vmatprep.subr.mxu0 0.0
    %10863 = vmatpush1.msra.mxu0 0.0
    %10864 = vmatprep.subr.mxu0 0.0
    %10865 = vmatpush1.msra.mxu0 0.0
    %10866 = vmatprep.subr.mxu0 0.0
    %10867 = vmatpush1.msra.mxu0 0.0
    %10868 = vmatprep.subr.mxu0 0.0
    %10869 = vmatpush1.msra.mxu0 0.0
    %10870 = vmatprep.subr.mxu0 0.0
    %10871 = vmatpush1.msra.mxu0 0.0
    %10872 = vmatprep.subr.mxu0 0.0
    %10873 = vmatpush1.msra.mxu0 0.0
    %10874 = vmatprep.subr.mxu0 0.0
    %10875 = vmatpush1.msra.mxu0 0.0
    %10876 = vmatprep.subr.mxu0 0.0
    %10877 = vmatpush1.msra.mxu0 0.0
    %10878 = vmatprep.subr.mxu0 0.0
    %10879 = vmatpush1.msra.mxu0 0.0
    %10880 = vmatprep.subr.mxu0 0.0
    %10881 = vmatpush1.msra.mxu0 0.0
    %10882 = vmatprep.subr.mxu0 0.0
    %10883 = vmatpush1.msra.mxu0 0.0
    %10884 = vmatprep.subr.mxu0 0.0
    %10885 = vmatpush1.msra.mxu0 0.0
    %10886 = vmatprep.subr.mxu0 0.0
    %10887 = vmatpush1.msra.mxu0 0.0
    %10888 = vmatprep.subr.mxu0 0.0
    %10889 = vmatpush1.msra.mxu0 0.0
    %10890 = vmatprep.subr.mxu0 0.0
    %10891 = vmatpush1.msra.mxu0 0.0
    %10892 = vmatprep.subr.mxu0 0.0
    %10893 = vmatpush1.msra.mxu0 0.0
    %10894 = vmatprep.subr.mxu0 0.0
    %10895 = vmatpush1.msra.mxu0 0.0
    %10896 = vmatprep.subr.mxu0 0.0
    %10897 = vmatpush1.msra.mxu0 0.0
    %10898 = vmatprep.subr.mxu0 0.0
    %10899 = vmatpush1.msra.mxu0 0.0
    %10900 = vmatprep.mubr.f32.mxu0 0.0
    %10901 = vmatmul.mubr.f32.gmra.mrb[0].mxu0 %v10834
    %v10902 = vpop.f32.mrb[0].mxu0
    %v10903 = vadd.f32 0.0, %v10902
    %v10904 = vpop.f32.mrb[0].mxu0
    %10905 = vdwg.mxu0
    %10906 = vrot.lane.b32.xlu0 %v6155, 108
    %v10907 = vpop.permute.xlu0 %10906
    %v10910 = vsel %vm1556, %v10365, 0
    %10912 = vmatprep.subr.mxu0 0.0
    %10913 = vmatpush1.msra.mxu0 %v10907
    %10914 = vmatprep.subr.mxu0 0.0
    %10915 = vmatpush1.msra.mxu0 0.0
    %10916 = vmatprep.subr.mxu0 0.0
    %10917 = vmatpush1.msra.mxu0 0.0
    %10918 = vmatprep.subr.mxu0 0.0
    %10919 = vmatpush1.msra.mxu0 0.0
    %10920 = vmatprep.subr.mxu0 0.0
    %10921 = vmatpush1.msra.mxu0 0.0
    %10922 = vmatprep.subr.mxu0 0.0
    %10923 = vmatpush1.msra.mxu0 0.0
    %10924 = vmatprep.subr.mxu0 0.0
    %10925 = vmatpush1.msra.mxu0 0.0
    %10926 = vmatprep.subr.mxu0 0.0
    %10927 = vmatpush1.msra.mxu0 0.0
    %10928 = vmatprep.subr.mxu0 0.0
    %10929 = vmatpush1.msra.mxu0 0.0
    %10930 = vmatprep.subr.mxu0 0.0
    %10931 = vmatpush1.msra.mxu0 0.0
    %10932 = vmatprep.subr.mxu0 0.0
    %10933 = vmatpush1.msra.mxu0 0.0
    %10934 = vmatprep.subr.mxu0 0.0
    %10935 = vmatpush1.msra.mxu0 0.0
    %10936 = vmatprep.subr.mxu0 0.0
    %10937 = vmatpush1.msra.mxu0 0.0
    %10938 = vmatprep.subr.mxu0 0.0
    %10939 = vmatpush1.msra.mxu0 0.0
    %10940 = vmatprep.subr.mxu0 0.0
    %10941 = vmatpush1.msra.mxu0 0.0
    %10942 = vmatprep.subr.mxu0 0.0
    %10943 = vmatpush1.msra.mxu0 0.0
    %10944 = vmatprep.subr.mxu0 0.0
    %10945 = vmatpush1.msra.mxu0 0.0
    %10946 = vmatprep.subr.mxu0 0.0
    %10947 = vmatpush1.msra.mxu0 0.0
    %10948 = vmatprep.subr.mxu0 0.0
    %10949 = vmatpush1.msra.mxu0 0.0
    %10950 = vmatprep.subr.mxu0 0.0
    %10951 = vmatpush1.msra.mxu0 0.0
    %10952 = vmatprep.subr.mxu0 0.0
    %10953 = vmatpush1.msra.mxu0 0.0
    %10954 = vmatprep.subr.mxu0 0.0
    %10955 = vmatpush1.msra.mxu0 0.0
    %10956 = vmatprep.subr.mxu0 0.0
    %10957 = vmatpush1.msra.mxu0 0.0
    %10958 = vmatprep.subr.mxu0 0.0
    %10959 = vmatpush1.msra.mxu0 0.0
    %10960 = vmatprep.subr.mxu0 0.0
    %10961 = vmatpush1.msra.mxu0 0.0
    %10962 = vmatprep.subr.mxu0 0.0
    %10963 = vmatpush1.msra.mxu0 0.0
    %10964 = vmatprep.subr.mxu0 0.0
    %10965 = vmatpush1.msra.mxu0 0.0
    %10966 = vmatprep.subr.mxu0 0.0
    %10967 = vmatpush1.msra.mxu0 0.0
    %10968 = vmatprep.subr.mxu0 0.0
    %10969 = vmatpush1.msra.mxu0 0.0
    %10970 = vmatprep.subr.mxu0 0.0
    %10971 = vmatpush1.msra.mxu0 0.0
    %10972 = vmatprep.subr.mxu0 0.0
    %10973 = vmatpush1.msra.mxu0 0.0
    %10974 = vmatprep.subr.mxu0 0.0
    %10975 = vmatpush1.msra.mxu0 0.0
    %10976 = vmatprep.mubr.f32.mxu0 0.0
    %10977 = vmatmul.mubr.f32.gmra.mrb[0].mxu0 %v10910
    %v10978 = vpop.f32.mrb[0].mxu0
    %v10979 = vadd.f32 0.0, %v10978
    %v10980 = vpop.f32.mrb[0].mxu0
    %10981 = vdwg.mxu0
    %10982 = vrot.lane.b32.xlu0 %v6284, 108
    %v10983 = vpop.permute.xlu0 %10982
    %v10986 = vsel %vm1556, %v10366, 0
    %10988 = vmatprep.subr.mxu0 0.0
    %10989 = vmatpush1.msra.mxu0 %v10983
    %10990 = vmatprep.subr.mxu0 0.0
    %10991 = vmatpush1.msra.mxu0 0.0
    %10992 = vmatprep.subr.mxu0 0.0
    %10993 = vmatpush1.msra.mxu0 0.0
    %10994 = vmatprep.subr.mxu0 0.0
    %10995 = vmatpush1.msra.mxu0 0.0
    %10996 = vmatprep.subr.mxu0 0.0
    %10997 = vmatpush1.msra.mxu0 0.0
    %10998 = vmatprep.subr.mxu0 0.0
    %10999 = vmatpush1.msra.mxu0 0.0
    %11000 = vmatprep.subr.mxu0 0.0
    %11001 = vmatpush1.msra.mxu0 0.0
    %11002 = vmatprep.subr.mxu0 0.0
    %11003 = vmatpush1.msra.mxu0 0.0
    %11004 = vmatprep.subr.mxu0 0.0
    %11005 = vmatpush1.msra.mxu0 0.0
    %11006 = vmatprep.subr.mxu0 0.0
    %11007 = vmatpush1.msra.mxu0 0.0
    %11008 = vmatprep.subr.mxu0 0.0
    %11009 = vmatpush1.msra.mxu0 0.0
    %11010 = vmatprep.subr.mxu0 0.0
    %11011 = vmatpush1.msra.mxu0 0.0
    %11012 = vmatprep.subr.mxu0 0.0
    %11013 = vmatpush1.msra.mxu0 0.0
    %11014 = vmatprep.subr.mxu0 0.0
    %11015 = vmatpush1.msra.mxu0 0.0
    %11016 = vmatprep.subr.mxu0 0.0
    %11017 = vmatpush1.msra.mxu0 0.0
    %11018 = vmatprep.subr.mxu0 0.0
    %11019 = vmatpush1.msra.mxu0 0.0
    %11020 = vmatprep.subr.mxu0 0.0
    %11021 = vmatpush1.msra.mxu0 0.0
    %11022 = vmatprep.subr.mxu0 0.0
    %11023 = vmatpush1.msra.mxu0 0.0
    %11024 = vmatprep.subr.mxu0 0.0
    %11025 = vmatpush1.msra.mxu0 0.0
    %11026 = vmatprep.subr.mxu0 0.0
    %11027 = vmatpush1.msra.mxu0 0.0
    %11028 = vmatprep.subr.mxu0 0.0
    %11029 = vmatpush1.msra.mxu0 0.0
    %11030 = vmatprep.subr.mxu0 0.0
    %11031 = vmatpush1.msra.mxu0 0.0
    %11032 = vmatprep.subr.mxu0 0.0
    %11033 = vmatpush1.msra.mxu0 0.0
    %11034 = vmatprep.subr.mxu0 0.0
    %11035 = vmatpush1.msra.mxu0 0.0
    %11036 = vmatprep.subr.mxu0 0.0
    %11037 = vmatpush1.msra.mxu0 0.0
    %11038 = vmatprep.subr.mxu0 0.0
    %11039 = vmatpush1.msra.mxu0 0.0
    %11040 = vmatprep.subr.mxu0 0.0
    %11041 = vmatpush1.msra.mxu0 0.0
    %11042 = vmatprep.subr.mxu0 0.0
    %11043 = vmatpush1.msra.mxu0 0.0
    %11044 = vmatprep.subr.mxu0 0.0
    %11045 = vmatpush1.msra.mxu0 0.0
    %11046 = vmatprep.subr.mxu0 0.0
    %11047 = vmatpush1.msra.mxu0 0.0
    %11048 = vmatprep.subr.mxu0 0.0
    %11049 = vmatpush1.msra.mxu0 0.0
    %11050 = vmatprep.subr.mxu0 0.0
    %11051 = vmatpush1.msra.mxu0 0.0
    %11052 = vmatprep.mubr.f32.mxu0 0.0
    %11053 = vmatmul.mubr.f32.gmra.mrb[0].mxu0 %v10986
    %v11054 = vpop.f32.mrb[0].mxu0
    %v11055 = vadd.f32 0.0, %v11054
    %v11056 = vpop.f32.mrb[0].mxu0
    %11057 = vdwg.mxu0
    %11058 = vrot.lane.b32.xlu0 %v6285, 108
    %v11059 = vpop.permute.xlu0 %11058
    %v11062 = vsel %vm1556, %v10367, 0
    %11064 = vmatprep.subr.mxu0 0.0
    %11065 = vmatpush1.msra.mxu0 %v11059
    %11066 = vmatprep.subr.mxu0 0.0
    %11067 = vmatpush1.msra.mxu0 0.0
    %11068 = vmatprep.subr.mxu0 0.0
    %11069 = vmatpush1.msra.mxu0 0.0
    %11070 = vmatprep.subr.mxu0 0.0
    %11071 = vmatpush1.msra.mxu0 0.0
    %11072 = vmatprep.subr.mxu0 0.0
    %11073 = vmatpush1.msra.mxu0 0.0
    %11074 = vmatprep.subr.mxu0 0.0
    %11075 = vmatpush1.msra.mxu0 0.0
    %11076 = vmatprep.subr.mxu0 0.0
    %11077 = vmatpush1.msra.mxu0 0.0
    %11078 = vmatprep.subr.mxu0 0.0
    %11079 = vmatpush1.msra.mxu0 0.0
    %11080 = vmatprep.subr.mxu0 0.0
    %11081 = vmatpush1.msra.mxu0 0.0
    %11082 = vmatprep.subr.mxu0 0.0
    %11083 = vmatpush1.msra.mxu0 0.0
    %11084 = vmatprep.subr.mxu0 0.0
    %11085 = vmatpush1.msra.mxu0 0.0
    %11086 = vmatprep.subr.mxu0 0.0
    %11087 = vmatpush1.msra.mxu0 0.0
    %11088 = vmatprep.subr.mxu0 0.0
    %11089 = vmatpush1.msra.mxu0 0.0
    %11090 = vmatprep.subr.mxu0 0.0
    %11091 = vmatpush1.msra.mxu0 0.0
    %11092 = vmatprep.subr.mxu0 0.0
    %11093 = vmatpush1.msra.mxu0 0.0
    %11094 = vmatprep.subr.mxu0 0.0
    %11095 = vmatpush1.msra.mxu0 0.0
    %11096 = vmatprep.subr.mxu0 0.0
    %11097 = vmatpush1.msra.mxu0 0.0
    %11098 = vmatprep.subr.mxu0 0.0
    %11099 = vmatpush1.msra.mxu0 0.0
    %11100 = vmatprep.subr.mxu0 0.0
    %11101 = vmatpush1.msra.mxu0 0.0
    %11102 = vmatprep.subr.mxu0 0.0
    %11103 = vmatpush1.msra.mxu0 0.0
    %11104 = vmatprep.subr.mxu0 0.0
    %11105 = vmatpush1.msra.mxu0 0.0
    %11106 = vmatprep.subr.mxu0 0.0
    %11107 = vmatpush1.msra.mxu0 0.0
    %11108 = vmatprep.subr.mxu0 0.0
    %11109 = vmatpush1.msra.mxu0 0.0
    %11110 = vmatprep.subr.mxu0 0.0
    %11111 = vmatpush1.msra.mxu0 0.0
    %11112 = vmatprep.subr.mxu0 0.0
    %11113 = vmatpush1.msra.mxu0 0.0
    %11114 = vmatprep.subr.mxu0 0.0
    %11115 = vmatpush1.msra.mxu0 0.0
    %11116 = vmatprep.subr.mxu0 0.0
    %11117 = vmatpush1.msra.mxu0 0.0
    %11118 = vmatprep.subr.mxu0 0.0
    %11119 = vmatpush1.msra.mxu0 0.0
    %11120 = vmatprep.subr.mxu0 0.0
    %11121 = vmatpush1.msra.mxu0 0.0
    %11122 = vmatprep.subr.mxu0 0.0
    %11123 = vmatpush1.msra.mxu0 0.0
    %11124 = vmatprep.subr.mxu0 0.0
    %11125 = vmatpush1.msra.mxu0 0.0
    %11126 = vmatprep.subr.mxu0 0.0
    %11127 = vmatpush1.msra.mxu0 0.0
    %11128 = vmatprep.mubr.f32.mxu0 0.0
    %11129 = vmatmul.mubr.f32.gmra.mrb[0].mxu0 %v11062
    %v11130 = vpop.f32.mrb[0].mxu0
    %v11131 = vadd.f32 0.0, %v11130
    %v11132 = vpop.f32.mrb[0].mxu0
    %11133 = vdwg.mxu0
    %11134 = vrot.lane.b32.xlu0 %v6286, 108
    %v11135 = vpop.permute.xlu0 %11134
    %v11138 = vsel %vm1556, %v10368, 0
    %11140 = vmatprep.subr.mxu0 0.0
    %11141 = vmatpush1.msra.mxu0 %v11135
    %11142 = vmatprep.subr.mxu0 0.0
    %11143 = vmatpush1.msra.mxu0 0.0
    %11144 = vmatprep.subr.mxu0 0.0
    %11145 = vmatpush1.msra.mxu0 0.0
    %11146 = vmatprep.subr.mxu0 0.0
    %11147 = vmatpush1.msra.mxu0 0.0
    %11148 = vmatprep.subr.mxu0 0.0
    %11149 = vmatpush1.msra.mxu0 0.0
    %11150 = vmatprep.subr.mxu0 0.0
    %11151 = vmatpush1.msra.mxu0 0.0
    %11152 = vmatprep.subr.mxu0 0.0
    %11153 = vmatpush1.msra.mxu0 0.0
    %11154 = vmatprep.subr.mxu0 0.0
    %11155 = vmatpush1.msra.mxu0 0.0
    %11156 = vmatprep.subr.mxu0 0.0
    %11157 = vmatpush1.msra.mxu0 0.0
    %11158 = vmatprep.subr.mxu0 0.0
    %11159 = vmatpush1.msra.mxu0 0.0
    %11160 = vmatprep.subr.mxu0 0.0
    %11161 = vmatpush1.msra.mxu0 0.0
    %11162 = vmatprep.subr.mxu0 0.0
    %11163 = vmatpush1.msra.mxu0 0.0
    %11164 = vmatprep.subr.mxu0 0.0
    %11165 = vmatpush1.msra.mxu0 0.0
    %11166 = vmatprep.subr.mxu0 0.0
    %11167 = vmatpush1.msra.mxu0 0.0
    %11168 = vmatprep.subr.mxu0 0.0
    %11169 = vmatpush1.msra.mxu0 0.0
    %11170 = vmatprep.subr.mxu0 0.0
    %11171 = vmatpush1.msra.mxu0 0.0
    %11172 = vmatprep.subr.mxu0 0.0
    %11173 = vmatpush1.msra.mxu0 0.0
    %11174 = vmatprep.subr.mxu0 0.0
    %11175 = vmatpush1.msra.mxu0 0.0
    %11176 = vmatprep.subr.mxu0 0.0
    %11177 = vmatpush1.msra.mxu0 0.0
    %11178 = vmatprep.subr.mxu0 0.0
    %11179 = vmatpush1.msra.mxu0 0.0
    %11180 = vmatprep.subr.mxu0 0.0
    %11181 = vmatpush1.msra.mxu0 0.0
    %11182 = vmatprep.subr.mxu0 0.0
    %11183 = vmatpush1.msra.mxu0 0.0
    %11184 = vmatprep.subr.mxu0 0.0
    %11185 = vmatpush1.msra.mxu0 0.0
    %11186 = vmatprep.subr.mxu0 0.0
    %11187 = vmatpush1.msra.mxu0 0.0
    %11188 = vmatprep.subr.mxu0 0.0
    %11189 = vmatpush1.msra.mxu0 0.0
    %11190 = vmatprep.subr.mxu0 0.0
    %11191 = vmatpush1.msra.mxu0 0.0
    %11192 = vmatprep.subr.mxu0 0.0
    %11193 = vmatpush1.msra.mxu0 0.0
    %11194 = vmatprep.subr.mxu0 0.0
    %11195 = vmatpush1.msra.mxu0 0.0
    %11196 = vmatprep.subr.mxu0 0.0
    %11197 = vmatpush1.msra.mxu0 0.0
    %11198 = vmatprep.subr.mxu0 0.0
    %11199 = vmatpush1.msra.mxu0 0.0
    %11200 = vmatprep.subr.mxu0 0.0
    %11201 = vmatpush1.msra.mxu0 0.0
    %11202 = vmatprep.subr.mxu0 0.0
    %11203 = vmatpush1.msra.mxu0 0.0
    %11204 = vmatprep.mubr.f32.mxu0 0.0
    %11205 = vmatmul.mubr.f32.gmra.mrb[0].mxu0 %v11138
    %v11206 = vpop.f32.mrb[0].mxu0
    %v11207 = vadd.f32 0.0, %v11206
    %v11208 = vpop.f32.mrb[0].mxu0
    %11209 = vdwg.mxu0
    %11210 = vrot.lane.b32.xlu0 %v6287, 108
    %v11211 = vpop.permute.xlu0 %11210
    %v11214 = vsel %vm1556, %v10369, 0
    %11216 = vmatprep.subr.mxu0 0.0
    %11217 = vmatpush1.msra.mxu0 %v11211
    %11218 = vmatprep.subr.mxu0 0.0
    %11219 = vmatpush1.msra.mxu0 0.0
    %11220 = vmatprep.subr.mxu0 0.0
    %11221 = vmatpush1.msra.mxu0 0.0
    %11222 = vmatprep.subr.mxu0 0.0
    %11223 = vmatpush1.msra.mxu0 0.0
    %11224 = vmatprep.subr.mxu0 0.0
    %11225 = vmatpush1.msra.mxu0 0.0
    %11226 = vmatprep.subr.mxu0 0.0
    %11227 = vmatpush1.msra.mxu0 0.0
    %11228 = vmatprep.subr.mxu0 0.0
    %11229 = vmatpush1.msra.mxu0 0.0
    %11230 = vmatprep.subr.mxu0 0.0
    %11231 = vmatpush1.msra.mxu0 0.0
    %11232 = vmatprep.subr.mxu0 0.0
    %11233 = vmatpush1.msra.mxu0 0.0
    %11234 = vmatprep.subr.mxu0 0.0
    %11235 = vmatpush1.msra.mxu0 0.0
    %11236 = vmatprep.subr.mxu0 0.0
    %11237 = vmatpush1.msra.mxu0 0.0
    %11238 = vmatprep.subr.mxu0 0.0
    %11239 = vmatpush1.msra.mxu0 0.0
    %11240 = vmatprep.subr.mxu0 0.0
    %11241 = vmatpush1.msra.mxu0 0.0
    %11242 = vmatprep.subr.mxu0 0.0
    %11243 = vmatpush1.msra.mxu0 0.0
    %11244 = vmatprep.subr.mxu0 0.0
    %11245 = vmatpush1.msra.mxu0 0.0
    %11246 = vmatprep.subr.mxu0 0.0
    %11247 = vmatpush1.msra.mxu0 0.0
    %11248 = vmatprep.subr.mxu0 0.0
    %11249 = vmatpush1.msra.mxu0 0.0
    %11250 = vmatprep.subr.mxu0 0.0
    %11251 = vmatpush1.msra.mxu0 0.0
    %11252 = vmatprep.subr.mxu0 0.0
    %11253 = vmatpush1.msra.mxu0 0.0
    %11254 = vmatprep.subr.mxu0 0.0
    %11255 = vmatpush1.msra.mxu0 0.0
    %11256 = vmatprep.subr.mxu0 0.0
    %11257 = vmatpush1.msra.mxu0 0.0
    %11258 = vmatprep.subr.mxu0 0.0
    %11259 = vmatpush1.msra.mxu0 0.0
    %11260 = vmatprep.subr.mxu0 0.0
    %11261 = vmatpush1.msra.mxu0 0.0
    %11262 = vmatprep.subr.mxu0 0.0
    %11263 = vmatpush1.msra.mxu0 0.0
    %11264 = vmatprep.subr.mxu0 0.0
    %11265 = vmatpush1.msra.mxu0 0.0
    %11266 = vmatprep.subr.mxu0 0.0
    %11267 = vmatpush1.msra.mxu0 0.0
    %11268 = vmatprep.subr.mxu0 0.0
    %11269 = vmatpush1.msra.mxu0 0.0
    %11270 = vmatprep.subr.mxu0 0.0
    %11271 = vmatpush1.msra.mxu0 0.0
    %11272 = vmatprep.subr.mxu0 0.0
    %11273 = vmatpush1.msra.mxu0 0.0
    %11274 = vmatprep.subr.mxu0 0.0
    %11275 = vmatpush1.msra.mxu0 0.0
    %11276 = vmatprep.subr.mxu0 0.0
    %11277 = vmatpush1.msra.mxu0 0.0
    %11278 = vmatprep.subr.mxu0 0.0
    %11279 = vmatpush1.msra.mxu0 0.0
    %11280 = vmatprep.mubr.f32.mxu0 0.0
    %11281 = vmatmul.mubr.f32.gmra.mrb[0].mxu0 %v11214
    %v11282 = vpop.f32.mrb[0].mxu0
    %v11283 = vadd.f32 0.0, %v11282
    %v11284 = vpop.f32.mrb[0].mxu0
    %11285 = vdwg.mxu0
    %11286 = vrot.lane.b32.xlu0 %v6288, 108
    %v11287 = vpop.permute.xlu0 %11286
    %v11290 = vsel %vm1556, %v10370, 0
    %11292 = vmatprep.subr.mxu0 0.0
    %11293 = vmatpush1.msra.mxu0 %v11287
    %11294 = vmatprep.subr.mxu0 0.0
    %11295 = vmatpush1.msra.mxu0 0.0
    %11296 = vmatprep.subr.mxu0 0.0
    %11297 = vmatpush1.msra.mxu0 0.0
    %11298 = vmatprep.subr.mxu0 0.0
    %11299 = vmatpush1.msra.mxu0 0.0
    %11300 = vmatprep.subr.mxu0 0.0
    %11301 = vmatpush1.msra.mxu0 0.0
    %11302 = vmatprep.subr.mxu0 0.0
    %11303 = vmatpush1.msra.mxu0 0.0
    %11304 = vmatprep.subr.mxu0 0.0
    %11305 = vmatpush1.msra.mxu0 0.0
    %11306 = vmatprep.subr.mxu0 0.0
    %11307 = vmatpush1.msra.mxu0 0.0
    %11308 = vmatprep.subr.mxu0 0.0
    %11309 = vmatpush1.msra.mxu0 0.0
    %11310 = vmatprep.subr.mxu0 0.0
    %11311 = vmatpush1.msra.mxu0 0.0
    %11312 = vmatprep.subr.mxu0 0.0
    %11313 = vmatpush1.msra.mxu0 0.0
    %11314 = vmatprep.subr.mxu0 0.0
    %11315 = vmatpush1.msra.mxu0 0.0
    %11316 = vmatprep.subr.mxu0 0.0
    %11317 = vmatpush1.msra.mxu0 0.0
    %11318 = vmatprep.subr.mxu0 0.0
    %11319 = vmatpush1.msra.mxu0 0.0
    %11320 = vmatprep.subr.mxu0 0.0
    %11321 = vmatpush1.msra.mxu0 0.0
    %11322 = vmatprep.subr.mxu0 0.0
    %11323 = vmatpush1.msra.mxu0 0.0
    %11324 = vmatprep.subr.mxu0 0.0
    %11325 = vmatpush1.msra.mxu0 0.0
    %11326 = vmatprep.subr.mxu0 0.0
    %11327 = vmatpush1.msra.mxu0 0.0
    %11328 = vmatprep.subr.mxu0 0.0
    %11329 = vmatpush1.msra.mxu0 0.0
    %11330 = vmatprep.subr.mxu0 0.0
    %11331 = vmatpush1.msra.mxu0 0.0
    %11332 = vmatprep.subr.mxu0 0.0
    %11333 = vmatpush1.msra.mxu0 0.0
    %11334 = vmatprep.subr.mxu0 0.0
    %11335 = vmatpush1.msra.mxu0 0.0
    %11336 = vmatprep.subr.mxu0 0.0
    %11337 = vmatpush1.msra.mxu0 0.0
    %11338 = vmatprep.subr.mxu0 0.0
    %11339 = vmatpush1.msra.mxu0 0.0
    %11340 = vmatprep.subr.mxu0 0.0
    %11341 = vmatpush1.msra.mxu0 0.0
    %11342 = vmatprep.subr.mxu0 0.0
    %11343 = vmatpush1.msra.mxu0 0.0
    %11344 = vmatprep.subr.mxu0 0.0
    %11345 = vmatpush1.msra.mxu0 0.0
    %11346 = vmatprep.subr.mxu0 0.0
    %11347 = vmatpush1.msra.mxu0 0.0
    %11348 = vmatprep.subr.mxu0 0.0
    %11349 = vmatpush1.msra.mxu0 0.0
    %11350 = vmatprep.subr.mxu0 0.0
    %11351 = vmatpush1.msra.mxu0 0.0
    %11352 = vmatprep.subr.mxu0 0.0
    %11353 = vmatpush1.msra.mxu0 0.0
    %11354 = vmatprep.subr.mxu0 0.0
    %11355 = vmatpush1.msra.mxu0 0.0
    %11356 = vmatprep.mubr.f32.mxu0 0.0
    %11357 = vmatmul.mubr.f32.gmra.mrb[0].mxu0 %v11290
    %v11358 = vpop.f32.mrb[0].mxu0
    %v11359 = vadd.f32 0.0, %v11358
    %v11360 = vpop.f32.mrb[0].mxu0
    %11361 = vdwg.mxu0
    %11362 = vrot.lane.b32.xlu0 %v6289, 108
    %v11363 = vpop.permute.xlu0 %11362
    %v11366 = vsel %vm1556, %v10371, 0
    %11368 = vmatprep.subr.mxu0 0.0
    %11369 = vmatpush1.msra.mxu0 %v11363
    %11370 = vmatprep.subr.mxu0 0.0
    %11371 = vmatpush1.msra.mxu0 0.0
    %11372 = vmatprep.subr.mxu0 0.0
    %11373 = vmatpush1.msra.mxu0 0.0
    %11374 = vmatprep.subr.mxu0 0.0
    %11375 = vmatpush1.msra.mxu0 0.0
    %11376 = vmatprep.subr.mxu0 0.0
    %11377 = vmatpush1.msra.mxu0 0.0
    %11378 = vmatprep.subr.mxu0 0.0
    %11379 = vmatpush1.msra.mxu0 0.0
    %11380 = vmatprep.subr.mxu0 0.0
    %11381 = vmatpush1.msra.mxu0 0.0
    %11382 = vmatprep.subr.mxu0 0.0
    %11383 = vmatpush1.msra.mxu0 0.0
    %11384 = vmatprep.subr.mxu0 0.0
    %11385 = vmatpush1.msra.mxu0 0.0
    %11386 = vmatprep.subr.mxu0 0.0
    %11387 = vmatpush1.msra.mxu0 0.0
    %11388 = vmatprep.subr.mxu0 0.0
    %11389 = vmatpush1.msra.mxu0 0.0
    %11390 = vmatprep.subr.mxu0 0.0
    %11391 = vmatpush1.msra.mxu0 0.0
    %11392 = vmatprep.subr.mxu0 0.0
    %11393 = vmatpush1.msra.mxu0 0.0
    %11394 = vmatprep.subr.mxu0 0.0
    %11395 = vmatpush1.msra.mxu0 0.0
    %11396 = vmatprep.subr.mxu0 0.0
    %11397 = vmatpush1.msra.mxu0 0.0
    %11398 = vmatprep.subr.mxu0 0.0
    %11399 = vmatpush1.msra.mxu0 0.0
    %11400 = vmatprep.subr.mxu0 0.0
    %11401 = vmatpush1.msra.mxu0 0.0
    %11402 = vmatprep.subr.mxu0 0.0
    %11403 = vmatpush1.msra.mxu0 0.0
    %11404 = vmatprep.subr.mxu0 0.0
    %11405 = vmatpush1.msra.mxu0 0.0
    %11406 = vmatprep.subr.mxu0 0.0
    %11407 = vmatpush1.msra.mxu0 0.0
    %11408 = vmatprep.subr.mxu0 0.0
    %11409 = vmatpush1.msra.mxu0 0.0
    %11410 = vmatprep.subr.mxu0 0.0
    %11411 = vmatpush1.msra.mxu0 0.0
    %11412 = vmatprep.subr.mxu0 0.0
    %11413 = vmatpush1.msra.mxu0 0.0
    %11414 = vmatprep.subr.mxu0 0.0
    %11415 = vmatpush1.msra.mxu0 0.0
    %11416 = vmatprep.subr.mxu0 0.0
    %11417 = vmatpush1.msra.mxu0 0.0
    %11418 = vmatprep.subr.mxu0 0.0
    %11419 = vmatpush1.msra.mxu0 0.0
    %11420 = vmatprep.subr.mxu0 0.0
    %11421 = vmatpush1.msra.mxu0 0.0
    %11422 = vmatprep.subr.mxu0 0.0
    %11423 = vmatpush1.msra.mxu0 0.0
    %11424 = vmatprep.subr.mxu0 0.0
    %11425 = vmatpush1.msra.mxu0 0.0
    %11426 = vmatprep.subr.mxu0 0.0
    %11427 = vmatpush1.msra.mxu0 0.0
    %11428 = vmatprep.subr.mxu0 0.0
    %11429 = vmatpush1.msra.mxu0 0.0
    %11430 = vmatprep.subr.mxu0 0.0
    %11431 = vmatpush1.msra.mxu0 0.0
    %11432 = vmatprep.mubr.f32.mxu0 0.0
    %11433 = vmatmul.mubr.f32.gmra.mrb[0].mxu0 %v11366
    %v11434 = vpop.f32.mrb[0].mxu0
    %v11435 = vadd.f32 0.0, %v11434
    %v11436 = vpop.f32.mrb[0].mxu0
    %11437 = vdwg.mxu0
    %11438 = vrot.lane.b32.xlu0 %v6290, 108
    %v11439 = vpop.permute.xlu0 %11438
    %v11442 = vsel %vm1556, %v10372, 0
    %11444 = vmatprep.subr.mxu0 0.0
    %11445 = vmatpush1.msra.mxu0 %v11439
    %11446 = vmatprep.subr.mxu0 0.0
    %11447 = vmatpush1.msra.mxu0 0.0
    %11448 = vmatprep.subr.mxu0 0.0
    %11449 = vmatpush1.msra.mxu0 0.0
    %11450 = vmatprep.subr.mxu0 0.0
    %11451 = vmatpush1.msra.mxu0 0.0
    %11452 = vmatprep.subr.mxu0 0.0
    %11453 = vmatpush1.msra.mxu0 0.0
    %11454 = vmatprep.subr.mxu0 0.0
    %11455 = vmatpush1.msra.mxu0 0.0
    %11456 = vmatprep.subr.mxu0 0.0
    %11457 = vmatpush1.msra.mxu0 0.0
    %11458 = vmatprep.subr.mxu0 0.0
    %11459 = vmatpush1.msra.mxu0 0.0
    %11460 = vmatprep.subr.mxu0 0.0
    %11461 = vmatpush1.msra.mxu0 0.0
    %11462 = vmatprep.subr.mxu0 0.0
    %11463 = vmatpush1.msra.mxu0 0.0
    %11464 = vmatprep.subr.mxu0 0.0
    %11465 = vmatpush1.msra.mxu0 0.0
    %11466 = vmatprep.subr.mxu0 0.0
    %11467 = vmatpush1.msra.mxu0 0.0
    %11468 = vmatprep.subr.mxu0 0.0
    %11469 = vmatpush1.msra.mxu0 0.0
    %11470 = vmatprep.subr.mxu0 0.0
    %11471 = vmatpush1.msra.mxu0 0.0
    %11472 = vmatprep.subr.mxu0 0.0
    %11473 = vmatpush1.msra.mxu0 0.0
    %11474 = vmatprep.subr.mxu0 0.0
    %11475 = vmatpush1.msra.mxu0 0.0
    %11476 = vmatprep.subr.mxu0 0.0
    %11477 = vmatpush1.msra.mxu0 0.0
    %11478 = vmatprep.subr.mxu0 0.0
    %11479 = vmatpush1.msra.mxu0 0.0
    %11480 = vmatprep.subr.mxu0 0.0
    %11481 = vmatpush1.msra.mxu0 0.0
    %11482 = vmatprep.subr.mxu0 0.0
    %11483 = vmatpush1.msra.mxu0 0.0
    %11484 = vmatprep.subr.mxu0 0.0
    %11485 = vmatpush1.msra.mxu0 0.0
    %11486 = vmatprep.subr.mxu0 0.0
    %11487 = vmatpush1.msra.mxu0 0.0
    %11488 = vmatprep.subr.mxu0 0.0
    %11489 = vmatpush1.msra.mxu0 0.0
    %11490 = vmatprep.subr.mxu0 0.0
    %11491 = vmatpush1.msra.mxu0 0.0
    %11492 = vmatprep.subr.mxu0 0.0
    %11493 = vmatpush1.msra.mxu0 0.0
    %11494 = vmatprep.subr.mxu0 0.0
    %11495 = vmatpush1.msra.mxu0 0.0
    %11496 = vmatprep.subr.mxu0 0.0
    %11497 = vmatpush1.msra.mxu0 0.0
    %11498 = vmatprep.subr.mxu0 0.0
    %11499 = vmatpush1.msra.mxu0 0.0
    %11500 = vmatprep.subr.mxu0 0.0
    %11501 = vmatpush1.msra.mxu0 0.0
    %11502 = vmatprep.subr.mxu0 0.0
    %11503 = vmatpush1.msra.mxu0 0.0
    %11504 = vmatprep.subr.mxu0 0.0
    %11505 = vmatpush1.msra.mxu0 0.0
    %11506 = vmatprep.subr.mxu0 0.0
    %11507 = vmatpush1.msra.mxu0 0.0
    %11508 = vmatprep.mubr.f32.mxu0 0.0
    %11509 = vmatmul.mubr.f32.gmra.mrb[0].mxu0 %v11442
    %v11510 = vpop.f32.mrb[0].mxu0
    %v11511 = vadd.f32 0.0, %v11510
    %v11512 = vpop.f32.mrb[0].mxu0
    %11513 = vdwg.mxu0
    %11514 = vrot.lane.b32.xlu0 %v6291, 108
    %v11515 = vpop.permute.xlu0 %11514
    %v11518 = vsel %vm1556, %v10373, 0
    %11520 = vmatprep.subr.mxu0 0.0
    %11521 = vmatpush1.msra.mxu0 %v11515
    %11522 = vmatprep.subr.mxu0 0.0
    %11523 = vmatpush1.msra.mxu0 0.0
    %11524 = vmatprep.subr.mxu0 0.0
    %11525 = vmatpush1.msra.mxu0 0.0
    %11526 = vmatprep.subr.mxu0 0.0
    %11527 = vmatpush1.msra.mxu0 0.0
    %11528 = vmatprep.subr.mxu0 0.0
    %11529 = vmatpush1.msra.mxu0 0.0
    %11530 = vmatprep.subr.mxu0 0.0
    %11531 = vmatpush1.msra.mxu0 0.0
    %11532 = vmatprep.subr.mxu0 0.0
    %11533 = vmatpush1.msra.mxu0 0.0
    %11534 = vmatprep.subr.mxu0 0.0
    %11535 = vmatpush1.msra.mxu0 0.0
    %11536 = vmatprep.subr.mxu0 0.0
    %11537 = vmatpush1.msra.mxu0 0.0
    %11538 = vmatprep.subr.mxu0 0.0
    %11539 = vmatpush1.msra.mxu0 0.0
    %11540 = vmatprep.subr.mxu0 0.0
    %11541 = vmatpush1.msra.mxu0 0.0
    %11542 = vmatprep.subr.mxu0 0.0
    %11543 = vmatpush1.msra.mxu0 0.0
    %11544 = vmatprep.subr.mxu0 0.0
    %11545 = vmatpush1.msra.mxu0 0.0
    %11546 = vmatprep.subr.mxu0 0.0
    %11547 = vmatpush1.msra.mxu0 0.0
    %11548 = vmatprep.subr.mxu0 0.0
    %11549 = vmatpush1.msra.mxu0 0.0
    %11550 = vmatprep.subr.mxu0 0.0
    %11551 = vmatpush1.msra.mxu0 0.0
    %11552 = vmatprep.subr.mxu0 0.0
    %11553 = vmatpush1.msra.mxu0 0.0
    %11554 = vmatprep.subr.mxu0 0.0
    %11555 = vmatpush1.msra.mxu0 0.0
    %11556 = vmatprep.subr.mxu0 0.0
    %11557 = vmatpush1.msra.mxu0 0.0
    %11558 = vmatprep.subr.mxu0 0.0
    %11559 = vmatpush1.msra.mxu0 0.0
    %11560 = vmatprep.subr.mxu0 0.0
    %11561 = vmatpush1.msra.mxu0 0.0
    %11562 = vmatprep.subr.mxu0 0.0
    %11563 = vmatpush1.msra.mxu0 0.0
    %11564 = vmatprep.subr.mxu0 0.0
    %11565 = vmatpush1.msra.mxu0 0.0
    %11566 = vmatprep.subr.mxu0 0.0
    %11567 = vmatpush1.msra.mxu0 0.0
    %11568 = vmatprep.subr.mxu0 0.0
    %11569 = vmatpush1.msra.mxu0 0.0
    %11570 = vmatprep.subr.mxu0 0.0
    %11571 = vmatpush1.msra.mxu0 0.0
    %11572 = vmatprep.subr.mxu0 0.0
    %11573 = vmatpush1.msra.mxu0 0.0
    %11574 = vmatprep.subr.mxu0 0.0
    %11575 = vmatpush1.msra.mxu0 0.0
    %11576 = vmatprep.subr.mxu0 0.0
    %11577 = vmatpush1.msra.mxu0 0.0
    %11578 = vmatprep.subr.mxu0 0.0
    %11579 = vmatpush1.msra.mxu0 0.0
    %11580 = vmatprep.subr.mxu0 0.0
    %11581 = vmatpush1.msra.mxu0 0.0
    %11582 = vmatprep.subr.mxu0 0.0
    %11583 = vmatpush1.msra.mxu0 0.0
    %11584 = vmatprep.mubr.f32.mxu0 0.0
    %11585 = vmatmul.mubr.f32.gmra.mrb[0].mxu0 %v11518
    %v11586 = vpop.f32.mrb[0].mxu0
    %v11587 = vadd.f32 0.0, %v11586
    %v11588 = vpop.f32.mrb[0].mxu0
    %11589 = vdwg.mxu0
    %v11591 = vrot.slane %v6292, 4
    %v11593 = vsel %vm280, %v10447, 0
    %v11596 = vsel %vm280, %v10523, 0
    %v11599 = vsel %vm280, %v10599, 0
    %v11602 = vsel %vm280, %v10675, 0
    %v11605 = vsel %vm280, %v10751, 0
    %v11608 = vsel %vm280, %v10827, 0
    %v11611 = vsel %vm280, %v10903, 0
    %v11614 = vsel %vm280, %v10979, 0
    %v11617 = vsel %vm280, %v11055, 0
    %v11620 = vsel %vm280, %v11131, 0
    %v11623 = vsel %vm280, %v11207, 0
    %v11626 = vsel %vm280, %v11283, 0
    %v11629 = vsel %vm280, %v11359, 0
    %v11632 = vsel %vm280, %v11435, 0
    %v11635 = vsel %vm280, %v11511, 0
    %v11638 = vsel %vm280, %v11587, 0
    %v11640 = vsel %vm5655, %v11591, 0
    %11642 = vmatprep.subr.mxu0 0.0
    %11643 = vmatpush1.msra.mxu0 %v11640
    %11644 = vmatprep.subr.mxu0 0.0
    %11645 = vmatpush1.msra.mxu0 0.0
    %11646 = vmatprep.subr.mxu0 0.0
    %11647 = vmatpush1.msra.mxu0 0.0
    %11648 = vmatprep.subr.mxu0 0.0
    %11649 = vmatpush1.msra.mxu0 0.0
    %11650 = vmatprep.subr.mxu0 0.0
    %11651 = vmatpush1.msra.mxu0 0.0
    %11652 = vmatprep.subr.mxu0 0.0
    %11653 = vmatpush1.msra.mxu0 0.0
    %11654 = vmatprep.subr.mxu0 0.0
    %11655 = vmatpush1.msra.mxu0 0.0
    %11656 = vmatprep.subr.mxu0 0.0
    %11657 = vmatpush1.msra.mxu0 0.0
    %11658 = vmatprep.subr.mxu0 0.0
    %11659 = vmatpush1.msra.mxu0 0.0
    %11660 = vmatprep.subr.mxu0 0.0
    %11661 = vmatpush1.msra.mxu0 0.0
    %11662 = vmatprep.subr.mxu0 0.0
    %11663 = vmatpush1.msra.mxu0 0.0
    %11664 = vmatprep.subr.mxu0 0.0
    %11665 = vmatpush1.msra.mxu0 0.0
    %11666 = vmatprep.subr.mxu0 0.0
    %11667 = vmatpush1.msra.mxu0 0.0
    %11668 = vmatprep.subr.mxu0 0.0
    %11669 = vmatpush1.msra.mxu0 0.0
    %11670 = vmatprep.subr.mxu0 0.0
    %11671 = vmatpush1.msra.mxu0 0.0
    %11672 = vmatprep.subr.mxu0 0.0
    %11673 = vmatpush1.msra.mxu0 0.0
    %11674 = vmatprep.subr.mxu0 0.0
    %11675 = vmatpush1.msra.mxu0 0.0
    %11676 = vmatprep.subr.mxu0 0.0
    %11677 = vmatpush1.msra.mxu0 0.0
    %11678 = vmatprep.subr.mxu0 0.0
    %11679 = vmatpush1.msra.mxu0 0.0
    %11680 = vmatprep.subr.mxu0 0.0
    %11681 = vmatpush1.msra.mxu0 0.0
    %11682 = vmatprep.subr.mxu0 0.0
    %11683 = vmatpush1.msra.mxu0 0.0
    %11684 = vmatprep.subr.mxu0 0.0
    %11685 = vmatpush1.msra.mxu0 0.0
    %11686 = vmatprep.subr.mxu0 0.0
    %11687 = vmatpush1.msra.mxu0 0.0
    %11688 = vmatprep.subr.mxu0 0.0
    %11689 = vmatpush1.msra.mxu0 0.0
    %11690 = vmatprep.subr.mxu0 0.0
    %11691 = vmatpush1.msra.mxu0 0.0
    %11692 = vmatprep.subr.mxu0 0.0
    %11693 = vmatpush1.msra.mxu0 0.0
    %11694 = vmatprep.subr.mxu0 0.0
    %11695 = vmatpush1.msra.mxu0 0.0
    %11696 = vmatprep.subr.mxu0 0.0
    %11697 = vmatpush1.msra.mxu0 0.0
    %11698 = vmatprep.subr.mxu0 0.0
    %11699 = vmatpush1.msra.mxu0 0.0
    %11700 = vmatprep.subr.mxu0 0.0
    %11701 = vmatpush1.msra.mxu0 0.0
    %11702 = vmatprep.subr.mxu0 0.0
    %11703 = vmatpush1.msra.mxu0 0.0
    %11704 = vmatprep.subr.mxu0 0.0
    %11705 = vmatpush1.msra.mxu0 0.0
    %11706 = vmatprep.mubr.f32.mxu0 0.0
    %11707 = vmatmul.mubr.f32.gmra.mrb[0].mxu0 %v11593
    %v11708 = vpop.f32.mrb[0].mxu0
    %v11709 = vadd.f32 0.0, %v11708
    %v11710 = vpop.f32.mrb[0].mxu0
    %11711 = vmatprep.mubr.f32.mxu0 0.0
    %11712 = vmatmul.mubr.f32.gmra.mrb[0].mxu0 %v11596
    %v11713 = vpop.f32.mrb[0].mxu0
    %v11714 = vadd.f32 0.0, %v11713
    %v11715 = vpop.f32.mrb[0].mxu0
    %11716 = vmatprep.mubr.f32.mxu0 0.0
    %11717 = vmatmul.mubr.f32.gmra.mrb[0].mxu0 %v11599
    %v11718 = vpop.f32.mrb[0].mxu0
    %v11719 = vadd.f32 0.0, %v11718
    %v11720 = vpop.f32.mrb[0].mxu0
    %11721 = vmatprep.mubr.f32.mxu0 0.0
    %11722 = vmatmul.mubr.f32.gmra.mrb[0].mxu0 %v11602
    %v11723 = vpop.f32.mrb[0].mxu0
    %v11724 = vadd.f32 0.0, %v11723
    %v11725 = vpop.f32.mrb[0].mxu0
    %11726 = vmatprep.mubr.f32.mxu0 0.0
    %11727 = vmatmul.mubr.f32.gmra.mrb[0].mxu0 %v11605
    %v11728 = vpop.f32.mrb[0].mxu0
    %v11729 = vadd.f32 0.0, %v11728
    %v11730 = vpop.f32.mrb[0].mxu0
    %11731 = vmatprep.mubr.f32.mxu0 0.0
    %11732 = vmatmul.mubr.f32.gmra.mrb[0].mxu0 %v11608
    %v11733 = vpop.f32.mrb[0].mxu0
    %v11734 = vadd.f32 0.0, %v11733
    %v11735 = vpop.f32.mrb[0].mxu0
    %11736 = vmatprep.mubr.f32.mxu0 0.0
    %11737 = vmatmul.mubr.f32.gmra.mrb[0].mxu0 %v11611
    %v11738 = vpop.f32.mrb[0].mxu0
    %v11739 = vadd.f32 0.0, %v11738
    %v11740 = vpop.f32.mrb[0].mxu0
    %11741 = vmatprep.mubr.f32.mxu0 0.0
    %11742 = vmatmul.mubr.f32.gmra.mrb[0].mxu0 %v11614
    %v11743 = vpop.f32.mrb[0].mxu0
    %v11744 = vadd.f32 0.0, %v11743
    %v11745 = vpop.f32.mrb[0].mxu0
    %11746 = vmatprep.mubr.f32.mxu0 0.0
    %11747 = vmatmul.mubr.f32.gmra.mrb[0].mxu0 %v11617
    %v11748 = vpop.f32.mrb[0].mxu0
    %v11749 = vadd.f32 0.0, %v11748
    %v11750 = vpop.f32.mrb[0].mxu0
    %11751 = vmatprep.mubr.f32.mxu0 0.0
    %11752 = vmatmul.mubr.f32.gmra.mrb[0].mxu0 %v11620
    %v11753 = vpop.f32.mrb[0].mxu0
    %v11754 = vadd.f32 0.0, %v11753
    %v11755 = vpop.f32.mrb[0].mxu0
    %11756 = vmatprep.mubr.f32.mxu0 0.0
    %11757 = vmatmul.mubr.f32.gmra.mrb[0].mxu0 %v11623
    %v11758 = vpop.f32.mrb[0].mxu0
    %v11759 = vadd.f32 0.0, %v11758
    %v11760 = vpop.f32.mrb[0].mxu0
    %11761 = vmatprep.mubr.f32.mxu0 0.0
    %11762 = vmatmul.mubr.f32.gmra.mrb[0].mxu0 %v11626
    %v11763 = vpop.f32.mrb[0].mxu0
    %v11764 = vadd.f32 0.0, %v11763
    %v11765 = vpop.f32.mrb[0].mxu0
    %11766 = vmatprep.mubr.f32.mxu0 0.0
    %11767 = vmatmul.mubr.f32.gmra.mrb[0].mxu0 %v11629
    %v11768 = vpop.f32.mrb[0].mxu0
    %v11769 = vadd.f32 0.0, %v11768
    %v11770 = vpop.f32.mrb[0].mxu0
    %11771 = vmatprep.mubr.f32.mxu0 0.0
    %11772 = vmatmul.mubr.f32.gmra.mrb[0].mxu0 %v11632
    %v11773 = vpop.f32.mrb[0].mxu0
    %v11774 = vadd.f32 0.0, %v11773
    %v11775 = vpop.f32.mrb[0].mxu0
    %11776 = vmatprep.mubr.f32.mxu0 0.0
    %11777 = vmatmul.mubr.f32.gmra.mrb[0].mxu0 %v11635
    %v11778 = vpop.f32.mrb[0].mxu0
    %v11779 = vadd.f32 0.0, %v11778
    %v11780 = vpop.f32.mrb[0].mxu0
    %11781 = vmatprep.mubr.f32.mxu0 0.0
    %11782 = vmatmul.mubr.f32.gmra.mrb[0].mxu0 %v11638
    %v11783 = vpop.f32.mrb[0].mxu0
    %v11784 = vadd.f32 0.0, %v11783
    %v11785 = vpop.f32.mrb[0].mxu0
    %11786 = vdwg.mxu0
    %v11788 = vsel %vm280, %v7791, 0
    %v11791 = vsel %vm280, %v7867, 0
    %v11794 = vsel %vm280, %v7943, 0
    %v11797 = vsel %vm280, %v8019, 0
    %v11800 = vsel %vm280, %v8095, 0
    %v11803 = vsel %vm280, %v8171, 0
    %v11806 = vsel %vm280, %v8247, 0
    %v11809 = vsel %vm280, %v8323, 0
    %v11812 = vsel %vm280, %v8399, 0
    %v11815 = vsel %vm280, %v8475, 0
    %v11818 = vsel %vm280, %v8551, 0
    %v11821 = vsel %vm280, %v8627, 0
    %v11824 = vsel %vm280, %v8703, 0
    %v11827 = vsel %vm280, %v8779, 0
    %v11830 = vsel %vm280, %v8855, 0
    %v11833 = vsel %vm280, %v8931, 0
    %v11835 = vsel %vm5655, %v6292, 0
    %11837 = vmatprep.subr.mxu0 0.0
    %11838 = vmatpush1.msra.mxu0 %v11835
    %11839 = vmatprep.subr.mxu0 0.0
    %11840 = vmatpush1.msra.mxu0 0.0
    %11841 = vmatprep.subr.mxu0 0.0
    %11842 = vmatpush1.msra.mxu0 0.0
    %11843 = vmatprep.subr.mxu0 0.0
    %11844 = vmatpush1.msra.mxu0 0.0
    %11845 = vmatprep.subr.mxu0 0.0
    %11846 = vmatpush1.msra.mxu0 0.0
    %11847 = vmatprep.subr.mxu0 0.0
    %11848 = vmatpush1.msra.mxu0 0.0
    %11849 = vmatprep.subr.mxu0 0.0
    %11850 = vmatpush1.msra.mxu0 0.0
    %11851 = vmatprep.subr.mxu0 0.0
    %11852 = vmatpush1.msra.mxu0 0.0
    %11853 = vmatprep.subr.mxu0 0.0
    %11854 = vmatpush1.msra.mxu0 0.0
    %11855 = vmatprep.subr.mxu0 0.0
    %11856 = vmatpush1.msra.mxu0 0.0
    %11857 = vmatprep.subr.mxu0 0.0
    %11858 = vmatpush1.msra.mxu0 0.0
    %11859 = vmatprep.subr.mxu0 0.0
    %11860 = vmatpush1.msra.mxu0 0.0
    %11861 = vmatprep.subr.mxu0 0.0
    %11862 = vmatpush1.msra.mxu0 0.0
    %11863 = vmatprep.subr.mxu0 0.0
    %11864 = vmatpush1.msra.mxu0 0.0
    %11865 = vmatprep.subr.mxu0 0.0
    %11866 = vmatpush1.msra.mxu0 0.0
    %11867 = vmatprep.subr.mxu0 0.0
    %11868 = vmatpush1.msra.mxu0 0.0
    %11869 = vmatprep.subr.mxu0 0.0
    %11870 = vmatpush1.msra.mxu0 0.0
    %11871 = vmatprep.subr.mxu0 0.0
    %11872 = vmatpush1.msra.mxu0 0.0
    %11873 = vmatprep.subr.mxu0 0.0
    %11874 = vmatpush1.msra.mxu0 0.0
    %11875 = vmatprep.subr.mxu0 0.0
    %11876 = vmatpush1.msra.mxu0 0.0
    %11877 = vmatprep.subr.mxu0 0.0
    %11878 = vmatpush1.msra.mxu0 0.0
    %11879 = vmatprep.subr.mxu0 0.0
    %11880 = vmatpush1.msra.mxu0 0.0
    %11881 = vmatprep.subr.mxu0 0.0
    %11882 = vmatpush1.msra.mxu0 0.0
    %11883 = vmatprep.subr.mxu0 0.0
    %11884 = vmatpush1.msra.mxu0 0.0
    %11885 = vmatprep.subr.mxu0 0.0
    %11886 = vmatpush1.msra.mxu0 0.0
    %11887 = vmatprep.subr.mxu0 0.0
    %11888 = vmatpush1.msra.mxu0 0.0
    %11889 = vmatprep.subr.mxu0 0.0
    %11890 = vmatpush1.msra.mxu0 0.0
    %11891 = vmatprep.subr.mxu0 0.0
    %11892 = vmatpush1.msra.mxu0 0.0
    %11893 = vmatprep.subr.mxu0 0.0
    %11894 = vmatpush1.msra.mxu0 0.0
    %11895 = vmatprep.subr.mxu0 0.0
    %11896 = vmatpush1.msra.mxu0 0.0
    %11897 = vmatprep.subr.mxu0 0.0
    %11898 = vmatpush1.msra.mxu0 0.0
    %11899 = vmatprep.subr.mxu0 0.0
    %11900 = vmatpush1.msra.mxu0 0.0
    %11901 = vmatprep.mubr.f32.mxu0 0.0
    %11902 = vmatmul.mubr.f32.gmra.mrb[0].mxu0 %v11788
    %v11903 = vpop.f32.mrb[0].mxu0
    %v11904 = vadd.f32 %v11709, %v11903
    %v11905 = vpop.f32.mrb[0].mxu0
    %11906 = vmatprep.mubr.f32.mxu0 0.0
    %11907 = vmatmul.mubr.f32.gmra.mrb[0].mxu0 %v11791
    %v11908 = vpop.f32.mrb[0].mxu0
    %v11909 = vadd.f32 %v11714, %v11908
    %v11910 = vpop.f32.mrb[0].mxu0
    %11911 = vmatprep.mubr.f32.mxu0 0.0
    %11912 = vmatmul.mubr.f32.gmra.mrb[0].mxu0 %v11794
    %v11913 = vpop.f32.mrb[0].mxu0
    %v11914 = vadd.f32 %v11719, %v11913
    %v11915 = vpop.f32.mrb[0].mxu0
    %11916 = vmatprep.mubr.f32.mxu0 0.0
    %11917 = vmatmul.mubr.f32.gmra.mrb[0].mxu0 %v11797
    %v11918 = vpop.f32.mrb[0].mxu0
    %v11919 = vadd.f32 %v11724, %v11918
    %v11920 = vpop.f32.mrb[0].mxu0
    %11921 = vmatprep.mubr.f32.mxu0 0.0
    %11922 = vmatmul.mubr.f32.gmra.mrb[0].mxu0 %v11800
    %v11923 = vpop.f32.mrb[0].mxu0
    %v11924 = vadd.f32 %v11729, %v11923
    %v11925 = vpop.f32.mrb[0].mxu0
    %11926 = vmatprep.mubr.f32.mxu0 0.0
    %11927 = vmatmul.mubr.f32.gmra.mrb[0].mxu0 %v11803
    %v11928 = vpop.f32.mrb[0].mxu0
    %v11929 = vadd.f32 %v11734, %v11928
    %v11930 = vpop.f32.mrb[0].mxu0
    %11931 = vmatprep.mubr.f32.mxu0 0.0
    %11932 = vmatmul.mubr.f32.gmra.mrb[0].mxu0 %v11806
    %v11933 = vpop.f32.mrb[0].mxu0
    %v11934 = vadd.f32 %v11739, %v11933
    %v11935 = vpop.f32.mrb[0].mxu0
    %11936 = vmatprep.mubr.f32.mxu0 0.0
    %11937 = vmatmul.mubr.f32.gmra.mrb[0].mxu0 %v11809
    %v11938 = vpop.f32.mrb[0].mxu0
    %v11939 = vadd.f32 %v11744, %v11938
    %v11940 = vpop.f32.mrb[0].mxu0
    %11941 = vmatprep.mubr.f32.mxu0 0.0
    %11942 = vmatmul.mubr.f32.gmra.mrb[0].mxu0 %v11812
    %v11943 = vpop.f32.mrb[0].mxu0
    %v11944 = vadd.f32 %v11749, %v11943
    %v11945 = vpop.f32.mrb[0].mxu0
    %11946 = vmatprep.mubr.f32.mxu0 0.0
    %11947 = vmatmul.mubr.f32.gmra.mrb[0].mxu0 %v11815
    %v11948 = vpop.f32.mrb[0].mxu0
    %v11949 = vadd.f32 %v11754, %v11948
    %v11950 = vpop.f32.mrb[0].mxu0
    %11951 = vmatprep.mubr.f32.mxu0 0.0
    %11952 = vmatmul.mubr.f32.gmra.mrb[0].mxu0 %v11818
    %v11953 = vpop.f32.mrb[0].mxu0
    %v11954 = vadd.f32 %v11759, %v11953
    %v11955 = vpop.f32.mrb[0].mxu0
    %11956 = vmatprep.mubr.f32.mxu0 0.0
    %11957 = vmatmul.mubr.f32.gmra.mrb[0].mxu0 %v11821
    %v11958 = vpop.f32.mrb[0].mxu0
    %v11959 = vadd.f32 %v11764, %v11958
    %v11960 = vpop.f32.mrb[0].mxu0
    %11961 = vmatprep.mubr.f32.mxu0 0.0
    %11962 = vmatmul.mubr.f32.gmra.mrb[0].mxu0 %v11824
    %v11963 = vpop.f32.mrb[0].mxu0
    %v11964 = vadd.f32 %v11769, %v11963
    %v11965 = vpop.f32.mrb[0].mxu0
    %11966 = vmatprep.mubr.f32.mxu0 0.0
    %11967 = vmatmul.mubr.f32.gmra.mrb[0].mxu0 %v11827
    %v11968 = vpop.f32.mrb[0].mxu0
    %v11969 = vadd.f32 %v11774, %v11968
    %v11970 = vpop.f32.mrb[0].mxu0
    %11971 = vmatprep.mubr.f32.mxu0 0.0
    %11972 = vmatmul.mubr.f32.gmra.mrb[0].mxu0 %v11830
    %v11973 = vpop.f32.mrb[0].mxu0
    %v11974 = vadd.f32 %v11779, %v11973
    %v11975 = vpop.f32.mrb[0].mxu0
    %11976 = vmatprep.mubr.f32.mxu0 0.0
    %11977 = vmatmul.mubr.f32.gmra.mrb[0].mxu0 %v11833
    %v11978 = vpop.f32.mrb[0].mxu0
    %v11979 = vadd.f32 %v11784, %v11978
    %v11980 = vpop.f32.mrb[0].mxu0
    %11981 = vdwg.mxu0
    %v11983 = vlaneseq
    %v11984 = vshrl.u32 %v11983, 7
    %v11985 = vsub.s32 0, %v11984
    %v11986 = vrot.slane %v6293, %v11985
    %v11988 = vadd.f32 %v11904, %v11986
    %v11989 = vadd.f32 %v11909, %v11986
    %v11990 = vadd.f32 %v11914, %v11986
    %v11991 = vadd.f32 %v11919, %v11986
    %v11992 = vadd.f32 %v11924, %v11986
    %v11993 = vadd.f32 %v11929, %v11986
    %v11994 = vadd.f32 %v11934, %v11986
    %v11995 = vadd.f32 %v11939, %v11986
    %v11996 = vadd.f32 %v11944, %v11986
    %v11997 = vadd.f32 %v11949, %v11986
    %v11998 = vadd.f32 %v11954, %v11986
    %v11999 = vadd.f32 %v11959, %v11986
    %v12000 = vadd.f32 %v11964, %v11986
    %v12001 = vadd.f32 %v11969, %v11986
    %v12002 = vadd.f32 %v11974, %v11986
    %v12003 = vadd.f32 %v11979, %v11986
    %v12004 = vcombine.low %v11988, %v11990
    %v12005 = vcombine.high %v11988, %v11990
    %v12007 = vunpack.c.l.s4 1983009808
    %v12008 = vunpack.c.0.s8 %v12007
    %v12009 = vlaneseq
    %v12010 = vshrl.u32 %v12009, 7
    %v12011 = vsub.s32 %v12008, %v12010
    %v12012 = vrot.slane %v12004, %v12011
    %v12014 = vunpack.c.l.s4 1983009808
    %v12015 = vunpack.c.0.s8 %v12014
    %v12016 = vlaneseq
    %v12017 = vshrl.u32 %v12016, 7
    %v12018 = vsub.s32 %v12015, %v12017
    %v12019 = vrot.slane %v12005, %v12018
    %v12020 = vcombine.low %v11989, %v11991
    %v12021 = vcombine.high %v11989, %v11991
    %v12023 = vunpack.c.l.s4 1983009808
    %v12024 = vunpack.c.0.s8 %v12023
    %v12025 = vlaneseq
    %v12026 = vshrl.u32 %v12025, 7
    %v12027 = vsub.s32 %v12024, %v12026
    %v12028 = vrot.slane %v12020, %v12027
    %v12030 = vunpack.c.l.s4 1983009808
    %v12031 = vunpack.c.0.s8 %v12030
    %v12032 = vlaneseq
    %v12033 = vshrl.u32 %v12032, 7
    %v12034 = vsub.s32 %v12031, %v12033
    %v12035 = vrot.slane %v12021, %v12034
    %v12036 = vcombine.low %v11992, %v11994
    %v12037 = vcombine.high %v11992, %v11994
    %v12039 = vunpack.c.l.s4 1983009808
    %v12040 = vunpack.c.0.s8 %v12039
    %v12041 = vlaneseq
    %v12042 = vshrl.u32 %v12041, 7
    %v12043 = vsub.s32 %v12040, %v12042
    %v12044 = vrot.slane %v12036, %v12043
    %v12046 = vunpack.c.l.s4 1983009808
    %v12047 = vunpack.c.0.s8 %v12046
    %v12048 = vlaneseq
    %v12049 = vshrl.u32 %v12048, 7
    %v12050 = vsub.s32 %v12047, %v12049
    %v12051 = vrot.slane %v12037, %v12050
    %v12052 = vcombine.low %v11993, %v11995
    %v12053 = vcombine.high %v11993, %v11995
    %v12055 = vunpack.c.l.s4 1983009808
    %v12056 = vunpack.c.0.s8 %v12055
    %v12057 = vlaneseq
    %v12058 = vshrl.u32 %v12057, 7
    %v12059 = vsub.s32 %v12056, %v12058
    %v12060 = vrot.slane %v12052, %v12059
    %v12062 = vunpack.c.l.s4 1983009808
    %v12063 = vunpack.c.0.s8 %v12062
    %v12064 = vlaneseq
    %v12065 = vshrl.u32 %v12064, 7
    %v12066 = vsub.s32 %v12063, %v12065
    %v12067 = vrot.slane %v12053, %v12066
    %v12068 = vcombine.low %v12012, %v12028
    %v12069 = vcombine.high %v12012, %v12028
    %v12071 = vunpack.c.l.s4 1934713408
    %v12072 = vunpack.c.0.s8 %v12071
    %v12073 = vlaneseq
    %v12074 = vshrl.u32 %v12073, 7
    %v12075 = vsub.s32 %v12072, %v12074
    %v12076 = vrot.slane %v12068, %v12075
    %v12078 = vunpack.c.l.s4 1934713408
    %v12079 = vunpack.c.0.s8 %v12078
    %v12080 = vlaneseq
    %v12081 = vshrl.u32 %v12080, 7
    %v12082 = vsub.s32 %v12079, %v12081
    %v12083 = vrot.slane %v12069, %v12082
    %v12084 = vcombine.low %v12019, %v12035
    %v12085 = vcombine.high %v12019, %v12035
    %v12087 = vunpack.c.l.s4 1934713408
    %v12088 = vunpack.c.0.s8 %v12087
    %v12089 = vlaneseq
    %v12090 = vshrl.u32 %v12089, 7
    %v12091 = vsub.s32 %v12088, %v12090
    %v12092 = vrot.slane %v12084, %v12091
    %v12094 = vunpack.c.l.s4 1934713408
    %v12095 = vunpack.c.0.s8 %v12094
    %v12096 = vlaneseq
    %v12097 = vshrl.u32 %v12096, 7
    %v12098 = vsub.s32 %v12095, %v12097
    %v12099 = vrot.slane %v12085, %v12098
    %v12100 = vcombine.low %v12044, %v12060
    %v12101 = vcombine.high %v12044, %v12060
    %v12103 = vunpack.c.l.s4 1934713408
    %v12104 = vunpack.c.0.s8 %v12103
    %v12105 = vlaneseq
    %v12106 = vshrl.u32 %v12105, 7
    %v12107 = vsub.s32 %v12104, %v12106
    %v12108 = vrot.slane %v12100, %v12107
    %v12110 = vunpack.c.l.s4 1934713408
    %v12111 = vunpack.c.0.s8 %v12110
    %v12112 = vlaneseq
    %v12113 = vshrl.u32 %v12112, 7
    %v12114 = vsub.s32 %v12111, %v12113
    %v12115 = vrot.slane %v12101, %v12114
    %v12116 = vcombine.low %v12051, %v12067
    %v12117 = vcombine.high %v12051, %v12067
    %v12119 = vunpack.c.l.s4 1934713408
    %v12120 = vunpack.c.0.s8 %v12119
    %v12121 = vlaneseq
    %v12122 = vshrl.u32 %v12121, 7
    %v12123 = vsub.s32 %v12120, %v12122
    %v12124 = vrot.slane %v12116, %v12123
    %v12126 = vunpack.c.l.s4 1934713408
    %v12127 = vunpack.c.0.s8 %v12126
    %v12128 = vlaneseq
    %v12129 = vshrl.u32 %v12128, 7
    %v12130 = vsub.s32 %v12127, %v12129
    %v12131 = vrot.slane %v12117, %v12130
    %v12132 = vcombine.low %v12076, %v12108
    %v12133 = vcombine.high %v12076, %v12108
    %v12134 = vcombine.low %v12083, %v12115
    %v12135 = vcombine.high %v12083, %v12115
    %v12136 = vcombine.low %v12092, %v12124
    %v12137 = vcombine.high %v12092, %v12124
    %v12138 = vcombine.low %v12099, %v12131
    %v12139 = vcombine.high %v12099, %v12131
    %v12140 = vadd.f32 %v6004, %v12132
    %v12141 = vadd.f32 %v6005, %v12133
    %v12142 = vadd.f32 %v6006, %v12134
    %v12143 = vadd.f32 %v6007, %v12135
    %v12144 = vadd.f32 %v6008, %v12136
    %v12145 = vadd.f32 %v6009, %v12137
    %v12146 = vadd.f32 %v6010, %v12138
    %v12147 = vadd.f32 %v6011, %v12139
    %v12148 = vadd.f32 %v12140, %v59
    %v12149 = vadd.f32 %v12141, %v60
    %v12150 = vadd.f32 %v12142, %v61
    %v12151 = vadd.f32 %v12143, %v62
    %v12152 = vadd.f32 %v12144, %v63
    %v12153 = vadd.f32 %v12145, %v64
    %v12154 = vadd.f32 %v12146, %v65
    %v12155 = vadd.f32 %v12147, %v66
    %v12156 = vmax.f32 %v12148, 0.0
    %v12157 = vmax.f32 %v12149, 0.0
    %v12158 = vmax.f32 %v12150, 0.0
    %v12159 = vmax.f32 %v12151, 0.0
    %v12160 = vmax.f32 %v12152, 0.0
    %v12161 = vmax.f32 %v12153, 0.0
    %v12162 = vmax.f32 %v12154, 0.0
    %v12163 = vmax.f32 %v12155, 0.0
    %12164 = vst.msk [vmem:[#allocation8] sm:$0xff] %vm77, %v12156
    %12165 = vst.msk [vmem:[#allocation8 + $0x8] sm:$0xff] %vm77, %v12157
    %12166 = vst.msk [vmem:[#allocation8 + $0x10] sm:$0xff] %vm77, %v12158
    %12167 = vst.msk [vmem:[#allocation8 + $0x18] sm:$0xff] %vm77, %v12159
    %12168 = vst.msk [vmem:[#allocation8 + $0x20] sm:$0xff] %vm77, %v12160
    %12169 = vst.msk [vmem:[#allocation8 + $0x28] sm:$0xff] %vm77, %v12161
    %12170 = vst.msk [vmem:[#allocation8 + $0x30] sm:$0xff] %vm77, %v12162
    %12171 = vst.msk [vmem:[#allocation8 + $0x38] sm:$0xff] %vm77, %v12163
    %v12172 = vcombine.low %v11996, %v11998
    %v12173 = vcombine.high %v11996, %v11998
    %v12175 = vunpack.c.l.s4 1983009808
    %v12176 = vunpack.c.0.s8 %v12175
    %v12177 = vlaneseq
    %v12178 = vshrl.u32 %v12177, 7
    %v12179 = vsub.s32 %v12176, %v12178
    %v12180 = vrot.slane %v12172, %v12179
    %v12182 = vunpack.c.l.s4 1983009808
    %v12183 = vunpack.c.0.s8 %v12182
    %v12184 = vlaneseq
    %v12185 = vshrl.u32 %v12184, 7
    %v12186 = vsub.s32 %v12183, %v12185
    %v12187 = vrot.slane %v12173, %v12186
    %v12188 = vcombine.low %v11997, %v11999
    %v12189 = vcombine.high %v11997, %v11999
    %v12191 = vunpack.c.l.s4 1983009808
    %v12192 = vunpack.c.0.s8 %v12191
    %v12193 = vlaneseq
    %v12194 = vshrl.u32 %v12193, 7
    %v12195 = vsub.s32 %v12192, %v12194
    %v12196 = vrot.slane %v12188, %v12195
    %v12198 = vunpack.c.l.s4 1983009808
    %v12199 = vunpack.c.0.s8 %v12198
    %v12200 = vlaneseq
    %v12201 = vshrl.u32 %v12200, 7
    %v12202 = vsub.s32 %v12199, %v12201
    %v12203 = vrot.slane %v12189, %v12202
    %v12204 = vcombine.low %v12000, %v12002
    %v12205 = vcombine.high %v12000, %v12002
    %v12207 = vunpack.c.l.s4 1983009808
    %v12208 = vunpack.c.0.s8 %v12207
    %v12209 = vlaneseq
    %v12210 = vshrl.u32 %v12209, 7
    %v12211 = vsub.s32 %v12208, %v12210
    %v12212 = vrot.slane %v12204, %v12211
    %v12214 = vunpack.c.l.s4 1983009808
    %v12215 = vunpack.c.0.s8 %v12214
    %v12216 = vlaneseq
    %v12217 = vshrl.u32 %v12216, 7
    %v12218 = vsub.s32 %v12215, %v12217
    %v12219 = vrot.slane %v12205, %v12218
    %v12220 = vcombine.low %v12001, %v12003
    %v12221 = vcombine.high %v12001, %v12003
    %v12223 = vunpack.c.l.s4 1983009808
    %v12224 = vunpack.c.0.s8 %v12223
    %v12225 = vlaneseq
    %v12226 = vshrl.u32 %v12225, 7
    %v12227 = vsub.s32 %v12224, %v12226
    %v12228 = vrot.slane %v12220, %v12227
    %v12230 = vunpack.c.l.s4 1983009808
    %v12231 = vunpack.c.0.s8 %v12230
    %v12232 = vlaneseq
    %v12233 = vshrl.u32 %v12232, 7
    %v12234 = vsub.s32 %v12231, %v12233
    %v12235 = vrot.slane %v12221, %v12234
    %v12236 = vcombine.low %v12180, %v12196
    %v12237 = vcombine.high %v12180, %v12196
    %v12239 = vunpack.c.l.s4 1934713408
    %v12240 = vunpack.c.0.s8 %v12239
    %v12241 = vlaneseq
    %v12242 = vshrl.u32 %v12241, 7
    %v12243 = vsub.s32 %v12240, %v12242
    %v12244 = vrot.slane %v12236, %v12243
    %v12246 = vunpack.c.l.s4 1934713408
    %v12247 = vunpack.c.0.s8 %v12246
    %v12248 = vlaneseq
    %v12249 = vshrl.u32 %v12248, 7
    %v12250 = vsub.s32 %v12247, %v12249
    %v12251 = vrot.slane %v12237, %v12250
    %v12252 = vcombine.low %v12187, %v12203
    %v12253 = vcombine.high %v12187, %v12203
    %v12255 = vunpack.c.l.s4 1934713408
    %v12256 = vunpack.c.0.s8 %v12255
    %v12257 = vlaneseq
    %v12258 = vshrl.u32 %v12257, 7
    %v12259 = vsub.s32 %v12256, %v12258
    %v12260 = vrot.slane %v12252, %v12259
    %v12262 = vunpack.c.l.s4 1934713408
    %v12263 = vunpack.c.0.s8 %v12262
    %v12264 = vlaneseq
    %v12265 = vshrl.u32 %v12264, 7
    %v12266 = vsub.s32 %v12263, %v12265
    %v12267 = vrot.slane %v12253, %v12266
    %v12268 = vcombine.low %v12212, %v12228
    %v12269 = vcombine.high %v12212, %v12228
    %v12271 = vunpack.c.l.s4 1934713408
    %v12272 = vunpack.c.0.s8 %v12271
    %v12273 = vlaneseq
    %v12274 = vshrl.u32 %v12273, 7
    %v12275 = vsub.s32 %v12272, %v12274
    %v12276 = vrot.slane %v12268, %v12275
    %v12278 = vunpack.c.l.s4 1934713408
    %v12279 = vunpack.c.0.s8 %v12278
    %v12280 = vlaneseq
    %v12281 = vshrl.u32 %v12280, 7
    %v12282 = vsub.s32 %v12279, %v12281
    %v12283 = vrot.slane %v12269, %v12282
    %v12284 = vcombine.low %v12219, %v12235
    %v12285 = vcombine.high %v12219, %v12235
    %v12287 = vunpack.c.l.s4 1934713408
    %v12288 = vunpack.c.0.s8 %v12287
    %v12289 = vlaneseq
    %v12290 = vshrl.u32 %v12289, 7
    %v12291 = vsub.s32 %v12288, %v12290
    %v12292 = vrot.slane %v12284, %v12291
    %v12294 = vunpack.c.l.s4 1934713408
    %v12295 = vunpack.c.0.s8 %v12294
    %v12296 = vlaneseq
    %v12297 = vshrl.u32 %v12296, 7
    %v12298 = vsub.s32 %v12295, %v12297
    %v12299 = vrot.slane %v12285, %v12298
    %v12300 = vcombine.low %v12244, %v12276
    %v12301 = vcombine.high %v12244, %v12276
    %v12302 = vcombine.low %v12251, %v12283
    %v12303 = vcombine.high %v12251, %v12283
    %v12304 = vcombine.low %v12260, %v12292
    %v12305 = vcombine.high %v12260, %v12292
    %v12306 = vcombine.low %v12267, %v12299
    %v12307 = vcombine.high %v12267, %v12299
    %v12308 = vadd.f32 %v6012, %v12300
    %v12309 = vadd.f32 %v6013, %v12301
    %v12310 = vadd.f32 %v6014, %v12302
    %v12311 = vadd.f32 %v6015, %v12303
    %v12312 = vadd.f32 %v6016, %v12304
    %v12313 = vadd.f32 %v6017, %v12305
    %v12314 = vadd.f32 %v6018, %v12306
    %v12315 = vadd.f32 %v6019, %v12307
    %v12316 = vadd.f32 %v12308, %v67
    %v12317 = vadd.f32 %v12309, %v68
    %v12318 = vadd.f32 %v12310, %v69
    %v12319 = vadd.f32 %v12311, %v70
    %v12320 = vadd.f32 %v12312, %v71
    %v12321 = vadd.f32 %v12313, %v72
    %v12322 = vadd.f32 %v12314, %v73
    %v12323 = vadd.f32 %v12315, %v74
    %v12324 = vmax.f32 %v12316, 0.0
    %v12325 = vmax.f32 %v12317, 0.0
    %v12326 = vmax.f32 %v12318, 0.0
    %v12327 = vmax.f32 %v12319, 0.0
    %v12328 = vmax.f32 %v12320, 0.0
    %v12329 = vmax.f32 %v12321, 0.0
    %v12330 = vmax.f32 %v12322, 0.0
    %v12331 = vmax.f32 %v12323, 0.0
    %s12332 = scalar_lea.vmem [#allocation8], 64
    %12333 = vst.msk [vmem:[%s12332] sm:$0xff] %vm77, %v12324
    %12334 = vst.msk [vmem:[%s12332 + $0x8] sm:$0xff] %vm77, %v12325
    %12335 = vst.msk [vmem:[%s12332 + $0x10] sm:$0xff] %vm77, %v12326
    %12336 = vst.msk [vmem:[%s12332 + $0x18] sm:$0xff] %vm77, %v12327
    %12337 = vst.msk [vmem:[%s12332 + $0x20] sm:$0xff] %vm77, %v12328
    %12338 = vst.msk [vmem:[%s12332 + $0x28] sm:$0xff] %vm77, %v12329
    %12339 = vst.msk [vmem:[%s12332 + $0x30] sm:$0xff] %vm77, %v12330
    %12340 = vst.msk [vmem:[%s12332 + $0x38] sm:$0xff] %vm77, %v12331
    // Predicated region
    $region30: #{tpu_custom_call.1} parent=1 // pred_check
      _
    $region31: #{tpu_custom_call.1} parent=1 // pred_check_branch
      %12342 = sbr.rel (0) target = $region33
    $region32: #{tpu_custom_call.1} parent=1 // pred_region
      %s12344 = ssub.s32 2048, 2048
      %12345 = vsyncadd [#allocation4], %s12344
      %s12346 = sshll.u32 [#allocation8], 4
      %s12347 = int_to_ptr.vmem [resolvable:$true] %s12346
      %12352 = dma.vmem_to_hbm [thread:$0]  %s12347, 2048, %s4, [#allocation4], 128, 128, 8
    $region33: #{tpu_custom_call.1} parent=1 // pred_fallthru
      _
    // Predicated region
    $region34: #{tpu_custom_call.1} parent=1 // pred_check
      _
    $region35: #{tpu_custom_call.1} parent=1 // pred_check_branch
      %12354 = sbr.rel (0) target = $region37
    $region36: #{tpu_custom_call.1} parent=1 // pred_region
      %12355 = dma.done [#allocation4], 2048
    $region37: #{tpu_custom_call.1} parent=1 // pred_fallthru
      _
    %12356 = vsyncpa [#allocation3], 1
    %12357 = vsyncpa [#allocation6], 1
    %12358 = vsyncpa [#allocation4], 1

</llo_original>
